<compile_context>
chip_gen: v5e
topology: v5e:2x2
jax: 0.10.0
libtpu: 0.0.40
codegen_flags: <defaults>
</compile_context>

<pallas_src>
import functools

import jax
import jax.numpy as jnp
from jax.experimental import pallas as pl
from jax.experimental.pallas import tpu as pltpu

NEG_SLOPE = 0.3
BN_EPS = 1e-5
COMPUTE_DTYPE = jnp.bfloat16
_VMEM_LIMIT = 48 * 1024 * 1024


def _leaky(x):
    return jnp.where(x > 0, x, NEG_SLOPE * x)


def _round_up(x, m):
    return (x + m - 1) // m * m


def _mosaic_params():
    return pltpu.CompilerParams(
        dimension_semantics=("parallel",),
        vmem_limit_bytes=_VMEM_LIMIT,
    )


# ----------------------------------------------------------------------------
# Pallas kernels
# ----------------------------------------------------------------------------
def _matmul_bias_kernel(x_ref, w_ref, b_ref, o_ref, *, apply_act):
    """1x1 conv (matmul over channels) with BN folded into w; bias [+leaky]."""
    y = jnp.dot(x_ref[...], w_ref[...], preferred_element_type=jnp.float32)
    y = y + b_ref[...]
    if apply_act:
        y = _leaky(y)
    o_ref[...] = y.astype(o_ref.dtype)


def _matmul_bias_res_kernel(x_ref, w_ref, b_ref, r_ref, o_ref):
    """conv3 + bn3 + identity-residual add + LeakyReLU (block epilogue)."""
    y = jnp.dot(x_ref[...], w_ref[...], preferred_element_type=jnp.float32)
    y = y + b_ref[...] + r_ref[...].astype(jnp.float32)
    o_ref[...] = _leaky(y).astype(o_ref.dtype)


def _matmul_bias_ds_kernel(x_ref, w_ref, b_ref, xr_ref, wr_ref, br_ref, o_ref):
    """conv3 + bn3 + fused downsample(1x1 conv + BN) residual + LeakyReLU."""
    y = jnp.dot(x_ref[...], w_ref[...], preferred_element_type=jnp.float32)
    y = y + b_ref[...]
    r = jnp.dot(xr_ref[...], wr_ref[...], preferred_element_type=jnp.float32)
    r = r + br_ref[...]
    o_ref[...] = _leaky(y + r).astype(o_ref.dtype)


def _conv3x3_kernel(x_ref, w_ref, b_ref, o_ref, acc_ref, *, wp, ho, wo):
    """3x3 conv (stride 1, pad 1) + BN bias + LeakyReLU for one image.

    x_ref  : (1, Mp, C)   zero-padded image, flattened row-major with row
                          pitch `wp` (wp is a multiple of 8), bf16
    w_ref  : (9, C, Co)   BN-folded weights, tap t = dy*3 + dx, bf16
    b_ref  : (1, Co)      f32 bias
    o_ref  : (1, ho, wo, Co)
    acc_ref: (ho*wp, Co)  f32 VMEM accumulator ("wide" rows incl. pad columns)
    """
    m_wide = ho * wp
    acc_ref[...] = jnp.zeros_like(acc_ref)
    for dy in range(3):           # static unrolled: 9 MXU matmuls into scratch
        for dx in range(3):
            off = dy * wp + dx    # shifted flat view of the padded image
            tap = x_ref[0, pl.ds(off, m_wide), :]
            acc_ref[...] += jnp.dot(
                tap, w_ref[dy * 3 + dx], preferred_element_type=jnp.float32)
    y = _leaky(acc_ref[...] + b_ref[...])
    y = y.reshape(ho, wp, -1)[:, :wo, :]   # drop the padded columns (aligned)
    o_ref[0] = y.astype(o_ref.dtype)


# ----------------------------------------------------------------------------
# Tiling helpers
# ----------------------------------------------------------------------------
def _row_tile(m, cap=512):
    """Pick (row_tile, padded_rows).

    Tile is a multiple of 8, <= cap, divides padded_rows, and when possible
    leaves >= 2 grid steps (so both v7x TensorCores get work).  Prefers a
    divisor of m (no padding); otherwise pads m up.
    """
    m8 = _round_up(m, 8)
    if m8 >= 16:
        cap = min(cap, m8 // 2)
    cap = max(8, min(cap, m8))
    cap = cap // 8 * 8
    best = 0
    for t in range(8, cap + 1, 8):
        if m % t == 0:
            best = t
    if best:
        return best, m
    return cap, _round_up(m, cap)


def _pad_rows(x, m_pad):
    if x.shape[0] == m_pad:
        return x
    return jnp.pad(x, ((0, m_pad - x.shape[0]),) + ((0, 0),) * (x.ndim - 1))


# ----------------------------------------------------------------------------
# pallas_call wrappers
# ----------------------------------------------------------------------------
def conv1x1_bn(x_flat, w, bias, *, apply_act, out_dtype):
    """y = act(x @ w + bias); w is BN-folded bf16, bias is f32 (1, cout)."""
    m, cin = x_flat.shape
    cout = w.shape[1]
    tm, m_pad = _row_tile(m)
    xp = _pad_rows(x_flat, m_pad)
    kernel = functools.partial(_matmul_bias_kernel, apply_act=apply_act)
    out = pl.pallas_call(
        kernel,
        out_shape=jax.ShapeDtypeStruct((m_pad, cout), out_dtype),
        grid=(m_pad // tm,),
        in_specs=[
            pl.BlockSpec((tm, cin), lambda i: (i, 0)),
            pl.BlockSpec((cin, cout), lambda i: (0, 0)),
            pl.BlockSpec((1, cout), lambda i: (0, 0)),
        ],
        out_specs=pl.BlockSpec((tm, cout), lambda i: (i, 0)),
        compiler_params=_mosaic_params(),
    )(xp, w, bias)
    return out[:m] if m_pad != m else out


def conv1x1_bn_add_act(x_flat, w, bias, residual, *, out_dtype):
    """Epilogue with identity residual: leaky(x @ w + bias + residual)."""
    m, cin = x_flat.shape
    cout = w.shape[1]
    tm, m_pad = _row_tile(m)
    xp = _pad_rows(x_flat, m_pad)
    rp = _pad_rows(residual, m_pad)
    out = pl.pallas_call(
        _matmul_bias_res_kernel,
        out_shape=jax.ShapeDtypeStruct((m_pad, cout), out_dtype),
        grid=(m_pad // tm,),
        in_specs=[
            pl.BlockSpec((tm, cin), lambda i: (i, 0)),
            pl.BlockSpec((cin, cout), lambda i: (0, 0)),
            pl.BlockSpec((1, cout), lambda i: (0, 0)),
            pl.BlockSpec((tm, cout), lambda i: (i, 0)),
        ],
        out_specs=pl.BlockSpec((tm, cout), lambda i: (i, 0)),
        compiler_params=_mosaic_params(),
    )(xp, w, bias, rp)
    return out[:m] if m_pad != m else out


def conv1x1_bn_fused_downsample_act(x_flat, w, bias, xres_flat, w_ds, bias_ds,
                                    *, out_dtype):
    """Epilogue with fused downsample: leaky(x@w + b + (xres@w_ds + b_ds))."""
    m, cin = x_flat.shape
    cout = w.shape[1]
    cres = xres_flat.shape[1]
    tm, m_pad = _row_tile(m)
    xp = _pad_rows(x_flat, m_pad)
    rp = _pad_rows(xres_flat, m_pad)
    out = pl.pallas_call(
        _matmul_bias_ds_kernel,
        out_shape=jax.ShapeDtypeStruct((m_pad, cout), out_dtype),
        grid=(m_pad // tm,),
        in_specs=[
            pl.BlockSpec((tm, cin), lambda i: (i, 0)),
            pl.BlockSpec((cin, cout), lambda i: (0, 0)),
            pl.BlockSpec((1, cout), lambda i: (0, 0)),
            pl.BlockSpec((tm, cres), lambda i: (i, 0)),
            pl.BlockSpec((cres, cout), lambda i: (0, 0)),
            pl.BlockSpec((1, cout), lambda i: (0, 0)),
        ],
        out_specs=pl.BlockSpec((tm, cout), lambda i: (i, 0)),
        compiler_params=_mosaic_params(),
    )(xp, w, bias, rp, w_ds, bias_ds)
    return out[:m] if m_pad != m else out


def conv3x3_bn_act(x_nhwc, w_taps, bias, *, out_dtype):
    """3x3 conv, stride 1, padding 1, + BN bias + LeakyReLU. One grid step
    per image; taps are sliced in VMEM (no im2col tensor in HBM)."""
    n, h, w, c = x_nhwc.shape
    co = w_taps.shape[2]
    ho, wo = h, w
    wp = _round_up(w + 2, 8)          # padded row pitch (multiple of 8)
    hp = h + 3                        # 1 top + 2 bottom rows (tap-offset slack)
    mp = hp * wp
    m_wide = ho * wp

    xpad = jnp.pad(x_nhwc, ((0, 0), (1, 2), (1, wp - w - 1), (0, 0)))
    xflat = xpad.reshape(n, mp, c)    # free (dim-collapsing) reshape

    kernel = functools.partial(_conv3x3_kernel, wp=wp, ho=ho, wo=wo)
    return pl.pallas_call(
        kernel,
        out_shape=jax.ShapeDtypeStruct((n, ho, wo, co), out_dtype),
        grid=(n,),
        in_specs=[
            pl.BlockSpec((1, mp, c), lambda i: (i, 0, 0)),
            pl.BlockSpec((9, c, co), lambda i: (0, 0, 0)),   # weights resident
            pl.BlockSpec((1, co), lambda i: (0, 0)),
        ],
        out_specs=pl.BlockSpec((1, ho, wo, co), lambda i: (i, 0, 0, 0)),
        scratch_shapes=[pltpu.VMEM((m_wide, co), jnp.float32)],
        compiler_params=_mosaic_params(),
    )(xflat, w_taps, bias)


# ----------------------------------------------------------------------------
# Glue: BN folding, strided-3x3 fallback
# ----------------------------------------------------------------------------
def _fold_bn(gamma, beta, mean, var):
    scale = gamma / jnp.sqrt(var + BN_EPS)
    bias = beta - mean * scale
    return scale, bias


def _prepare_params(p):
    """Fold the BN scale into the conv weights (f32) and cast to bf16."""
    fp = {}
    s1, b1 = _fold_bn(p["g1"], p["be1"], p["m1"], p["v1"])
    fp["w1"] = (p["w1"] * s1[None, :]).astype(COMPUTE_DTYPE)
    fp["b1"] = b1.reshape(1, -1).astype(jnp.float32)

    s2, b2 = _fold_bn(p["g2"], p["be2"], p["m2"], p["v2"])
    cmid = p["w2_hwio"].shape[2]
    w2 = (p["w2_hwio"] * s2[None, None, None, :]).astype(COMPUTE_DTYPE)
    fp["w2"] = w2.reshape(9, cmid, -1)            # tap-major (dy, dx, cin)
    fp["b2"] = b2.reshape(1, -1).astype(jnp.float32)

    s3, b3 = _fold_bn(p["g3"], p["be3"], p["m3"], p["v3"])
    fp["w3"] = (p["w3"] * s3[None, :]).astype(COMPUTE_DTYPE)
    fp["b3"] = b3.reshape(1, -1).astype(jnp.float32)

    if p.get("wd") is not None:
        sd, bd = _fold_bn(p["gd"], p["bed"], p["md"], p["vd"])
        fp["wd"] = (p["wd"] * sd[None, :]).astype(COMPUTE_DTYPE)
        fp["bd"] = bd.reshape(1, -1).astype(jnp.float32)
    else:
        fp["wd"] = None
    return fp


def _extract_taps_catC(x_nhwc, stride):
    """Strided-3x3 fallback: gather taps on host, concatenated along C."""
    n, h, w, c = x_nhwc.shape
    ho = (h - 1) // stride + 1
    wo = (w - 1) // stride + 1
    xp = jnp.pad(x_nhwc, ((0, 0), (1, 1), (1, 1), (0, 0)))
    taps = []
    for dy in range(3):
        for dx in range(3):
            sl = xp[:, dy: dy + stride * (ho - 1) + 1: stride,
                       dx: dx + stride * (wo - 1) + 1: stride, :]
            taps.append(sl.reshape(n * ho * wo, c))
    return jnp.concatenate(taps, axis=-1), ho, wo


# ----------------------------------------------------------------------------
# Public forward
# ----------------------------------------------------------------------------
def bottleneck_forward(x_nchw, p, stride=1, stride_at_1x1=False):
    """Pallas implementation of Bottleneck.forward (NCHW in / NCHW out)."""
    out_dtype = x_nchw.dtype
    x = jnp.transpose(x_nchw, (0, 2, 3, 1)).astype(COMPUTE_DTYPE)   # NHWC bf16
    n, h, w, cin = x.shape
    s1, s3 = (stride, 1) if stride_at_1x1 else (1, stride)
    fp = _prepare_params(p)
    cmid = fp["w1"].shape[1]
    cout = fp["w3"].shape[1]

    # conv1 (1x1, stride s1) + bn1 + LeakyReLU
    x1 = x if s1 == 1 else x[:, ::s1, ::s1, :]
    h1, w1 = x1.shape[1], x1.shape[2]
    out1 = conv1x1_bn(x1.reshape(-1, cin), fp["w1"], fp["b1"],
                      apply_act=True, out_dtype=COMPUTE_DTYPE)
    out1 = out1.reshape(n, h1, w1, cmid)

    # conv2 (3x3, stride s3, pad 1) + bn2 + LeakyReLU
    if s3 == 1:
        ho, wo = h1, w1
        out2 = conv3x3_bn_act(out1, fp["w2"], fp["b2"], out_dtype=COMPUTE_DTYPE)
        out2_flat = out2.reshape(-1, cmid)
    else:
        # TODO(synk): strided 3x3 uses host-side tap gathering (one big-K
        #             matmul); not halo-tiled like the stride-1 path.
        taps, ho, wo = _extract_taps_catC(out1, s3)
        out2_flat = conv1x1_bn(taps, fp["w2"].reshape(9 * cmid, cmid),
                               fp["b2"], apply_act=True,
                               out_dtype=COMPUTE_DTYPE)

    # conv3 (1x1) + bn3 + residual + LeakyReLU (fused epilogue)
    if fp["wd"] is not None:
        xd = x if stride == 1 else x[:, ::stride, ::stride, :]
        out3 = conv1x1_bn_fused_downsample_act(
            out2_flat, fp["w3"], fp["b3"],
            xd.reshape(-1, cin), fp["wd"], fp["bd"], out_dtype=out_dtype)
    else:
        assert cin == cout and stride == 1, "identity residual shape mismatch"
        out3 = conv1x1_bn_add_act(out2_flat, fp["w3"], fp["b3"],
                                  x.reshape(-1, cout), out_dtype=out_dtype)

    out3 = out3.reshape(n, ho, wo, cout)
    return jnp.transpose(out3, (0, 3, 1, 2))      # back to NCHW


# ----------------------------------------------------------------------------
# Pure-JAX reference (mirrors the kernel's bf16 quantization points)
# ----------------------------------------------------------------------------
def reference_forward(x_nchw, p, stride=1, stride_at_1x1=False):
    out_dtype = x_nchw.dtype
    fp = _prepare_params(p)
    x = jnp.transpose(x_nchw, (0, 2, 3, 1)).astype(COMPUTE_DTYPE)
    s1, s3 = (stride, 1) if stride_at_1x1 else (1, stride)
    cmid = fp["w1"].shape[1]

    x1 = x if s1 == 1 else x[:, ::s1, ::s1, :]
    out = jnp.dot(x1.reshape(-1, x1.shape[-1]), fp["w1"],
                  preferred_element_type=jnp.float32) + fp["b1"]
    out = _leaky(out).astype(COMPUTE_DTYPE)
    out = out.reshape(x1.shape[0], x1.shape[1], x1.shape[2], cmid)

    w2 = fp["w2"].reshape(3, 3, cmid, cmid)
    out = jax.lax.conv_general_dilated(
        out, w2, window_strides=(s3, s3), padding=((1, 1), (1, 1)),
        dimension_numbers=("NHWC", "HWIO", "NHWC"),
        preferred_element_type=jnp.float32)
    out = _leaky(out + fp["b2"].reshape(1, 1, 1, -1)).astype(COMPUTE_DTYPE)
    n, ho, wo, _ = out.shape

    y = jnp.dot(out.reshape(-1, cmid), fp["w3"],
                preferred_element_type=jnp.float32) + fp["b3"]
    if fp["wd"] is not None:
        xd = x if stride == 1 else x[:, ::stride, ::stride, :]
        r = jnp.dot(xd.reshape(-1, xd.shape[-1]), fp["wd"],
                    preferred_element_type=jnp.float32) + fp["bd"]
    else:
        r = x.reshape(-1, y.shape[-1]).astype(jnp.float32)
    out = _leaky(y + r).astype(out_dtype)
    out = out.reshape(n, ho, wo, -1)
    return jnp.transpose(out, (0, 3, 1, 2))


# ----------------------------------------------------------------------------
# Deterministic synthetic parameters (shapes implied by Bottleneck.__init__)
# ----------------------------------------------------------------------------
def init_params(key, cin, cmid, cout, stride):
    ks = jax.random.split(key, 24)

    def bn(k0, k1, k2, k3, c):
        return dict(
            g=1.0 + 0.1 * jax.random.normal(k0, (c,), jnp.float32),
            be=0.1 * jax.random.normal(k1, (c,), jnp.float32),
            m=0.1 * jax.random.normal(k2, (c,), jnp.float32),
            v=1.0 + 0.2 * jax.random.uniform(k3, (c,), jnp.float32),
        )

    p = {
        "w1": 0.2 * jax.random.normal(ks[0], (cin, cmid), jnp.float32),
        "w2_hwio": 0.2 * jax.random.normal(ks[1], (3, 3, cmid, cmid), jnp.float32),
        "w3": 0.2 * jax.random.normal(ks[2], (cmid, cout), jnp.float32),
    }
    for name, k4, c in (("1", 4, cmid), ("2", 8, cmid), ("3", 12, cout)):
        b = bn(ks[k4], ks[k4 + 1], ks[k4 + 2], ks[k4 + 3], c)
        p["g" + name], p["be" + name], p["m" + name], p["v" + name] = (
            b["g"], b["be"], b["m"], b["v"])
    if cin != cout or stride != 1:
        p["wd"] = 0.2 * jax.random.normal(ks[3], (cin, cout), jnp.float32)
        b = bn(ks[16], ks[17], ks[18], ks[19], cout)
        p["gd"], p["bed"], p["md"], p["vd"] = b["g"], b["be"], b["m"], b["v"]
    else:
        p["wd"] = None
    return p


if __name__ == "__main__":
    fwd = jax.jit(bottleneck_forward, static_argnames=("stride", "stride_at_1x1"))
    ref_fn = jax.jit(reference_forward, static_argnames=("stride", "stride_at_1x1"))

    N, H, W = 2, 16, 16
    configs = [
        # (cin, cmid, cout, stride, stride_at_1x1)
        (4, 4, 8, 1, False),   # projection (downsample) residual, stride-1 3x3
        (8, 4, 8, 1, False),   # identity residual
        (4, 4, 8, 2, False),   # strided block (downsample + fallback 3x3 path)
    ]

    key = jax.random.PRNGKey(0)
    for cin, cmid, cout, stride, s11 in configs:
        kp, kx, key = jax.random.split(key, 3)
        params = init_params(kp, cin, cmid, cout, stride)
        x = jax.random.normal(kx, (N, cin, H, W), jnp.float32)

        out = jax.block_until_ready(fwd(x, params, stride=stride, stride_at_1x1=s11))
        ref = jax.block_until_ready(ref_fn(x, params, stride=stride, stride_at_1x1=s11))

        assert out.shape == ref.shape, (out.shape, ref.shape)
        max_err = float(jnp.max(jnp.abs(out.astype(jnp.float32) -
                                        ref.astype(jnp.float32))))
        assert max_err < 2e-2, (
            f"mismatch vs reference (cin={cin}, cout={cout}, stride={stride}): "
            f"{max_err}")

    print("KERNEL_OK")
</pallas_src>

<mosaic_0001>
module attributes {stable_mosaic.version = 11 : i64} {
  func.func @_matmul_bias_kernel(%arg0: i32, %arg1: memref<256x4xbf16, #tpu.memory_space<vmem>>, %arg2: memref<4x4xbf16, #tpu.memory_space<vmem>>, %arg3: memref<1x4xf32, #tpu.memory_space<vmem>>, %arg4: memref<256x4xbf16, #tpu.memory_space<vmem>>) attributes {dimension_semantics = [#tpu.dimension_semantics<parallel>], iteration_bounds = array<i64: 2>, scalar_prefetch = 0 : i64, scratch_operands = 0 : i64, tpu.core_type = #tpu.core_type<tc>, window_params = [{transform_indices = @transform_0, window_bounds = array<i64: 256, 4>}, {pipeline_mode = #tpu.pipeline_mode<synchronous>, transform_indices = @transform_1, window_bounds = array<i64: 4, 4>}, {pipeline_mode = #tpu.pipeline_mode<synchronous>, transform_indices = @transform_2, window_bounds = array<i64: 1, 4>}, {transform_indices = @transform_3, window_bounds = array<i64: 256, 4>}]} {
    %c0 = arith.constant 0 : index
    %c0_0 = arith.constant 0 : index
    %0 = vector.load %arg1[%c0, %c0_0] : memref<256x4xbf16, #tpu.memory_space<vmem>>, vector<256x4xbf16>
    %c0_1 = arith.constant 0 : index
    %c0_2 = arith.constant 0 : index
    %1 = vector.load %arg2[%c0_1, %c0_2] : memref<4x4xbf16, #tpu.memory_space<vmem>>, vector<4x4xbf16>
    %cst = arith.constant dense<0.000000e+00> : vector<256x4xf32>
    %2 = tpu.matmul %0, %1, %cst {dimension_numbers = #tpu.dot_dimension_numbers<[1], [0], [0], [1], [0, 0, 1, 1], [], []>} : vector<256x4xbf16>, vector<4x4xbf16>, vector<256x4xf32> -> vector<256x4xf32>
    %c0_3 = arith.constant 0 : index
    %c0_4 = arith.constant 0 : index
    %3 = vector.load %arg3[%c0_3, %c0_4] : memref<1x4xf32, #tpu.memory_space<vmem>>, vector<1x4xf32>
    %4 = vector.broadcast %3 : vector<1x4xf32> to vector<256x4xf32>
    %5 = arith.addf %2, %4 : vector<256x4xf32>
    %cst_5 = arith.constant 0.000000e+00 : f32
    %6 = vector.broadcast %cst_5 : f32 to vector<256x4xf32>
    %7 = arith.cmpf ogt, %5, %6 : vector<256x4xf32>
    %cst_6 = arith.constant 3.000000e-01 : f32
    %8 = vector.broadcast %cst_6 : f32 to vector<256x4xf32>
    %9 = arith.mulf %8, %5 : vector<256x4xf32>
    %10 = arith.select %7, %5, %9 : vector<256x4xi1>, vector<256x4xf32>
    %11 = arith.truncf %10 : vector<256x4xf32> to vector<256x4xbf16>
    %c0_7 = arith.constant 0 : index
    %c0_8 = arith.constant 0 : index
    %12 = vector.load %arg4[%c0_7, %c0_8] : memref<256x4xbf16, #tpu.memory_space<vmem>>, vector<256x4xbf16>
    tpu.vector_store %arg4[%c0_7, %c0_8], %11 {strides = array<i32>} : memref<256x4xbf16, #tpu.memory_space<vmem>>, vector<256x4xbf16>,
    return
  }
  func.func @transform_0(%arg0: i32) -> (i32, i32) {
    %c0_i32 = arith.constant 0 : i32
    %c0_i32_0 = arith.constant 0 : i32
    return %arg0, %c0_i32 : i32, i32
  }
  func.func @transform_1(%arg0: i32) -> (i32, i32) {
    %c0_i32 = arith.constant 0 : i32
    %c0_i32_0 = arith.constant 0 : i32
    %c0_i32_1 = arith.constant 0 : i32
    return %c0_i32, %c0_i32_0 : i32, i32
  }
  func.func @transform_2(%arg0: i32) -> (i32, i32) {
    %c0_i32 = arith.constant 0 : i32
    %c0_i32_0 = arith.constant 0 : i32
    %c0_i32_1 = arith.constant 0 : i32
    return %c0_i32, %c0_i32_0 : i32, i32
  }
  func.func @transform_3(%arg0: i32) -> (i32, i32) {
    %c0_i32 = arith.constant 0 : i32
    %c0_i32_0 = arith.constant 0 : i32
    return %arg0, %c0_i32 : i32, i32
  }
}

module attributes {stable_mosaic.version = 11 : i64} {
  func.func @_conv3x3_kernel(%arg0: i32, %arg1: memref<1x456x4xbf16, #tpu.memory_space<vmem>>, %arg2: memref<9x4x4xbf16, #tpu.memory_space<vmem>>, %arg3: memref<1x4xf32, #tpu.memory_space<vmem>>, %arg4: memref<1x16x16x4xbf16, #tpu.memory_space<vmem>>, %arg5: memref<384x4xf32, #tpu.memory_space<vmem>>) attributes {dimension_semantics = [#tpu.dimension_semantics<parallel>], iteration_bounds = array<i64: 2>, scalar_prefetch = 0 : i64, scratch_operands = 1 : i64, tpu.core_type = #tpu.core_type<tc>, window_params = [{transform_indices = @transform_0, window_bounds = array<i64: 1, 456, 4>}, {pipeline_mode = #tpu.pipeline_mode<synchronous>, transform_indices = @transform_1, window_bounds = array<i64: 9, 4, 4>}, {pipeline_mode = #tpu.pipeline_mode<synchronous>, transform_indices = @transform_2, window_bounds = array<i64: 1, 4>}, {transform_indices = @transform_3, window_bounds = array<i64: 1, 16, 16, 4>}]} {
    %cst = arith.constant 0.000000e+00 : f32
    %0 = vector.broadcast %cst : f32 to vector<384x4xf32>
    %c0 = arith.constant 0 : index
    %c0_0 = arith.constant 0 : index
    %1 = vector.load %arg5[%c0, %c0_0] : memref<384x4xf32, #tpu.memory_space<vmem>>, vector<384x4xf32>
    tpu.vector_store %arg5[%c0, %c0_0], %0 {strides = array<i32>} : memref<384x4xf32, #tpu.memory_space<vmem>>, vector<384x4xf32>,
    %c0_1 = arith.constant 0 : index
    %c0_2 = arith.constant 0 : index
    %c0_3 = arith.constant 0 : index
    %2 = vector.load %arg1[%c0_1, %c0_2, %c0_3] : memref<1x456x4xbf16, #tpu.memory_space<vmem>>, vector<1x384x4xbf16>
    %3 = vector.shape_cast %2 : vector<1x384x4xbf16> to vector<384x4xbf16>
    %c0_4 = arith.constant 0 : index
    %c0_5 = arith.constant 0 : index
    %4 = vector.load %arg5[%c0_4, %c0_5] : memref<384x4xf32, #tpu.memory_space<vmem>>, vector<384x4xf32>
    %c0_6 = arith.constant 0 : index
    %c0_7 = arith.constant 0 : index
    %c0_8 = arith.constant 0 : index
    %5 = vector.load %arg2[%c0_6, %c0_7, %c0_8] : memref<9x4x4xbf16, #tpu.memory_space<vmem>>, vector<1x4x4xbf16>
    %6 = vector.shape_cast %5 : vector<1x4x4xbf16> to vector<4x4xbf16>
    %cst_9 = arith.constant dense<0.000000e+00> : vector<384x4xf32>
    %7 = tpu.matmul %3, %6, %cst_9 {dimension_numbers = #tpu.dot_dimension_numbers<[1], [0], [0], [1], [0, 0, 1, 1], [], []>} : vector<384x4xbf16>, vector<4x4xbf16>, vector<384x4xf32> -> vector<384x4xf32>
    %8 = arith.addf %4, %7 : vector<384x4xf32>
    %c0_10 = arith.constant 0 : index
    %c0_11 = arith.constant 0 : index
    %9 = vector.load %arg5[%c0_10, %c0_11] : memref<384x4xf32, #tpu.memory_space<vmem>>, vector<384x4xf32>
    tpu.vector_store %arg5[%c0_10, %c0_11], %8 {strides = array<i32>} : memref<384x4xf32, #tpu.memory_space<vmem>>, vector<384x4xf32>,
    %c0_12 = arith.constant 0 : index
    %c1 = arith.constant 1 : index
    %c0_13 = arith.constant 0 : index
    %10 = vector.load %arg1[%c0_12, %c1, %c0_13] : memref<1x456x4xbf16, #tpu.memory_space<vmem>>, vector<1x384x4xbf16>
    %11 = vector.shape_cast %10 : vector<1x384x4xbf16> to vector<384x4xbf16>
    %c0_14 = arith.constant 0 : index
    %c0_15 = arith.constant 0 : index
    %12 = vector.load %arg5[%c0_14, %c0_15] : memref<384x4xf32, #tpu.memory_space<vmem>>, vector<384x4xf32>
    %c1_16 = arith.constant 1 : index
    %c0_17 = arith.constant 0 : index
    %c0_18 = arith.constant 0 : index
    %13 = vector.load %arg2[%c1_16, %c0_17, %c0_18] : memref<9x4x4xbf16, #tpu.memory_space<vmem>>, vector<1x4x4xbf16>
    %14 = vector.shape_cast %13 : vector<1x4x4xbf16> to vector<4x4xbf16>
    %cst_19 = arith.constant dense<0.000000e+00> : vector<384x4xf32>
    %15 = tpu.matmul %11, %14, %cst_19 {dimension_numbers = #tpu.dot_dimension_numbers<[1], [0], [0], [1], [0, 0, 1, 1], [], []>} : vector<384x4xbf16>, vector<4x4xbf16>, vector<384x4xf32> -> vector<384x4xf32>
    %16 = arith.addf %12, %15 : vector<384x4xf32>
    %c0_20 = arith.constant 0 : index
    %c0_21 = arith.constant 0 : index
    %17 = vector.load %arg5[%c0_20, %c0_21] : memref<384x4xf32, #tpu.memory_space<vmem>>, vector<384x4xf32>
    tpu.vector_store %arg5[%c0_20, %c0_21], %16 {strides = array<i32>} : memref<384x4xf32, #tpu.memory_space<vmem>>, vector<384x4xf32>,
    %c0_22 = arith.constant 0 : index
    %c2 = arith.constant 2 : index
    %c0_23 = arith.constant 0 : index
    %18 = vector.load %arg1[%c0_22, %c2, %c0_23] : memref<1x456x4xbf16, #tpu.memory_space<vmem>>, vector<1x384x4xbf16>
    %19 = vector.shape_cast %18 : vector<1x384x4xbf16> to vector<384x4xbf16>
    %c0_24 = arith.constant 0 : index
    %c0_25 = arith.constant 0 : index
    %20 = vector.load %arg5[%c0_24, %c0_25] : memref<384x4xf32, #tpu.memory_space<vmem>>, vector<384x4xf32>
    %c2_26 = arith.constant 2 : index
    %c0_27 = arith.constant 0 : index
    %c0_28 = arith.constant 0 : index
    %21 = vector.load %arg2[%c2_26, %c0_27, %c0_28] : memref<9x4x4xbf16, #tpu.memory_space<vmem>>, vector<1x4x4xbf16>
    %22 = vector.shape_cast %21 : vector<1x4x4xbf16> to vector<4x4xbf16>
    %cst_29 = arith.constant dense<0.000000e+00> : vector<384x4xf32>
    %23 = tpu.matmul %19, %22, %cst_29 {dimension_numbers = #tpu.dot_dimension_numbers<[1], [0], [0], [1], [0, 0, 1, 1], [], []>} : vector<384x4xbf16>, vector<4x4xbf16>, vector<384x4xf32> -> vector<384x4xf32>
    %24 = arith.addf %20, %23 : vector<384x4xf32>
    %c0_30 = arith.constant 0 : index
    %c0_31 = arith.constant 0 : index
    %25 = vector.load %arg5[%c0_30, %c0_31] : memref<384x4xf32, #tpu.memory_space<vmem>>, vector<384x4xf32>
    tpu.vector_store %arg5[%c0_30, %c0_31], %24 {strides = array<i32>} : memref<384x4xf32, #tpu.memory_space<vmem>>, vector<384x4xf32>,
    %c0_32 = arith.constant 0 : index
    %c24 = arith.constant 24 : index
    %c0_33 = arith.constant 0 : index
    %26 = vector.load %arg1[%c0_32, %c24, %c0_33] : memref<1x456x4xbf16, #tpu.memory_space<vmem>>, vector<1x384x4xbf16>
    %27 = vector.shape_cast %26 : vector<1x384x4xbf16> to vector<384x4xbf16>
    %c0_34 = arith.constant 0 : index
    %c0_35 = arith.constant 0 : index
    %28 = vector.load %arg5[%c0_34, %c0_35] : memref<384x4xf32, #tpu.memory_space<vmem>>, vector<384x4xf32>
    %c3 = arith.constant 3 : index
    %c0_36 = arith.constant 0 : index
    %c0_37 = arith.constant 0 : index
    %29 = vector.load %arg2[%c3, %c0_36, %c0_37] : memref<9x4x4xbf16, #tpu.memory_space<vmem>>, vector<1x4x4xbf16>
    %30 = vector.shape_cast %29 : vector<1x4x4xbf16> to vector<4x4xbf16>
    %cst_38 = arith.constant dense<0.000000e+00> : vector<384x4xf32>
    %31 = tpu.matmul %27, %30, %cst_38 {dimension_numbers = #tpu.dot_dimension_numbers<[1], [0], [0], [1], [0, 0, 1, 1], [], []>} : vector<384x4xbf16>, vector<4x4xbf16>, vector<384x4xf32> -> vector<384x4xf32>
    %32 = arith.addf %28, %31 : vector<384x4xf32>
    %c0_39 = arith.constant 0 : index
    %c0_40 = arith.constant 0 : index
    %33 = vector.load %arg5[%c0_39, %c0_40] : memref<384x4xf32, #tpu.memory_space<vmem>>, vector<384x4xf32>
    tpu.vector_store %arg5[%c0_39, %c0_40], %32 {strides = array<i32>} : memref<384x4xf32, #tpu.memory_space<vmem>>, vector<384x4xf32>,
    %c0_41 = arith.constant 0 : index
    %c25 = arith.constant 25 : index
    %c0_42 = arith.constant 0 : index
    %34 = vector.load %arg1[%c0_41, %c25, %c0_42] : memref<1x456x4xbf16, #tpu.memory_space<vmem>>, vector<1x384x4xbf16>
    %35 = vector.shape_cast %34 : vector<1x384x4xbf16> to vector<384x4xbf16>
    %c0_43 = arith.constant 0 : index
    %c0_44 = arith.constant 0 : index
    %36 = vector.load %arg5[%c0_43, %c0_44] : memref<384x4xf32, #tpu.memory_space<vmem>>, vector<384x4xf32>
    %c4 = arith.constant 4 : index
    %c0_45 = arith.constant 0 : index
    %c0_46 = arith.constant 0 : index
    %37 = vector.load %arg2[%c4, %c0_45, %c0_46] : memref<9x4x4xbf16, #tpu.memory_space<vmem>>, vector<1x4x4xbf16>
    %38 = vector.shape_cast %37 : vector<1x4x4xbf16> to vector<4x4xbf16>
    %cst_47 = arith.constant dense<0.000000e+00> : vector<384x4xf32>
    %39 = tpu.matmul %35, %38, %cst_47 {dimension_numbers = #tpu.dot_dimension_numbers<[1], [0], [0], [1], [0, 0, 1, 1], [], []>} : vector<384x4xbf16>, vector<4x4xbf16>, vector<384x4xf32> -> vector<384x4xf32>
    %40 = arith.addf %36, %39 : vector<384x4xf32>
    %c0_48 = arith.constant 0 : index
    %c0_49 = arith.constant 0 : index
    %41 = vector.load %arg5[%c0_48, %c0_49] : memref<384x4xf32, #tpu.memory_space<vmem>>, vector<384x4xf32>
    tpu.vector_store %arg5[%c0_48, %c0_49], %40 {strides = array<i32>} : memref<384x4xf32, #tpu.memory_space<vmem>>, vector<384x4xf32>,
    %c0_50 = arith.constant 0 : index
    %c26 = arith.constant 26 : index
    %c0_51 = arith.constant 0 : index
    %42 = vector.load %arg1[%c0_50, %c26, %c0_51] : memref<1x456x4xbf16, #tpu.memory_space<vmem>>, vector<1x384x4xbf16>
    %43 = vector.shape_cast %42 : vector<1x384x4xbf16> to vector<384x4xbf16>
    %c0_52 = arith.constant 0 : index
    %c0_53 = arith.constant 0 : index
    %44 = vector.load %arg5[%c0_52, %c0_53] : memref<384x4xf32, #tpu.memory_space<vmem>>, vector<384x4xf32>
    %c5 = arith.constant 5 : index
    %c0_54 = arith.constant 0 : index
    %c0_55 = arith.constant 0 : index
    %45 = vector.load %arg2[%c5, %c0_54, %c0_55] : memref<9x4x4xbf16, #tpu.memory_space<vmem>>, vector<1x4x4xbf16>
    %46 = vector.shape_cast %45 : vector<1x4x4xbf16> to vector<4x4xbf16>
    %cst_56 = arith.constant dense<0.000000e+00> : vector<384x4xf32>
    %47 = tpu.matmul %43, %46, %cst_56 {dimension_numbers = #tpu.dot_dimension_numbers<[1], [0], [0], [1], [0, 0, 1, 1], [], []>} : vector<384x4xbf16>, vector<4x4xbf16>, vector<384x4xf32> -> vector<384x4xf32>
    %48 = arith.addf %44, %47 : vector<384x4xf32>
    %c0_57 = arith.constant 0 : index
    %c0_58 = arith.constant 0 : index
    %49 = vector.load %arg5[%c0_57, %c0_58] : memref<384x4xf32, #tpu.memory_space<vmem>>, vector<384x4xf32>
    tpu.vector_store %arg5[%c0_57, %c0_58], %48 {strides = array<i32>} : memref<384x4xf32, #tpu.memory_space<vmem>>, vector<384x4xf32>,
    %c0_59 = arith.constant 0 : index
    %c48 = arith.constant 48 : index
    %c0_60 = arith.constant 0 : index
    %50 = vector.load %arg1[%c0_59, %c48, %c0_60] : memref<1x456x4xbf16, #tpu.memory_space<vmem>>, vector<1x384x4xbf16>
    %51 = vector.shape_cast %50 : vector<1x384x4xbf16> to vector<384x4xbf16>
    %c0_61 = arith.constant 0 : index
    %c0_62 = arith.constant 0 : index
    %52 = vector.load %arg5[%c0_61, %c0_62] : memref<384x4xf32, #tpu.memory_space<vmem>>, vector<384x4xf32>
    %c6 = arith.constant 6 : index
    %c0_63 = arith.constant 0 : index
    %c0_64 = arith.constant 0 : index
    %53 = vector.load %arg2[%c6, %c0_63, %c0_64] : memref<9x4x4xbf16, #tpu.memory_space<vmem>>, vector<1x4x4xbf16>
    %54 = vector.shape_cast %53 : vector<1x4x4xbf16> to vector<4x4xbf16>
    %cst_65 = arith.constant dense<0.000000e+00> : vector<384x4xf32>
    %55 = tpu.matmul %51, %54, %cst_65 {dimension_numbers = #tpu.dot_dimension_numbers<[1], [0], [0], [1], [0, 0, 1, 1], [], []>} : vector<384x4xbf16>, vector<4x4xbf16>, vector<384x4xf32> -> vector<384x4xf32>
    %56 = arith.addf %52, %55 : vector<384x4xf32>
    %c0_66 = arith.constant 0 : index
    %c0_67 = arith.constant 0 : index
    %57 = vector.load %arg5[%c0_66, %c0_67] : memref<384x4xf32, #tpu.memory_space<vmem>>, vector<384x4xf32>
    tpu.vector_store %arg5[%c0_66, %c0_67], %56 {strides = array<i32>} : memref<384x4xf32, #tpu.memory_space<vmem>>, vector<384x4xf32>,
    %c0_68 = arith.constant 0 : index
    %c49 = arith.constant 49 : index
    %c0_69 = arith.constant 0 : index
    %58 = vector.load %arg1[%c0_68, %c49, %c0_69] : memref<1x456x4xbf16, #tpu.memory_space<vmem>>, vector<1x384x4xbf16>
    %59 = vector.shape_cast %58 : vector<1x384x4xbf16> to vector<384x4xbf16>
    %c0_70 = arith.constant 0 : index
    %c0_71 = arith.constant 0 : index
    %60 = vector.load %arg5[%c0_70, %c0_71] : memref<384x4xf32, #tpu.memory_space<vmem>>, vector<384x4xf32>
    %c7 = arith.constant 7 : index
    %c0_72 = arith.constant 0 : index
    %c0_73 = arith.constant 0 : index
    %61 = vector.load %arg2[%c7, %c0_72, %c0_73] : memref<9x4x4xbf16, #tpu.memory_space<vmem>>, vector<1x4x4xbf16>
    %62 = vector.shape_cast %61 : vector<1x4x4xbf16> to vector<4x4xbf16>
    %cst_74 = arith.constant dense<0.000000e+00> : vector<384x4xf32>
    %63 = tpu.matmul %59, %62, %cst_74 {dimension_numbers = #tpu.dot_dimension_numbers<[1], [0], [0], [1], [0, 0, 1, 1], [], []>} : vector<384x4xbf16>, vector<4x4xbf16>, vector<384x4xf32> -> vector<384x4xf32>
    %64 = arith.addf %60, %63 : vector<384x4xf32>
    %c0_75 = arith.constant 0 : index
    %c0_76 = arith.constant 0 : index
    %65 = vector.load %arg5[%c0_75, %c0_76] : memref<384x4xf32, #tpu.memory_space<vmem>>, vector<384x4xf32>
    tpu.vector_store %arg5[%c0_75, %c0_76], %64 {strides = array<i32>} : memref<384x4xf32, #tpu.memory_space<vmem>>, vector<384x4xf32>,
    %c0_77 = arith.constant 0 : index
    %c50 = arith.constant 50 : index
    %c0_78 = arith.constant 0 : index
    %66 = vector.load %arg1[%c0_77, %c50, %c0_78] : memref<1x456x4xbf16, #tpu.memory_space<vmem>>, vector<1x384x4xbf16>
    %67 = vector.shape_cast %66 : vector<1x384x4xbf16> to vector<384x4xbf16>
    %c0_79 = arith.constant 0 : index
    %c0_80 = arith.constant 0 : index
    %68 = vector.load %arg5[%c0_79, %c0_80] : memref<384x4xf32, #tpu.memory_space<vmem>>, vector<384x4xf32>
    %c8 = arith.constant 8 : index
    %c0_81 = arith.constant 0 : index
    %c0_82 = arith.constant 0 : index
    %69 = vector.load %arg2[%c8, %c0_81, %c0_82] : memref<9x4x4xbf16, #tpu.memory_space<vmem>>, vector<1x4x4xbf16>
    %70 = vector.shape_cast %69 : vector<1x4x4xbf16> to vector<4x4xbf16>
    %cst_83 = arith.constant dense<0.000000e+00> : vector<384x4xf32>
    %71 = tpu.matmul %67, %70, %cst_83 {dimension_numbers = #tpu.dot_dimension_numbers<[1], [0], [0], [1], [0, 0, 1, 1], [], []>} : vector<384x4xbf16>, vector<4x4xbf16>, vector<384x4xf32> -> vector<384x4xf32>
    %72 = arith.addf %68, %71 : vector<384x4xf32>
    %c0_84 = arith.constant 0 : index
    %c0_85 = arith.constant 0 : index
    %73 = vector.load %arg5[%c0_84, %c0_85] : memref<384x4xf32, #tpu.memory_space<vmem>>, vector<384x4xf32>
    tpu.vector_store %arg5[%c0_84, %c0_85], %72 {strides = array<i32>} : memref<384x4xf32, #tpu.memory_space<vmem>>, vector<384x4xf32>,
    %c0_86 = arith.constant 0 : index
    %c0_87 = arith.constant 0 : index
    %74 = vector.load %arg5[%c0_86, %c0_87] : memref<384x4xf32, #tpu.memory_space<vmem>>, vector<384x4xf32>
    %c0_88 = arith.constant 0 : index
    %c0_89 = arith.constant 0 : index
    %75 = vector.load %arg3[%c0_88, %c0_89] : memref<1x4xf32, #tpu.memory_space<vmem>>, vector<1x4xf32>
    %76 = vector.broadcast %75 : vector<1x4xf32> to vector<384x4xf32>
    %77 = arith.addf %74, %76 : vector<384x4xf32>
    %cst_90 = arith.constant 0.000000e+00 : f32
    %78 = vector.broadcast %cst_90 : f32 to vector<384x4xf32>
    %79 = arith.cmpf ogt, %77, %78 : vector<384x4xf32>
    %cst_91 = arith.constant 3.000000e-01 : f32
    %80 = vector.broadcast %cst_91 : f32 to vector<384x4xf32>
    %81 = arith.mulf %80, %77 : vector<384x4xf32>
    %82 = arith.select %79, %77, %81 : vector<384x4xi1>, vector<384x4xf32>
    %83 = vector.shape_cast %82 : vector<384x4xf32> to vector<16x24x4xf32>
    %84 = vector.extract_strided_slice %83 {offsets = [0, 0, 0], sizes = [16, 16, 4], strides = [1, 1, 1]} : vector<16x24x4xf32> to vector<16x16x4xf32>
    %85 = arith.truncf %84 : vector<16x16x4xf32> to vector<16x16x4xbf16>
    %c0_92 = arith.constant 0 : index
    %c0_93 = arith.constant 0 : index
    %c0_94 = arith.constant 0 : index
    %c0_95 = arith.constant 0 : index
    %86 = vector.load %arg4[%c0_92, %c0_93, %c0_94, %c0_95] : memref<1x16x16x4xbf16, #tpu.memory_space<vmem>>, vector<1x16x16x4xbf16>
    %87 = vector.shape_cast %86 : vector<1x16x16x4xbf16> to vector<16x16x4xbf16>
    %88 = vector.shape_cast %85 : vector<16x16x4xbf16> to vector<1x16x16x4xbf16>
    tpu.vector_store %arg4[%c0_92, %c0_93, %c0_94, %c0_95], %88 {strides = array<i32>} : memref<1x16x16x4xbf16, #tpu.memory_space<vmem>>, vector<1x16x16x4xbf16>,
    return
  }
  func.func @transform_0(%arg0: i32) -> (i32, i32, i32) {
    %c0_i32 = arith.constant 0 : i32
    %c0_i32_0 = arith.constant 0 : i32
    %c0_i32_1 = arith.constant 0 : i32
    return %arg0, %c0_i32, %c0_i32_0 : i32, i32, i32
  }
  func.func @transform_1(%arg0: i32) -> (i32, i32, i32) {
    %c0_i32 = arith.constant 0 : i32
    %c0_i32_0 = arith.constant 0 : i32
    %c0_i32_1 = arith.constant 0 : i32
    %c0_i32_2 = arith.constant 0 : i32
    return %c0_i32, %c0_i32_0, %c0_i32_1 : i32, i32, i32
  }
  func.func @transform_2(%arg0: i32) -> (i32, i32) {
    %c0_i32 = arith.constant 0 : i32
    %c0_i32_0 = arith.constant 0 : i32
    %c0_i32_1 = arith.constant 0 : i32
    return %c0_i32, %c0_i32_0 : i32, i32
  }
  func.func @transform_3(%arg0: i32) -> (i32, i32, i32, i32) {
    %c0_i32 = arith.constant 0 : i32
    %c0_i32_0 = arith.constant 0 : i32
    %c0_i32_1 = arith.constant 0 : i32
    %c0_i32_2 = arith.constant 0 : i32
    return %arg0, %c0_i32, %c0_i32_0, %c0_i32_1 : i32, i32, i32, i32
  }
}

module attributes {stable_mosaic.version = 11 : i64} {
  func.func @_matmul_bias_ds_kernel(%arg0: i32, %arg1: memref<256x4xbf16, #tpu.memory_space<vmem>>, %arg2: memref<4x8xbf16, #tpu.memory_space<vmem>>, %arg3: memref<1x8xf32, #tpu.memory_space<vmem>>, %arg4: memref<256x4xbf16, #tpu.memory_space<vmem>>, %arg5: memref<4x8xbf16, #tpu.memory_space<vmem>>, %arg6: memref<1x8xf32, #tpu.memory_space<vmem>>, %arg7: memref<256x8xf32, #tpu.memory_space<vmem>>) attributes {dimension_semantics = [#tpu.dimension_semantics<parallel>], iteration_bounds = array<i64: 2>, scalar_prefetch = 0 : i64, scratch_operands = 0 : i64, tpu.core_type = #tpu.core_type<tc>, window_params = [{transform_indices = @transform_0, window_bounds = array<i64: 256, 4>}, {pipeline_mode = #tpu.pipeline_mode<synchronous>, transform_indices = @transform_1, window_bounds = array<i64: 4, 8>}, {pipeline_mode = #tpu.pipeline_mode<synchronous>, transform_indices = @transform_2, window_bounds = array<i64: 1, 8>}, {transform_indices = @transform_3, window_bounds = array<i64: 256, 4>}, {pipeline_mode = #tpu.pipeline_mode<synchronous>, transform_indices = @transform_4, window_bounds = array<i64: 4, 8>}, {pipeline_mode = #tpu.pipeline_mode<synchronous>, transform_indices = @transform_5, window_bounds = array<i64: 1, 8>}, {transform_indices = @transform_6, window_bounds = array<i64: 256, 8>}]} {
    %c0 = arith.constant 0 : index
    %c0_0 = arith.constant 0 : index
    %0 = vector.load %arg1[%c0, %c0_0] : memref<256x4xbf16, #tpu.memory_space<vmem>>, vector<256x4xbf16>
    %c0_1 = arith.constant 0 : index
    %c0_2 = arith.constant 0 : index
    %1 = vector.load %arg2[%c0_1, %c0_2] : memref<4x8xbf16, #tpu.memory_space<vmem>>, vector<4x8xbf16>
    %cst = arith.constant dense<0.000000e+00> : vector<256x8xf32>
    %2 = tpu.matmul %0, %1, %cst {dimension_numbers = #tpu.dot_dimension_numbers<[1], [0], [0], [1], [0, 0, 1, 1], [], []>} : vector<256x4xbf16>, vector<4x8xbf16>, vector<256x8xf32> -> vector<256x8xf32>
    %c0_3 = arith.constant 0 : index
    %c0_4 = arith.constant 0 : index
    %3 = vector.load %arg3[%c0_3, %c0_4] : memref<1x8xf32, #tpu.memory_space<vmem>>, vector<1x8xf32>
    %4 = vector.broadcast %3 : vector<1x8xf32> to vector<256x8xf32>
    %5 = arith.addf %2, %4 : vector<256x8xf32>
    %c0_5 = arith.constant 0 : index
    %c0_6 = arith.constant 0 : index
    %6 = vector.load %arg4[%c0_5, %c0_6] : memref<256x4xbf16, #tpu.memory_space<vmem>>, vector<256x4xbf16>
    %c0_7 = arith.constant 0 : index
    %c0_8 = arith.constant 0 : index
    %7 = vector.load %arg5[%c0_7, %c0_8] : memref<4x8xbf16, #tpu.memory_space<vmem>>, vector<4x8xbf16>
    %cst_9 = arith.constant dense<0.000000e+00> : vector<256x8xf32>
    %8 = tpu.matmul %6, %7, %cst_9 {dimension_numbers = #tpu.dot_dimension_numbers<[1], [0], [0], [1], [0, 0, 1, 1], [], []>} : vector<256x4xbf16>, vector<4x8xbf16>, vector<256x8xf32> -> vector<256x8xf32>
    %c0_10 = arith.constant 0 : index
    %c0_11 = arith.constant 0 : index
    %9 = vector.load %arg6[%c0_10, %c0_11] : memref<1x8xf32, #tpu.memory_space<vmem>>, vector<1x8xf32>
    %10 = vector.broadcast %9 : vector<1x8xf32> to vector<256x8xf32>
    %11 = arith.addf %8, %10 : vector<256x8xf32>
    %12 = arith.addf %5, %11 : vector<256x8xf32>
    %cst_12 = arith.constant 0.000000e+00 : f32
    %13 = vector.broadcast %cst_12 : f32 to vector<256x8xf32>
    %14 = arith.cmpf ogt, %12, %13 : vector<256x8xf32>
    %cst_13 = arith.constant 3.000000e-01 : f32
    %15 = vector.broadcast %cst_13 : f32 to vector<256x8xf32>
    %16 = arith.mulf %15, %12 : vector<256x8xf32>
    %17 = arith.select %14, %12, %16 : vector<256x8xi1>, vector<256x8xf32>
    %c0_14 = arith.constant 0 : index
    %c0_15 = arith.constant 0 : index
    %18 = vector.load %arg7[%c0_14, %c0_15] : memref<256x8xf32, #tpu.memory_space<vmem>>, vector<256x8xf32>
    tpu.vector_store %arg7[%c0_14, %c0_15], %17 {strides = array<i32>} : memref<256x8xf32, #tpu.memory_space<vmem>>, vector<256x8xf32>,
    return
  }
  func.func @transform_0(%arg0: i32) -> (i32, i32) {
    %c0_i32 = arith.constant 0 : i32
    %c0_i32_0 = arith.constant 0 : i32
    return %arg0, %c0_i32 : i32, i32
  }
  func.func @transform_1(%arg0: i32) -> (i32, i32) {
    %c0_i32 = arith.constant 0 : i32
    %c0_i32_0 = arith.constant 0 : i32
    %c0_i32_1 = arith.constant 0 : i32
    return %c0_i32, %c0_i32_0 : i32, i32
  }
  func.func @transform_2(%arg0: i32) -> (i32, i32) {
    %c0_i32 = arith.constant 0 : i32
    %c0_i32_0 = arith.constant 0 : i32
    %c0_i32_1 = arith.constant 0 : i32
    return %c0_i32, %c0_i32_0 : i32, i32
  }
  func.func @transform_3(%arg0: i32) -> (i32, i32) {
    %c0_i32 = arith.constant 0 : i32
    %c0_i32_0 = arith.constant 0 : i32
    return %arg0, %c0_i32 : i32, i32
  }
  func.func @transform_4(%arg0: i32) -> (i32, i32) {
    %c0_i32 = arith.constant 0 : i32
    %c0_i32_0 = arith.constant 0 : i32
    %c0_i32_1 = arith.constant 0 : i32
    return %c0_i32, %c0_i32_0 : i32, i32
  }
  func.func @transform_5(%arg0: i32) -> (i32, i32) {
    %c0_i32 = arith.constant 0 : i32
    %c0_i32_0 = arith.constant 0 : i32
    %c0_i32_1 = arith.constant 0 : i32
    return %c0_i32, %c0_i32_0 : i32, i32
  }
  func.func @transform_6(%arg0: i32) -> (i32, i32) {
    %c0_i32 = arith.constant 0 : i32
    %c0_i32_0 = arith.constant 0 : i32
    return %arg0, %c0_i32 : i32, i32
  }
}

</mosaic_0001>

<llo_original>
// kernel: bottleneck_forward.3
$region0: #{bottleneck_forward.3}
  #allocation0 [shape = 'u32[]', space=smem, size = 0x4, offset = 0x4, fixed_abs, tag = 'smem constant byte address 0x4 - core index']
  #allocation1 [shape = 'u32[72,128]{1,0:T(1,128)}', space=vmem, size = 0x9000, scoped, tag = 'internal scratch']
  %s0 = inlined_call_operand.vmem [shape: bf16[512,4], index: 0, kind: input, shape index: {}]
  %s1 = inlined_call_operand.vmem [shape: bf16[4,4], index: 1, kind: input, shape index: {}]
  %s2 = inlined_call_operand.vmem [shape: f32[1,4], index: 2, kind: input, shape index: {}]
  %s3 = inlined_call_operand.vmem [shape: bf16[512,4], index: 3, kind: output, shape index: {}]
  %s4 = sld [smem:[#allocation0]]
  $region45: #{bottleneck_forward.3} parent=0
    _
  %s6 = ssub.s32 1, %s4
  %s7 = scalar_select 0, %s6, %s4
  loop: start=0, step=1, limit=4
  $region2: #{bottleneck_forward.3} parent=0 // loop_pre_header
    _
  $region3: #{bottleneck_forward.3} parent=0 // loop_header
    %s9 = sphi 0, %s13
    %p10 = scmp.ge.s32.totalorder %s9, 4
    %s19 = sphi 0, %s21
    %s22 = sphi 0, %s19
    %s23 = sphi 0, %s22
    %s39 = sphi 0, %s23
    %s43 = sphi 0, %s43
    %s45 = sphi 0, %s43
    %s46 = sphi 0, %s45
    %s60 = sphi 0, %s46
    %s64 = sphi 0, %s64
    %s66 = sphi 0, %s64
    %s67 = sphi 0, %s66
    %s81 = sphi 0, %s67
    %s87 = sphi 0, %s89
    %s90 = sphi 0, %s87
    %s91 = sphi 0, %s90
    %s107 = sphi 0, %s91
  $region4: #{bottleneck_forward.3} parent=0 // loop_header_branch
    %12 = sbr.rel (%p10) target = $region8
  $region5: #{bottleneck_forward.3} parent=0 // loop_body
    %s14 = ssub.s32 %s9, 1
    %s15 = ssub.s32 %s9, 2
    %s16 = sadd.s32 %s9, 1
    %s17 = ssub.s32 %s9, %s16
    %p18 = scmp.eq.s32.totalorder %s17, 0
    %s20 = sadd.s32 %s19, 1
    %s21 = scalar_select %p18, %s19, %s20
    %p24 = pneg %p18
    %p25 = scmp.eq.s32.totalorder %s9, 1
    %p26 = por %p24, %p25
    %p27 = scmp.ne.s32.totalorder %s19, %s22
    %p28 = scmp.eq.s32.totalorder %s9, 0
    %p29 = por %p27, %p28
    %p30 = scmp.ne.s32.totalorder %s19, %s22
    %p31 = scmp.eq.s32.totalorder %s14, 1
    %p32 = por %p30, %p31
    %p33 = scmp.ne.s32.totalorder %s22, %s23
    %p34 = scmp.eq.s32.totalorder %s14, 0
    %p35 = por %p33, %p34
    %p36 = scmp.ne.s32.totalorder %s22, %s23
    %p37 = scmp.eq.s32.totalorder %s15, 1
    %p38 = por %p36, %p37
    %p40 = scmp.ne.s32.totalorder %s23, %s39
    %p41 = scmp.eq.s32.totalorder %s15, 0
    %p42 = por %p40, %p41
    %s44 = sadd.s32 %s43, 1
    %p47 = scmp.eq.s32.totalorder %s9, 1
    %p48 = scmp.ne.s32.totalorder %s43, %s45
    %p49 = scmp.eq.s32.totalorder %s9, 0
    %p50 = por %p48, %p49
    %p51 = scmp.ne.s32.totalorder %s43, %s45
    %p52 = scmp.eq.s32.totalorder %s14, 1
    %p53 = por %p51, %p52
    %p54 = scmp.ne.s32.totalorder %s45, %s46
    %p55 = scmp.eq.s32.totalorder %s14, 0
    %p56 = por %p54, %p55
    %p57 = scmp.ne.s32.totalorder %s45, %s46
    %p58 = scmp.eq.s32.totalorder %s15, 1
    %p59 = por %p57, %p58
    %p61 = scmp.ne.s32.totalorder %s46, %s60
    %p62 = scmp.eq.s32.totalorder %s15, 0
    %p63 = por %p61, %p62
    %s65 = sadd.s32 %s64, 1
    %p68 = scmp.eq.s32.totalorder %s9, 1
    %p69 = scmp.ne.s32.totalorder %s64, %s66
    %p70 = scmp.eq.s32.totalorder %s9, 0
    %p71 = por %p69, %p70
    %p72 = scmp.ne.s32.totalorder %s64, %s66
    %p73 = scmp.eq.s32.totalorder %s14, 1
    %p74 = por %p72, %p73
    %p75 = scmp.ne.s32.totalorder %s66, %s67
    %p76 = scmp.eq.s32.totalorder %s14, 0
    %p77 = por %p75, %p76
    %p78 = scmp.ne.s32.totalorder %s66, %s67
    %p79 = scmp.eq.s32.totalorder %s15, 1
    %p80 = por %p78, %p79
    %p82 = scmp.ne.s32.totalorder %s67, %s81
    %p83 = scmp.eq.s32.totalorder %s15, 0
    %p84 = por %p82, %p83
    %s85 = ssub.s32 %s9, %s16
    %p86 = scmp.eq.s32.totalorder %s85, 0
    %s88 = sadd.s32 %s87, 1
    %s89 = scalar_select %p86, %s87, %s88
    %p92 = pneg %p86
    %p93 = scmp.eq.s32.totalorder %s9, 1
    %p94 = por %p92, %p93
    %p95 = scmp.ne.s32.totalorder %s87, %s90
    %p96 = scmp.eq.s32.totalorder %s9, 0
    %p97 = por %p95, %p96
    %p98 = scmp.ne.s32.totalorder %s87, %s90
    %p99 = scmp.eq.s32.totalorder %s14, 1
    %p100 = por %p98, %p99
    %p101 = scmp.ne.s32.totalorder %s90, %s91
    %p102 = scmp.eq.s32.totalorder %s14, 0
    %p103 = por %p101, %p102
    %p104 = scmp.ne.s32.totalorder %s90, %s91
    %p105 = scmp.eq.s32.totalorder %s15, 1
    %p106 = por %p104, %p105
    %p108 = scmp.ne.s32.totalorder %s91, %s107
    %p109 = scmp.eq.s32.totalorder %s15, 0
    %p110 = por %p108, %p109
    %p111 = scmp.le.s32.totalorder 1, %s9
    %p112 = scmp.lt.s32.totalorder %s9, 3
    %p113 = pnand %p111, %p112
    %p114 = pneg %p113
    // Predicated region
    $region9: #{bottleneck_forward.3} parent=5 // pred_check
      _
    $region10: #{bottleneck_forward.3} parent=5 // pred_check_branch
      %116 = sbr.rel (%p113) target = $region12
    $region11: #{bottleneck_forward.3} parent=5 // pred_region
      %s117 = ssub.s32 %s9, 1
      // Predicated region
      $region13: #{bottleneck_forward.3} parent=11 // pred_check
        %p118 = pneg %p56
      $region14: #{bottleneck_forward.3} parent=11 // pred_check_branch
        %120 = sbr.rel (%p118) target = $region16
      $region15: #{bottleneck_forward.3} parent=11 // pred_region
        _
      $region16: #{bottleneck_forward.3} parent=11 // pred_fallthru
        _
      // Predicated region
      $region17: #{bottleneck_forward.3} parent=11 // pred_check
        %p121 = pneg %p77
      $region18: #{bottleneck_forward.3} parent=11 // pred_check_branch
        %123 = sbr.rel (%p121) target = $region20
      $region19: #{bottleneck_forward.3} parent=11 // pred_region
        _
      $region20: #{bottleneck_forward.3} parent=11 // pred_fallthru
        _
    $region12: #{bottleneck_forward.3} parent=5 // pred_fallthru
      _
    %p124 = scmp.lt.s32.totalorder %s9, 2
    // Predicated region
    $region21: #{bottleneck_forward.3} parent=5 // pred_check
      %p125 = pneg %p124
    $region22: #{bottleneck_forward.3} parent=5 // pred_check_branch
      %127 = sbr.rel (%p125) target = $region24
    $region23: #{bottleneck_forward.3} parent=5 // pred_region
      // Predicated region
      $region25: #{bottleneck_forward.3} parent=23 // pred_check
        %p128 = pneg %p29
      $region26: #{bottleneck_forward.3} parent=23 // pred_check_branch
        %130 = sbr.rel (%p128) target = $region28
      $region27: #{bottleneck_forward.3} parent=23 // pred_region
        %s131 = smul.u32 32, %s9
        %p132 = scmp.lt.s32.totalorder %s131, 63
        %s133 = scalar_select %p132, %s131, 63
        %s134 = smul.addr %s133, 4
        %s135 = scalar_lea.vmem %s0, %s134
        %s136 = smul.u32 32, %s9
      $region28: #{bottleneck_forward.3} parent=23 // pred_fallthru
        _
    $region24: #{bottleneck_forward.3} parent=5 // pred_fallthru
      _
    %p137 = scmp.le.s32.totalorder 1, %s9
    %p138 = scmp.lt.s32.totalorder %s9, 3
    %p139 = pnand %p137, %p138
    %p140 = pneg %p139
    // Predicated region
    $region29: #{bottleneck_forward.3} parent=5 // pred_check
      _
    $region30: #{bottleneck_forward.3} parent=5 // pred_check_branch
      %142 = sbr.rel (%p139) target = $region32
    $region31: #{bottleneck_forward.3} parent=5 // pred_region
      %s143 = ssub.s32 %s9, 1
      %s144 = smul.u32 32, %s14
      %p145 = scmp.lt.s32.totalorder %s144, 63
      %s146 = scalar_select %p145, %s144, 63
      %s147 = smul.addr %s146, 4
      %s148 = scalar_lea.vmem %s0, %s147
      %p149 = pneg %p35
      %p150 = pneg %p32
      %p151 = pneg %p56
      %p152 = pneg %p53
      %p153 = pneg %p77
      %p154 = pneg %p74
      %p155 = pneg %p103
      %p156 = pneg %p100
      %s157 = smul.u32 32, %s14
      %p158 = scmp.lt.s32.totalorder %s157, 63
      %s159 = scalar_select %p158, %s157, 63
      %s160 = smul.addr %s159, 4
      %s161 = scalar_lea.vmem %s3, %s160
      %s162 = smul.u32 32, %s14
      %p163 = scmp.lt.s32.totalorder %s162, 63
      %s164 = scalar_select %p163, %s162, 63
      %s165 = smul.addr %s164, 4
      %s166 = scalar_lea.vmem %s0, %s165
      %s167 = smul.u32 32, %s14
      %s168 = smul.u32 32, %s14
      %p169 = scmp.lt.s32.totalorder %s168, 63
      %s170 = scalar_select %p169, %s168, 63
      %s171 = smul.addr %s170, 4
      %s172 = scalar_lea.vmem %s3, %s171
      %s173 = smul.u32 32, %s14
      %v175 = vld [vmem:[%s166] sm:$0xf]
      %v176 = vld [vmem:[%s166 + $0x4] sm:$0xf]
      %v177 = vld [vmem:[%s166 + $0x8] sm:$0xf]
      %v178 = vld [vmem:[%s166 + $0xc] sm:$0xf]
      %v179 = vld [vmem:[%s166 + $0x10] sm:$0xf]
      %v180 = vld [vmem:[%s166 + $0x14] sm:$0xf]
      %v181 = vld [vmem:[%s166 + $0x18] sm:$0xf]
      %v182 = vld [vmem:[%s166 + $0x1c] sm:$0xf]
      %v183 = vld [vmem:[%s166 + $0x20] sm:$0xf]
      %v184 = vld [vmem:[%s166 + $0x24] sm:$0xf]
      %v185 = vld [vmem:[%s166 + $0x28] sm:$0xf]
      %v186 = vld [vmem:[%s166 + $0x2c] sm:$0xf]
      %v187 = vld [vmem:[%s166 + $0x30] sm:$0xf]
      %v188 = vld [vmem:[%s166 + $0x34] sm:$0xf]
      %v189 = vld [vmem:[%s166 + $0x38] sm:$0xf]
      %v190 = vld [vmem:[%s166 + $0x3c] sm:$0xf]
      %v191 = vld [vmem:[%s166 + $0x40] sm:$0xf]
      %v192 = vld [vmem:[%s166 + $0x44] sm:$0xf]
      %v193 = vld [vmem:[%s166 + $0x48] sm:$0xf]
      %v194 = vld [vmem:[%s166 + $0x4c] sm:$0xf]
      %v195 = vld [vmem:[%s166 + $0x50] sm:$0xf]
      %v196 = vld [vmem:[%s166 + $0x54] sm:$0xf]
      %v197 = vld [vmem:[%s166 + $0x58] sm:$0xf]
      %v198 = vld [vmem:[%s166 + $0x5c] sm:$0xf]
      %v199 = vld [vmem:[%s166 + $0x60] sm:$0xf]
      %v200 = vld [vmem:[%s166 + $0x64] sm:$0xf]
      %v201 = vld [vmem:[%s166 + $0x68] sm:$0xf]
      %v202 = vld [vmem:[%s166 + $0x6c] sm:$0xf]
      %v203 = vld [vmem:[%s166 + $0x70] sm:$0xf]
      %v204 = vld [vmem:[%s166 + $0x74] sm:$0xf]
      %v205 = vld [vmem:[%s166 + $0x78] sm:$0xf]
      %v206 = vld [vmem:[%s166 + $0x7c] sm:$0xf]
      %v207 = vld [vmem:[%s1] sm:$0x3]
      %v208 = vld [vmem:[%s2] sm:$0x1]
      %v210 = vperm.slane %v208, 0
      %v244 = vunpack.c.l.b16 %v175
      %v245 = vunpack.c.l.b16 %v176
      %v246 = vunpack.c.l.b16 %v177
      %v247 = vunpack.c.l.b16 %v178
      %v248 = vunpack.c.l.b16 %v179
      %v249 = vunpack.c.l.b16 %v180
      %v250 = vunpack.c.l.b16 %v181
      %v251 = vunpack.c.l.b16 %v182
      %v252 = vunpack.c.l.b16 %v183
      %v253 = vunpack.c.l.b16 %v184
      %v254 = vunpack.c.l.b16 %v185
      %v255 = vunpack.c.l.b16 %v186
      %v256 = vunpack.c.l.b16 %v187
      %v257 = vunpack.c.l.b16 %v188
      %v258 = vunpack.c.l.b16 %v189
      %v259 = vunpack.c.l.b16 %v190
      %v260 = vunpack.c.l.b16 %v191
      %v261 = vunpack.c.l.b16 %v192
      %v262 = vunpack.c.l.b16 %v193
      %v263 = vunpack.c.l.b16 %v194
      %v264 = vunpack.c.l.b16 %v195
      %v265 = vunpack.c.l.b16 %v196
      %v266 = vunpack.c.l.b16 %v197
      %v267 = vunpack.c.l.b16 %v198
      %v268 = vunpack.c.l.b16 %v199
      %v269 = vunpack.c.l.b16 %v200
      %v270 = vunpack.c.l.b16 %v201
      %v271 = vunpack.c.l.b16 %v202
      %v272 = vunpack.c.l.b16 %v203
      %v273 = vunpack.c.l.b16 %v204
      %v274 = vunpack.c.l.b16 %v205
      %v275 = vunpack.c.l.b16 %v206
      %v276 = vpack.c.b16 %v245, %v244
      %v277 = vpack.c.b16 %v247, %v246
      %v278 = vpack.c.b16 %v249, %v248
      %v279 = vpack.c.b16 %v251, %v250
      %v280 = vpack.c.b16 %v253, %v252
      %v281 = vpack.c.b16 %v255, %v254
      %v282 = vpack.c.b16 %v257, %v256
      %v283 = vpack.c.b16 %v259, %v258
      %v284 = vpack.c.b16 %v261, %v260
      %v285 = vpack.c.b16 %v263, %v262
      %v286 = vpack.c.b16 %v265, %v264
      %v287 = vpack.c.b16 %v267, %v266
      %v288 = vpack.c.b16 %v269, %v268
      %v289 = vpack.c.b16 %v271, %v270
      %v290 = vpack.c.b16 %v273, %v272
      %v291 = vpack.c.b16 %v275, %v274
      %vm292 = vcmask 31744
      %v294 = vsel %vm292, %v276, 0
      %v297 = vsel %vm292, %v277, 0
      %v300 = vsel %vm292, %v278, 0
      %v303 = vsel %vm292, %v279, 0
      %v306 = vsel %vm292, %v280, 0
      %v309 = vsel %vm292, %v281, 0
      %v312 = vsel %vm292, %v282, 0
      %v315 = vsel %vm292, %v283, 0
      %v318 = vsel %vm292, %v284, 0
      %v321 = vsel %vm292, %v285, 0
      %v324 = vsel %vm292, %v286, 0
      %v327 = vsel %vm292, %v287, 0
      %v330 = vsel %vm292, %v288, 0
      %v333 = vsel %vm292, %v289, 0
      %v336 = vsel %vm292, %v290, 0
      %v339 = vsel %vm292, %v291, 0
      %vm341 = vcmask 1041408
      %v343 = vsel %vm341, %v207, 0
      %345 = vmatpush.bf16.msra.mxu0 0
      %346 = vmatpush.bf16.msra.mxu0 0
      %347 = vmatpush.bf16.msra.mxu0 0
      %348 = vmatpush.bf16.msra.mxu0 0
      %349 = vmatpush.bf16.msra.mxu0 0
      %350 = vmatpush.bf16.msra.mxu0 0
      %351 = vmatpush.bf16.msra.mxu0 0
      %352 = vmatpush.bf16.msra.mxu0 %v343
      %353 = vmatmul.bf16.gmra.mxu0 %v294
      %v354 = vpop.f32.mrf.mxu0
      %v355 = vadd.f32 %v210, %v354
      %v356 = vpop.f32.mrf.mxu0
      %v357 = vadd.f32 %v210, %v356
      %358 = vmatmul.bf16.gmra.mxu0 %v297
      %v359 = vpop.f32.mrf.mxu0
      %v360 = vadd.f32 %v210, %v359
      %v361 = vpop.f32.mrf.mxu0
      %v362 = vadd.f32 %v210, %v361
      %363 = vmatmul.bf16.gmra.mxu0 %v300
      %v364 = vpop.f32.mrf.mxu0
      %v365 = vadd.f32 %v210, %v364
      %v366 = vpop.f32.mrf.mxu0
      %v367 = vadd.f32 %v210, %v366
      %368 = vmatmul.bf16.gmra.mxu0 %v303
      %v369 = vpop.f32.mrf.mxu0
      %v370 = vadd.f32 %v210, %v369
      %v371 = vpop.f32.mrf.mxu0
      %v372 = vadd.f32 %v210, %v371
      %373 = vmatmul.bf16.gmra.mxu0 %v306
      %v374 = vpop.f32.mrf.mxu0
      %v375 = vadd.f32 %v210, %v374
      %v376 = vpop.f32.mrf.mxu0
      %v377 = vadd.f32 %v210, %v376
      %378 = vmatmul.bf16.gmra.mxu0 %v309
      %v379 = vpop.f32.mrf.mxu0
      %v380 = vadd.f32 %v210, %v379
      %v381 = vpop.f32.mrf.mxu0
      %v382 = vadd.f32 %v210, %v381
      %383 = vmatmul.bf16.gmra.mxu0 %v312
      %v384 = vpop.f32.mrf.mxu0
      %v385 = vadd.f32 %v210, %v384
      %v386 = vpop.f32.mrf.mxu0
      %v387 = vadd.f32 %v210, %v386
      %388 = vmatmul.bf16.gmra.mxu0 %v315
      %v389 = vpop.f32.mrf.mxu0
      %v390 = vadd.f32 %v210, %v389
      %v391 = vpop.f32.mrf.mxu0
      %v392 = vadd.f32 %v210, %v391
      %393 = vmatmul.bf16.gmra.mxu0 %v318
      %v394 = vpop.f32.mrf.mxu0
      %v395 = vadd.f32 %v210, %v394
      %v396 = vpop.f32.mrf.mxu0
      %v397 = vadd.f32 %v210, %v396
      %398 = vmatmul.bf16.gmra.mxu0 %v321
      %v399 = vpop.f32.mrf.mxu0
      %v400 = vadd.f32 %v210, %v399
      %v401 = vpop.f32.mrf.mxu0
      %v402 = vadd.f32 %v210, %v401
      %403 = vmatmul.bf16.gmra.mxu0 %v324
      %v404 = vpop.f32.mrf.mxu0
      %v405 = vadd.f32 %v210, %v404
      %v406 = vpop.f32.mrf.mxu0
      %v407 = vadd.f32 %v210, %v406
      %408 = vmatmul.bf16.gmra.mxu0 %v327
      %v409 = vpop.f32.mrf.mxu0
      %v410 = vadd.f32 %v210, %v409
      %v411 = vpop.f32.mrf.mxu0
      %v412 = vadd.f32 %v210, %v411
      %413 = vmatmul.bf16.gmra.mxu0 %v330
      %v414 = vpop.f32.mrf.mxu0
      %v415 = vadd.f32 %v210, %v414
      %v416 = vpop.f32.mrf.mxu0
      %v417 = vadd.f32 %v210, %v416
      %418 = vmatmul.bf16.gmra.mxu0 %v333
      %v419 = vpop.f32.mrf.mxu0
      %v420 = vadd.f32 %v210, %v419
      %v421 = vpop.f32.mrf.mxu0
      %v422 = vadd.f32 %v210, %v421
      %423 = vmatmul.bf16.gmra.mxu0 %v336
      %v424 = vpop.f32.mrf.mxu0
      %v425 = vadd.f32 %v210, %v424
      %v426 = vpop.f32.mrf.mxu0
      %v427 = vadd.f32 %v210, %v426
      %428 = vmatmul.bf16.gmra.mxu0 %v339
      %v429 = vpop.f32.mrf.mxu0
      %v430 = vadd.f32 %v210, %v429
      %v431 = vpop.f32.mrf.mxu0
      %v432 = vadd.f32 %v210, %v431
      %433 = vdwg.mxu0
      %vm434 = vcmp.gt.f32.partialorder %v355, 0.0
      %vm435 = vcmp.gt.f32.partialorder %v357, 0.0
      %vm436 = vcmp.gt.f32.partialorder %v360, 0.0
      %vm437 = vcmp.gt.f32.partialorder %v362, 0.0
      %vm438 = vcmp.gt.f32.partialorder %v365, 0.0
      %vm439 = vcmp.gt.f32.partialorder %v367, 0.0
      %vm440 = vcmp.gt.f32.partialorder %v370, 0.0
      %vm441 = vcmp.gt.f32.partialorder %v372, 0.0
      %vm442 = vcmp.gt.f32.partialorder %v375, 0.0
      %vm443 = vcmp.gt.f32.partialorder %v377, 0.0
      %vm444 = vcmp.gt.f32.partialorder %v380, 0.0
      %vm445 = vcmp.gt.f32.partialorder %v382, 0.0
      %vm446 = vcmp.gt.f32.partialorder %v385, 0.0
      %vm447 = vcmp.gt.f32.partialorder %v387, 0.0
      %vm448 = vcmp.gt.f32.partialorder %v390, 0.0
      %vm449 = vcmp.gt.f32.partialorder %v392, 0.0
      %vm450 = vcmp.gt.f32.partialorder %v395, 0.0
      %vm451 = vcmp.gt.f32.partialorder %v397, 0.0
      %vm452 = vcmp.gt.f32.partialorder %v400, 0.0
      %vm453 = vcmp.gt.f32.partialorder %v402, 0.0
      %vm454 = vcmp.gt.f32.partialorder %v405, 0.0
      %vm455 = vcmp.gt.f32.partialorder %v407, 0.0
      %vm456 = vcmp.gt.f32.partialorder %v410, 0.0
      %vm457 = vcmp.gt.f32.partialorder %v412, 0.0
      %vm458 = vcmp.gt.f32.partialorder %v415, 0.0
      %vm459 = vcmp.gt.f32.partialorder %v417, 0.0
      %vm460 = vcmp.gt.f32.partialorder %v420, 0.0
      %vm461 = vcmp.gt.f32.partialorder %v422, 0.0
      %vm462 = vcmp.gt.f32.partialorder %v425, 0.0
      %vm463 = vcmp.gt.f32.partialorder %v427, 0.0
      %vm464 = vcmp.gt.f32.partialorder %v430, 0.0
      %vm465 = vcmp.gt.f32.partialorder %v432, 0.0
      %v466 = vmul.f32 %v355, 0.3
      %v467 = vmul.f32 %v357, 0.3
      %v468 = vmul.f32 %v360, 0.3
      %v469 = vmul.f32 %v362, 0.3
      %v470 = vmul.f32 %v365, 0.3
      %v471 = vmul.f32 %v367, 0.3
      %v472 = vmul.f32 %v370, 0.3
      %v473 = vmul.f32 %v372, 0.3
      %v474 = vmul.f32 %v375, 0.3
      %v475 = vmul.f32 %v377, 0.3
      %v476 = vmul.f32 %v380, 0.3
      %v477 = vmul.f32 %v382, 0.3
      %v478 = vmul.f32 %v385, 0.3
      %v479 = vmul.f32 %v387, 0.3
      %v480 = vmul.f32 %v390, 0.3
      %v481 = vmul.f32 %v392, 0.3
      %v482 = vmul.f32 %v395, 0.3
      %v483 = vmul.f32 %v397, 0.3
      %v484 = vmul.f32 %v400, 0.3
      %v485 = vmul.f32 %v402, 0.3
      %v486 = vmul.f32 %v405, 0.3
      %v487 = vmul.f32 %v407, 0.3
      %v488 = vmul.f32 %v410, 0.3
      %v489 = vmul.f32 %v412, 0.3
      %v490 = vmul.f32 %v415, 0.3
      %v491 = vmul.f32 %v417, 0.3
      %v492 = vmul.f32 %v420, 0.3
      %v493 = vmul.f32 %v422, 0.3
      %v494 = vmul.f32 %v425, 0.3
      %v495 = vmul.f32 %v427, 0.3
      %v496 = vmul.f32 %v430, 0.3
      %v497 = vmul.f32 %v432, 0.3
      %v498 = vsel %vm434, %v355, %v466
      %v499 = vsel %vm435, %v357, %v467
      %v500 = vsel %vm436, %v360, %v468
      %v501 = vsel %vm437, %v362, %v469
      %v502 = vsel %vm438, %v365, %v470
      %v503 = vsel %vm439, %v367, %v471
      %v504 = vsel %vm440, %v370, %v472
      %v505 = vsel %vm441, %v372, %v473
      %v506 = vsel %vm442, %v375, %v474
      %v507 = vsel %vm443, %v377, %v475
      %v508 = vsel %vm444, %v380, %v476
      %v509 = vsel %vm445, %v382, %v477
      %v510 = vsel %vm446, %v385, %v478
      %v511 = vsel %vm447, %v387, %v479
      %v512 = vsel %vm448, %v390, %v480
      %v513 = vsel %vm449, %v392, %v481
      %v514 = vsel %vm450, %v395, %v482
      %v515 = vsel %vm451, %v397, %v483
      %v516 = vsel %vm452, %v400, %v484
      %v517 = vsel %vm453, %v402, %v485
      %v518 = vsel %vm454, %v405, %v486
      %v519 = vsel %vm455, %v407, %v487
      %v520 = vsel %vm456, %v410, %v488
      %v521 = vsel %vm457, %v412, %v489
      %v522 = vsel %vm458, %v415, %v490
      %v523 = vsel %vm459, %v417, %v491
      %v524 = vsel %vm460, %v420, %v492
      %v525 = vsel %vm461, %v422, %v493
      %v526 = vsel %vm462, %v425, %v494
      %v527 = vsel %vm463, %v427, %v495
      %v528 = vsel %vm464, %v430, %v496
      %v529 = vsel %vm465, %v432, %v497
      %v530 = vpack.c.bf16 %v498, %v498
      %v531 = vpack.c.bf16 %v499, %v499
      %v532 = vpack.c.bf16 %v500, %v500
      %v533 = vpack.c.bf16 %v501, %v501
      %v534 = vpack.c.bf16 %v502, %v502
      %v535 = vpack.c.bf16 %v503, %v503
      %v536 = vpack.c.bf16 %v504, %v504
      %v537 = vpack.c.bf16 %v505, %v505
      %v538 = vpack.c.bf16 %v506, %v506
      %v539 = vpack.c.bf16 %v507, %v507
      %v540 = vpack.c.bf16 %v508, %v508
      %v541 = vpack.c.bf16 %v509, %v509
      %v542 = vpack.c.bf16 %v510, %v510
      %v543 = vpack.c.bf16 %v511, %v511
      %v544 = vpack.c.bf16 %v512, %v512
      %v545 = vpack.c.bf16 %v513, %v513
      %v546 = vpack.c.bf16 %v514, %v514
      %v547 = vpack.c.bf16 %v515, %v515
      %v548 = vpack.c.bf16 %v516, %v516
      %v549 = vpack.c.bf16 %v517, %v517
      %v550 = vpack.c.bf16 %v518, %v518
      %v551 = vpack.c.bf16 %v519, %v519
      %v552 = vpack.c.bf16 %v520, %v520
      %v553 = vpack.c.bf16 %v521, %v521
      %v554 = vpack.c.bf16 %v522, %v522
      %v555 = vpack.c.bf16 %v523, %v523
      %v556 = vpack.c.bf16 %v524, %v524
      %v557 = vpack.c.bf16 %v525, %v525
      %v558 = vpack.c.bf16 %v526, %v526
      %v559 = vpack.c.bf16 %v527, %v527
      %v560 = vpack.c.bf16 %v528, %v528
      %v561 = vpack.c.bf16 %v529, %v529
      %vm562 = vcmask 27648
      %563 = vst.msk [vmem:[%s172] sm:$0xf] %vm562, %v530
      %564 = vst.msk [vmem:[%s172 + $0x4] sm:$0xf] %vm562, %v531
      %565 = vst.msk [vmem:[%s172 + $0x8] sm:$0xf] %vm562, %v532
      %566 = vst.msk [vmem:[%s172 + $0xc] sm:$0xf] %vm562, %v533
      %567 = vst.msk [vmem:[%s172 + $0x10] sm:$0xf] %vm562, %v534
      %568 = vst.msk [vmem:[%s172 + $0x14] sm:$0xf] %vm562, %v535
      %569 = vst.msk [vmem:[%s172 + $0x18] sm:$0xf] %vm562, %v536
      %570 = vst.msk [vmem:[%s172 + $0x1c] sm:$0xf] %vm562, %v537
      %571 = vst.msk [vmem:[%s172 + $0x20] sm:$0xf] %vm562, %v538
      %572 = vst.msk [vmem:[%s172 + $0x24] sm:$0xf] %vm562, %v539
      %573 = vst.msk [vmem:[%s172 + $0x28] sm:$0xf] %vm562, %v540
      %574 = vst.msk [vmem:[%s172 + $0x2c] sm:$0xf] %vm562, %v541
      %575 = vst.msk [vmem:[%s172 + $0x30] sm:$0xf] %vm562, %v542
      %576 = vst.msk [vmem:[%s172 + $0x34] sm:$0xf] %vm562, %v543
      %577 = vst.msk [vmem:[%s172 + $0x38] sm:$0xf] %vm562, %v544
      %578 = vst.msk [vmem:[%s172 + $0x3c] sm:$0xf] %vm562, %v545
      %579 = vst.msk [vmem:[%s172 + $0x40] sm:$0xf] %vm562, %v546
      %580 = vst.msk [vmem:[%s172 + $0x44] sm:$0xf] %vm562, %v547
      %581 = vst.msk [vmem:[%s172 + $0x48] sm:$0xf] %vm562, %v548
      %582 = vst.msk [vmem:[%s172 + $0x4c] sm:$0xf] %vm562, %v549
      %583 = vst.msk [vmem:[%s172 + $0x50] sm:$0xf] %vm562, %v550
      %584 = vst.msk [vmem:[%s172 + $0x54] sm:$0xf] %vm562, %v551
      %585 = vst.msk [vmem:[%s172 + $0x58] sm:$0xf] %vm562, %v552
      %586 = vst.msk [vmem:[%s172 + $0x5c] sm:$0xf] %vm562, %v553
      %587 = vst.msk [vmem:[%s172 + $0x60] sm:$0xf] %vm562, %v554
      %588 = vst.msk [vmem:[%s172 + $0x64] sm:$0xf] %vm562, %v555
      %589 = vst.msk [vmem:[%s172 + $0x68] sm:$0xf] %vm562, %v556
      %590 = vst.msk [vmem:[%s172 + $0x6c] sm:$0xf] %vm562, %v557
      %591 = vst.msk [vmem:[%s172 + $0x70] sm:$0xf] %vm562, %v558
      %592 = vst.msk [vmem:[%s172 + $0x74] sm:$0xf] %vm562, %v559
      %593 = vst.msk [vmem:[%s172 + $0x78] sm:$0xf] %vm562, %v560
      %594 = vst.msk [vmem:[%s172 + $0x7c] sm:$0xf] %vm562, %v561
      %s595 = smul.u32 32, %s14
      %p596 = scmp.lt.s32.totalorder %s595, 63
      %s597 = scalar_select %p596, %s595, 63
      %s598 = smul.addr %s597, 4
      %s599 = scalar_lea.vmem %s3, %s598
      // Predicated region
      $region33: #{bottleneck_forward.3} parent=31 // pred_check
        %p600 = pneg %p100
      $region34: #{bottleneck_forward.3} parent=31 // pred_check_branch
        %602 = sbr.rel (%p600) target = $region36
      $region35: #{bottleneck_forward.3} parent=31 // pred_region
        %s603 = smul.u32 32, %s14
      $region36: #{bottleneck_forward.3} parent=31 // pred_fallthru
        _
    $region32: #{bottleneck_forward.3} parent=5 // pred_fallthru
      _
    %p604 = scmp.le.s32.totalorder 2, %s9
    // Predicated region
    $region37: #{bottleneck_forward.3} parent=5 // pred_check
      %p605 = pneg %p604
    $region38: #{bottleneck_forward.3} parent=5 // pred_check_branch
      %607 = sbr.rel (%p605) target = $region40
    $region39: #{bottleneck_forward.3} parent=5 // pred_region
      %s608 = ssub.s32 %s9, 2
      // Predicated region
      $region41: #{bottleneck_forward.3} parent=39 // pred_check
        %p609 = pneg %p106
      $region42: #{bottleneck_forward.3} parent=39 // pred_check_branch
        %611 = sbr.rel (%p609) target = $region44
      $region43: #{bottleneck_forward.3} parent=39 // pred_region
        %s612 = smul.u32 32, %s15
        %p613 = scmp.lt.s32.totalorder %s612, 63
        %s614 = scalar_select %p613, %s612, 63
        %s615 = smul.addr %s614, 4
        %s616 = scalar_lea.vmem %s3, %s615
      $region44: #{bottleneck_forward.3} parent=39 // pred_fallthru
        _
    $region40: #{bottleneck_forward.3} parent=5 // pred_fallthru
      _
  $region6: #{bottleneck_forward.3} parent=0 // loop_footer
    %s13 = sadd.s32 1, %s9
  $region7: #{bottleneck_forward.3} parent=0 // loop_footer_branch
    %8 = sbr.rel target = $region3
  $region8: #{bottleneck_forward.3} parent=0 // loop_exit
    _

// kernel: bottleneck_forward.5
$region0: #{bottleneck_forward.5}
  #allocation0 [shape = 'u32[]', space=smem, size = 0x4, offset = 0x4, fixed_abs, tag = 'smem constant byte address 0x4 - core index']
  #allocation1 [shape = 'u32[72,128]{1,0:T(1,128)}', space=vmem, size = 0x9000, scoped, tag = 'internal scratch']
  %s0 = inlined_call_operand.vmem [shape: bf16[512,4], index: 0, kind: input, shape index: {}]
  %s1 = inlined_call_operand.vmem [shape: bf16[4,8], index: 1, kind: input, shape index: {}]
  %s2 = inlined_call_operand.vmem [shape: f32[1,8], index: 2, kind: input, shape index: {}]
  %s3 = inlined_call_operand.vmem [shape: bf16[512,4], index: 3, kind: input, shape index: {}]
  %s4 = inlined_call_operand.vmem [shape: bf16[4,8], index: 4, kind: input, shape index: {}]
  %s5 = inlined_call_operand.vmem [shape: f32[1,8], index: 5, kind: input, shape index: {}]
  %s6 = inlined_call_operand.vmem [shape: f32[512,8], index: 6, kind: output, shape index: {}]
  %s7 = sld [smem:[#allocation0]]
  $region57: #{bottleneck_forward.5} parent=0
    _
  %s9 = ssub.s32 1, %s7
  %s10 = scalar_select 0, %s9, %s7
  loop: start=0, step=1, limit=4
  $region2: #{bottleneck_forward.5} parent=0 // loop_pre_header
    _
  $region3: #{bottleneck_forward.5} parent=0 // loop_header
    %s12 = sphi 0, %s16
    %p13 = scmp.ge.s32.totalorder %s12, 4
    %s22 = sphi 0, %s24
    %s25 = sphi 0, %s22
    %s26 = sphi 0, %s25
    %s42 = sphi 0, %s26
    %s46 = sphi 0, %s46
    %s48 = sphi 0, %s46
    %s49 = sphi 0, %s48
    %s63 = sphi 0, %s49
    %s67 = sphi 0, %s67
    %s69 = sphi 0, %s67
    %s70 = sphi 0, %s69
    %s84 = sphi 0, %s70
    %s90 = sphi 0, %s92
    %s93 = sphi 0, %s90
    %s94 = sphi 0, %s93
    %s110 = sphi 0, %s94
    %s114 = sphi 0, %s114
    %s116 = sphi 0, %s114
    %s117 = sphi 0, %s116
    %s131 = sphi 0, %s117
    %s135 = sphi 0, %s135
    %s137 = sphi 0, %s135
    %s138 = sphi 0, %s137
    %s152 = sphi 0, %s138
    %s158 = sphi 0, %s160
    %s161 = sphi 0, %s158
    %s162 = sphi 0, %s161
    %s178 = sphi 0, %s162
  $region4: #{bottleneck_forward.5} parent=0 // loop_header_branch
    %15 = sbr.rel (%p13) target = $region8
  $region5: #{bottleneck_forward.5} parent=0 // loop_body
    %s17 = ssub.s32 %s12, 1
    %s18 = ssub.s32 %s12, 2
    %s19 = sadd.s32 %s12, 1
    %s20 = ssub.s32 %s12, %s19
    %p21 = scmp.eq.s32.totalorder %s20, 0
    %s23 = sadd.s32 %s22, 1
    %s24 = scalar_select %p21, %s22, %s23
    %p27 = pneg %p21
    %p28 = scmp.eq.s32.totalorder %s12, 1
    %p29 = por %p27, %p28
    %p30 = scmp.ne.s32.totalorder %s22, %s25
    %p31 = scmp.eq.s32.totalorder %s12, 0
    %p32 = por %p30, %p31
    %p33 = scmp.ne.s32.totalorder %s22, %s25
    %p34 = scmp.eq.s32.totalorder %s17, 1
    %p35 = por %p33, %p34
    %p36 = scmp.ne.s32.totalorder %s25, %s26
    %p37 = scmp.eq.s32.totalorder %s17, 0
    %p38 = por %p36, %p37
    %p39 = scmp.ne.s32.totalorder %s25, %s26
    %p40 = scmp.eq.s32.totalorder %s18, 1
    %p41 = por %p39, %p40
    %p43 = scmp.ne.s32.totalorder %s26, %s42
    %p44 = scmp.eq.s32.totalorder %s18, 0
    %p45 = por %p43, %p44
    %s47 = sadd.s32 %s46, 1
    %p50 = scmp.eq.s32.totalorder %s12, 1
    %p51 = scmp.ne.s32.totalorder %s46, %s48
    %p52 = scmp.eq.s32.totalorder %s12, 0
    %p53 = por %p51, %p52
    %p54 = scmp.ne.s32.totalorder %s46, %s48
    %p55 = scmp.eq.s32.totalorder %s17, 1
    %p56 = por %p54, %p55
    %p57 = scmp.ne.s32.totalorder %s48, %s49
    %p58 = scmp.eq.s32.totalorder %s17, 0
    %p59 = por %p57, %p58
    %p60 = scmp.ne.s32.totalorder %s48, %s49
    %p61 = scmp.eq.s32.totalorder %s18, 1
    %p62 = por %p60, %p61
    %p64 = scmp.ne.s32.totalorder %s49, %s63
    %p65 = scmp.eq.s32.totalorder %s18, 0
    %p66 = por %p64, %p65
    %s68 = sadd.s32 %s67, 1
    %p71 = scmp.eq.s32.totalorder %s12, 1
    %p72 = scmp.ne.s32.totalorder %s67, %s69
    %p73 = scmp.eq.s32.totalorder %s12, 0
    %p74 = por %p72, %p73
    %p75 = scmp.ne.s32.totalorder %s67, %s69
    %p76 = scmp.eq.s32.totalorder %s17, 1
    %p77 = por %p75, %p76
    %p78 = scmp.ne.s32.totalorder %s69, %s70
    %p79 = scmp.eq.s32.totalorder %s17, 0
    %p80 = por %p78, %p79
    %p81 = scmp.ne.s32.totalorder %s69, %s70
    %p82 = scmp.eq.s32.totalorder %s18, 1
    %p83 = por %p81, %p82
    %p85 = scmp.ne.s32.totalorder %s70, %s84
    %p86 = scmp.eq.s32.totalorder %s18, 0
    %p87 = por %p85, %p86
    %s88 = ssub.s32 %s12, %s19
    %p89 = scmp.eq.s32.totalorder %s88, 0
    %s91 = sadd.s32 %s90, 1
    %s92 = scalar_select %p89, %s90, %s91
    %p95 = pneg %p89
    %p96 = scmp.eq.s32.totalorder %s12, 1
    %p97 = por %p95, %p96
    %p98 = scmp.ne.s32.totalorder %s90, %s93
    %p99 = scmp.eq.s32.totalorder %s12, 0
    %p100 = por %p98, %p99
    %p101 = scmp.ne.s32.totalorder %s90, %s93
    %p102 = scmp.eq.s32.totalorder %s17, 1
    %p103 = por %p101, %p102
    %p104 = scmp.ne.s32.totalorder %s93, %s94
    %p105 = scmp.eq.s32.totalorder %s17, 0
    %p106 = por %p104, %p105
    %p107 = scmp.ne.s32.totalorder %s93, %s94
    %p108 = scmp.eq.s32.totalorder %s18, 1
    %p109 = por %p107, %p108
    %p111 = scmp.ne.s32.totalorder %s94, %s110
    %p112 = scmp.eq.s32.totalorder %s18, 0
    %p113 = por %p111, %p112
    %s115 = sadd.s32 %s114, 1
    %p118 = scmp.eq.s32.totalorder %s12, 1
    %p119 = scmp.ne.s32.totalorder %s114, %s116
    %p120 = scmp.eq.s32.totalorder %s12, 0
    %p121 = por %p119, %p120
    %p122 = scmp.ne.s32.totalorder %s114, %s116
    %p123 = scmp.eq.s32.totalorder %s17, 1
    %p124 = por %p122, %p123
    %p125 = scmp.ne.s32.totalorder %s116, %s117
    %p126 = scmp.eq.s32.totalorder %s17, 0
    %p127 = por %p125, %p126
    %p128 = scmp.ne.s32.totalorder %s116, %s117
    %p129 = scmp.eq.s32.totalorder %s18, 1
    %p130 = por %p128, %p129
    %p132 = scmp.ne.s32.totalorder %s117, %s131
    %p133 = scmp.eq.s32.totalorder %s18, 0
    %p134 = por %p132, %p133
    %s136 = sadd.s32 %s135, 1
    %p139 = scmp.eq.s32.totalorder %s12, 1
    %p140 = scmp.ne.s32.totalorder %s135, %s137
    %p141 = scmp.eq.s32.totalorder %s12, 0
    %p142 = por %p140, %p141
    %p143 = scmp.ne.s32.totalorder %s135, %s137
    %p144 = scmp.eq.s32.totalorder %s17, 1
    %p145 = por %p143, %p144
    %p146 = scmp.ne.s32.totalorder %s137, %s138
    %p147 = scmp.eq.s32.totalorder %s17, 0
    %p148 = por %p146, %p147
    %p149 = scmp.ne.s32.totalorder %s137, %s138
    %p150 = scmp.eq.s32.totalorder %s18, 1
    %p151 = por %p149, %p150
    %p153 = scmp.ne.s32.totalorder %s138, %s152
    %p154 = scmp.eq.s32.totalorder %s18, 0
    %p155 = por %p153, %p154
    %s156 = ssub.s32 %s12, %s19
    %p157 = scmp.eq.s32.totalorder %s156, 0
    %s159 = sadd.s32 %s158, 1
    %s160 = scalar_select %p157, %s158, %s159
    %p163 = pneg %p157
    %p164 = scmp.eq.s32.totalorder %s12, 1
    %p165 = por %p163, %p164
    %p166 = scmp.ne.s32.totalorder %s158, %s161
    %p167 = scmp.eq.s32.totalorder %s12, 0
    %p168 = por %p166, %p167
    %p169 = scmp.ne.s32.totalorder %s158, %s161
    %p170 = scmp.eq.s32.totalorder %s17, 1
    %p171 = por %p169, %p170
    %p172 = scmp.ne.s32.totalorder %s161, %s162
    %p173 = scmp.eq.s32.totalorder %s17, 0
    %p174 = por %p172, %p173
    %p175 = scmp.ne.s32.totalorder %s161, %s162
    %p176 = scmp.eq.s32.totalorder %s18, 1
    %p177 = por %p175, %p176
    %p179 = scmp.ne.s32.totalorder %s162, %s178
    %p180 = scmp.eq.s32.totalorder %s18, 0
    %p181 = por %p179, %p180
    %p182 = scmp.le.s32.totalorder 1, %s12
    %p183 = scmp.lt.s32.totalorder %s12, 3
    %p184 = pnand %p182, %p183
    %p185 = pneg %p184
    // Predicated region
    $region9: #{bottleneck_forward.5} parent=5 // pred_check
      _
    $region10: #{bottleneck_forward.5} parent=5 // pred_check_branch
      %187 = sbr.rel (%p184) target = $region12
    $region11: #{bottleneck_forward.5} parent=5 // pred_region
      %s188 = ssub.s32 %s12, 1
      // Predicated region
      $region13: #{bottleneck_forward.5} parent=11 // pred_check
        %p189 = pneg %p59
      $region14: #{bottleneck_forward.5} parent=11 // pred_check_branch
        %191 = sbr.rel (%p189) target = $region16
      $region15: #{bottleneck_forward.5} parent=11 // pred_region
        _
      $region16: #{bottleneck_forward.5} parent=11 // pred_fallthru
        _
      // Predicated region
      $region17: #{bottleneck_forward.5} parent=11 // pred_check
        %p192 = pneg %p80
      $region18: #{bottleneck_forward.5} parent=11 // pred_check_branch
        %194 = sbr.rel (%p192) target = $region20
      $region19: #{bottleneck_forward.5} parent=11 // pred_region
        _
      $region20: #{bottleneck_forward.5} parent=11 // pred_fallthru
        _
      // Predicated region
      $region21: #{bottleneck_forward.5} parent=11 // pred_check
        %p195 = pneg %p127
      $region22: #{bottleneck_forward.5} parent=11 // pred_check_branch
        %197 = sbr.rel (%p195) target = $region24
      $region23: #{bottleneck_forward.5} parent=11 // pred_region
        _
      $region24: #{bottleneck_forward.5} parent=11 // pred_fallthru
        _
      // Predicated region
      $region25: #{bottleneck_forward.5} parent=11 // pred_check
        %p198 = pneg %p148
      $region26: #{bottleneck_forward.5} parent=11 // pred_check_branch
        %200 = sbr.rel (%p198) target = $region28
      $region27: #{bottleneck_forward.5} parent=11 // pred_region
        _
      $region28: #{bottleneck_forward.5} parent=11 // pred_fallthru
        _
    $region12: #{bottleneck_forward.5} parent=5 // pred_fallthru
      _
    %p201 = scmp.lt.s32.totalorder %s12, 2
    // Predicated region
    $region29: #{bottleneck_forward.5} parent=5 // pred_check
      %p202 = pneg %p201
    $region30: #{bottleneck_forward.5} parent=5 // pred_check_branch
      %204 = sbr.rel (%p202) target = $region32
    $region31: #{bottleneck_forward.5} parent=5 // pred_region
      // Predicated region
      $region33: #{bottleneck_forward.5} parent=31 // pred_check
        %p205 = pneg %p32
      $region34: #{bottleneck_forward.5} parent=31 // pred_check_branch
        %207 = sbr.rel (%p205) target = $region36
      $region35: #{bottleneck_forward.5} parent=31 // pred_region
        %s208 = smul.u32 32, %s12
        %p209 = scmp.lt.s32.totalorder %s208, 63
        %s210 = scalar_select %p209, %s208, 63
        %s211 = smul.addr %s210, 4
        %s212 = scalar_lea.vmem %s0, %s211
        %s213 = smul.u32 32, %s12
      $region36: #{bottleneck_forward.5} parent=31 // pred_fallthru
        _
      // Predicated region
      $region37: #{bottleneck_forward.5} parent=31 // pred_check
        %p214 = pneg %p100
      $region38: #{bottleneck_forward.5} parent=31 // pred_check_branch
        %216 = sbr.rel (%p214) target = $region40
      $region39: #{bottleneck_forward.5} parent=31 // pred_region
        %s217 = smul.u32 32, %s12
        %p218 = scmp.lt.s32.totalorder %s217, 63
        %s219 = scalar_select %p218, %s217, 63
        %s220 = smul.addr %s219, 4
        %s221 = scalar_lea.vmem %s3, %s220
        %s222 = smul.u32 32, %s12
      $region40: #{bottleneck_forward.5} parent=31 // pred_fallthru
        _
    $region32: #{bottleneck_forward.5} parent=5 // pred_fallthru
      _
    %p223 = scmp.le.s32.totalorder 1, %s12
    %p224 = scmp.lt.s32.totalorder %s12, 3
    %p225 = pnand %p223, %p224
    %p226 = pneg %p225
    // Predicated region
    $region41: #{bottleneck_forward.5} parent=5 // pred_check
      _
    $region42: #{bottleneck_forward.5} parent=5 // pred_check_branch
      %228 = sbr.rel (%p225) target = $region44
    $region43: #{bottleneck_forward.5} parent=5 // pred_region
      %s229 = ssub.s32 %s12, 1
      %s230 = smul.u32 32, %s17
      %p231 = scmp.lt.s32.totalorder %s230, 63
      %s232 = scalar_select %p231, %s230, 63
      %s233 = smul.addr %s232, 4
      %s234 = scalar_lea.vmem %s0, %s233
      %p235 = pneg %p38
      %p236 = pneg %p35
      %p237 = pneg %p59
      %p238 = pneg %p56
      %p239 = pneg %p80
      %p240 = pneg %p77
      %s241 = smul.u32 32, %s17
      %p242 = scmp.lt.s32.totalorder %s241, 63
      %s243 = scalar_select %p242, %s241, 63
      %s244 = smul.addr %s243, 4
      %s245 = scalar_lea.vmem %s3, %s244
      %p246 = pneg %p106
      %p247 = pneg %p103
      %p248 = pneg %p127
      %p249 = pneg %p124
      %p250 = pneg %p148
      %p251 = pneg %p145
      %p252 = pneg %p174
      %p253 = pneg %p171
      %s254 = smul.u32 32, %s17
      %p255 = scmp.lt.s32.totalorder %s254, 63
      %s256 = scalar_select %p255, %s254, 63
      %s257 = smul.addr %s256, 8
      %s258 = scalar_lea.vmem %s6, %s257
      %s259 = smul.u32 32, %s17
      %p260 = scmp.lt.s32.totalorder %s259, 63
      %s261 = scalar_select %p260, %s259, 63
      %s262 = smul.addr %s261, 4
      %s263 = scalar_lea.vmem %s0, %s262
      %s264 = smul.u32 32, %s17
      %s265 = smul.u32 32, %s17
      %p266 = scmp.lt.s32.totalorder %s265, 63
      %s267 = scalar_select %p266, %s265, 63
      %s268 = smul.addr %s267, 4
      %s269 = scalar_lea.vmem %s3, %s268
      %s270 = smul.u32 32, %s17
      %s271 = smul.u32 32, %s17
      %p272 = scmp.lt.s32.totalorder %s271, 63
      %s273 = scalar_select %p272, %s271, 63
      %s274 = smul.addr %s273, 8
      %s275 = scalar_lea.vmem %s6, %s274
      %s276 = smul.u32 32, %s17
      %v278 = vld [vmem:[%s263] sm:$0xf]
      %v279 = vld [vmem:[%s263 + $0x4] sm:$0xf]
      %v280 = vld [vmem:[%s263 + $0x8] sm:$0xf]
      %v281 = vld [vmem:[%s263 + $0xc] sm:$0xf]
      %v282 = vld [vmem:[%s263 + $0x10] sm:$0xf]
      %v283 = vld [vmem:[%s263 + $0x14] sm:$0xf]
      %v284 = vld [vmem:[%s263 + $0x18] sm:$0xf]
      %v285 = vld [vmem:[%s263 + $0x1c] sm:$0xf]
      %v286 = vld [vmem:[%s263 + $0x20] sm:$0xf]
      %v287 = vld [vmem:[%s263 + $0x24] sm:$0xf]
      %v288 = vld [vmem:[%s263 + $0x28] sm:$0xf]
      %v289 = vld [vmem:[%s263 + $0x2c] sm:$0xf]
      %v290 = vld [vmem:[%s263 + $0x30] sm:$0xf]
      %v291 = vld [vmem:[%s263 + $0x34] sm:$0xf]
      %v292 = vld [vmem:[%s263 + $0x38] sm:$0xf]
      %v293 = vld [vmem:[%s263 + $0x3c] sm:$0xf]
      %v294 = vld [vmem:[%s263 + $0x40] sm:$0xf]
      %v295 = vld [vmem:[%s263 + $0x44] sm:$0xf]
      %v296 = vld [vmem:[%s263 + $0x48] sm:$0xf]
      %v297 = vld [vmem:[%s263 + $0x4c] sm:$0xf]
      %v298 = vld [vmem:[%s263 + $0x50] sm:$0xf]
      %v299 = vld [vmem:[%s263 + $0x54] sm:$0xf]
      %v300 = vld [vmem:[%s263 + $0x58] sm:$0xf]
      %v301 = vld [vmem:[%s263 + $0x5c] sm:$0xf]
      %v302 = vld [vmem:[%s263 + $0x60] sm:$0xf]
      %v303 = vld [vmem:[%s263 + $0x64] sm:$0xf]
      %v304 = vld [vmem:[%s263 + $0x68] sm:$0xf]
      %v305 = vld [vmem:[%s263 + $0x6c] sm:$0xf]
      %v306 = vld [vmem:[%s263 + $0x70] sm:$0xf]
      %v307 = vld [vmem:[%s263 + $0x74] sm:$0xf]
      %v308 = vld [vmem:[%s263 + $0x78] sm:$0xf]
      %v309 = vld [vmem:[%s263 + $0x7c] sm:$0xf]
      %v310 = vld [vmem:[%s1] sm:$0x3]
      %v311 = vld [vmem:[%s2] sm:$0x1]
      %v313 = vperm.slane %v311, 0
      %v347 = vunpack.c.l.b16 %v278
      %v348 = vunpack.c.l.b16 %v279
      %v349 = vunpack.c.l.b16 %v280
      %v350 = vunpack.c.l.b16 %v281
      %v351 = vunpack.c.l.b16 %v282
      %v352 = vunpack.c.l.b16 %v283
      %v353 = vunpack.c.l.b16 %v284
      %v354 = vunpack.c.l.b16 %v285
      %v355 = vunpack.c.l.b16 %v286
      %v356 = vunpack.c.l.b16 %v287
      %v357 = vunpack.c.l.b16 %v288
      %v358 = vunpack.c.l.b16 %v289
      %v359 = vunpack.c.l.b16 %v290
      %v360 = vunpack.c.l.b16 %v291
      %v361 = vunpack.c.l.b16 %v292
      %v362 = vunpack.c.l.b16 %v293
      %v363 = vunpack.c.l.b16 %v294
      %v364 = vunpack.c.l.b16 %v295
      %v365 = vunpack.c.l.b16 %v296
      %v366 = vunpack.c.l.b16 %v297
      %v367 = vunpack.c.l.b16 %v298
      %v368 = vunpack.c.l.b16 %v299
      %v369 = vunpack.c.l.b16 %v300
      %v370 = vunpack.c.l.b16 %v301
      %v371 = vunpack.c.l.b16 %v302
      %v372 = vunpack.c.l.b16 %v303
      %v373 = vunpack.c.l.b16 %v304
      %v374 = vunpack.c.l.b16 %v305
      %v375 = vunpack.c.l.b16 %v306
      %v376 = vunpack.c.l.b16 %v307
      %v377 = vunpack.c.l.b16 %v308
      %v378 = vunpack.c.l.b16 %v309
      %v379 = vpack.c.b16 %v348, %v347
      %v380 = vpack.c.b16 %v350, %v349
      %v381 = vpack.c.b16 %v352, %v351
      %v382 = vpack.c.b16 %v354, %v353
      %v383 = vpack.c.b16 %v356, %v355
      %v384 = vpack.c.b16 %v358, %v357
      %v385 = vpack.c.b16 %v360, %v359
      %v386 = vpack.c.b16 %v362, %v361
      %v387 = vpack.c.b16 %v364, %v363
      %v388 = vpack.c.b16 %v366, %v365
      %v389 = vpack.c.b16 %v368, %v367
      %v390 = vpack.c.b16 %v370, %v369
      %v391 = vpack.c.b16 %v372, %v371
      %v392 = vpack.c.b16 %v374, %v373
      %v393 = vpack.c.b16 %v376, %v375
      %v394 = vpack.c.b16 %v378, %v377
      %vm395 = vcmask 31744
      %v397 = vsel %vm395, %v379, 0
      %v400 = vsel %vm395, %v380, 0
      %v403 = vsel %vm395, %v381, 0
      %v406 = vsel %vm395, %v382, 0
      %v409 = vsel %vm395, %v383, 0
      %v412 = vsel %vm395, %v384, 0
      %v415 = vsel %vm395, %v385, 0
      %v418 = vsel %vm395, %v386, 0
      %v421 = vsel %vm395, %v387, 0
      %v424 = vsel %vm395, %v388, 0
      %v427 = vsel %vm395, %v389, 0
      %v430 = vsel %vm395, %v390, 0
      %v433 = vsel %vm395, %v391, 0
      %v436 = vsel %vm395, %v392, 0
      %v439 = vsel %vm395, %v393, 0
      %v442 = vsel %vm395, %v394, 0
      %vm444 = vcmask 1041408
      %v446 = vsel %vm444, %v310, 0
      %448 = vmatpush.bf16.msra.mxu0 0
      %449 = vmatpush.bf16.msra.mxu0 0
      %450 = vmatpush.bf16.msra.mxu0 0
      %451 = vmatpush.bf16.msra.mxu0 0
      %452 = vmatpush.bf16.msra.mxu0 0
      %453 = vmatpush.bf16.msra.mxu0 0
      %454 = vmatpush.bf16.msra.mxu0 0
      %455 = vmatpush.bf16.msra.mxu0 %v446
      %456 = vmatmul.bf16.gmra.mxu0 %v397
      %v457 = vpop.f32.mrf.mxu0
      %v458 = vadd.f32 %v313, %v457
      %v459 = vpop.f32.mrf.mxu0
      %v460 = vadd.f32 %v313, %v459
      %461 = vmatmul.bf16.gmra.mxu0 %v400
      %v462 = vpop.f32.mrf.mxu0
      %v463 = vadd.f32 %v313, %v462
      %v464 = vpop.f32.mrf.mxu0
      %v465 = vadd.f32 %v313, %v464
      %466 = vmatmul.bf16.gmra.mxu0 %v403
      %v467 = vpop.f32.mrf.mxu0
      %v468 = vadd.f32 %v313, %v467
      %v469 = vpop.f32.mrf.mxu0
      %v470 = vadd.f32 %v313, %v469
      %471 = vmatmul.bf16.gmra.mxu0 %v406
      %v472 = vpop.f32.mrf.mxu0
      %v473 = vadd.f32 %v313, %v472
      %v474 = vpop.f32.mrf.mxu0
      %v475 = vadd.f32 %v313, %v474
      %476 = vmatmul.bf16.gmra.mxu0 %v409
      %v477 = vpop.f32.mrf.mxu0
      %v478 = vadd.f32 %v313, %v477
      %v479 = vpop.f32.mrf.mxu0
      %v480 = vadd.f32 %v313, %v479
      %481 = vmatmul.bf16.gmra.mxu0 %v412
      %v482 = vpop.f32.mrf.mxu0
      %v483 = vadd.f32 %v313, %v482
      %v484 = vpop.f32.mrf.mxu0
      %v485 = vadd.f32 %v313, %v484
      %486 = vmatmul.bf16.gmra.mxu0 %v415
      %v487 = vpop.f32.mrf.mxu0
      %v488 = vadd.f32 %v313, %v487
      %v489 = vpop.f32.mrf.mxu0
      %v490 = vadd.f32 %v313, %v489
      %491 = vmatmul.bf16.gmra.mxu0 %v418
      %v492 = vpop.f32.mrf.mxu0
      %v493 = vadd.f32 %v313, %v492
      %v494 = vpop.f32.mrf.mxu0
      %v495 = vadd.f32 %v313, %v494
      %496 = vmatmul.bf16.gmra.mxu0 %v421
      %v497 = vpop.f32.mrf.mxu0
      %v498 = vadd.f32 %v313, %v497
      %v499 = vpop.f32.mrf.mxu0
      %v500 = vadd.f32 %v313, %v499
      %501 = vmatmul.bf16.gmra.mxu0 %v424
      %v502 = vpop.f32.mrf.mxu0
      %v503 = vadd.f32 %v313, %v502
      %v504 = vpop.f32.mrf.mxu0
      %v505 = vadd.f32 %v313, %v504
      %506 = vmatmul.bf16.gmra.mxu0 %v427
      %v507 = vpop.f32.mrf.mxu0
      %v508 = vadd.f32 %v313, %v507
      %v509 = vpop.f32.mrf.mxu0
      %v510 = vadd.f32 %v313, %v509
      %511 = vmatmul.bf16.gmra.mxu0 %v430
      %v512 = vpop.f32.mrf.mxu0
      %v513 = vadd.f32 %v313, %v512
      %v514 = vpop.f32.mrf.mxu0
      %v515 = vadd.f32 %v313, %v514
      %516 = vmatmul.bf16.gmra.mxu0 %v433
      %v517 = vpop.f32.mrf.mxu0
      %v518 = vadd.f32 %v313, %v517
      %v519 = vpop.f32.mrf.mxu0
      %v520 = vadd.f32 %v313, %v519
      %521 = vmatmul.bf16.gmra.mxu0 %v436
      %v522 = vpop.f32.mrf.mxu0
      %v523 = vadd.f32 %v313, %v522
      %v524 = vpop.f32.mrf.mxu0
      %v525 = vadd.f32 %v313, %v524
      %526 = vmatmul.bf16.gmra.mxu0 %v439
      %v527 = vpop.f32.mrf.mxu0
      %v528 = vadd.f32 %v313, %v527
      %v529 = vpop.f32.mrf.mxu0
      %v530 = vadd.f32 %v313, %v529
      %531 = vmatmul.bf16.gmra.mxu0 %v442
      %v532 = vpop.f32.mrf.mxu0
      %v533 = vadd.f32 %v313, %v532
      %v534 = vpop.f32.mrf.mxu0
      %v535 = vadd.f32 %v313, %v534
      %536 = vdwg.mxu0
      %v537 = vld [vmem:[%s269] sm:$0xf]
      %v538 = vld [vmem:[%s269 + $0x4] sm:$0xf]
      %v539 = vld [vmem:[%s269 + $0x8] sm:$0xf]
      %v540 = vld [vmem:[%s269 + $0xc] sm:$0xf]
      %v541 = vld [vmem:[%s269 + $0x10] sm:$0xf]
      %v542 = vld [vmem:[%s269 + $0x14] sm:$0xf]
      %v543 = vld [vmem:[%s269 + $0x18] sm:$0xf]
      %v544 = vld [vmem:[%s269 + $0x1c] sm:$0xf]
      %v545 = vld [vmem:[%s269 + $0x20] sm:$0xf]
      %v546 = vld [vmem:[%s269 + $0x24] sm:$0xf]
      %v547 = vld [vmem:[%s269 + $0x28] sm:$0xf]
      %v548 = vld [vmem:[%s269 + $0x2c] sm:$0xf]
      %v549 = vld [vmem:[%s269 + $0x30] sm:$0xf]
      %v550 = vld [vmem:[%s269 + $0x34] sm:$0xf]
      %v551 = vld [vmem:[%s269 + $0x38] sm:$0xf]
      %v552 = vld [vmem:[%s269 + $0x3c] sm:$0xf]
      %v553 = vld [vmem:[%s269 + $0x40] sm:$0xf]
      %v554 = vld [vmem:[%s269 + $0x44] sm:$0xf]
      %v555 = vld [vmem:[%s269 + $0x48] sm:$0xf]
      %v556 = vld [vmem:[%s269 + $0x4c] sm:$0xf]
      %v557 = vld [vmem:[%s269 + $0x50] sm:$0xf]
      %v558 = vld [vmem:[%s269 + $0x54] sm:$0xf]
      %v559 = vld [vmem:[%s269 + $0x58] sm:$0xf]
      %v560 = vld [vmem:[%s269 + $0x5c] sm:$0xf]
      %v561 = vld [vmem:[%s269 + $0x60] sm:$0xf]
      %v562 = vld [vmem:[%s269 + $0x64] sm:$0xf]
      %v563 = vld [vmem:[%s269 + $0x68] sm:$0xf]
      %v564 = vld [vmem:[%s269 + $0x6c] sm:$0xf]
      %v565 = vld [vmem:[%s269 + $0x70] sm:$0xf]
      %v566 = vld [vmem:[%s269 + $0x74] sm:$0xf]
      %v567 = vld [vmem:[%s269 + $0x78] sm:$0xf]
      %v568 = vld [vmem:[%s269 + $0x7c] sm:$0xf]
      %v569 = vld [vmem:[%s4] sm:$0x3]
      %v570 = vld [vmem:[%s5] sm:$0x1]
      %v572 = vperm.slane %v570, 0
      %v606 = vunpack.c.l.b16 %v537
      %v607 = vunpack.c.l.b16 %v538
      %v608 = vunpack.c.l.b16 %v539
      %v609 = vunpack.c.l.b16 %v540
      %v610 = vunpack.c.l.b16 %v541
      %v611 = vunpack.c.l.b16 %v542
      %v612 = vunpack.c.l.b16 %v543
      %v613 = vunpack.c.l.b16 %v544
      %v614 = vunpack.c.l.b16 %v545
      %v615 = vunpack.c.l.b16 %v546
      %v616 = vunpack.c.l.b16 %v547
      %v617 = vunpack.c.l.b16 %v548
      %v618 = vunpack.c.l.b16 %v549
      %v619 = vunpack.c.l.b16 %v550
      %v620 = vunpack.c.l.b16 %v551
      %v621 = vunpack.c.l.b16 %v552
      %v622 = vunpack.c.l.b16 %v553
      %v623 = vunpack.c.l.b16 %v554
      %v624 = vunpack.c.l.b16 %v555
      %v625 = vunpack.c.l.b16 %v556
      %v626 = vunpack.c.l.b16 %v557
      %v627 = vunpack.c.l.b16 %v558
      %v628 = vunpack.c.l.b16 %v559
      %v629 = vunpack.c.l.b16 %v560
      %v630 = vunpack.c.l.b16 %v561
      %v631 = vunpack.c.l.b16 %v562
      %v632 = vunpack.c.l.b16 %v563
      %v633 = vunpack.c.l.b16 %v564
      %v634 = vunpack.c.l.b16 %v565
      %v635 = vunpack.c.l.b16 %v566
      %v636 = vunpack.c.l.b16 %v567
      %v637 = vunpack.c.l.b16 %v568
      %v638 = vpack.c.b16 %v607, %v606
      %v639 = vpack.c.b16 %v609, %v608
      %v640 = vpack.c.b16 %v611, %v610
      %v641 = vpack.c.b16 %v613, %v612
      %v642 = vpack.c.b16 %v615, %v614
      %v643 = vpack.c.b16 %v617, %v616
      %v644 = vpack.c.b16 %v619, %v618
      %v645 = vpack.c.b16 %v621, %v620
      %v646 = vpack.c.b16 %v623, %v622
      %v647 = vpack.c.b16 %v625, %v624
      %v648 = vpack.c.b16 %v627, %v626
      %v649 = vpack.c.b16 %v629, %v628
      %v650 = vpack.c.b16 %v631, %v630
      %v651 = vpack.c.b16 %v633, %v632
      %v652 = vpack.c.b16 %v635, %v634
      %v653 = vpack.c.b16 %v637, %v636
      %v655 = vsel %vm395, %v638, 0
      %v658 = vsel %vm395, %v639, 0
      %v661 = vsel %vm395, %v640, 0
      %v664 = vsel %vm395, %v641, 0
      %v667 = vsel %vm395, %v642, 0
      %v670 = vsel %vm395, %v643, 0
      %v673 = vsel %vm395, %v644, 0
      %v676 = vsel %vm395, %v645, 0
      %v679 = vsel %vm395, %v646, 0
      %v682 = vsel %vm395, %v647, 0
      %v685 = vsel %vm395, %v648, 0
      %v688 = vsel %vm395, %v649, 0
      %v691 = vsel %vm395, %v650, 0
      %v694 = vsel %vm395, %v651, 0
      %v697 = vsel %vm395, %v652, 0
      %v700 = vsel %vm395, %v653, 0
      %v703 = vsel %vm444, %v569, 0
      %705 = vmatpush.bf16.msra.mxu0 0
      %706 = vmatpush.bf16.msra.mxu0 0
      %707 = vmatpush.bf16.msra.mxu0 0
      %708 = vmatpush.bf16.msra.mxu0 0
      %709 = vmatpush.bf16.msra.mxu0 0
      %710 = vmatpush.bf16.msra.mxu0 0
      %711 = vmatpush.bf16.msra.mxu0 0
      %712 = vmatpush.bf16.msra.mxu0 %v703
      %713 = vmatmul.bf16.gmra.mxu0 %v655
      %v714 = vpop.f32.mrf.mxu0
      %v715 = vadd.f32 %v572, %v714
      %v716 = vpop.f32.mrf.mxu0
      %v717 = vadd.f32 %v572, %v716
      %718 = vmatmul.bf16.gmra.mxu0 %v658
      %v719 = vpop.f32.mrf.mxu0
      %v720 = vadd.f32 %v572, %v719
      %v721 = vpop.f32.mrf.mxu0
      %v722 = vadd.f32 %v572, %v721
      %723 = vmatmul.bf16.gmra.mxu0 %v661
      %v724 = vpop.f32.mrf.mxu0
      %v725 = vadd.f32 %v572, %v724
      %v726 = vpop.f32.mrf.mxu0
      %v727 = vadd.f32 %v572, %v726
      %728 = vmatmul.bf16.gmra.mxu0 %v664
      %v729 = vpop.f32.mrf.mxu0
      %v730 = vadd.f32 %v572, %v729
      %v731 = vpop.f32.mrf.mxu0
      %v732 = vadd.f32 %v572, %v731
      %733 = vmatmul.bf16.gmra.mxu0 %v667
      %v734 = vpop.f32.mrf.mxu0
      %v735 = vadd.f32 %v572, %v734
      %v736 = vpop.f32.mrf.mxu0
      %v737 = vadd.f32 %v572, %v736
      %738 = vmatmul.bf16.gmra.mxu0 %v670
      %v739 = vpop.f32.mrf.mxu0
      %v740 = vadd.f32 %v572, %v739
      %v741 = vpop.f32.mrf.mxu0
      %v742 = vadd.f32 %v572, %v741
      %743 = vmatmul.bf16.gmra.mxu0 %v673
      %v744 = vpop.f32.mrf.mxu0
      %v745 = vadd.f32 %v572, %v744
      %v746 = vpop.f32.mrf.mxu0
      %v747 = vadd.f32 %v572, %v746
      %748 = vmatmul.bf16.gmra.mxu0 %v676
      %v749 = vpop.f32.mrf.mxu0
      %v750 = vadd.f32 %v572, %v749
      %v751 = vpop.f32.mrf.mxu0
      %v752 = vadd.f32 %v572, %v751
      %753 = vmatmul.bf16.gmra.mxu0 %v679
      %v754 = vpop.f32.mrf.mxu0
      %v755 = vadd.f32 %v572, %v754
      %v756 = vpop.f32.mrf.mxu0
      %v757 = vadd.f32 %v572, %v756
      %758 = vmatmul.bf16.gmra.mxu0 %v682
      %v759 = vpop.f32.mrf.mxu0
      %v760 = vadd.f32 %v572, %v759
      %v761 = vpop.f32.mrf.mxu0
      %v762 = vadd.f32 %v572, %v761
      %763 = vmatmul.bf16.gmra.mxu0 %v685
      %v764 = vpop.f32.mrf.mxu0
      %v765 = vadd.f32 %v572, %v764
      %v766 = vpop.f32.mrf.mxu0
      %v767 = vadd.f32 %v572, %v766
      %768 = vmatmul.bf16.gmra.mxu0 %v688
      %v769 = vpop.f32.mrf.mxu0
      %v770 = vadd.f32 %v572, %v769
      %v771 = vpop.f32.mrf.mxu0
      %v772 = vadd.f32 %v572, %v771
      %773 = vmatmul.bf16.gmra.mxu0 %v691
      %v774 = vpop.f32.mrf.mxu0
      %v775 = vadd.f32 %v572, %v774
      %v776 = vpop.f32.mrf.mxu0
      %v777 = vadd.f32 %v572, %v776
      %778 = vmatmul.bf16.gmra.mxu0 %v694
      %v779 = vpop.f32.mrf.mxu0
      %v780 = vadd.f32 %v572, %v779
      %v781 = vpop.f32.mrf.mxu0
      %v782 = vadd.f32 %v572, %v781
      %783 = vmatmul.bf16.gmra.mxu0 %v697
      %v784 = vpop.f32.mrf.mxu0
      %v785 = vadd.f32 %v572, %v784
      %v786 = vpop.f32.mrf.mxu0
      %v787 = vadd.f32 %v572, %v786
      %788 = vmatmul.bf16.gmra.mxu0 %v700
      %v789 = vpop.f32.mrf.mxu0
      %v790 = vadd.f32 %v572, %v789
      %v791 = vpop.f32.mrf.mxu0
      %v792 = vadd.f32 %v572, %v791
      %793 = vdwg.mxu0
      %v794 = vadd.f32 %v458, %v715
      %v795 = vadd.f32 %v460, %v717
      %v796 = vadd.f32 %v463, %v720
      %v797 = vadd.f32 %v465, %v722
      %v798 = vadd.f32 %v468, %v725
      %v799 = vadd.f32 %v470, %v727
      %v800 = vadd.f32 %v473, %v730
      %v801 = vadd.f32 %v475, %v732
      %v802 = vadd.f32 %v478, %v735
      %v803 = vadd.f32 %v480, %v737
      %v804 = vadd.f32 %v483, %v740
      %v805 = vadd.f32 %v485, %v742
      %v806 = vadd.f32 %v488, %v745
      %v807 = vadd.f32 %v490, %v747
      %v808 = vadd.f32 %v493, %v750
      %v809 = vadd.f32 %v495, %v752
      %v810 = vadd.f32 %v498, %v755
      %v811 = vadd.f32 %v500, %v757
      %v812 = vadd.f32 %v503, %v760
      %v813 = vadd.f32 %v505, %v762
      %v814 = vadd.f32 %v508, %v765
      %v815 = vadd.f32 %v510, %v767
      %v816 = vadd.f32 %v513, %v770
      %v817 = vadd.f32 %v515, %v772
      %v818 = vadd.f32 %v518, %v775
      %v819 = vadd.f32 %v520, %v777
      %v820 = vadd.f32 %v523, %v780
      %v821 = vadd.f32 %v525, %v782
      %v822 = vadd.f32 %v528, %v785
      %v823 = vadd.f32 %v530, %v787
      %v824 = vadd.f32 %v533, %v790
      %v825 = vadd.f32 %v535, %v792
      %vm826 = vcmp.gt.f32.partialorder %v794, 0.0
      %vm827 = vcmp.gt.f32.partialorder %v795, 0.0
      %vm828 = vcmp.gt.f32.partialorder %v796, 0.0
      %vm829 = vcmp.gt.f32.partialorder %v797, 0.0
      %vm830 = vcmp.gt.f32.partialorder %v798, 0.0
      %vm831 = vcmp.gt.f32.partialorder %v799, 0.0
      %vm832 = vcmp.gt.f32.partialorder %v800, 0.0
      %vm833 = vcmp.gt.f32.partialorder %v801, 0.0
      %vm834 = vcmp.gt.f32.partialorder %v802, 0.0
      %vm835 = vcmp.gt.f32.partialorder %v803, 0.0
      %vm836 = vcmp.gt.f32.partialorder %v804, 0.0
      %vm837 = vcmp.gt.f32.partialorder %v805, 0.0
      %vm838 = vcmp.gt.f32.partialorder %v806, 0.0
      %vm839 = vcmp.gt.f32.partialorder %v807, 0.0
      %vm840 = vcmp.gt.f32.partialorder %v808, 0.0
      %vm841 = vcmp.gt.f32.partialorder %v809, 0.0
      %vm842 = vcmp.gt.f32.partialorder %v810, 0.0
      %vm843 = vcmp.gt.f32.partialorder %v811, 0.0
      %vm844 = vcmp.gt.f32.partialorder %v812, 0.0
      %vm845 = vcmp.gt.f32.partialorder %v813, 0.0
      %vm846 = vcmp.gt.f32.partialorder %v814, 0.0
      %vm847 = vcmp.gt.f32.partialorder %v815, 0.0
      %vm848 = vcmp.gt.f32.partialorder %v816, 0.0
      %vm849 = vcmp.gt.f32.partialorder %v817, 0.0
      %vm850 = vcmp.gt.f32.partialorder %v818, 0.0
      %vm851 = vcmp.gt.f32.partialorder %v819, 0.0
      %vm852 = vcmp.gt.f32.partialorder %v820, 0.0
      %vm853 = vcmp.gt.f32.partialorder %v821, 0.0
      %vm854 = vcmp.gt.f32.partialorder %v822, 0.0
      %vm855 = vcmp.gt.f32.partialorder %v823, 0.0
      %vm856 = vcmp.gt.f32.partialorder %v824, 0.0
      %vm857 = vcmp.gt.f32.partialorder %v825, 0.0
      %v858 = vmul.f32 %v794, 0.3
      %v859 = vmul.f32 %v795, 0.3
      %v860 = vmul.f32 %v796, 0.3
      %v861 = vmul.f32 %v797, 0.3
      %v862 = vmul.f32 %v798, 0.3
      %v863 = vmul.f32 %v799, 0.3
      %v864 = vmul.f32 %v800, 0.3
      %v865 = vmul.f32 %v801, 0.3
      %v866 = vmul.f32 %v802, 0.3
      %v867 = vmul.f32 %v803, 0.3
      %v868 = vmul.f32 %v804, 0.3
      %v869 = vmul.f32 %v805, 0.3
      %v870 = vmul.f32 %v806, 0.3
      %v871 = vmul.f32 %v807, 0.3
      %v872 = vmul.f32 %v808, 0.3
      %v873 = vmul.f32 %v809, 0.3
      %v874 = vmul.f32 %v810, 0.3
      %v875 = vmul.f32 %v811, 0.3
      %v876 = vmul.f32 %v812, 0.3
      %v877 = vmul.f32 %v813, 0.3
      %v878 = vmul.f32 %v814, 0.3
      %v879 = vmul.f32 %v815, 0.3
      %v880 = vmul.f32 %v816, 0.3
      %v881 = vmul.f32 %v817, 0.3
      %v882 = vmul.f32 %v818, 0.3
      %v883 = vmul.f32 %v819, 0.3
      %v884 = vmul.f32 %v820, 0.3
      %v885 = vmul.f32 %v821, 0.3
      %v886 = vmul.f32 %v822, 0.3
      %v887 = vmul.f32 %v823, 0.3
      %v888 = vmul.f32 %v824, 0.3
      %v889 = vmul.f32 %v825, 0.3
      %v890 = vsel %vm826, %v794, %v858
      %v891 = vsel %vm827, %v795, %v859
      %v892 = vsel %vm828, %v796, %v860
      %v893 = vsel %vm829, %v797, %v861
      %v894 = vsel %vm830, %v798, %v862
      %v895 = vsel %vm831, %v799, %v863
      %v896 = vsel %vm832, %v800, %v864
      %v897 = vsel %vm833, %v801, %v865
      %v898 = vsel %vm834, %v802, %v866
      %v899 = vsel %vm835, %v803, %v867
      %v900 = vsel %vm836, %v804, %v868
      %v901 = vsel %vm837, %v805, %v869
      %v902 = vsel %vm838, %v806, %v870
      %v903 = vsel %vm839, %v807, %v871
      %v904 = vsel %vm840, %v808, %v872
      %v905 = vsel %vm841, %v809, %v873
      %v906 = vsel %vm842, %v810, %v874
      %v907 = vsel %vm843, %v811, %v875
      %v908 = vsel %vm844, %v812, %v876
      %v909 = vsel %vm845, %v813, %v877
      %v910 = vsel %vm846, %v814, %v878
      %v911 = vsel %vm847, %v815, %v879
      %v912 = vsel %vm848, %v816, %v880
      %v913 = vsel %vm849, %v817, %v881
      %v914 = vsel %vm850, %v818, %v882
      %v915 = vsel %vm851, %v819, %v883
      %v916 = vsel %vm852, %v820, %v884
      %v917 = vsel %vm853, %v821, %v885
      %v918 = vsel %vm854, %v822, %v886
      %v919 = vsel %vm855, %v823, %v887
      %v920 = vsel %vm856, %v824, %v888
      %v921 = vsel %vm857, %v825, %v889
      %vm922 = vcmask 64512
      %923 = vst.msk [vmem:[%s275] sm:$0xff] %vm922, %v890
      %924 = vst.msk [vmem:[%s275 + $0x8] sm:$0xff] %vm922, %v891
      %925 = vst.msk [vmem:[%s275 + $0x10] sm:$0xff] %vm922, %v892
      %926 = vst.msk [vmem:[%s275 + $0x18] sm:$0xff] %vm922, %v893
      %927 = vst.msk [vmem:[%s275 + $0x20] sm:$0xff] %vm922, %v894
      %928 = vst.msk [vmem:[%s275 + $0x28] sm:$0xff] %vm922, %v895
      %929 = vst.msk [vmem:[%s275 + $0x30] sm:$0xff] %vm922, %v896
      %930 = vst.msk [vmem:[%s275 + $0x38] sm:$0xff] %vm922, %v897
      %931 = vst.msk [vmem:[%s275 + $0x40] sm:$0xff] %vm922, %v898
      %932 = vst.msk [vmem:[%s275 + $0x48] sm:$0xff] %vm922, %v899
      %933 = vst.msk [vmem:[%s275 + $0x50] sm:$0xff] %vm922, %v900
      %934 = vst.msk [vmem:[%s275 + $0x58] sm:$0xff] %vm922, %v901
      %935 = vst.msk [vmem:[%s275 + $0x60] sm:$0xff] %vm922, %v902
      %936 = vst.msk [vmem:[%s275 + $0x68] sm:$0xff] %vm922, %v903
      %937 = vst.msk [vmem:[%s275 + $0x70] sm:$0xff] %vm922, %v904
      %938 = vst.msk [vmem:[%s275 + $0x78] sm:$0xff] %vm922, %v905
      %939 = vst.msk [vmem:[%s275 + $0x80] sm:$0xff] %vm922, %v906
      %940 = vst.msk [vmem:[%s275 + $0x88] sm:$0xff] %vm922, %v907
      %941 = vst.msk [vmem:[%s275 + $0x90] sm:$0xff] %vm922, %v908
      %942 = vst.msk [vmem:[%s275 + $0x98] sm:$0xff] %vm922, %v909
      %943 = vst.msk [vmem:[%s275 + $0xa0] sm:$0xff] %vm922, %v910
      %944 = vst.msk [vmem:[%s275 + $0xa8] sm:$0xff] %vm922, %v911
      %945 = vst.msk [vmem:[%s275 + $0xb0] sm:$0xff] %vm922, %v912
      %946 = vst.msk [vmem:[%s275 + $0xb8] sm:$0xff] %vm922, %v913
      %947 = vst.msk [vmem:[%s275 + $0xc0] sm:$0xff] %vm922, %v914
      %948 = vst.msk [vmem:[%s275 + $0xc8] sm:$0xff] %vm922, %v915
      %949 = vst.msk [vmem:[%s275 + $0xd0] sm:$0xff] %vm922, %v916
      %950 = vst.msk [vmem:[%s275 + $0xd8] sm:$0xff] %vm922, %v917
      %951 = vst.msk [vmem:[%s275 + $0xe0] sm:$0xff] %vm922, %v918
      %952 = vst.msk [vmem:[%s275 + $0xe8] sm:$0xff] %vm922, %v919
      %953 = vst.msk [vmem:[%s275 + $0xf0] sm:$0xff] %vm922, %v920
      %954 = vst.msk [vmem:[%s275 + $0xf8] sm:$0xff] %vm922, %v921
      %s955 = smul.u32 32, %s17
      %p956 = scmp.lt.s32.totalorder %s955, 63
      %s957 = scalar_select %p956, %s955, 63
      %s958 = smul.addr %s957, 8
      %s959 = scalar_lea.vmem %s6, %s958
      // Predicated region
      $region45: #{bottleneck_forward.5} parent=43 // pred_check
        %p960 = pneg %p171
      $region46: #{bottleneck_forward.5} parent=43 // pred_check_branch
        %962 = sbr.rel (%p960) target = $region48
      $region47: #{bottleneck_forward.5} parent=43 // pred_region
        %s963 = smul.u32 32, %s17
      $region48: #{bottleneck_forward.5} parent=43 // pred_fallthru
        _
    $region44: #{bottleneck_forward.5} parent=5 // pred_fallthru
      _
    %p964 = scmp.le.s32.totalorder 2, %s12
    // Predicated region
    $region49: #{bottleneck_forward.5} parent=5 // pred_check
      %p965 = pneg %p964
    $region50: #{bottleneck_forward.5} parent=5 // pred_check_branch
      %967 = sbr.rel (%p965) target = $region52
    $region51: #{bottleneck_forward.5} parent=5 // pred_region
      %s968 = ssub.s32 %s12, 2
      // Predicated region
      $region53: #{bottleneck_forward.5} parent=51 // pred_check
        %p969 = pneg %p177
      $region54: #{bottleneck_forward.5} parent=51 // pred_check_branch
        %971 = sbr.rel (%p969) target = $region56
      $region55: #{bottleneck_forward.5} parent=51 // pred_region
        %s972 = smul.u32 32, %s18
        %p973 = scmp.lt.s32.totalorder %s972, 63
        %s974 = scalar_select %p973, %s972, 63
        %s975 = smul.addr %s974, 8
        %s976 = scalar_lea.vmem %s6, %s975
      $region56: #{bottleneck_forward.5} parent=51 // pred_fallthru
        _
    $region52: #{bottleneck_forward.5} parent=5 // pred_fallthru
      _
  $region6: #{bottleneck_forward.5} parent=0 // loop_footer
    %s16 = sadd.s32 1, %s12
  $region7: #{bottleneck_forward.5} parent=0 // loop_footer_branch
    %11 = sbr.rel target = $region3
  $region8: #{bottleneck_forward.5} parent=0 // loop_exit
    _

// kernel: bottleneck_forward.4
$region0: #{bottleneck_forward.4}
  #allocation0 [shape = 'u32[]', space=smem, size = 0x4, offset = 0x4, fixed_abs, tag = 'smem constant byte address 0x4 - core index']
  #allocation1 [shape = 'u32[72,128]{1,0:T(1,128)}', space=vmem, size = 0x9000, scoped, tag = 'internal scratch']
  #allocation2 [shape = 'f32[384,4]{1,0:T(8,128)}', space=vmem, size = 0x30000, scoped, tag = 'scratch operand']
  %s0 = inlined_call_operand.vmem [shape: bf16[2,456,4], index: 0, kind: input, shape index: {}]
  %s1 = inlined_call_operand.vmem [shape: bf16[9,4,4], index: 1, kind: input, shape index: {}]
  %s2 = inlined_call_operand.vmem [shape: f32[1,4], index: 2, kind: input, shape index: {}]
  %s3 = inlined_call_operand.vmem [shape: bf16[2,16,16,4], index: 3, kind: output, shape index: {}]
  %s4 = sld [smem:[#allocation0]]
  $region45: #{bottleneck_forward.4} parent=0
    _
  %s6 = ssub.s32 1, %s4
  %s7 = scalar_select 0, %s6, %s4
  loop: start=0, step=1, limit=4
  $region2: #{bottleneck_forward.4} parent=0 // loop_pre_header
    _
  $region3: #{bottleneck_forward.4} parent=0 // loop_header
    %s9 = sphi 0, %s13
    %p10 = scmp.ge.s32.totalorder %s9, 4
    %s19 = sphi 0, %s21
    %s22 = sphi 0, %s19
    %s23 = sphi 0, %s22
    %s39 = sphi 0, %s23
    %s43 = sphi 0, %s43
    %s45 = sphi 0, %s43
    %s46 = sphi 0, %s45
    %s60 = sphi 0, %s46
    %s64 = sphi 0, %s64
    %s66 = sphi 0, %s64
    %s67 = sphi 0, %s66
    %s81 = sphi 0, %s67
    %s87 = sphi 0, %s89
    %s90 = sphi 0, %s87
    %s91 = sphi 0, %s90
    %s107 = sphi 0, %s91
  $region4: #{bottleneck_forward.4} parent=0 // loop_header_branch
    %12 = sbr.rel (%p10) target = $region8
  $region5: #{bottleneck_forward.4} parent=0 // loop_body
    %s14 = ssub.s32 %s9, 1
    %s15 = ssub.s32 %s9, 2
    %s16 = sadd.s32 %s9, 1
    %s17 = ssub.s32 %s9, %s16
    %p18 = scmp.eq.s32.totalorder %s17, 0
    %s20 = sadd.s32 %s19, 1
    %s21 = scalar_select %p18, %s19, %s20
    %p24 = pneg %p18
    %p25 = scmp.eq.s32.totalorder %s9, 1
    %p26 = por %p24, %p25
    %p27 = scmp.ne.s32.totalorder %s19, %s22
    %p28 = scmp.eq.s32.totalorder %s9, 0
    %p29 = por %p27, %p28
    %p30 = scmp.ne.s32.totalorder %s19, %s22
    %p31 = scmp.eq.s32.totalorder %s14, 1
    %p32 = por %p30, %p31
    %p33 = scmp.ne.s32.totalorder %s22, %s23
    %p34 = scmp.eq.s32.totalorder %s14, 0
    %p35 = por %p33, %p34
    %p36 = scmp.ne.s32.totalorder %s22, %s23
    %p37 = scmp.eq.s32.totalorder %s15, 1
    %p38 = por %p36, %p37
    %p40 = scmp.ne.s32.totalorder %s23, %s39
    %p41 = scmp.eq.s32.totalorder %s15, 0
    %p42 = por %p40, %p41
    %s44 = sadd.s32 %s43, 1
    %p47 = scmp.eq.s32.totalorder %s9, 1
    %p48 = scmp.ne.s32.totalorder %s43, %s45
    %p49 = scmp.eq.s32.totalorder %s9, 0
    %p50 = por %p48, %p49
    %p51 = scmp.ne.s32.totalorder %s43, %s45
    %p52 = scmp.eq.s32.totalorder %s14, 1
    %p53 = por %p51, %p52
    %p54 = scmp.ne.s32.totalorder %s45, %s46
    %p55 = scmp.eq.s32.totalorder %s14, 0
    %p56 = por %p54, %p55
    %p57 = scmp.ne.s32.totalorder %s45, %s46
    %p58 = scmp.eq.s32.totalorder %s15, 1
    %p59 = por %p57, %p58
    %p61 = scmp.ne.s32.totalorder %s46, %s60
    %p62 = scmp.eq.s32.totalorder %s15, 0
    %p63 = por %p61, %p62
    %s65 = sadd.s32 %s64, 1
    %p68 = scmp.eq.s32.totalorder %s9, 1
    %p69 = scmp.ne.s32.totalorder %s64, %s66
    %p70 = scmp.eq.s32.totalorder %s9, 0
    %p71 = por %p69, %p70
    %p72 = scmp.ne.s32.totalorder %s64, %s66
    %p73 = scmp.eq.s32.totalorder %s14, 1
    %p74 = por %p72, %p73
    %p75 = scmp.ne.s32.totalorder %s66, %s67
    %p76 = scmp.eq.s32.totalorder %s14, 0
    %p77 = por %p75, %p76
    %p78 = scmp.ne.s32.totalorder %s66, %s67
    %p79 = scmp.eq.s32.totalorder %s15, 1
    %p80 = por %p78, %p79
    %p82 = scmp.ne.s32.totalorder %s67, %s81
    %p83 = scmp.eq.s32.totalorder %s15, 0
    %p84 = por %p82, %p83
    %s85 = ssub.s32 %s9, %s16
    %p86 = scmp.eq.s32.totalorder %s85, 0
    %s88 = sadd.s32 %s87, 1
    %s89 = scalar_select %p86, %s87, %s88
    %p92 = pneg %p86
    %p93 = scmp.eq.s32.totalorder %s9, 1
    %p94 = por %p92, %p93
    %p95 = scmp.ne.s32.totalorder %s87, %s90
    %p96 = scmp.eq.s32.totalorder %s9, 0
    %p97 = por %p95, %p96
    %p98 = scmp.ne.s32.totalorder %s87, %s90
    %p99 = scmp.eq.s32.totalorder %s14, 1
    %p100 = por %p98, %p99
    %p101 = scmp.ne.s32.totalorder %s90, %s91
    %p102 = scmp.eq.s32.totalorder %s14, 0
    %p103 = por %p101, %p102
    %p104 = scmp.ne.s32.totalorder %s90, %s91
    %p105 = scmp.eq.s32.totalorder %s15, 1
    %p106 = por %p104, %p105
    %p108 = scmp.ne.s32.totalorder %s91, %s107
    %p109 = scmp.eq.s32.totalorder %s15, 0
    %p110 = por %p108, %p109
    %p111 = scmp.le.s32.totalorder 1, %s9
    %p112 = scmp.lt.s32.totalorder %s9, 3
    %p113 = pnand %p111, %p112
    %p114 = pneg %p113
    // Predicated region
    $region9: #{bottleneck_forward.4} parent=5 // pred_check
      _
    $region10: #{bottleneck_forward.4} parent=5 // pred_check_branch
      %116 = sbr.rel (%p113) target = $region12
    $region11: #{bottleneck_forward.4} parent=5 // pred_region
      %s117 = ssub.s32 %s9, 1
      // Predicated region
      $region13: #{bottleneck_forward.4} parent=11 // pred_check
        %p118 = pneg %p56
      $region14: #{bottleneck_forward.4} parent=11 // pred_check_branch
        %120 = sbr.rel (%p118) target = $region16
      $region15: #{bottleneck_forward.4} parent=11 // pred_region
        _
      $region16: #{bottleneck_forward.4} parent=11 // pred_fallthru
        _
      // Predicated region
      $region17: #{bottleneck_forward.4} parent=11 // pred_check
        %p121 = pneg %p77
      $region18: #{bottleneck_forward.4} parent=11 // pred_check_branch
        %123 = sbr.rel (%p121) target = $region20
      $region19: #{bottleneck_forward.4} parent=11 // pred_region
        _
      $region20: #{bottleneck_forward.4} parent=11 // pred_fallthru
        _
    $region12: #{bottleneck_forward.4} parent=5 // pred_fallthru
      _
    %p124 = scmp.lt.s32.totalorder %s9, 2
    // Predicated region
    $region21: #{bottleneck_forward.4} parent=5 // pred_check
      %p125 = pneg %p124
    $region22: #{bottleneck_forward.4} parent=5 // pred_check_branch
      %127 = sbr.rel (%p125) target = $region24
    $region23: #{bottleneck_forward.4} parent=5 // pred_region
      // Predicated region
      $region25: #{bottleneck_forward.4} parent=23 // pred_check
        %p128 = pneg %p29
      $region26: #{bottleneck_forward.4} parent=23 // pred_check_branch
        %130 = sbr.rel (%p128) target = $region28
      $region27: #{bottleneck_forward.4} parent=23 // pred_region
        %p131 = scmp.lt.s32.totalorder %s9, 1
        %s132 = scalar_select %p131, %s9, 1
        %s133 = smul.addr %s132, 57
        %s134 = smul.addr %s133, 4
        %s135 = scalar_lea.vmem %s0, %s134
      $region28: #{bottleneck_forward.4} parent=23 // pred_fallthru
        _
    $region24: #{bottleneck_forward.4} parent=5 // pred_fallthru
      _
    %p136 = scmp.le.s32.totalorder 1, %s9
    %p137 = scmp.lt.s32.totalorder %s9, 3
    %p138 = pnand %p136, %p137
    %p139 = pneg %p138
    // Predicated region
    $region29: #{bottleneck_forward.4} parent=5 // pred_check
      _
    $region30: #{bottleneck_forward.4} parent=5 // pred_check_branch
      %141 = sbr.rel (%p138) target = $region32
    $region31: #{bottleneck_forward.4} parent=5 // pred_region
      %s142 = ssub.s32 %s9, 1
      %p143 = scmp.lt.s32.totalorder %s14, 1
      %s144 = scalar_select %p143, %s14, 1
      %s145 = smul.addr %s144, 57
      %s146 = smul.addr %s145, 4
      %s147 = scalar_lea.vmem %s0, %s146
      %p148 = pneg %p35
      %p149 = pneg %p32
      %p150 = pneg %p56
      %p151 = pneg %p53
      %p152 = pneg %p77
      %p153 = pneg %p74
      %p154 = pneg %p103
      %p155 = pneg %p100
      %p156 = scmp.lt.s32.totalorder %s14, 1
      %s157 = scalar_select %p156, %s14, 1
      %s158 = smul.addr %s157, 32
      %s159 = smul.addr %s158, 4
      %s160 = scalar_lea.vmem %s3, %s159
      %p161 = scmp.lt.s32.totalorder %s14, 1
      %s162 = scalar_select %p161, %s14, 1
      %s163 = smul.addr %s162, 57
      %s164 = smul.addr %s163, 4
      %s165 = scalar_lea.vmem %s0, %s164
      %p166 = scmp.lt.s32.totalorder %s14, 1
      %s167 = scalar_select %p166, %s14, 1
      %s168 = smul.addr %s167, 32
      %s169 = smul.addr %s168, 4
      %s170 = scalar_lea.vmem %s3, %s169
      %vm172 = vcmask 31744
      %173 = vst.msk [vmem:[#allocation2] sm:$0xff] %vm172, 0.0
      %174 = vst.msk [vmem:[#allocation2 + $0x8] sm:$0xff] %vm172, 0.0
      %175 = vst.msk [vmem:[#allocation2 + $0x10] sm:$0xff] %vm172, 0.0
      %176 = vst.msk [vmem:[#allocation2 + $0x18] sm:$0xff] %vm172, 0.0
      %177 = vst.msk [vmem:[#allocation2 + $0x20] sm:$0xff] %vm172, 0.0
      %178 = vst.msk [vmem:[#allocation2 + $0x28] sm:$0xff] %vm172, 0.0
      %179 = vst.msk [vmem:[#allocation2 + $0x30] sm:$0xff] %vm172, 0.0
      %180 = vst.msk [vmem:[#allocation2 + $0x38] sm:$0xff] %vm172, 0.0
      %181 = vst.msk [vmem:[#allocation2 + $0x40] sm:$0xff] %vm172, 0.0
      %182 = vst.msk [vmem:[#allocation2 + $0x48] sm:$0xff] %vm172, 0.0
      %183 = vst.msk [vmem:[#allocation2 + $0x50] sm:$0xff] %vm172, 0.0
      %184 = vst.msk [vmem:[#allocation2 + $0x58] sm:$0xff] %vm172, 0.0
      %185 = vst.msk [vmem:[#allocation2 + $0x60] sm:$0xff] %vm172, 0.0
      %186 = vst.msk [vmem:[#allocation2 + $0x68] sm:$0xff] %vm172, 0.0
      %187 = vst.msk [vmem:[#allocation2 + $0x70] sm:$0xff] %vm172, 0.0
      %188 = vst.msk [vmem:[#allocation2 + $0x78] sm:$0xff] %vm172, 0.0
      %189 = vst.msk [vmem:[#allocation2 + $0x80] sm:$0xff] %vm172, 0.0
      %190 = vst.msk [vmem:[#allocation2 + $0x88] sm:$0xff] %vm172, 0.0
      %191 = vst.msk [vmem:[#allocation2 + $0x90] sm:$0xff] %vm172, 0.0
      %192 = vst.msk [vmem:[#allocation2 + $0x98] sm:$0xff] %vm172, 0.0
      %193 = vst.msk [vmem:[#allocation2 + $0xa0] sm:$0xff] %vm172, 0.0
      %194 = vst.msk [vmem:[#allocation2 + $0xa8] sm:$0xff] %vm172, 0.0
      %195 = vst.msk [vmem:[#allocation2 + $0xb0] sm:$0xff] %vm172, 0.0
      %196 = vst.msk [vmem:[#allocation2 + $0xb8] sm:$0xff] %vm172, 0.0
      %197 = vst.msk [vmem:[#allocation2 + $0xc0] sm:$0xff] %vm172, 0.0
      %198 = vst.msk [vmem:[#allocation2 + $0xc8] sm:$0xff] %vm172, 0.0
      %199 = vst.msk [vmem:[#allocation2 + $0xd0] sm:$0xff] %vm172, 0.0
      %200 = vst.msk [vmem:[#allocation2 + $0xd8] sm:$0xff] %vm172, 0.0
      %201 = vst.msk [vmem:[#allocation2 + $0xe0] sm:$0xff] %vm172, 0.0
      %202 = vst.msk [vmem:[#allocation2 + $0xe8] sm:$0xff] %vm172, 0.0
      %203 = vst.msk [vmem:[#allocation2 + $0xf0] sm:$0xff] %vm172, 0.0
      %204 = vst.msk [vmem:[#allocation2 + $0xf8] sm:$0xff] %vm172, 0.0
      %205 = vst.msk [vmem:[#allocation2 + $0x100] sm:$0xff] %vm172, 0.0
      %206 = vst.msk [vmem:[#allocation2 + $0x108] sm:$0xff] %vm172, 0.0
      %207 = vst.msk [vmem:[#allocation2 + $0x110] sm:$0xff] %vm172, 0.0
      %208 = vst.msk [vmem:[#allocation2 + $0x118] sm:$0xff] %vm172, 0.0
      %209 = vst.msk [vmem:[#allocation2 + $0x120] sm:$0xff] %vm172, 0.0
      %210 = vst.msk [vmem:[#allocation2 + $0x128] sm:$0xff] %vm172, 0.0
      %211 = vst.msk [vmem:[#allocation2 + $0x130] sm:$0xff] %vm172, 0.0
      %212 = vst.msk [vmem:[#allocation2 + $0x138] sm:$0xff] %vm172, 0.0
      %213 = vst.msk [vmem:[#allocation2 + $0x140] sm:$0xff] %vm172, 0.0
      %214 = vst.msk [vmem:[#allocation2 + $0x148] sm:$0xff] %vm172, 0.0
      %215 = vst.msk [vmem:[#allocation2 + $0x150] sm:$0xff] %vm172, 0.0
      %216 = vst.msk [vmem:[#allocation2 + $0x158] sm:$0xff] %vm172, 0.0
      %217 = vst.msk [vmem:[#allocation2 + $0x160] sm:$0xff] %vm172, 0.0
      %218 = vst.msk [vmem:[#allocation2 + $0x168] sm:$0xff] %vm172, 0.0
      %219 = vst.msk [vmem:[#allocation2 + $0x170] sm:$0xff] %vm172, 0.0
      %220 = vst.msk [vmem:[#allocation2 + $0x178] sm:$0xff] %vm172, 0.0
      %v221 = vld [vmem:[%s165] sm:$0xf]
      %v222 = vld [vmem:[%s165 + $0x4] sm:$0xf]
      %v223 = vld [vmem:[%s165 + $0x8] sm:$0xf]
      %v224 = vld [vmem:[%s165 + $0xc] sm:$0xf]
      %v225 = vld [vmem:[%s165 + $0x10] sm:$0xf]
      %v226 = vld [vmem:[%s165 + $0x14] sm:$0xf]
      %v227 = vld [vmem:[%s165 + $0x18] sm:$0xf]
      %v228 = vld [vmem:[%s165 + $0x1c] sm:$0xf]
      %v229 = vld [vmem:[%s165 + $0x20] sm:$0xf]
      %v230 = vld [vmem:[%s165 + $0x24] sm:$0xf]
      %v231 = vld [vmem:[%s165 + $0x28] sm:$0xf]
      %v232 = vld [vmem:[%s165 + $0x2c] sm:$0xf]
      %v233 = vld [vmem:[%s165 + $0x30] sm:$0xf]
      %v234 = vld [vmem:[%s165 + $0x34] sm:$0xf]
      %v235 = vld [vmem:[%s165 + $0x38] sm:$0xf]
      %v236 = vld [vmem:[%s165 + $0x3c] sm:$0xf]
      %v237 = vld [vmem:[%s165 + $0x40] sm:$0xf]
      %v238 = vld [vmem:[%s165 + $0x44] sm:$0xf]
      %v239 = vld [vmem:[%s165 + $0x48] sm:$0xf]
      %v240 = vld [vmem:[%s165 + $0x4c] sm:$0xf]
      %v241 = vld [vmem:[%s165 + $0x50] sm:$0xf]
      %v242 = vld [vmem:[%s165 + $0x54] sm:$0xf]
      %v243 = vld [vmem:[%s165 + $0x58] sm:$0xf]
      %v244 = vld [vmem:[%s165 + $0x5c] sm:$0xf]
      %v245 = vld [vmem:[%s165 + $0x60] sm:$0xf]
      %v246 = vld [vmem:[%s165 + $0x64] sm:$0xf]
      %v247 = vld [vmem:[%s165 + $0x68] sm:$0xf]
      %v248 = vld [vmem:[%s165 + $0x6c] sm:$0xf]
      %v249 = vld [vmem:[%s165 + $0x70] sm:$0xf]
      %v250 = vld [vmem:[%s165 + $0x74] sm:$0xf]
      %v251 = vld [vmem:[%s165 + $0x78] sm:$0xf]
      %v252 = vld [vmem:[%s165 + $0x7c] sm:$0xf]
      %v253 = vld [vmem:[%s165 + $0x80] sm:$0xf]
      %v254 = vld [vmem:[%s165 + $0x84] sm:$0xf]
      %v255 = vld [vmem:[%s165 + $0x88] sm:$0xf]
      %v256 = vld [vmem:[%s165 + $0x8c] sm:$0xf]
      %v257 = vld [vmem:[%s165 + $0x90] sm:$0xf]
      %v258 = vld [vmem:[%s165 + $0x94] sm:$0xf]
      %v259 = vld [vmem:[%s165 + $0x98] sm:$0xf]
      %v260 = vld [vmem:[%s165 + $0x9c] sm:$0xf]
      %v261 = vld [vmem:[%s165 + $0xa0] sm:$0xf]
      %v262 = vld [vmem:[%s165 + $0xa4] sm:$0xf]
      %v263 = vld [vmem:[%s165 + $0xa8] sm:$0xf]
      %v264 = vld [vmem:[%s165 + $0xac] sm:$0xf]
      %v265 = vld [vmem:[%s165 + $0xb0] sm:$0xf]
      %v266 = vld [vmem:[%s165 + $0xb4] sm:$0xf]
      %v267 = vld [vmem:[%s165 + $0xb8] sm:$0xf]
      %v268 = vld [vmem:[%s165 + $0xbc] sm:$0xf]
      %v269 = vld [vmem:[#allocation2] sm:$0xff]
      %v270 = vld [vmem:[#allocation2 + $0x8] sm:$0xff]
      %v271 = vld [vmem:[#allocation2 + $0x10] sm:$0xff]
      %v272 = vld [vmem:[#allocation2 + $0x18] sm:$0xff]
      %v273 = vld [vmem:[#allocation2 + $0x20] sm:$0xff]
      %v274 = vld [vmem:[#allocation2 + $0x28] sm:$0xff]
      %v275 = vld [vmem:[#allocation2 + $0x30] sm:$0xff]
      %v276 = vld [vmem:[#allocation2 + $0x38] sm:$0xff]
      %v277 = vld [vmem:[#allocation2 + $0x40] sm:$0xff]
      %v278 = vld [vmem:[#allocation2 + $0x48] sm:$0xff]
      %v279 = vld [vmem:[#allocation2 + $0x50] sm:$0xff]
      %v280 = vld [vmem:[#allocation2 + $0x58] sm:$0xff]
      %v281 = vld [vmem:[#allocation2 + $0x60] sm:$0xff]
      %v282 = vld [vmem:[#allocation2 + $0x68] sm:$0xff]
      %v283 = vld [vmem:[#allocation2 + $0x70] sm:$0xff]
      %v284 = vld [vmem:[#allocation2 + $0x78] sm:$0xff]
      %v285 = vld [vmem:[#allocation2 + $0x80] sm:$0xff]
      %v286 = vld [vmem:[#allocation2 + $0x88] sm:$0xff]
      %v287 = vld [vmem:[#allocation2 + $0x90] sm:$0xff]
      %v288 = vld [vmem:[#allocation2 + $0x98] sm:$0xff]
      %v289 = vld [vmem:[#allocation2 + $0xa0] sm:$0xff]
      %v290 = vld [vmem:[#allocation2 + $0xa8] sm:$0xff]
      %v291 = vld [vmem:[#allocation2 + $0xb0] sm:$0xff]
      %v292 = vld [vmem:[#allocation2 + $0xb8] sm:$0xff]
      %v293 = vld [vmem:[#allocation2 + $0xc0] sm:$0xff]
      %v294 = vld [vmem:[#allocation2 + $0xc8] sm:$0xff]
      %v295 = vld [vmem:[#allocation2 + $0xd0] sm:$0xff]
      %v296 = vld [vmem:[#allocation2 + $0xd8] sm:$0xff]
      %v297 = vld [vmem:[#allocation2 + $0xe0] sm:$0xff]
      %v298 = vld [vmem:[#allocation2 + $0xe8] sm:$0xff]
      %v299 = vld [vmem:[#allocation2 + $0xf0] sm:$0xff]
      %v300 = vld [vmem:[#allocation2 + $0xf8] sm:$0xff]
      %v301 = vld [vmem:[#allocation2 + $0x100] sm:$0xff]
      %v302 = vld [vmem:[#allocation2 + $0x108] sm:$0xff]
      %v303 = vld [vmem:[#allocation2 + $0x110] sm:$0xff]
      %v304 = vld [vmem:[#allocation2 + $0x118] sm:$0xff]
      %v305 = vld [vmem:[#allocation2 + $0x120] sm:$0xff]
      %v306 = vld [vmem:[#allocation2 + $0x128] sm:$0xff]
      %v307 = vld [vmem:[#allocation2 + $0x130] sm:$0xff]
      %v308 = vld [vmem:[#allocation2 + $0x138] sm:$0xff]
      %v309 = vld [vmem:[#allocation2 + $0x140] sm:$0xff]
      %v310 = vld [vmem:[#allocation2 + $0x148] sm:$0xff]
      %v311 = vld [vmem:[#allocation2 + $0x150] sm:$0xff]
      %v312 = vld [vmem:[#allocation2 + $0x158] sm:$0xff]
      %v313 = vld [vmem:[#allocation2 + $0x160] sm:$0xff]
      %v314 = vld [vmem:[#allocation2 + $0x168] sm:$0xff]
      %v315 = vld [vmem:[#allocation2 + $0x170] sm:$0xff]
      %v316 = vld [vmem:[#allocation2 + $0x178] sm:$0xff]
      %v317 = vld [vmem:[%s1] sm:$0x3]
      %v366 = vunpack.c.l.b16 %v221
      %v367 = vunpack.c.l.b16 %v222
      %v368 = vunpack.c.l.b16 %v223
      %v369 = vunpack.c.l.b16 %v224
      %v370 = vunpack.c.l.b16 %v225
      %v371 = vunpack.c.l.b16 %v226
      %v372 = vunpack.c.l.b16 %v227
      %v373 = vunpack.c.l.b16 %v228
      %v374 = vunpack.c.l.b16 %v229
      %v375 = vunpack.c.l.b16 %v230
      %v376 = vunpack.c.l.b16 %v231
      %v377 = vunpack.c.l.b16 %v232
      %v378 = vunpack.c.l.b16 %v233
      %v379 = vunpack.c.l.b16 %v234
      %v380 = vunpack.c.l.b16 %v235
      %v381 = vunpack.c.l.b16 %v236
      %v382 = vunpack.c.l.b16 %v237
      %v383 = vunpack.c.l.b16 %v238
      %v384 = vunpack.c.l.b16 %v239
      %v385 = vunpack.c.l.b16 %v240
      %v386 = vunpack.c.l.b16 %v241
      %v387 = vunpack.c.l.b16 %v242
      %v388 = vunpack.c.l.b16 %v243
      %v389 = vunpack.c.l.b16 %v244
      %v390 = vunpack.c.l.b16 %v245
      %v391 = vunpack.c.l.b16 %v246
      %v392 = vunpack.c.l.b16 %v247
      %v393 = vunpack.c.l.b16 %v248
      %v394 = vunpack.c.l.b16 %v249
      %v395 = vunpack.c.l.b16 %v250
      %v396 = vunpack.c.l.b16 %v251
      %v397 = vunpack.c.l.b16 %v252
      %v398 = vunpack.c.l.b16 %v253
      %v399 = vunpack.c.l.b16 %v254
      %v400 = vunpack.c.l.b16 %v255
      %v401 = vunpack.c.l.b16 %v256
      %v402 = vunpack.c.l.b16 %v257
      %v403 = vunpack.c.l.b16 %v258
      %v404 = vunpack.c.l.b16 %v259
      %v405 = vunpack.c.l.b16 %v260
      %v406 = vunpack.c.l.b16 %v261
      %v407 = vunpack.c.l.b16 %v262
      %v408 = vunpack.c.l.b16 %v263
      %v409 = vunpack.c.l.b16 %v264
      %v410 = vunpack.c.l.b16 %v265
      %v411 = vunpack.c.l.b16 %v266
      %v412 = vunpack.c.l.b16 %v267
      %v413 = vunpack.c.l.b16 %v268
      %v414 = vpack.c.b16 %v367, %v366
      %v415 = vpack.c.b16 %v369, %v368
      %v416 = vpack.c.b16 %v371, %v370
      %v417 = vpack.c.b16 %v373, %v372
      %v418 = vpack.c.b16 %v375, %v374
      %v419 = vpack.c.b16 %v377, %v376
      %v420 = vpack.c.b16 %v379, %v378
      %v421 = vpack.c.b16 %v381, %v380
      %v422 = vpack.c.b16 %v383, %v382
      %v423 = vpack.c.b16 %v385, %v384
      %v424 = vpack.c.b16 %v387, %v386
      %v425 = vpack.c.b16 %v389, %v388
      %v426 = vpack.c.b16 %v391, %v390
      %v427 = vpack.c.b16 %v393, %v392
      %v428 = vpack.c.b16 %v395, %v394
      %v429 = vpack.c.b16 %v397, %v396
      %v430 = vpack.c.b16 %v399, %v398
      %v431 = vpack.c.b16 %v401, %v400
      %v432 = vpack.c.b16 %v403, %v402
      %v433 = vpack.c.b16 %v405, %v404
      %v434 = vpack.c.b16 %v407, %v406
      %v435 = vpack.c.b16 %v409, %v408
      %v436 = vpack.c.b16 %v411, %v410
      %v437 = vpack.c.b16 %v413, %v412
      %v439 = vsel %vm172, %v414, 0
      %v442 = vsel %vm172, %v415, 0
      %v445 = vsel %vm172, %v416, 0
      %v448 = vsel %vm172, %v417, 0
      %v451 = vsel %vm172, %v418, 0
      %v454 = vsel %vm172, %v419, 0
      %v457 = vsel %vm172, %v420, 0
      %v460 = vsel %vm172, %v421, 0
      %v463 = vsel %vm172, %v422, 0
      %v466 = vsel %vm172, %v423, 0
      %v469 = vsel %vm172, %v424, 0
      %v472 = vsel %vm172, %v425, 0
      %v475 = vsel %vm172, %v426, 0
      %v478 = vsel %vm172, %v427, 0
      %v481 = vsel %vm172, %v428, 0
      %v484 = vsel %vm172, %v429, 0
      %v487 = vsel %vm172, %v430, 0
      %v490 = vsel %vm172, %v431, 0
      %v493 = vsel %vm172, %v432, 0
      %v496 = vsel %vm172, %v433, 0
      %v499 = vsel %vm172, %v434, 0
      %v502 = vsel %vm172, %v435, 0
      %v505 = vsel %vm172, %v436, 0
      %v508 = vsel %vm172, %v437, 0
      %vm510 = vcmask 1041408
      %v512 = vsel %vm510, %v317, 0
      %514 = vmatpush.bf16.msra.mxu0 0
      %515 = vmatpush.bf16.msra.mxu0 0
      %516 = vmatpush.bf16.msra.mxu0 0
      %517 = vmatpush.bf16.msra.mxu0 0
      %518 = vmatpush.bf16.msra.mxu0 0
      %519 = vmatpush.bf16.msra.mxu0 0
      %520 = vmatpush.bf16.msra.mxu0 0
      %521 = vmatpush.bf16.msra.mxu0 %v512
      %522 = vmatmul.bf16.gmra.mxu0 %v439
      %v523 = vpop.f32.mrf.mxu0
      %v524 = vadd.f32 0.0, %v523
      %v525 = vpop.f32.mrf.mxu0
      %v526 = vadd.f32 0.0, %v525
      %527 = vmatmul.bf16.gmra.mxu0 %v442
      %v528 = vpop.f32.mrf.mxu0
      %v529 = vadd.f32 0.0, %v528
      %v530 = vpop.f32.mrf.mxu0
      %v531 = vadd.f32 0.0, %v530
      %532 = vmatmul.bf16.gmra.mxu0 %v445
      %v533 = vpop.f32.mrf.mxu0
      %v534 = vadd.f32 0.0, %v533
      %v535 = vpop.f32.mrf.mxu0
      %v536 = vadd.f32 0.0, %v535
      %537 = vmatmul.bf16.gmra.mxu0 %v448
      %v538 = vpop.f32.mrf.mxu0
      %v539 = vadd.f32 0.0, %v538
      %v540 = vpop.f32.mrf.mxu0
      %v541 = vadd.f32 0.0, %v540
      %542 = vmatmul.bf16.gmra.mxu0 %v451
      %v543 = vpop.f32.mrf.mxu0
      %v544 = vadd.f32 0.0, %v543
      %v545 = vpop.f32.mrf.mxu0
      %v546 = vadd.f32 0.0, %v545
      %547 = vmatmul.bf16.gmra.mxu0 %v454
      %v548 = vpop.f32.mrf.mxu0
      %v549 = vadd.f32 0.0, %v548
      %v550 = vpop.f32.mrf.mxu0
      %v551 = vadd.f32 0.0, %v550
      %552 = vmatmul.bf16.gmra.mxu0 %v457
      %v553 = vpop.f32.mrf.mxu0
      %v554 = vadd.f32 0.0, %v553
      %v555 = vpop.f32.mrf.mxu0
      %v556 = vadd.f32 0.0, %v555
      %557 = vmatmul.bf16.gmra.mxu0 %v460
      %v558 = vpop.f32.mrf.mxu0
      %v559 = vadd.f32 0.0, %v558
      %v560 = vpop.f32.mrf.mxu0
      %v561 = vadd.f32 0.0, %v560
      %562 = vmatmul.bf16.gmra.mxu0 %v463
      %v563 = vpop.f32.mrf.mxu0
      %v564 = vadd.f32 0.0, %v563
      %v565 = vpop.f32.mrf.mxu0
      %v566 = vadd.f32 0.0, %v565
      %567 = vmatmul.bf16.gmra.mxu0 %v466
      %v568 = vpop.f32.mrf.mxu0
      %v569 = vadd.f32 0.0, %v568
      %v570 = vpop.f32.mrf.mxu0
      %v571 = vadd.f32 0.0, %v570
      %572 = vmatmul.bf16.gmra.mxu0 %v469
      %v573 = vpop.f32.mrf.mxu0
      %v574 = vadd.f32 0.0, %v573
      %v575 = vpop.f32.mrf.mxu0
      %v576 = vadd.f32 0.0, %v575
      %577 = vmatmul.bf16.gmra.mxu0 %v472
      %v578 = vpop.f32.mrf.mxu0
      %v579 = vadd.f32 0.0, %v578
      %v580 = vpop.f32.mrf.mxu0
      %v581 = vadd.f32 0.0, %v580
      %582 = vmatmul.bf16.gmra.mxu0 %v475
      %v583 = vpop.f32.mrf.mxu0
      %v584 = vadd.f32 0.0, %v583
      %v585 = vpop.f32.mrf.mxu0
      %v586 = vadd.f32 0.0, %v585
      %587 = vmatmul.bf16.gmra.mxu0 %v478
      %v588 = vpop.f32.mrf.mxu0
      %v589 = vadd.f32 0.0, %v588
      %v590 = vpop.f32.mrf.mxu0
      %v591 = vadd.f32 0.0, %v590
      %592 = vmatmul.bf16.gmra.mxu0 %v481
      %v593 = vpop.f32.mrf.mxu0
      %v594 = vadd.f32 0.0, %v593
      %v595 = vpop.f32.mrf.mxu0
      %v596 = vadd.f32 0.0, %v595
      %597 = vmatmul.bf16.gmra.mxu0 %v484
      %v598 = vpop.f32.mrf.mxu0
      %v599 = vadd.f32 0.0, %v598
      %v600 = vpop.f32.mrf.mxu0
      %v601 = vadd.f32 0.0, %v600
      %602 = vmatmul.bf16.gmra.mxu0 %v487
      %v603 = vpop.f32.mrf.mxu0
      %v604 = vadd.f32 0.0, %v603
      %v605 = vpop.f32.mrf.mxu0
      %v606 = vadd.f32 0.0, %v605
      %607 = vmatmul.bf16.gmra.mxu0 %v490
      %v608 = vpop.f32.mrf.mxu0
      %v609 = vadd.f32 0.0, %v608
      %v610 = vpop.f32.mrf.mxu0
      %v611 = vadd.f32 0.0, %v610
      %612 = vmatmul.bf16.gmra.mxu0 %v493
      %v613 = vpop.f32.mrf.mxu0
      %v614 = vadd.f32 0.0, %v613
      %v615 = vpop.f32.mrf.mxu0
      %v616 = vadd.f32 0.0, %v615
      %617 = vmatmul.bf16.gmra.mxu0 %v496
      %v618 = vpop.f32.mrf.mxu0
      %v619 = vadd.f32 0.0, %v618
      %v620 = vpop.f32.mrf.mxu0
      %v621 = vadd.f32 0.0, %v620
      %622 = vmatmul.bf16.gmra.mxu0 %v499
      %v623 = vpop.f32.mrf.mxu0
      %v624 = vadd.f32 0.0, %v623
      %v625 = vpop.f32.mrf.mxu0
      %v626 = vadd.f32 0.0, %v625
      %627 = vmatmul.bf16.gmra.mxu0 %v502
      %v628 = vpop.f32.mrf.mxu0
      %v629 = vadd.f32 0.0, %v628
      %v630 = vpop.f32.mrf.mxu0
      %v631 = vadd.f32 0.0, %v630
      %632 = vmatmul.bf16.gmra.mxu0 %v505
      %v633 = vpop.f32.mrf.mxu0
      %v634 = vadd.f32 0.0, %v633
      %v635 = vpop.f32.mrf.mxu0
      %v636 = vadd.f32 0.0, %v635
      %637 = vmatmul.bf16.gmra.mxu0 %v508
      %v638 = vpop.f32.mrf.mxu0
      %v639 = vadd.f32 0.0, %v638
      %v640 = vpop.f32.mrf.mxu0
      %v641 = vadd.f32 0.0, %v640
      %642 = vdwg.mxu0
      %v643 = vadd.f32 %v269, %v524
      %v644 = vadd.f32 %v270, %v526
      %v645 = vadd.f32 %v271, %v529
      %v646 = vadd.f32 %v272, %v531
      %v647 = vadd.f32 %v273, %v534
      %v648 = vadd.f32 %v274, %v536
      %v649 = vadd.f32 %v275, %v539
      %v650 = vadd.f32 %v276, %v541
      %v651 = vadd.f32 %v277, %v544
      %v652 = vadd.f32 %v278, %v546
      %v653 = vadd.f32 %v279, %v549
      %v654 = vadd.f32 %v280, %v551
      %v655 = vadd.f32 %v281, %v554
      %v656 = vadd.f32 %v282, %v556
      %v657 = vadd.f32 %v283, %v559
      %v658 = vadd.f32 %v284, %v561
      %v659 = vadd.f32 %v285, %v564
      %v660 = vadd.f32 %v286, %v566
      %v661 = vadd.f32 %v287, %v569
      %v662 = vadd.f32 %v288, %v571
      %v663 = vadd.f32 %v289, %v574
      %v664 = vadd.f32 %v290, %v576
      %v665 = vadd.f32 %v291, %v579
      %v666 = vadd.f32 %v292, %v581
      %v667 = vadd.f32 %v293, %v584
      %v668 = vadd.f32 %v294, %v586
      %v669 = vadd.f32 %v295, %v589
      %v670 = vadd.f32 %v296, %v591
      %v671 = vadd.f32 %v297, %v594
      %v672 = vadd.f32 %v298, %v596
      %v673 = vadd.f32 %v299, %v599
      %v674 = vadd.f32 %v300, %v601
      %v675 = vadd.f32 %v301, %v604
      %v676 = vadd.f32 %v302, %v606
      %v677 = vadd.f32 %v303, %v609
      %v678 = vadd.f32 %v304, %v611
      %v679 = vadd.f32 %v305, %v614
      %v680 = vadd.f32 %v306, %v616
      %v681 = vadd.f32 %v307, %v619
      %v682 = vadd.f32 %v308, %v621
      %v683 = vadd.f32 %v309, %v624
      %v684 = vadd.f32 %v310, %v626
      %v685 = vadd.f32 %v311, %v629
      %v686 = vadd.f32 %v312, %v631
      %v687 = vadd.f32 %v313, %v634
      %v688 = vadd.f32 %v314, %v636
      %v689 = vadd.f32 %v315, %v639
      %v690 = vadd.f32 %v316, %v641
      %691 = vst.msk [vmem:[#allocation2] sm:$0xff] %vm172, %v643
      %692 = vst.msk [vmem:[#allocation2 + $0x8] sm:$0xff] %vm172, %v644
      %693 = vst.msk [vmem:[#allocation2 + $0x10] sm:$0xff] %vm172, %v645
      %694 = vst.msk [vmem:[#allocation2 + $0x18] sm:$0xff] %vm172, %v646
      %695 = vst.msk [vmem:[#allocation2 + $0x20] sm:$0xff] %vm172, %v647
      %696 = vst.msk [vmem:[#allocation2 + $0x28] sm:$0xff] %vm172, %v648
      %697 = vst.msk [vmem:[#allocation2 + $0x30] sm:$0xff] %vm172, %v649
      %698 = vst.msk [vmem:[#allocation2 + $0x38] sm:$0xff] %vm172, %v650
      %699 = vst.msk [vmem:[#allocation2 + $0x40] sm:$0xff] %vm172, %v651
      %700 = vst.msk [vmem:[#allocation2 + $0x48] sm:$0xff] %vm172, %v652
      %701 = vst.msk [vmem:[#allocation2 + $0x50] sm:$0xff] %vm172, %v653
      %702 = vst.msk [vmem:[#allocation2 + $0x58] sm:$0xff] %vm172, %v654
      %703 = vst.msk [vmem:[#allocation2 + $0x60] sm:$0xff] %vm172, %v655
      %704 = vst.msk [vmem:[#allocation2 + $0x68] sm:$0xff] %vm172, %v656
      %705 = vst.msk [vmem:[#allocation2 + $0x70] sm:$0xff] %vm172, %v657
      %706 = vst.msk [vmem:[#allocation2 + $0x78] sm:$0xff] %vm172, %v658
      %707 = vst.msk [vmem:[#allocation2 + $0x80] sm:$0xff] %vm172, %v659
      %708 = vst.msk [vmem:[#allocation2 + $0x88] sm:$0xff] %vm172, %v660
      %709 = vst.msk [vmem:[#allocation2 + $0x90] sm:$0xff] %vm172, %v661
      %710 = vst.msk [vmem:[#allocation2 + $0x98] sm:$0xff] %vm172, %v662
      %711 = vst.msk [vmem:[#allocation2 + $0xa0] sm:$0xff] %vm172, %v663
      %712 = vst.msk [vmem:[#allocation2 + $0xa8] sm:$0xff] %vm172, %v664
      %713 = vst.msk [vmem:[#allocation2 + $0xb0] sm:$0xff] %vm172, %v665
      %714 = vst.msk [vmem:[#allocation2 + $0xb8] sm:$0xff] %vm172, %v666
      %715 = vst.msk [vmem:[#allocation2 + $0xc0] sm:$0xff] %vm172, %v667
      %716 = vst.msk [vmem:[#allocation2 + $0xc8] sm:$0xff] %vm172, %v668
      %717 = vst.msk [vmem:[#allocation2 + $0xd0] sm:$0xff] %vm172, %v669
      %718 = vst.msk [vmem:[#allocation2 + $0xd8] sm:$0xff] %vm172, %v670
      %719 = vst.msk [vmem:[#allocation2 + $0xe0] sm:$0xff] %vm172, %v671
      %720 = vst.msk [vmem:[#allocation2 + $0xe8] sm:$0xff] %vm172, %v672
      %721 = vst.msk [vmem:[#allocation2 + $0xf0] sm:$0xff] %vm172, %v673
      %722 = vst.msk [vmem:[#allocation2 + $0xf8] sm:$0xff] %vm172, %v674
      %723 = vst.msk [vmem:[#allocation2 + $0x100] sm:$0xff] %vm172, %v675
      %724 = vst.msk [vmem:[#allocation2 + $0x108] sm:$0xff] %vm172, %v676
      %725 = vst.msk [vmem:[#allocation2 + $0x110] sm:$0xff] %vm172, %v677
      %726 = vst.msk [vmem:[#allocation2 + $0x118] sm:$0xff] %vm172, %v678
      %727 = vst.msk [vmem:[#allocation2 + $0x120] sm:$0xff] %vm172, %v679
      %728 = vst.msk [vmem:[#allocation2 + $0x128] sm:$0xff] %vm172, %v680
      %729 = vst.msk [vmem:[#allocation2 + $0x130] sm:$0xff] %vm172, %v681
      %730 = vst.msk [vmem:[#allocation2 + $0x138] sm:$0xff] %vm172, %v682
      %731 = vst.msk [vmem:[#allocation2 + $0x140] sm:$0xff] %vm172, %v683
      %732 = vst.msk [vmem:[#allocation2 + $0x148] sm:$0xff] %vm172, %v684
      %733 = vst.msk [vmem:[#allocation2 + $0x150] sm:$0xff] %vm172, %v685
      %734 = vst.msk [vmem:[#allocation2 + $0x158] sm:$0xff] %vm172, %v686
      %735 = vst.msk [vmem:[#allocation2 + $0x160] sm:$0xff] %vm172, %v687
      %736 = vst.msk [vmem:[#allocation2 + $0x168] sm:$0xff] %vm172, %v688
      %737 = vst.msk [vmem:[#allocation2 + $0x170] sm:$0xff] %vm172, %v689
      %738 = vst.msk [vmem:[#allocation2 + $0x178] sm:$0xff] %vm172, %v690
      %v739 = vld [vmem:[%s165] sm:$0xf]
      %v740 = vld [vmem:[%s165 + $0x4] sm:$0xf]
      %v741 = vld [vmem:[%s165 + $0x8] sm:$0xf]
      %v742 = vld [vmem:[%s165 + $0xc] sm:$0xf]
      %v743 = vld [vmem:[%s165 + $0x10] sm:$0xf]
      %v744 = vld [vmem:[%s165 + $0x14] sm:$0xf]
      %v745 = vld [vmem:[%s165 + $0x18] sm:$0xf]
      %v746 = vld [vmem:[%s165 + $0x1c] sm:$0xf]
      %v747 = vld [vmem:[%s165 + $0x20] sm:$0xf]
      %v748 = vld [vmem:[%s165 + $0x24] sm:$0xf]
      %v749 = vld [vmem:[%s165 + $0x28] sm:$0xf]
      %v750 = vld [vmem:[%s165 + $0x2c] sm:$0xf]
      %v751 = vld [vmem:[%s165 + $0x30] sm:$0xf]
      %v752 = vld [vmem:[%s165 + $0x34] sm:$0xf]
      %v753 = vld [vmem:[%s165 + $0x38] sm:$0xf]
      %v754 = vld [vmem:[%s165 + $0x3c] sm:$0xf]
      %v755 = vld [vmem:[%s165 + $0x40] sm:$0xf]
      %v756 = vld [vmem:[%s165 + $0x44] sm:$0xf]
      %v757 = vld [vmem:[%s165 + $0x48] sm:$0xf]
      %v758 = vld [vmem:[%s165 + $0x4c] sm:$0xf]
      %v759 = vld [vmem:[%s165 + $0x50] sm:$0xf]
      %v760 = vld [vmem:[%s165 + $0x54] sm:$0xf]
      %v761 = vld [vmem:[%s165 + $0x58] sm:$0xf]
      %v762 = vld [vmem:[%s165 + $0x5c] sm:$0xf]
      %v763 = vld [vmem:[%s165 + $0x60] sm:$0xf]
      %v764 = vld [vmem:[%s165 + $0x64] sm:$0xf]
      %v765 = vld [vmem:[%s165 + $0x68] sm:$0xf]
      %v766 = vld [vmem:[%s165 + $0x6c] sm:$0xf]
      %v767 = vld [vmem:[%s165 + $0x70] sm:$0xf]
      %v768 = vld [vmem:[%s165 + $0x74] sm:$0xf]
      %v769 = vld [vmem:[%s165 + $0x78] sm:$0xf]
      %v770 = vld [vmem:[%s165 + $0x7c] sm:$0xf]
      %v771 = vld [vmem:[%s165 + $0x80] sm:$0xf]
      %v772 = vld [vmem:[%s165 + $0x84] sm:$0xf]
      %v773 = vld [vmem:[%s165 + $0x88] sm:$0xf]
      %v774 = vld [vmem:[%s165 + $0x8c] sm:$0xf]
      %v775 = vld [vmem:[%s165 + $0x90] sm:$0xf]
      %v776 = vld [vmem:[%s165 + $0x94] sm:$0xf]
      %v777 = vld [vmem:[%s165 + $0x98] sm:$0xf]
      %v778 = vld [vmem:[%s165 + $0x9c] sm:$0xf]
      %v779 = vld [vmem:[%s165 + $0xa0] sm:$0xf]
      %v780 = vld [vmem:[%s165 + $0xa4] sm:$0xf]
      %v781 = vld [vmem:[%s165 + $0xa8] sm:$0xf]
      %v782 = vld [vmem:[%s165 + $0xac] sm:$0xf]
      %v783 = vld [vmem:[%s165 + $0xb0] sm:$0xf]
      %v784 = vld [vmem:[%s165 + $0xb4] sm:$0xf]
      %v785 = vld [vmem:[%s165 + $0xb8] sm:$0xf]
      %v786 = vld [vmem:[%s165 + $0xbc] sm:$0xf]
      %v787 = vld [vmem:[%s165 + $0xc0] sm:$0x1]
      %v788 = vld [vmem:[#allocation2] sm:$0xff]
      %v789 = vld [vmem:[#allocation2 + $0x8] sm:$0xff]
      %v790 = vld [vmem:[#allocation2 + $0x10] sm:$0xff]
      %v791 = vld [vmem:[#allocation2 + $0x18] sm:$0xff]
      %v792 = vld [vmem:[#allocation2 + $0x20] sm:$0xff]
      %v793 = vld [vmem:[#allocation2 + $0x28] sm:$0xff]
      %v794 = vld [vmem:[#allocation2 + $0x30] sm:$0xff]
      %v795 = vld [vmem:[#allocation2 + $0x38] sm:$0xff]
      %v796 = vld [vmem:[#allocation2 + $0x40] sm:$0xff]
      %v797 = vld [vmem:[#allocation2 + $0x48] sm:$0xff]
      %v798 = vld [vmem:[#allocation2 + $0x50] sm:$0xff]
      %v799 = vld [vmem:[#allocation2 + $0x58] sm:$0xff]
      %v800 = vld [vmem:[#allocation2 + $0x60] sm:$0xff]
      %v801 = vld [vmem:[#allocation2 + $0x68] sm:$0xff]
      %v802 = vld [vmem:[#allocation2 + $0x70] sm:$0xff]
      %v803 = vld [vmem:[#allocation2 + $0x78] sm:$0xff]
      %v804 = vld [vmem:[#allocation2 + $0x80] sm:$0xff]
      %v805 = vld [vmem:[#allocation2 + $0x88] sm:$0xff]
      %v806 = vld [vmem:[#allocation2 + $0x90] sm:$0xff]
      %v807 = vld [vmem:[#allocation2 + $0x98] sm:$0xff]
      %v808 = vld [vmem:[#allocation2 + $0xa0] sm:$0xff]
      %v809 = vld [vmem:[#allocation2 + $0xa8] sm:$0xff]
      %v810 = vld [vmem:[#allocation2 + $0xb0] sm:$0xff]
      %v811 = vld [vmem:[#allocation2 + $0xb8] sm:$0xff]
      %v812 = vld [vmem:[#allocation2 + $0xc0] sm:$0xff]
      %v813 = vld [vmem:[#allocation2 + $0xc8] sm:$0xff]
      %v814 = vld [vmem:[#allocation2 + $0xd0] sm:$0xff]
      %v815 = vld [vmem:[#allocation2 + $0xd8] sm:$0xff]
      %v816 = vld [vmem:[#allocation2 + $0xe0] sm:$0xff]
      %v817 = vld [vmem:[#allocation2 + $0xe8] sm:$0xff]
      %v818 = vld [vmem:[#allocation2 + $0xf0] sm:$0xff]
      %v819 = vld [vmem:[#allocation2 + $0xf8] sm:$0xff]
      %v820 = vld [vmem:[#allocation2 + $0x100] sm:$0xff]
      %v821 = vld [vmem:[#allocation2 + $0x108] sm:$0xff]
      %v822 = vld [vmem:[#allocation2 + $0x110] sm:$0xff]
      %v823 = vld [vmem:[#allocation2 + $0x118] sm:$0xff]
      %v824 = vld [vmem:[#allocation2 + $0x120] sm:$0xff]
      %v825 = vld [vmem:[#allocation2 + $0x128] sm:$0xff]
      %v826 = vld [vmem:[#allocation2 + $0x130] sm:$0xff]
      %v827 = vld [vmem:[#allocation2 + $0x138] sm:$0xff]
      %v828 = vld [vmem:[#allocation2 + $0x140] sm:$0xff]
      %v829 = vld [vmem:[#allocation2 + $0x148] sm:$0xff]
      %v830 = vld [vmem:[#allocation2 + $0x150] sm:$0xff]
      %v831 = vld [vmem:[#allocation2 + $0x158] sm:$0xff]
      %v832 = vld [vmem:[#allocation2 + $0x160] sm:$0xff]
      %v833 = vld [vmem:[#allocation2 + $0x168] sm:$0xff]
      %v834 = vld [vmem:[#allocation2 + $0x170] sm:$0xff]
      %v835 = vld [vmem:[#allocation2 + $0x178] sm:$0xff]
      %s836 = scalar_lea.vmem %s1, 2
      %v837 = vld [vmem:[%s836] sm:$0x3]
      %v887 = vunpack.c.l.b16 %v739
      %v888 = vunpack.c.l.b16 %v740
      %v889 = vunpack.c.l.b16 %v741
      %v890 = vunpack.c.l.b16 %v742
      %v891 = vunpack.c.l.b16 %v743
      %v892 = vunpack.c.l.b16 %v744
      %v893 = vunpack.c.l.b16 %v745
      %v894 = vunpack.c.l.b16 %v746
      %v895 = vunpack.c.l.b16 %v747
      %v896 = vunpack.c.l.b16 %v748
      %v897 = vunpack.c.l.b16 %v749
      %v898 = vunpack.c.l.b16 %v750
      %v899 = vunpack.c.l.b16 %v751
      %v900 = vunpack.c.l.b16 %v752
      %v901 = vunpack.c.l.b16 %v753
      %v902 = vunpack.c.l.b16 %v754
      %v903 = vunpack.c.l.b16 %v755
      %v904 = vunpack.c.l.b16 %v756
      %v905 = vunpack.c.l.b16 %v757
      %v906 = vunpack.c.l.b16 %v758
      %v907 = vunpack.c.l.b16 %v759
      %v908 = vunpack.c.l.b16 %v760
      %v909 = vunpack.c.l.b16 %v761
      %v910 = vunpack.c.l.b16 %v762
      %v911 = vunpack.c.l.b16 %v763
      %v912 = vunpack.c.l.b16 %v764
      %v913 = vunpack.c.l.b16 %v765
      %v914 = vunpack.c.l.b16 %v766
      %v915 = vunpack.c.l.b16 %v767
      %v916 = vunpack.c.l.b16 %v768
      %v917 = vunpack.c.l.b16 %v769
      %v918 = vunpack.c.l.b16 %v770
      %v919 = vunpack.c.l.b16 %v771
      %v920 = vunpack.c.l.b16 %v772
      %v921 = vunpack.c.l.b16 %v773
      %v922 = vunpack.c.l.b16 %v774
      %v923 = vunpack.c.l.b16 %v775
      %v924 = vunpack.c.l.b16 %v776
      %v925 = vunpack.c.l.b16 %v777
      %v926 = vunpack.c.l.b16 %v778
      %v927 = vunpack.c.l.b16 %v779
      %v928 = vunpack.c.l.b16 %v780
      %v929 = vunpack.c.l.b16 %v781
      %v930 = vunpack.c.l.b16 %v782
      %v931 = vunpack.c.l.b16 %v783
      %v932 = vunpack.c.l.b16 %v784
      %v933 = vunpack.c.l.b16 %v785
      %v934 = vunpack.c.l.b16 %v786
      %v935 = vunpack.c.l.b16 %v787
      %v936 = vpack.c.b16 %v888, %v887
      %v937 = vpack.c.b16 %v890, %v889
      %v938 = vpack.c.b16 %v892, %v891
      %v939 = vpack.c.b16 %v894, %v893
      %v940 = vpack.c.b16 %v896, %v895
      %v941 = vpack.c.b16 %v898, %v897
      %v942 = vpack.c.b16 %v900, %v899
      %v943 = vpack.c.b16 %v902, %v901
      %v944 = vpack.c.b16 %v904, %v903
      %v945 = vpack.c.b16 %v906, %v905
      %v946 = vpack.c.b16 %v908, %v907
      %v947 = vpack.c.b16 %v910, %v909
      %v948 = vpack.c.b16 %v912, %v911
      %v949 = vpack.c.b16 %v914, %v913
      %v950 = vpack.c.b16 %v916, %v915
      %v951 = vpack.c.b16 %v918, %v917
      %v952 = vpack.c.b16 %v920, %v919
      %v953 = vpack.c.b16 %v922, %v921
      %v954 = vpack.c.b16 %v924, %v923
      %v955 = vpack.c.b16 %v926, %v925
      %v956 = vpack.c.b16 %v928, %v927
      %v957 = vpack.c.b16 %v930, %v929
      %v958 = vpack.c.b16 %v932, %v931
      %v959 = vpack.c.b16 %v934, %v933
      %v960 = vpack.c.b16 %v935, %v935
      %vm961 = vsmask.f32 7424
      %v963 = vshrl.u32 %v936, 16
      %v965 = vshll.u32 %v936, 16
      %v967 = vrot.slane %v965, 1
      %v968 = vor.u32 %v963, %v967
      %v970 = vshll.u32 %v937, 16
      %v972 = vrot.slane %v970, 1
      %v973 = vsel %vm961, %v968, %v972
      %v974 = vshrl.u32 %v937, 16
      %v976 = vor.u32 %v974, %v972
      %v978 = vshll.u32 %v938, 16
      %v980 = vrot.slane %v978, 1
      %v981 = vsel %vm961, %v976, %v980
      %v982 = vshrl.u32 %v938, 16
      %v984 = vor.u32 %v982, %v980
      %v986 = vshll.u32 %v939, 16
      %v988 = vrot.slane %v986, 1
      %v989 = vsel %vm961, %v984, %v988
      %v990 = vshrl.u32 %v939, 16
      %v992 = vor.u32 %v990, %v988
      %v994 = vshll.u32 %v940, 16
      %v996 = vrot.slane %v994, 1
      %v997 = vsel %vm961, %v992, %v996
      %v998 = vshrl.u32 %v940, 16
      %v1000 = vor.u32 %v998, %v996
      %v1002 = vshll.u32 %v941, 16
      %v1004 = vrot.slane %v1002, 1
      %v1005 = vsel %vm961, %v1000, %v1004
      %v1006 = vshrl.u32 %v941, 16
      %v1008 = vor.u32 %v1006, %v1004
      %v1010 = vshll.u32 %v942, 16
      %v1012 = vrot.slane %v1010, 1
      %v1013 = vsel %vm961, %v1008, %v1012
      %v1014 = vshrl.u32 %v942, 16
      %v1016 = vor.u32 %v1014, %v1012
      %v1018 = vshll.u32 %v943, 16
      %v1020 = vrot.slane %v1018, 1
      %v1021 = vsel %vm961, %v1016, %v1020
      %v1022 = vshrl.u32 %v943, 16
      %v1024 = vor.u32 %v1022, %v1020
      %v1026 = vshll.u32 %v944, 16
      %v1028 = vrot.slane %v1026, 1
      %v1029 = vsel %vm961, %v1024, %v1028
      %v1030 = vshrl.u32 %v944, 16
      %v1032 = vor.u32 %v1030, %v1028
      %v1034 = vshll.u32 %v945, 16
      %v1036 = vrot.slane %v1034, 1
      %v1037 = vsel %vm961, %v1032, %v1036
      %v1038 = vshrl.u32 %v945, 16
      %v1040 = vor.u32 %v1038, %v1036
      %v1042 = vshll.u32 %v946, 16
      %v1044 = vrot.slane %v1042, 1
      %v1045 = vsel %vm961, %v1040, %v1044
      %v1046 = vshrl.u32 %v946, 16
      %v1048 = vor.u32 %v1046, %v1044
      %v1050 = vshll.u32 %v947, 16
      %v1052 = vrot.slane %v1050, 1
      %v1053 = vsel %vm961, %v1048, %v1052
      %v1054 = vshrl.u32 %v947, 16
      %v1056 = vor.u32 %v1054, %v1052
      %v1058 = vshll.u32 %v948, 16
      %v1060 = vrot.slane %v1058, 1
      %v1061 = vsel %vm961, %v1056, %v1060
      %v1062 = vshrl.u32 %v948, 16
      %v1064 = vor.u32 %v1062, %v1060
      %v1066 = vshll.u32 %v949, 16
      %v1068 = vrot.slane %v1066, 1
      %v1069 = vsel %vm961, %v1064, %v1068
      %v1070 = vshrl.u32 %v949, 16
      %v1072 = vor.u32 %v1070, %v1068
      %v1074 = vshll.u32 %v950, 16
      %v1076 = vrot.slane %v1074, 1
      %v1077 = vsel %vm961, %v1072, %v1076
      %v1078 = vshrl.u32 %v950, 16
      %v1080 = vor.u32 %v1078, %v1076
      %v1082 = vshll.u32 %v951, 16
      %v1084 = vrot.slane %v1082, 1
      %v1085 = vsel %vm961, %v1080, %v1084
      %v1086 = vshrl.u32 %v951, 16
      %v1088 = vor.u32 %v1086, %v1084
      %v1090 = vshll.u32 %v952, 16
      %v1092 = vrot.slane %v1090, 1
      %v1093 = vsel %vm961, %v1088, %v1092
      %v1094 = vshrl.u32 %v952, 16
      %v1096 = vor.u32 %v1094, %v1092
      %v1098 = vshll.u32 %v953, 16
      %v1100 = vrot.slane %v1098, 1
      %v1101 = vsel %vm961, %v1096, %v1100
      %v1102 = vshrl.u32 %v953, 16
      %v1104 = vor.u32 %v1102, %v1100
      %v1106 = vshll.u32 %v954, 16
      %v1108 = vrot.slane %v1106, 1
      %v1109 = vsel %vm961, %v1104, %v1108
      %v1110 = vshrl.u32 %v954, 16
      %v1112 = vor.u32 %v1110, %v1108
      %v1114 = vshll.u32 %v955, 16
      %v1116 = vrot.slane %v1114, 1
      %v1117 = vsel %vm961, %v1112, %v1116
      %v1118 = vshrl.u32 %v955, 16
      %v1120 = vor.u32 %v1118, %v1116
      %v1122 = vshll.u32 %v956, 16
      %v1124 = vrot.slane %v1122, 1
      %v1125 = vsel %vm961, %v1120, %v1124
      %v1126 = vshrl.u32 %v956, 16
      %v1128 = vor.u32 %v1126, %v1124
      %v1130 = vshll.u32 %v957, 16
      %v1132 = vrot.slane %v1130, 1
      %v1133 = vsel %vm961, %v1128, %v1132
      %v1134 = vshrl.u32 %v957, 16
      %v1136 = vor.u32 %v1134, %v1132
      %v1138 = vshll.u32 %v958, 16
      %v1140 = vrot.slane %v1138, 1
      %v1141 = vsel %vm961, %v1136, %v1140
      %v1142 = vshrl.u32 %v958, 16
      %v1144 = vor.u32 %v1142, %v1140
      %v1146 = vshll.u32 %v959, 16
      %v1148 = vrot.slane %v1146, 1
      %v1149 = vsel %vm961, %v1144, %v1148
      %v1150 = vshrl.u32 %v959, 16
      %v1152 = vor.u32 %v1150, %v1148
      %v1154 = vshll.u32 %v960, 16
      %v1156 = vrot.slane %v1154, 1
      %v1157 = vsel %vm961, %v1152, %v1156
      %v1159 = vsel %vm172, %v973, 0
      %v1162 = vsel %vm172, %v981, 0
      %v1165 = vsel %vm172, %v989, 0
      %v1168 = vsel %vm172, %v997, 0
      %v1171 = vsel %vm172, %v1005, 0
      %v1174 = vsel %vm172, %v1013, 0
      %v1177 = vsel %vm172, %v1021, 0
      %v1180 = vsel %vm172, %v1029, 0
      %v1183 = vsel %vm172, %v1037, 0
      %v1186 = vsel %vm172, %v1045, 0
      %v1189 = vsel %vm172, %v1053, 0
      %v1192 = vsel %vm172, %v1061, 0
      %v1195 = vsel %vm172, %v1069, 0
      %v1198 = vsel %vm172, %v1077, 0
      %v1201 = vsel %vm172, %v1085, 0
      %v1204 = vsel %vm172, %v1093, 0
      %v1207 = vsel %vm172, %v1101, 0
      %v1210 = vsel %vm172, %v1109, 0
      %v1213 = vsel %vm172, %v1117, 0
      %v1216 = vsel %vm172, %v1125, 0
      %v1219 = vsel %vm172, %v1133, 0
      %v1222 = vsel %vm172, %v1141, 0
      %v1225 = vsel %vm172, %v1149, 0
      %v1228 = vsel %vm172, %v1157, 0
      %v1231 = vsel %vm510, %v837, 0
      %1233 = vmatpush.bf16.msra.mxu0 0
      %1234 = vmatpush.bf16.msra.mxu0 0
      %1235 = vmatpush.bf16.msra.mxu0 0
      %1236 = vmatpush.bf16.msra.mxu0 0
      %1237 = vmatpush.bf16.msra.mxu0 0
      %1238 = vmatpush.bf16.msra.mxu0 0
      %1239 = vmatpush.bf16.msra.mxu0 0
      %1240 = vmatpush.bf16.msra.mxu0 %v1231
      %1241 = vmatmul.bf16.gmra.mxu0 %v1159
      %v1242 = vpop.f32.mrf.mxu0
      %v1243 = vadd.f32 0.0, %v1242
      %v1244 = vpop.f32.mrf.mxu0
      %v1245 = vadd.f32 0.0, %v1244
      %1246 = vmatmul.bf16.gmra.mxu0 %v1162
      %v1247 = vpop.f32.mrf.mxu0
      %v1248 = vadd.f32 0.0, %v1247
      %v1249 = vpop.f32.mrf.mxu0
      %v1250 = vadd.f32 0.0, %v1249
      %1251 = vmatmul.bf16.gmra.mxu0 %v1165
      %v1252 = vpop.f32.mrf.mxu0
      %v1253 = vadd.f32 0.0, %v1252
      %v1254 = vpop.f32.mrf.mxu0
      %v1255 = vadd.f32 0.0, %v1254
      %1256 = vmatmul.bf16.gmra.mxu0 %v1168
      %v1257 = vpop.f32.mrf.mxu0
      %v1258 = vadd.f32 0.0, %v1257
      %v1259 = vpop.f32.mrf.mxu0
      %v1260 = vadd.f32 0.0, %v1259
      %1261 = vmatmul.bf16.gmra.mxu0 %v1171
      %v1262 = vpop.f32.mrf.mxu0
      %v1263 = vadd.f32 0.0, %v1262
      %v1264 = vpop.f32.mrf.mxu0
      %v1265 = vadd.f32 0.0, %v1264
      %1266 = vmatmul.bf16.gmra.mxu0 %v1174
      %v1267 = vpop.f32.mrf.mxu0
      %v1268 = vadd.f32 0.0, %v1267
      %v1269 = vpop.f32.mrf.mxu0
      %v1270 = vadd.f32 0.0, %v1269
      %1271 = vmatmul.bf16.gmra.mxu0 %v1177
      %v1272 = vpop.f32.mrf.mxu0
      %v1273 = vadd.f32 0.0, %v1272
      %v1274 = vpop.f32.mrf.mxu0
      %v1275 = vadd.f32 0.0, %v1274
      %1276 = vmatmul.bf16.gmra.mxu0 %v1180
      %v1277 = vpop.f32.mrf.mxu0
      %v1278 = vadd.f32 0.0, %v1277
      %v1279 = vpop.f32.mrf.mxu0
      %v1280 = vadd.f32 0.0, %v1279
      %1281 = vmatmul.bf16.gmra.mxu0 %v1183
      %v1282 = vpop.f32.mrf.mxu0
      %v1283 = vadd.f32 0.0, %v1282
      %v1284 = vpop.f32.mrf.mxu0
      %v1285 = vadd.f32 0.0, %v1284
      %1286 = vmatmul.bf16.gmra.mxu0 %v1186
      %v1287 = vpop.f32.mrf.mxu0
      %v1288 = vadd.f32 0.0, %v1287
      %v1289 = vpop.f32.mrf.mxu0
      %v1290 = vadd.f32 0.0, %v1289
      %1291 = vmatmul.bf16.gmra.mxu0 %v1189
      %v1292 = vpop.f32.mrf.mxu0
      %v1293 = vadd.f32 0.0, %v1292
      %v1294 = vpop.f32.mrf.mxu0
      %v1295 = vadd.f32 0.0, %v1294
      %1296 = vmatmul.bf16.gmra.mxu0 %v1192
      %v1297 = vpop.f32.mrf.mxu0
      %v1298 = vadd.f32 0.0, %v1297
      %v1299 = vpop.f32.mrf.mxu0
      %v1300 = vadd.f32 0.0, %v1299
      %1301 = vmatmul.bf16.gmra.mxu0 %v1195
      %v1302 = vpop.f32.mrf.mxu0
      %v1303 = vadd.f32 0.0, %v1302
      %v1304 = vpop.f32.mrf.mxu0
      %v1305 = vadd.f32 0.0, %v1304
      %1306 = vmatmul.bf16.gmra.mxu0 %v1198
      %v1307 = vpop.f32.mrf.mxu0
      %v1308 = vadd.f32 0.0, %v1307
      %v1309 = vpop.f32.mrf.mxu0
      %v1310 = vadd.f32 0.0, %v1309
      %1311 = vmatmul.bf16.gmra.mxu0 %v1201
      %v1312 = vpop.f32.mrf.mxu0
      %v1313 = vadd.f32 0.0, %v1312
      %v1314 = vpop.f32.mrf.mxu0
      %v1315 = vadd.f32 0.0, %v1314
      %1316 = vmatmul.bf16.gmra.mxu0 %v1204
      %v1317 = vpop.f32.mrf.mxu0
      %v1318 = vadd.f32 0.0, %v1317
      %v1319 = vpop.f32.mrf.mxu0
      %v1320 = vadd.f32 0.0, %v1319
      %1321 = vmatmul.bf16.gmra.mxu0 %v1207
      %v1322 = vpop.f32.mrf.mxu0
      %v1323 = vadd.f32 0.0, %v1322
      %v1324 = vpop.f32.mrf.mxu0
      %v1325 = vadd.f32 0.0, %v1324
      %1326 = vmatmul.bf16.gmra.mxu0 %v1210
      %v1327 = vpop.f32.mrf.mxu0
      %v1328 = vadd.f32 0.0, %v1327
      %v1329 = vpop.f32.mrf.mxu0
      %v1330 = vadd.f32 0.0, %v1329
      %1331 = vmatmul.bf16.gmra.mxu0 %v1213
      %v1332 = vpop.f32.mrf.mxu0
      %v1333 = vadd.f32 0.0, %v1332
      %v1334 = vpop.f32.mrf.mxu0
      %v1335 = vadd.f32 0.0, %v1334
      %1336 = vmatmul.bf16.gmra.mxu0 %v1216
      %v1337 = vpop.f32.mrf.mxu0
      %v1338 = vadd.f32 0.0, %v1337
      %v1339 = vpop.f32.mrf.mxu0
      %v1340 = vadd.f32 0.0, %v1339
      %1341 = vmatmul.bf16.gmra.mxu0 %v1219
      %v1342 = vpop.f32.mrf.mxu0
      %v1343 = vadd.f32 0.0, %v1342
      %v1344 = vpop.f32.mrf.mxu0
      %v1345 = vadd.f32 0.0, %v1344
      %1346 = vmatmul.bf16.gmra.mxu0 %v1222
      %v1347 = vpop.f32.mrf.mxu0
      %v1348 = vadd.f32 0.0, %v1347
      %v1349 = vpop.f32.mrf.mxu0
      %v1350 = vadd.f32 0.0, %v1349
      %1351 = vmatmul.bf16.gmra.mxu0 %v1225
      %v1352 = vpop.f32.mrf.mxu0
      %v1353 = vadd.f32 0.0, %v1352
      %v1354 = vpop.f32.mrf.mxu0
      %v1355 = vadd.f32 0.0, %v1354
      %1356 = vmatmul.bf16.gmra.mxu0 %v1228
      %v1357 = vpop.f32.mrf.mxu0
      %v1358 = vadd.f32 0.0, %v1357
      %v1359 = vpop.f32.mrf.mxu0
      %v1360 = vadd.f32 0.0, %v1359
      %1361 = vdwg.mxu0
      %v1362 = vadd.f32 %v788, %v1243
      %v1363 = vadd.f32 %v789, %v1245
      %v1364 = vadd.f32 %v790, %v1248
      %v1365 = vadd.f32 %v791, %v1250
      %v1366 = vadd.f32 %v792, %v1253
      %v1367 = vadd.f32 %v793, %v1255
      %v1368 = vadd.f32 %v794, %v1258
      %v1369 = vadd.f32 %v795, %v1260
      %v1370 = vadd.f32 %v796, %v1263
      %v1371 = vadd.f32 %v797, %v1265
      %v1372 = vadd.f32 %v798, %v1268
      %v1373 = vadd.f32 %v799, %v1270
      %v1374 = vadd.f32 %v800, %v1273
      %v1375 = vadd.f32 %v801, %v1275
      %v1376 = vadd.f32 %v802, %v1278
      %v1377 = vadd.f32 %v803, %v1280
      %v1378 = vadd.f32 %v804, %v1283
      %v1379 = vadd.f32 %v805, %v1285
      %v1380 = vadd.f32 %v806, %v1288
      %v1381 = vadd.f32 %v807, %v1290
      %v1382 = vadd.f32 %v808, %v1293
      %v1383 = vadd.f32 %v809, %v1295
      %v1384 = vadd.f32 %v810, %v1298
      %v1385 = vadd.f32 %v811, %v1300
      %v1386 = vadd.f32 %v812, %v1303
      %v1387 = vadd.f32 %v813, %v1305
      %v1388 = vadd.f32 %v814, %v1308
      %v1389 = vadd.f32 %v815, %v1310
      %v1390 = vadd.f32 %v816, %v1313
      %v1391 = vadd.f32 %v817, %v1315
      %v1392 = vadd.f32 %v818, %v1318
      %v1393 = vadd.f32 %v819, %v1320
      %v1394 = vadd.f32 %v820, %v1323
      %v1395 = vadd.f32 %v821, %v1325
      %v1396 = vadd.f32 %v822, %v1328
      %v1397 = vadd.f32 %v823, %v1330
      %v1398 = vadd.f32 %v824, %v1333
      %v1399 = vadd.f32 %v825, %v1335
      %v1400 = vadd.f32 %v826, %v1338
      %v1401 = vadd.f32 %v827, %v1340
      %v1402 = vadd.f32 %v828, %v1343
      %v1403 = vadd.f32 %v829, %v1345
      %v1404 = vadd.f32 %v830, %v1348
      %v1405 = vadd.f32 %v831, %v1350
      %v1406 = vadd.f32 %v832, %v1353
      %v1407 = vadd.f32 %v833, %v1355
      %v1408 = vadd.f32 %v834, %v1358
      %v1409 = vadd.f32 %v835, %v1360
      %1410 = vst.msk [vmem:[#allocation2] sm:$0xff] %vm172, %v1362
      %1411 = vst.msk [vmem:[#allocation2 + $0x8] sm:$0xff] %vm172, %v1363
      %1412 = vst.msk [vmem:[#allocation2 + $0x10] sm:$0xff] %vm172, %v1364
      %1413 = vst.msk [vmem:[#allocation2 + $0x18] sm:$0xff] %vm172, %v1365
      %1414 = vst.msk [vmem:[#allocation2 + $0x20] sm:$0xff] %vm172, %v1366
      %1415 = vst.msk [vmem:[#allocation2 + $0x28] sm:$0xff] %vm172, %v1367
      %1416 = vst.msk [vmem:[#allocation2 + $0x30] sm:$0xff] %vm172, %v1368
      %1417 = vst.msk [vmem:[#allocation2 + $0x38] sm:$0xff] %vm172, %v1369
      %1418 = vst.msk [vmem:[#allocation2 + $0x40] sm:$0xff] %vm172, %v1370
      %1419 = vst.msk [vmem:[#allocation2 + $0x48] sm:$0xff] %vm172, %v1371
      %1420 = vst.msk [vmem:[#allocation2 + $0x50] sm:$0xff] %vm172, %v1372
      %1421 = vst.msk [vmem:[#allocation2 + $0x58] sm:$0xff] %vm172, %v1373
      %1422 = vst.msk [vmem:[#allocation2 + $0x60] sm:$0xff] %vm172, %v1374
      %1423 = vst.msk [vmem:[#allocation2 + $0x68] sm:$0xff] %vm172, %v1375
      %1424 = vst.msk [vmem:[#allocation2 + $0x70] sm:$0xff] %vm172, %v1376
      %1425 = vst.msk [vmem:[#allocation2 + $0x78] sm:$0xff] %vm172, %v1377
      %1426 = vst.msk [vmem:[#allocation2 + $0x80] sm:$0xff] %vm172, %v1378
      %1427 = vst.msk [vmem:[#allocation2 + $0x88] sm:$0xff] %vm172, %v1379
      %1428 = vst.msk [vmem:[#allocation2 + $0x90] sm:$0xff] %vm172, %v1380
      %1429 = vst.msk [vmem:[#allocation2 + $0x98] sm:$0xff] %vm172, %v1381
      %1430 = vst.msk [vmem:[#allocation2 + $0xa0] sm:$0xff] %vm172, %v1382
      %1431 = vst.msk [vmem:[#allocation2 + $0xa8] sm:$0xff] %vm172, %v1383
      %1432 = vst.msk [vmem:[#allocation2 + $0xb0] sm:$0xff] %vm172, %v1384
      %1433 = vst.msk [vmem:[#allocation2 + $0xb8] sm:$0xff] %vm172, %v1385
      %1434 = vst.msk [vmem:[#allocation2 + $0xc0] sm:$0xff] %vm172, %v1386
      %1435 = vst.msk [vmem:[#allocation2 + $0xc8] sm:$0xff] %vm172, %v1387
      %1436 = vst.msk [vmem:[#allocation2 + $0xd0] sm:$0xff] %vm172, %v1388
      %1437 = vst.msk [vmem:[#allocation2 + $0xd8] sm:$0xff] %vm172, %v1389
      %1438 = vst.msk [vmem:[#allocation2 + $0xe0] sm:$0xff] %vm172, %v1390
      %1439 = vst.msk [vmem:[#allocation2 + $0xe8] sm:$0xff] %vm172, %v1391
      %1440 = vst.msk [vmem:[#allocation2 + $0xf0] sm:$0xff] %vm172, %v1392
      %1441 = vst.msk [vmem:[#allocation2 + $0xf8] sm:$0xff] %vm172, %v1393
      %1442 = vst.msk [vmem:[#allocation2 + $0x100] sm:$0xff] %vm172, %v1394
      %1443 = vst.msk [vmem:[#allocation2 + $0x108] sm:$0xff] %vm172, %v1395
      %1444 = vst.msk [vmem:[#allocation2 + $0x110] sm:$0xff] %vm172, %v1396
      %1445 = vst.msk [vmem:[#allocation2 + $0x118] sm:$0xff] %vm172, %v1397
      %1446 = vst.msk [vmem:[#allocation2 + $0x120] sm:$0xff] %vm172, %v1398
      %1447 = vst.msk [vmem:[#allocation2 + $0x128] sm:$0xff] %vm172, %v1399
      %1448 = vst.msk [vmem:[#allocation2 + $0x130] sm:$0xff] %vm172, %v1400
      %1449 = vst.msk [vmem:[#allocation2 + $0x138] sm:$0xff] %vm172, %v1401
      %1450 = vst.msk [vmem:[#allocation2 + $0x140] sm:$0xff] %vm172, %v1402
      %1451 = vst.msk [vmem:[#allocation2 + $0x148] sm:$0xff] %vm172, %v1403
      %1452 = vst.msk [vmem:[#allocation2 + $0x150] sm:$0xff] %vm172, %v1404
      %1453 = vst.msk [vmem:[#allocation2 + $0x158] sm:$0xff] %vm172, %v1405
      %1454 = vst.msk [vmem:[#allocation2 + $0x160] sm:$0xff] %vm172, %v1406
      %1455 = vst.msk [vmem:[#allocation2 + $0x168] sm:$0xff] %vm172, %v1407
      %1456 = vst.msk [vmem:[#allocation2 + $0x170] sm:$0xff] %vm172, %v1408
      %1457 = vst.msk [vmem:[#allocation2 + $0x178] sm:$0xff] %vm172, %v1409
      %v1458 = vld [vmem:[%s165] sm:$0xe]
      %v1459 = vld [vmem:[%s165 + $0x4] sm:$0xf]
      %v1460 = vld [vmem:[%s165 + $0x8] sm:$0xf]
      %v1461 = vld [vmem:[%s165 + $0xc] sm:$0xf]
      %v1462 = vld [vmem:[%s165 + $0x10] sm:$0xf]
      %v1463 = vld [vmem:[%s165 + $0x14] sm:$0xf]
      %v1464 = vld [vmem:[%s165 + $0x18] sm:$0xf]
      %v1465 = vld [vmem:[%s165 + $0x1c] sm:$0xf]
      %v1466 = vld [vmem:[%s165 + $0x20] sm:$0xf]
      %v1467 = vld [vmem:[%s165 + $0x24] sm:$0xf]
      %v1468 = vld [vmem:[%s165 + $0x28] sm:$0xf]
      %v1469 = vld [vmem:[%s165 + $0x2c] sm:$0xf]
      %v1470 = vld [vmem:[%s165 + $0x30] sm:$0xf]
      %v1471 = vld [vmem:[%s165 + $0x34] sm:$0xf]
      %v1472 = vld [vmem:[%s165 + $0x38] sm:$0xf]
      %v1473 = vld [vmem:[%s165 + $0x3c] sm:$0xf]
      %v1474 = vld [vmem:[%s165 + $0x40] sm:$0xf]
      %v1475 = vld [vmem:[%s165 + $0x44] sm:$0xf]
      %v1476 = vld [vmem:[%s165 + $0x48] sm:$0xf]
      %v1477 = vld [vmem:[%s165 + $0x4c] sm:$0xf]
      %v1478 = vld [vmem:[%s165 + $0x50] sm:$0xf]
      %v1479 = vld [vmem:[%s165 + $0x54] sm:$0xf]
      %v1480 = vld [vmem:[%s165 + $0x58] sm:$0xf]
      %v1481 = vld [vmem:[%s165 + $0x5c] sm:$0xf]
      %v1482 = vld [vmem:[%s165 + $0x60] sm:$0xf]
      %v1483 = vld [vmem:[%s165 + $0x64] sm:$0xf]
      %v1484 = vld [vmem:[%s165 + $0x68] sm:$0xf]
      %v1485 = vld [vmem:[%s165 + $0x6c] sm:$0xf]
      %v1486 = vld [vmem:[%s165 + $0x70] sm:$0xf]
      %v1487 = vld [vmem:[%s165 + $0x74] sm:$0xf]
      %v1488 = vld [vmem:[%s165 + $0x78] sm:$0xf]
      %v1489 = vld [vmem:[%s165 + $0x7c] sm:$0xf]
      %v1490 = vld [vmem:[%s165 + $0x80] sm:$0xf]
      %v1491 = vld [vmem:[%s165 + $0x84] sm:$0xf]
      %v1492 = vld [vmem:[%s165 + $0x88] sm:$0xf]
      %v1493 = vld [vmem:[%s165 + $0x8c] sm:$0xf]
      %v1494 = vld [vmem:[%s165 + $0x90] sm:$0xf]
      %v1495 = vld [vmem:[%s165 + $0x94] sm:$0xf]
      %v1496 = vld [vmem:[%s165 + $0x98] sm:$0xf]
      %v1497 = vld [vmem:[%s165 + $0x9c] sm:$0xf]
      %v1498 = vld [vmem:[%s165 + $0xa0] sm:$0xf]
      %v1499 = vld [vmem:[%s165 + $0xa4] sm:$0xf]
      %v1500 = vld [vmem:[%s165 + $0xa8] sm:$0xf]
      %v1501 = vld [vmem:[%s165 + $0xac] sm:$0xf]
      %v1502 = vld [vmem:[%s165 + $0xb0] sm:$0xf]
      %v1503 = vld [vmem:[%s165 + $0xb4] sm:$0xf]
      %v1504 = vld [vmem:[%s165 + $0xb8] sm:$0xf]
      %v1505 = vld [vmem:[%s165 + $0xbc] sm:$0xf]
      %v1506 = vld [vmem:[%s165 + $0xc0] sm:$0x1]
      %v1507 = vld [vmem:[#allocation2] sm:$0xff]
      %v1508 = vld [vmem:[#allocation2 + $0x8] sm:$0xff]
      %v1509 = vld [vmem:[#allocation2 + $0x10] sm:$0xff]
      %v1510 = vld [vmem:[#allocation2 + $0x18] sm:$0xff]
      %v1511 = vld [vmem:[#allocation2 + $0x20] sm:$0xff]
      %v1512 = vld [vmem:[#allocation2 + $0x28] sm:$0xff]
      %v1513 = vld [vmem:[#allocation2 + $0x30] sm:$0xff]
      %v1514 = vld [vmem:[#allocation2 + $0x38] sm:$0xff]
      %v1515 = vld [vmem:[#allocation2 + $0x40] sm:$0xff]
      %v1516 = vld [vmem:[#allocation2 + $0x48] sm:$0xff]
      %v1517 = vld [vmem:[#allocation2 + $0x50] sm:$0xff]
      %v1518 = vld [vmem:[#allocation2 + $0x58] sm:$0xff]
      %v1519 = vld [vmem:[#allocation2 + $0x60] sm:$0xff]
      %v1520 = vld [vmem:[#allocation2 + $0x68] sm:$0xff]
      %v1521 = vld [vmem:[#allocation2 + $0x70] sm:$0xff]
      %v1522 = vld [vmem:[#allocation2 + $0x78] sm:$0xff]
      %v1523 = vld [vmem:[#allocation2 + $0x80] sm:$0xff]
      %v1524 = vld [vmem:[#allocation2 + $0x88] sm:$0xff]
      %v1525 = vld [vmem:[#allocation2 + $0x90] sm:$0xff]
      %v1526 = vld [vmem:[#allocation2 + $0x98] sm:$0xff]
      %v1527 = vld [vmem:[#allocation2 + $0xa0] sm:$0xff]
      %v1528 = vld [vmem:[#allocation2 + $0xa8] sm:$0xff]
      %v1529 = vld [vmem:[#allocation2 + $0xb0] sm:$0xff]
      %v1530 = vld [vmem:[#allocation2 + $0xb8] sm:$0xff]
      %v1531 = vld [vmem:[#allocation2 + $0xc0] sm:$0xff]
      %v1532 = vld [vmem:[#allocation2 + $0xc8] sm:$0xff]
      %v1533 = vld [vmem:[#allocation2 + $0xd0] sm:$0xff]
      %v1534 = vld [vmem:[#allocation2 + $0xd8] sm:$0xff]
      %v1535 = vld [vmem:[#allocation2 + $0xe0] sm:$0xff]
      %v1536 = vld [vmem:[#allocation2 + $0xe8] sm:$0xff]
      %v1537 = vld [vmem:[#allocation2 + $0xf0] sm:$0xff]
      %v1538 = vld [vmem:[#allocation2 + $0xf8] sm:$0xff]
      %v1539 = vld [vmem:[#allocation2 + $0x100] sm:$0xff]
      %v1540 = vld [vmem:[#allocation2 + $0x108] sm:$0xff]
      %v1541 = vld [vmem:[#allocation2 + $0x110] sm:$0xff]
      %v1542 = vld [vmem:[#allocation2 + $0x118] sm:$0xff]
      %v1543 = vld [vmem:[#allocation2 + $0x120] sm:$0xff]
      %v1544 = vld [vmem:[#allocation2 + $0x128] sm:$0xff]
      %v1545 = vld [vmem:[#allocation2 + $0x130] sm:$0xff]
      %v1546 = vld [vmem:[#allocation2 + $0x138] sm:$0xff]
      %v1547 = vld [vmem:[#allocation2 + $0x140] sm:$0xff]
      %v1548 = vld [vmem:[#allocation2 + $0x148] sm:$0xff]
      %v1549 = vld [vmem:[#allocation2 + $0x150] sm:$0xff]
      %v1550 = vld [vmem:[#allocation2 + $0x158] sm:$0xff]
      %v1551 = vld [vmem:[#allocation2 + $0x160] sm:$0xff]
      %v1552 = vld [vmem:[#allocation2 + $0x168] sm:$0xff]
      %v1553 = vld [vmem:[#allocation2 + $0x170] sm:$0xff]
      %v1554 = vld [vmem:[#allocation2 + $0x178] sm:$0xff]
      %s1555 = scalar_lea.vmem %s1, 4
      %v1556 = vld [vmem:[%s1555] sm:$0x3]
      %v1606 = vunpack.c.l.b16 %v1458
      %v1607 = vunpack.c.l.b16 %v1459
      %v1608 = vunpack.c.l.b16 %v1460
      %v1609 = vunpack.c.l.b16 %v1461
      %v1610 = vunpack.c.l.b16 %v1462
      %v1611 = vunpack.c.l.b16 %v1463
      %v1612 = vunpack.c.l.b16 %v1464
      %v1613 = vunpack.c.l.b16 %v1465
      %v1614 = vunpack.c.l.b16 %v1466
      %v1615 = vunpack.c.l.b16 %v1467
      %v1616 = vunpack.c.l.b16 %v1468
      %v1617 = vunpack.c.l.b16 %v1469
      %v1618 = vunpack.c.l.b16 %v1470
      %v1619 = vunpack.c.l.b16 %v1471
      %v1620 = vunpack.c.l.b16 %v1472
      %v1621 = vunpack.c.l.b16 %v1473
      %v1622 = vunpack.c.l.b16 %v1474
      %v1623 = vunpack.c.l.b16 %v1475
      %v1624 = vunpack.c.l.b16 %v1476
      %v1625 = vunpack.c.l.b16 %v1477
      %v1626 = vunpack.c.l.b16 %v1478
      %v1627 = vunpack.c.l.b16 %v1479
      %v1628 = vunpack.c.l.b16 %v1480
      %v1629 = vunpack.c.l.b16 %v1481
      %v1630 = vunpack.c.l.b16 %v1482
      %v1631 = vunpack.c.l.b16 %v1483
      %v1632 = vunpack.c.l.b16 %v1484
      %v1633 = vunpack.c.l.b16 %v1485
      %v1634 = vunpack.c.l.b16 %v1486
      %v1635 = vunpack.c.l.b16 %v1487
      %v1636 = vunpack.c.l.b16 %v1488
      %v1637 = vunpack.c.l.b16 %v1489
      %v1638 = vunpack.c.l.b16 %v1490
      %v1639 = vunpack.c.l.b16 %v1491
      %v1640 = vunpack.c.l.b16 %v1492
      %v1641 = vunpack.c.l.b16 %v1493
      %v1642 = vunpack.c.l.b16 %v1494
      %v1643 = vunpack.c.l.b16 %v1495
      %v1644 = vunpack.c.l.b16 %v1496
      %v1645 = vunpack.c.l.b16 %v1497
      %v1646 = vunpack.c.l.b16 %v1498
      %v1647 = vunpack.c.l.b16 %v1499
      %v1648 = vunpack.c.l.b16 %v1500
      %v1649 = vunpack.c.l.b16 %v1501
      %v1650 = vunpack.c.l.b16 %v1502
      %v1651 = vunpack.c.l.b16 %v1503
      %v1652 = vunpack.c.l.b16 %v1504
      %v1653 = vunpack.c.l.b16 %v1505
      %v1654 = vunpack.c.l.b16 %v1506
      %v1655 = vpack.c.b16 %v1607, %v1606
      %v1656 = vpack.c.b16 %v1609, %v1608
      %v1657 = vpack.c.b16 %v1611, %v1610
      %v1658 = vpack.c.b16 %v1613, %v1612
      %v1659 = vpack.c.b16 %v1615, %v1614
      %v1660 = vpack.c.b16 %v1617, %v1616
      %v1661 = vpack.c.b16 %v1619, %v1618
      %v1662 = vpack.c.b16 %v1621, %v1620
      %v1663 = vpack.c.b16 %v1623, %v1622
      %v1664 = vpack.c.b16 %v1625, %v1624
      %v1665 = vpack.c.b16 %v1627, %v1626
      %v1666 = vpack.c.b16 %v1629, %v1628
      %v1667 = vpack.c.b16 %v1631, %v1630
      %v1668 = vpack.c.b16 %v1633, %v1632
      %v1669 = vpack.c.b16 %v1635, %v1634
      %v1670 = vpack.c.b16 %v1637, %v1636
      %v1671 = vpack.c.b16 %v1639, %v1638
      %v1672 = vpack.c.b16 %v1641, %v1640
      %v1673 = vpack.c.b16 %v1643, %v1642
      %v1674 = vpack.c.b16 %v1645, %v1644
      %v1675 = vpack.c.b16 %v1647, %v1646
      %v1676 = vpack.c.b16 %v1649, %v1648
      %v1677 = vpack.c.b16 %v1651, %v1650
      %v1678 = vpack.c.b16 %v1653, %v1652
      %v1679 = vpack.c.b16 %v1654, %v1654
      %vm1680 = vcmask 1046528
      %v1681 = vrot.slane %v1655, 1
      %v1682 = vrot.slane %v1656, 1
      %v1683 = vsel %vm1680, %v1681, %v1682
      %v1684 = vrot.slane %v1657, 1
      %v1685 = vsel %vm1680, %v1682, %v1684
      %v1686 = vrot.slane %v1658, 1
      %v1687 = vsel %vm1680, %v1684, %v1686
      %v1688 = vrot.slane %v1659, 1
      %v1689 = vsel %vm1680, %v1686, %v1688
      %v1690 = vrot.slane %v1660, 1
      %v1691 = vsel %vm1680, %v1688, %v1690
      %v1692 = vrot.slane %v1661, 1
      %v1693 = vsel %vm1680, %v1690, %v1692
      %v1694 = vrot.slane %v1662, 1
      %v1695 = vsel %vm1680, %v1692, %v1694
      %v1696 = vrot.slane %v1663, 1
      %v1697 = vsel %vm1680, %v1694, %v1696
      %v1698 = vrot.slane %v1664, 1
      %v1699 = vsel %vm1680, %v1696, %v1698
      %v1700 = vrot.slane %v1665, 1
      %v1701 = vsel %vm1680, %v1698, %v1700
      %v1702 = vrot.slane %v1666, 1
      %v1703 = vsel %vm1680, %v1700, %v1702
      %v1704 = vrot.slane %v1667, 1
      %v1705 = vsel %vm1680, %v1702, %v1704
      %v1706 = vrot.slane %v1668, 1
      %v1707 = vsel %vm1680, %v1704, %v1706
      %v1708 = vrot.slane %v1669, 1
      %v1709 = vsel %vm1680, %v1706, %v1708
      %v1710 = vrot.slane %v1670, 1
      %v1711 = vsel %vm1680, %v1708, %v1710
      %v1712 = vrot.slane %v1671, 1
      %v1713 = vsel %vm1680, %v1710, %v1712
      %v1714 = vrot.slane %v1672, 1
      %v1715 = vsel %vm1680, %v1712, %v1714
      %v1716 = vrot.slane %v1673, 1
      %v1717 = vsel %vm1680, %v1714, %v1716
      %v1718 = vrot.slane %v1674, 1
      %v1719 = vsel %vm1680, %v1716, %v1718
      %v1720 = vrot.slane %v1675, 1
      %v1721 = vsel %vm1680, %v1718, %v1720
      %v1722 = vrot.slane %v1676, 1
      %v1723 = vsel %vm1680, %v1720, %v1722
      %v1724 = vrot.slane %v1677, 1
      %v1725 = vsel %vm1680, %v1722, %v1724
      %v1726 = vrot.slane %v1678, 1
      %v1727 = vsel %vm1680, %v1724, %v1726
      %v1728 = vrot.slane %v1679, 1
      %v1729 = vsel %vm1680, %v1726, %v1728
      %v1731 = vsel %vm172, %v1683, 0
      %v1734 = vsel %vm172, %v1685, 0
      %v1737 = vsel %vm172, %v1687, 0
      %v1740 = vsel %vm172, %v1689, 0
      %v1743 = vsel %vm172, %v1691, 0
      %v1746 = vsel %vm172, %v1693, 0
      %v1749 = vsel %vm172, %v1695, 0
      %v1752 = vsel %vm172, %v1697, 0
      %v1755 = vsel %vm172, %v1699, 0
      %v1758 = vsel %vm172, %v1701, 0
      %v1761 = vsel %vm172, %v1703, 0
      %v1764 = vsel %vm172, %v1705, 0
      %v1767 = vsel %vm172, %v1707, 0
      %v1770 = vsel %vm172, %v1709, 0
      %v1773 = vsel %vm172, %v1711, 0
      %v1776 = vsel %vm172, %v1713, 0
      %v1779 = vsel %vm172, %v1715, 0
      %v1782 = vsel %vm172, %v1717, 0
      %v1785 = vsel %vm172, %v1719, 0
      %v1788 = vsel %vm172, %v1721, 0
      %v1791 = vsel %vm172, %v1723, 0
      %v1794 = vsel %vm172, %v1725, 0
      %v1797 = vsel %vm172, %v1727, 0
      %v1800 = vsel %vm172, %v1729, 0
      %v1803 = vsel %vm510, %v1556, 0
      %1805 = vmatpush.bf16.msra.mxu0 0
      %1806 = vmatpush.bf16.msra.mxu0 0
      %1807 = vmatpush.bf16.msra.mxu0 0
      %1808 = vmatpush.bf16.msra.mxu0 0
      %1809 = vmatpush.bf16.msra.mxu0 0
      %1810 = vmatpush.bf16.msra.mxu0 0
      %1811 = vmatpush.bf16.msra.mxu0 0
      %1812 = vmatpush.bf16.msra.mxu0 %v1803
      %1813 = vmatmul.bf16.gmra.mxu0 %v1731
      %v1814 = vpop.f32.mrf.mxu0
      %v1815 = vadd.f32 0.0, %v1814
      %v1816 = vpop.f32.mrf.mxu0
      %v1817 = vadd.f32 0.0, %v1816
      %1818 = vmatmul.bf16.gmra.mxu0 %v1734
      %v1819 = vpop.f32.mrf.mxu0
      %v1820 = vadd.f32 0.0, %v1819
      %v1821 = vpop.f32.mrf.mxu0
      %v1822 = vadd.f32 0.0, %v1821
      %1823 = vmatmul.bf16.gmra.mxu0 %v1737
      %v1824 = vpop.f32.mrf.mxu0
      %v1825 = vadd.f32 0.0, %v1824
      %v1826 = vpop.f32.mrf.mxu0
      %v1827 = vadd.f32 0.0, %v1826
      %1828 = vmatmul.bf16.gmra.mxu0 %v1740
      %v1829 = vpop.f32.mrf.mxu0
      %v1830 = vadd.f32 0.0, %v1829
      %v1831 = vpop.f32.mrf.mxu0
      %v1832 = vadd.f32 0.0, %v1831
      %1833 = vmatmul.bf16.gmra.mxu0 %v1743
      %v1834 = vpop.f32.mrf.mxu0
      %v1835 = vadd.f32 0.0, %v1834
      %v1836 = vpop.f32.mrf.mxu0
      %v1837 = vadd.f32 0.0, %v1836
      %1838 = vmatmul.bf16.gmra.mxu0 %v1746
      %v1839 = vpop.f32.mrf.mxu0
      %v1840 = vadd.f32 0.0, %v1839
      %v1841 = vpop.f32.mrf.mxu0
      %v1842 = vadd.f32 0.0, %v1841
      %1843 = vmatmul.bf16.gmra.mxu0 %v1749
      %v1844 = vpop.f32.mrf.mxu0
      %v1845 = vadd.f32 0.0, %v1844
      %v1846 = vpop.f32.mrf.mxu0
      %v1847 = vadd.f32 0.0, %v1846
      %1848 = vmatmul.bf16.gmra.mxu0 %v1752
      %v1849 = vpop.f32.mrf.mxu0
      %v1850 = vadd.f32 0.0, %v1849
      %v1851 = vpop.f32.mrf.mxu0
      %v1852 = vadd.f32 0.0, %v1851
      %1853 = vmatmul.bf16.gmra.mxu0 %v1755
      %v1854 = vpop.f32.mrf.mxu0
      %v1855 = vadd.f32 0.0, %v1854
      %v1856 = vpop.f32.mrf.mxu0
      %v1857 = vadd.f32 0.0, %v1856
      %1858 = vmatmul.bf16.gmra.mxu0 %v1758
      %v1859 = vpop.f32.mrf.mxu0
      %v1860 = vadd.f32 0.0, %v1859
      %v1861 = vpop.f32.mrf.mxu0
      %v1862 = vadd.f32 0.0, %v1861
      %1863 = vmatmul.bf16.gmra.mxu0 %v1761
      %v1864 = vpop.f32.mrf.mxu0
      %v1865 = vadd.f32 0.0, %v1864
      %v1866 = vpop.f32.mrf.mxu0
      %v1867 = vadd.f32 0.0, %v1866
      %1868 = vmatmul.bf16.gmra.mxu0 %v1764
      %v1869 = vpop.f32.mrf.mxu0
      %v1870 = vadd.f32 0.0, %v1869
      %v1871 = vpop.f32.mrf.mxu0
      %v1872 = vadd.f32 0.0, %v1871
      %1873 = vmatmul.bf16.gmra.mxu0 %v1767
      %v1874 = vpop.f32.mrf.mxu0
      %v1875 = vadd.f32 0.0, %v1874
      %v1876 = vpop.f32.mrf.mxu0
      %v1877 = vadd.f32 0.0, %v1876
      %1878 = vmatmul.bf16.gmra.mxu0 %v1770
      %v1879 = vpop.f32.mrf.mxu0
      %v1880 = vadd.f32 0.0, %v1879
      %v1881 = vpop.f32.mrf.mxu0
      %v1882 = vadd.f32 0.0, %v1881
      %1883 = vmatmul.bf16.gmra.mxu0 %v1773
      %v1884 = vpop.f32.mrf.mxu0
      %v1885 = vadd.f32 0.0, %v1884
      %v1886 = vpop.f32.mrf.mxu0
      %v1887 = vadd.f32 0.0, %v1886
      %1888 = vmatmul.bf16.gmra.mxu0 %v1776
      %v1889 = vpop.f32.mrf.mxu0
      %v1890 = vadd.f32 0.0, %v1889
      %v1891 = vpop.f32.mrf.mxu0
      %v1892 = vadd.f32 0.0, %v1891
      %1893 = vmatmul.bf16.gmra.mxu0 %v1779
      %v1894 = vpop.f32.mrf.mxu0
      %v1895 = vadd.f32 0.0, %v1894
      %v1896 = vpop.f32.mrf.mxu0
      %v1897 = vadd.f32 0.0, %v1896
      %1898 = vmatmul.bf16.gmra.mxu0 %v1782
      %v1899 = vpop.f32.mrf.mxu0
      %v1900 = vadd.f32 0.0, %v1899
      %v1901 = vpop.f32.mrf.mxu0
      %v1902 = vadd.f32 0.0, %v1901
      %1903 = vmatmul.bf16.gmra.mxu0 %v1785
      %v1904 = vpop.f32.mrf.mxu0
      %v1905 = vadd.f32 0.0, %v1904
      %v1906 = vpop.f32.mrf.mxu0
      %v1907 = vadd.f32 0.0, %v1906
      %1908 = vmatmul.bf16.gmra.mxu0 %v1788
      %v1909 = vpop.f32.mrf.mxu0
      %v1910 = vadd.f32 0.0, %v1909
      %v1911 = vpop.f32.mrf.mxu0
      %v1912 = vadd.f32 0.0, %v1911
      %1913 = vmatmul.bf16.gmra.mxu0 %v1791
      %v1914 = vpop.f32.mrf.mxu0
      %v1915 = vadd.f32 0.0, %v1914
      %v1916 = vpop.f32.mrf.mxu0
      %v1917 = vadd.f32 0.0, %v1916
      %1918 = vmatmul.bf16.gmra.mxu0 %v1794
      %v1919 = vpop.f32.mrf.mxu0
      %v1920 = vadd.f32 0.0, %v1919
      %v1921 = vpop.f32.mrf.mxu0
      %v1922 = vadd.f32 0.0, %v1921
      %1923 = vmatmul.bf16.gmra.mxu0 %v1797
      %v1924 = vpop.f32.mrf.mxu0
      %v1925 = vadd.f32 0.0, %v1924
      %v1926 = vpop.f32.mrf.mxu0
      %v1927 = vadd.f32 0.0, %v1926
      %1928 = vmatmul.bf16.gmra.mxu0 %v1800
      %v1929 = vpop.f32.mrf.mxu0
      %v1930 = vadd.f32 0.0, %v1929
      %v1931 = vpop.f32.mrf.mxu0
      %v1932 = vadd.f32 0.0, %v1931
      %1933 = vdwg.mxu0
      %v1934 = vadd.f32 %v1507, %v1815
      %v1935 = vadd.f32 %v1508, %v1817
      %v1936 = vadd.f32 %v1509, %v1820
      %v1937 = vadd.f32 %v1510, %v1822
      %v1938 = vadd.f32 %v1511, %v1825
      %v1939 = vadd.f32 %v1512, %v1827
      %v1940 = vadd.f32 %v1513, %v1830
      %v1941 = vadd.f32 %v1514, %v1832
      %v1942 = vadd.f32 %v1515, %v1835
      %v1943 = vadd.f32 %v1516, %v1837
      %v1944 = vadd.f32 %v1517, %v1840
      %v1945 = vadd.f32 %v1518, %v1842
      %v1946 = vadd.f32 %v1519, %v1845
      %v1947 = vadd.f32 %v1520, %v1847
      %v1948 = vadd.f32 %v1521, %v1850
      %v1949 = vadd.f32 %v1522, %v1852
      %v1950 = vadd.f32 %v1523, %v1855
      %v1951 = vadd.f32 %v1524, %v1857
      %v1952 = vadd.f32 %v1525, %v1860
      %v1953 = vadd.f32 %v1526, %v1862
      %v1954 = vadd.f32 %v1527, %v1865
      %v1955 = vadd.f32 %v1528, %v1867
      %v1956 = vadd.f32 %v1529, %v1870
      %v1957 = vadd.f32 %v1530, %v1872
      %v1958 = vadd.f32 %v1531, %v1875
      %v1959 = vadd.f32 %v1532, %v1877
      %v1960 = vadd.f32 %v1533, %v1880
      %v1961 = vadd.f32 %v1534, %v1882
      %v1962 = vadd.f32 %v1535, %v1885
      %v1963 = vadd.f32 %v1536, %v1887
      %v1964 = vadd.f32 %v1537, %v1890
      %v1965 = vadd.f32 %v1538, %v1892
      %v1966 = vadd.f32 %v1539, %v1895
      %v1967 = vadd.f32 %v1540, %v1897
      %v1968 = vadd.f32 %v1541, %v1900
      %v1969 = vadd.f32 %v1542, %v1902
      %v1970 = vadd.f32 %v1543, %v1905
      %v1971 = vadd.f32 %v1544, %v1907
      %v1972 = vadd.f32 %v1545, %v1910
      %v1973 = vadd.f32 %v1546, %v1912
      %v1974 = vadd.f32 %v1547, %v1915
      %v1975 = vadd.f32 %v1548, %v1917
      %v1976 = vadd.f32 %v1549, %v1920
      %v1977 = vadd.f32 %v1550, %v1922
      %v1978 = vadd.f32 %v1551, %v1925
      %v1979 = vadd.f32 %v1552, %v1927
      %v1980 = vadd.f32 %v1553, %v1930
      %v1981 = vadd.f32 %v1554, %v1932
      %1982 = vst.msk [vmem:[#allocation2] sm:$0xff] %vm172, %v1934
      %1983 = vst.msk [vmem:[#allocation2 + $0x8] sm:$0xff] %vm172, %v1935
      %1984 = vst.msk [vmem:[#allocation2 + $0x10] sm:$0xff] %vm172, %v1936
      %1985 = vst.msk [vmem:[#allocation2 + $0x18] sm:$0xff] %vm172, %v1937
      %1986 = vst.msk [vmem:[#allocation2 + $0x20] sm:$0xff] %vm172, %v1938
      %1987 = vst.msk [vmem:[#allocation2 + $0x28] sm:$0xff] %vm172, %v1939
      %1988 = vst.msk [vmem:[#allocation2 + $0x30] sm:$0xff] %vm172, %v1940
      %1989 = vst.msk [vmem:[#allocation2 + $0x38] sm:$0xff] %vm172, %v1941
      %1990 = vst.msk [vmem:[#allocation2 + $0x40] sm:$0xff] %vm172, %v1942
      %1991 = vst.msk [vmem:[#allocation2 + $0x48] sm:$0xff] %vm172, %v1943
      %1992 = vst.msk [vmem:[#allocation2 + $0x50] sm:$0xff] %vm172, %v1944
      %1993 = vst.msk [vmem:[#allocation2 + $0x58] sm:$0xff] %vm172, %v1945
      %1994 = vst.msk [vmem:[#allocation2 + $0x60] sm:$0xff] %vm172, %v1946
      %1995 = vst.msk [vmem:[#allocation2 + $0x68] sm:$0xff] %vm172, %v1947
      %1996 = vst.msk [vmem:[#allocation2 + $0x70] sm:$0xff] %vm172, %v1948
      %1997 = vst.msk [vmem:[#allocation2 + $0x78] sm:$0xff] %vm172, %v1949
      %1998 = vst.msk [vmem:[#allocation2 + $0x80] sm:$0xff] %vm172, %v1950
      %1999 = vst.msk [vmem:[#allocation2 + $0x88] sm:$0xff] %vm172, %v1951
      %2000 = vst.msk [vmem:[#allocation2 + $0x90] sm:$0xff] %vm172, %v1952
      %2001 = vst.msk [vmem:[#allocation2 + $0x98] sm:$0xff] %vm172, %v1953
      %2002 = vst.msk [vmem:[#allocation2 + $0xa0] sm:$0xff] %vm172, %v1954
      %2003 = vst.msk [vmem:[#allocation2 + $0xa8] sm:$0xff] %vm172, %v1955
      %2004 = vst.msk [vmem:[#allocation2 + $0xb0] sm:$0xff] %vm172, %v1956
      %2005 = vst.msk [vmem:[#allocation2 + $0xb8] sm:$0xff] %vm172, %v1957
      %2006 = vst.msk [vmem:[#allocation2 + $0xc0] sm:$0xff] %vm172, %v1958
      %2007 = vst.msk [vmem:[#allocation2 + $0xc8] sm:$0xff] %vm172, %v1959
      %2008 = vst.msk [vmem:[#allocation2 + $0xd0] sm:$0xff] %vm172, %v1960
      %2009 = vst.msk [vmem:[#allocation2 + $0xd8] sm:$0xff] %vm172, %v1961
      %2010 = vst.msk [vmem:[#allocation2 + $0xe0] sm:$0xff] %vm172, %v1962
      %2011 = vst.msk [vmem:[#allocation2 + $0xe8] sm:$0xff] %vm172, %v1963
      %2012 = vst.msk [vmem:[#allocation2 + $0xf0] sm:$0xff] %vm172, %v1964
      %2013 = vst.msk [vmem:[#allocation2 + $0xf8] sm:$0xff] %vm172, %v1965
      %2014 = vst.msk [vmem:[#allocation2 + $0x100] sm:$0xff] %vm172, %v1966
      %2015 = vst.msk [vmem:[#allocation2 + $0x108] sm:$0xff] %vm172, %v1967
      %2016 = vst.msk [vmem:[#allocation2 + $0x110] sm:$0xff] %vm172, %v1968
      %2017 = vst.msk [vmem:[#allocation2 + $0x118] sm:$0xff] %vm172, %v1969
      %2018 = vst.msk [vmem:[#allocation2 + $0x120] sm:$0xff] %vm172, %v1970
      %2019 = vst.msk [vmem:[#allocation2 + $0x128] sm:$0xff] %vm172, %v1971
      %2020 = vst.msk [vmem:[#allocation2 + $0x130] sm:$0xff] %vm172, %v1972
      %2021 = vst.msk [vmem:[#allocation2 + $0x138] sm:$0xff] %vm172, %v1973
      %2022 = vst.msk [vmem:[#allocation2 + $0x140] sm:$0xff] %vm172, %v1974
      %2023 = vst.msk [vmem:[#allocation2 + $0x148] sm:$0xff] %vm172, %v1975
      %2024 = vst.msk [vmem:[#allocation2 + $0x150] sm:$0xff] %vm172, %v1976
      %2025 = vst.msk [vmem:[#allocation2 + $0x158] sm:$0xff] %vm172, %v1977
      %2026 = vst.msk [vmem:[#allocation2 + $0x160] sm:$0xff] %vm172, %v1978
      %2027 = vst.msk [vmem:[#allocation2 + $0x168] sm:$0xff] %vm172, %v1979
      %2028 = vst.msk [vmem:[#allocation2 + $0x170] sm:$0xff] %vm172, %v1980
      %2029 = vst.msk [vmem:[#allocation2 + $0x178] sm:$0xff] %vm172, %v1981
      %v2030 = vld [vmem:[%s165 + $0xc] sm:$0xf]
      %v2031 = vld [vmem:[%s165 + $0x10] sm:$0xf]
      %v2032 = vld [vmem:[%s165 + $0x14] sm:$0xf]
      %v2033 = vld [vmem:[%s165 + $0x18] sm:$0xf]
      %v2034 = vld [vmem:[%s165 + $0x1c] sm:$0xf]
      %v2035 = vld [vmem:[%s165 + $0x20] sm:$0xf]
      %v2036 = vld [vmem:[%s165 + $0x24] sm:$0xf]
      %v2037 = vld [vmem:[%s165 + $0x28] sm:$0xf]
      %v2038 = vld [vmem:[%s165 + $0x2c] sm:$0xf]
      %v2039 = vld [vmem:[%s165 + $0x30] sm:$0xf]
      %v2040 = vld [vmem:[%s165 + $0x34] sm:$0xf]
      %v2041 = vld [vmem:[%s165 + $0x38] sm:$0xf]
      %v2042 = vld [vmem:[%s165 + $0x3c] sm:$0xf]
      %v2043 = vld [vmem:[%s165 + $0x40] sm:$0xf]
      %v2044 = vld [vmem:[%s165 + $0x44] sm:$0xf]
      %v2045 = vld [vmem:[%s165 + $0x48] sm:$0xf]
      %v2046 = vld [vmem:[%s165 + $0x4c] sm:$0xf]
      %v2047 = vld [vmem:[%s165 + $0x50] sm:$0xf]
      %v2048 = vld [vmem:[%s165 + $0x54] sm:$0xf]
      %v2049 = vld [vmem:[%s165 + $0x58] sm:$0xf]
      %v2050 = vld [vmem:[%s165 + $0x5c] sm:$0xf]
      %v2051 = vld [vmem:[%s165 + $0x60] sm:$0xf]
      %v2052 = vld [vmem:[%s165 + $0x64] sm:$0xf]
      %v2053 = vld [vmem:[%s165 + $0x68] sm:$0xf]
      %v2054 = vld [vmem:[%s165 + $0x6c] sm:$0xf]
      %v2055 = vld [vmem:[%s165 + $0x70] sm:$0xf]
      %v2056 = vld [vmem:[%s165 + $0x74] sm:$0xf]
      %v2057 = vld [vmem:[%s165 + $0x78] sm:$0xf]
      %v2058 = vld [vmem:[%s165 + $0x7c] sm:$0xf]
      %v2059 = vld [vmem:[%s165 + $0x80] sm:$0xf]
      %v2060 = vld [vmem:[%s165 + $0x84] sm:$0xf]
      %v2061 = vld [vmem:[%s165 + $0x88] sm:$0xf]
      %v2062 = vld [vmem:[%s165 + $0x8c] sm:$0xf]
      %v2063 = vld [vmem:[%s165 + $0x90] sm:$0xf]
      %v2064 = vld [vmem:[%s165 + $0x94] sm:$0xf]
      %v2065 = vld [vmem:[%s165 + $0x98] sm:$0xf]
      %v2066 = vld [vmem:[%s165 + $0x9c] sm:$0xf]
      %v2067 = vld [vmem:[%s165 + $0xa0] sm:$0xf]
      %v2068 = vld [vmem:[%s165 + $0xa4] sm:$0xf]
      %v2069 = vld [vmem:[%s165 + $0xa8] sm:$0xf]
      %v2070 = vld [vmem:[%s165 + $0xac] sm:$0xf]
      %v2071 = vld [vmem:[%s165 + $0xb0] sm:$0xf]
      %v2072 = vld [vmem:[%s165 + $0xb4] sm:$0xf]
      %v2073 = vld [vmem:[%s165 + $0xb8] sm:$0xf]
      %v2074 = vld [vmem:[%s165 + $0xbc] sm:$0xf]
      %v2075 = vld [vmem:[%s165 + $0xc0] sm:$0xf]
      %v2076 = vld [vmem:[%s165 + $0xc4] sm:$0xf]
      %v2077 = vld [vmem:[%s165 + $0xc8] sm:$0xf]
      %v2078 = vld [vmem:[#allocation2] sm:$0xff]
      %v2079 = vld [vmem:[#allocation2 + $0x8] sm:$0xff]
      %v2080 = vld [vmem:[#allocation2 + $0x10] sm:$0xff]
      %v2081 = vld [vmem:[#allocation2 + $0x18] sm:$0xff]
      %v2082 = vld [vmem:[#allocation2 + $0x20] sm:$0xff]
      %v2083 = vld [vmem:[#allocation2 + $0x28] sm:$0xff]
      %v2084 = vld [vmem:[#allocation2 + $0x30] sm:$0xff]
      %v2085 = vld [vmem:[#allocation2 + $0x38] sm:$0xff]
      %v2086 = vld [vmem:[#allocation2 + $0x40] sm:$0xff]
      %v2087 = vld [vmem:[#allocation2 + $0x48] sm:$0xff]
      %v2088 = vld [vmem:[#allocation2 + $0x50] sm:$0xff]
      %v2089 = vld [vmem:[#allocation2 + $0x58] sm:$0xff]
      %v2090 = vld [vmem:[#allocation2 + $0x60] sm:$0xff]
      %v2091 = vld [vmem:[#allocation2 + $0x68] sm:$0xff]
      %v2092 = vld [vmem:[#allocation2 + $0x70] sm:$0xff]
      %v2093 = vld [vmem:[#allocation2 + $0x78] sm:$0xff]
      %v2094 = vld [vmem:[#allocation2 + $0x80] sm:$0xff]
      %v2095 = vld [vmem:[#allocation2 + $0x88] sm:$0xff]
      %v2096 = vld [vmem:[#allocation2 + $0x90] sm:$0xff]
      %v2097 = vld [vmem:[#allocation2 + $0x98] sm:$0xff]
      %v2098 = vld [vmem:[#allocation2 + $0xa0] sm:$0xff]
      %v2099 = vld [vmem:[#allocation2 + $0xa8] sm:$0xff]
      %v2100 = vld [vmem:[#allocation2 + $0xb0] sm:$0xff]
      %v2101 = vld [vmem:[#allocation2 + $0xb8] sm:$0xff]
      %v2102 = vld [vmem:[#allocation2 + $0xc0] sm:$0xff]
      %v2103 = vld [vmem:[#allocation2 + $0xc8] sm:$0xff]
      %v2104 = vld [vmem:[#allocation2 + $0xd0] sm:$0xff]
      %v2105 = vld [vmem:[#allocation2 + $0xd8] sm:$0xff]
      %v2106 = vld [vmem:[#allocation2 + $0xe0] sm:$0xff]
      %v2107 = vld [vmem:[#allocation2 + $0xe8] sm:$0xff]
      %v2108 = vld [vmem:[#allocation2 + $0xf0] sm:$0xff]
      %v2109 = vld [vmem:[#allocation2 + $0xf8] sm:$0xff]
      %v2110 = vld [vmem:[#allocation2 + $0x100] sm:$0xff]
      %v2111 = vld [vmem:[#allocation2 + $0x108] sm:$0xff]
      %v2112 = vld [vmem:[#allocation2 + $0x110] sm:$0xff]
      %v2113 = vld [vmem:[#allocation2 + $0x118] sm:$0xff]
      %v2114 = vld [vmem:[#allocation2 + $0x120] sm:$0xff]
      %v2115 = vld [vmem:[#allocation2 + $0x128] sm:$0xff]
      %v2116 = vld [vmem:[#allocation2 + $0x130] sm:$0xff]
      %v2117 = vld [vmem:[#allocation2 + $0x138] sm:$0xff]
      %v2118 = vld [vmem:[#allocation2 + $0x140] sm:$0xff]
      %v2119 = vld [vmem:[#allocation2 + $0x148] sm:$0xff]
      %v2120 = vld [vmem:[#allocation2 + $0x150] sm:$0xff]
      %v2121 = vld [vmem:[#allocation2 + $0x158] sm:$0xff]
      %v2122 = vld [vmem:[#allocation2 + $0x160] sm:$0xff]
      %v2123 = vld [vmem:[#allocation2 + $0x168] sm:$0xff]
      %v2124 = vld [vmem:[#allocation2 + $0x170] sm:$0xff]
      %v2125 = vld [vmem:[#allocation2 + $0x178] sm:$0xff]
      %s2126 = scalar_lea.vmem %s1, 6
      %v2127 = vld [vmem:[%s2126] sm:$0x3]
      %v2176 = vunpack.c.l.b16 %v2030
      %v2177 = vunpack.c.l.b16 %v2031
      %v2178 = vunpack.c.l.b16 %v2032
      %v2179 = vunpack.c.l.b16 %v2033
      %v2180 = vunpack.c.l.b16 %v2034
      %v2181 = vunpack.c.l.b16 %v2035
      %v2182 = vunpack.c.l.b16 %v2036
      %v2183 = vunpack.c.l.b16 %v2037
      %v2184 = vunpack.c.l.b16 %v2038
      %v2185 = vunpack.c.l.b16 %v2039
      %v2186 = vunpack.c.l.b16 %v2040
      %v2187 = vunpack.c.l.b16 %v2041
      %v2188 = vunpack.c.l.b16 %v2042
      %v2189 = vunpack.c.l.b16 %v2043
      %v2190 = vunpack.c.l.b16 %v2044
      %v2191 = vunpack.c.l.b16 %v2045
      %v2192 = vunpack.c.l.b16 %v2046
      %v2193 = vunpack.c.l.b16 %v2047
      %v2194 = vunpack.c.l.b16 %v2048
      %v2195 = vunpack.c.l.b16 %v2049
      %v2196 = vunpack.c.l.b16 %v2050
      %v2197 = vunpack.c.l.b16 %v2051
      %v2198 = vunpack.c.l.b16 %v2052
      %v2199 = vunpack.c.l.b16 %v2053
      %v2200 = vunpack.c.l.b16 %v2054
      %v2201 = vunpack.c.l.b16 %v2055
      %v2202 = vunpack.c.l.b16 %v2056
      %v2203 = vunpack.c.l.b16 %v2057
      %v2204 = vunpack.c.l.b16 %v2058
      %v2205 = vunpack.c.l.b16 %v2059
      %v2206 = vunpack.c.l.b16 %v2060
      %v2207 = vunpack.c.l.b16 %v2061
      %v2208 = vunpack.c.l.b16 %v2062
      %v2209 = vunpack.c.l.b16 %v2063
      %v2210 = vunpack.c.l.b16 %v2064
      %v2211 = vunpack.c.l.b16 %v2065
      %v2212 = vunpack.c.l.b16 %v2066
      %v2213 = vunpack.c.l.b16 %v2067
      %v2214 = vunpack.c.l.b16 %v2068
      %v2215 = vunpack.c.l.b16 %v2069
      %v2216 = vunpack.c.l.b16 %v2070
      %v2217 = vunpack.c.l.b16 %v2071
      %v2218 = vunpack.c.l.b16 %v2072
      %v2219 = vunpack.c.l.b16 %v2073
      %v2220 = vunpack.c.l.b16 %v2074
      %v2221 = vunpack.c.l.b16 %v2075
      %v2222 = vunpack.c.l.b16 %v2076
      %v2223 = vunpack.c.l.b16 %v2077
      %v2224 = vpack.c.b16 %v2177, %v2176
      %v2225 = vpack.c.b16 %v2179, %v2178
      %v2226 = vpack.c.b16 %v2181, %v2180
      %v2227 = vpack.c.b16 %v2183, %v2182
      %v2228 = vpack.c.b16 %v2185, %v2184
      %v2229 = vpack.c.b16 %v2187, %v2186
      %v2230 = vpack.c.b16 %v2189, %v2188
      %v2231 = vpack.c.b16 %v2191, %v2190
      %v2232 = vpack.c.b16 %v2193, %v2192
      %v2233 = vpack.c.b16 %v2195, %v2194
      %v2234 = vpack.c.b16 %v2197, %v2196
      %v2235 = vpack.c.b16 %v2199, %v2198
      %v2236 = vpack.c.b16 %v2201, %v2200
      %v2237 = vpack.c.b16 %v2203, %v2202
      %v2238 = vpack.c.b16 %v2205, %v2204
      %v2239 = vpack.c.b16 %v2207, %v2206
      %v2240 = vpack.c.b16 %v2209, %v2208
      %v2241 = vpack.c.b16 %v2211, %v2210
      %v2242 = vpack.c.b16 %v2213, %v2212
      %v2243 = vpack.c.b16 %v2215, %v2214
      %v2244 = vpack.c.b16 %v2217, %v2216
      %v2245 = vpack.c.b16 %v2219, %v2218
      %v2246 = vpack.c.b16 %v2221, %v2220
      %v2247 = vpack.c.b16 %v2223, %v2222
      %v2249 = vsel %vm172, %v2224, 0
      %v2252 = vsel %vm172, %v2225, 0
      %v2255 = vsel %vm172, %v2226, 0
      %v2258 = vsel %vm172, %v2227, 0
      %v2261 = vsel %vm172, %v2228, 0
      %v2264 = vsel %vm172, %v2229, 0
      %v2267 = vsel %vm172, %v2230, 0
      %v2270 = vsel %vm172, %v2231, 0
      %v2273 = vsel %vm172, %v2232, 0
      %v2276 = vsel %vm172, %v2233, 0
      %v2279 = vsel %vm172, %v2234, 0
      %v2282 = vsel %vm172, %v2235, 0
      %v2285 = vsel %vm172, %v2236, 0
      %v2288 = vsel %vm172, %v2237, 0
      %v2291 = vsel %vm172, %v2238, 0
      %v2294 = vsel %vm172, %v2239, 0
      %v2297 = vsel %vm172, %v2240, 0
      %v2300 = vsel %vm172, %v2241, 0
      %v2303 = vsel %vm172, %v2242, 0
      %v2306 = vsel %vm172, %v2243, 0
      %v2309 = vsel %vm172, %v2244, 0
      %v2312 = vsel %vm172, %v2245, 0
      %v2315 = vsel %vm172, %v2246, 0
      %v2318 = vsel %vm172, %v2247, 0
      %v2321 = vsel %vm510, %v2127, 0
      %2323 = vmatpush.bf16.msra.mxu0 0
      %2324 = vmatpush.bf16.msra.mxu0 0
      %2325 = vmatpush.bf16.msra.mxu0 0
      %2326 = vmatpush.bf16.msra.mxu0 0
      %2327 = vmatpush.bf16.msra.mxu0 0
      %2328 = vmatpush.bf16.msra.mxu0 0
      %2329 = vmatpush.bf16.msra.mxu0 0
      %2330 = vmatpush.bf16.msra.mxu0 %v2321
      %2331 = vmatmul.bf16.gmra.mxu0 %v2249
      %v2332 = vpop.f32.mrf.mxu0
      %v2333 = vadd.f32 0.0, %v2332
      %v2334 = vpop.f32.mrf.mxu0
      %v2335 = vadd.f32 0.0, %v2334
      %2336 = vmatmul.bf16.gmra.mxu0 %v2252
      %v2337 = vpop.f32.mrf.mxu0
      %v2338 = vadd.f32 0.0, %v2337
      %v2339 = vpop.f32.mrf.mxu0
      %v2340 = vadd.f32 0.0, %v2339
      %2341 = vmatmul.bf16.gmra.mxu0 %v2255
      %v2342 = vpop.f32.mrf.mxu0
      %v2343 = vadd.f32 0.0, %v2342
      %v2344 = vpop.f32.mrf.mxu0
      %v2345 = vadd.f32 0.0, %v2344
      %2346 = vmatmul.bf16.gmra.mxu0 %v2258
      %v2347 = vpop.f32.mrf.mxu0
      %v2348 = vadd.f32 0.0, %v2347
      %v2349 = vpop.f32.mrf.mxu0
      %v2350 = vadd.f32 0.0, %v2349
      %2351 = vmatmul.bf16.gmra.mxu0 %v2261
      %v2352 = vpop.f32.mrf.mxu0
      %v2353 = vadd.f32 0.0, %v2352
      %v2354 = vpop.f32.mrf.mxu0
      %v2355 = vadd.f32 0.0, %v2354
      %2356 = vmatmul.bf16.gmra.mxu0 %v2264
      %v2357 = vpop.f32.mrf.mxu0
      %v2358 = vadd.f32 0.0, %v2357
      %v2359 = vpop.f32.mrf.mxu0
      %v2360 = vadd.f32 0.0, %v2359
      %2361 = vmatmul.bf16.gmra.mxu0 %v2267
      %v2362 = vpop.f32.mrf.mxu0
      %v2363 = vadd.f32 0.0, %v2362
      %v2364 = vpop.f32.mrf.mxu0
      %v2365 = vadd.f32 0.0, %v2364
      %2366 = vmatmul.bf16.gmra.mxu0 %v2270
      %v2367 = vpop.f32.mrf.mxu0
      %v2368 = vadd.f32 0.0, %v2367
      %v2369 = vpop.f32.mrf.mxu0
      %v2370 = vadd.f32 0.0, %v2369
      %2371 = vmatmul.bf16.gmra.mxu0 %v2273
      %v2372 = vpop.f32.mrf.mxu0
      %v2373 = vadd.f32 0.0, %v2372
      %v2374 = vpop.f32.mrf.mxu0
      %v2375 = vadd.f32 0.0, %v2374
      %2376 = vmatmul.bf16.gmra.mxu0 %v2276
      %v2377 = vpop.f32.mrf.mxu0
      %v2378 = vadd.f32 0.0, %v2377
      %v2379 = vpop.f32.mrf.mxu0
      %v2380 = vadd.f32 0.0, %v2379
      %2381 = vmatmul.bf16.gmra.mxu0 %v2279
      %v2382 = vpop.f32.mrf.mxu0
      %v2383 = vadd.f32 0.0, %v2382
      %v2384 = vpop.f32.mrf.mxu0
      %v2385 = vadd.f32 0.0, %v2384
      %2386 = vmatmul.bf16.gmra.mxu0 %v2282
      %v2387 = vpop.f32.mrf.mxu0
      %v2388 = vadd.f32 0.0, %v2387
      %v2389 = vpop.f32.mrf.mxu0
      %v2390 = vadd.f32 0.0, %v2389
      %2391 = vmatmul.bf16.gmra.mxu0 %v2285
      %v2392 = vpop.f32.mrf.mxu0
      %v2393 = vadd.f32 0.0, %v2392
      %v2394 = vpop.f32.mrf.mxu0
      %v2395 = vadd.f32 0.0, %v2394
      %2396 = vmatmul.bf16.gmra.mxu0 %v2288
      %v2397 = vpop.f32.mrf.mxu0
      %v2398 = vadd.f32 0.0, %v2397
      %v2399 = vpop.f32.mrf.mxu0
      %v2400 = vadd.f32 0.0, %v2399
      %2401 = vmatmul.bf16.gmra.mxu0 %v2291
      %v2402 = vpop.f32.mrf.mxu0
      %v2403 = vadd.f32 0.0, %v2402
      %v2404 = vpop.f32.mrf.mxu0
      %v2405 = vadd.f32 0.0, %v2404
      %2406 = vmatmul.bf16.gmra.mxu0 %v2294
      %v2407 = vpop.f32.mrf.mxu0
      %v2408 = vadd.f32 0.0, %v2407
      %v2409 = vpop.f32.mrf.mxu0
      %v2410 = vadd.f32 0.0, %v2409
      %2411 = vmatmul.bf16.gmra.mxu0 %v2297
      %v2412 = vpop.f32.mrf.mxu0
      %v2413 = vadd.f32 0.0, %v2412
      %v2414 = vpop.f32.mrf.mxu0
      %v2415 = vadd.f32 0.0, %v2414
      %2416 = vmatmul.bf16.gmra.mxu0 %v2300
      %v2417 = vpop.f32.mrf.mxu0
      %v2418 = vadd.f32 0.0, %v2417
      %v2419 = vpop.f32.mrf.mxu0
      %v2420 = vadd.f32 0.0, %v2419
      %2421 = vmatmul.bf16.gmra.mxu0 %v2303
      %v2422 = vpop.f32.mrf.mxu0
      %v2423 = vadd.f32 0.0, %v2422
      %v2424 = vpop.f32.mrf.mxu0
      %v2425 = vadd.f32 0.0, %v2424
      %2426 = vmatmul.bf16.gmra.mxu0 %v2306
      %v2427 = vpop.f32.mrf.mxu0
      %v2428 = vadd.f32 0.0, %v2427
      %v2429 = vpop.f32.mrf.mxu0
      %v2430 = vadd.f32 0.0, %v2429
      %2431 = vmatmul.bf16.gmra.mxu0 %v2309
      %v2432 = vpop.f32.mrf.mxu0
      %v2433 = vadd.f32 0.0, %v2432
      %v2434 = vpop.f32.mrf.mxu0
      %v2435 = vadd.f32 0.0, %v2434
      %2436 = vmatmul.bf16.gmra.mxu0 %v2312
      %v2437 = vpop.f32.mrf.mxu0
      %v2438 = vadd.f32 0.0, %v2437
      %v2439 = vpop.f32.mrf.mxu0
      %v2440 = vadd.f32 0.0, %v2439
      %2441 = vmatmul.bf16.gmra.mxu0 %v2315
      %v2442 = vpop.f32.mrf.mxu0
      %v2443 = vadd.f32 0.0, %v2442
      %v2444 = vpop.f32.mrf.mxu0
      %v2445 = vadd.f32 0.0, %v2444
      %2446 = vmatmul.bf16.gmra.mxu0 %v2318
      %v2447 = vpop.f32.mrf.mxu0
      %v2448 = vadd.f32 0.0, %v2447
      %v2449 = vpop.f32.mrf.mxu0
      %v2450 = vadd.f32 0.0, %v2449
      %2451 = vdwg.mxu0
      %v2452 = vadd.f32 %v2078, %v2333
      %v2453 = vadd.f32 %v2079, %v2335
      %v2454 = vadd.f32 %v2080, %v2338
      %v2455 = vadd.f32 %v2081, %v2340
      %v2456 = vadd.f32 %v2082, %v2343
      %v2457 = vadd.f32 %v2083, %v2345
      %v2458 = vadd.f32 %v2084, %v2348
      %v2459 = vadd.f32 %v2085, %v2350
      %v2460 = vadd.f32 %v2086, %v2353
      %v2461 = vadd.f32 %v2087, %v2355
      %v2462 = vadd.f32 %v2088, %v2358
      %v2463 = vadd.f32 %v2089, %v2360
      %v2464 = vadd.f32 %v2090, %v2363
      %v2465 = vadd.f32 %v2091, %v2365
      %v2466 = vadd.f32 %v2092, %v2368
      %v2467 = vadd.f32 %v2093, %v2370
      %v2468 = vadd.f32 %v2094, %v2373
      %v2469 = vadd.f32 %v2095, %v2375
      %v2470 = vadd.f32 %v2096, %v2378
      %v2471 = vadd.f32 %v2097, %v2380
      %v2472 = vadd.f32 %v2098, %v2383
      %v2473 = vadd.f32 %v2099, %v2385
      %v2474 = vadd.f32 %v2100, %v2388
      %v2475 = vadd.f32 %v2101, %v2390
      %v2476 = vadd.f32 %v2102, %v2393
      %v2477 = vadd.f32 %v2103, %v2395
      %v2478 = vadd.f32 %v2104, %v2398
      %v2479 = vadd.f32 %v2105, %v2400
      %v2480 = vadd.f32 %v2106, %v2403
      %v2481 = vadd.f32 %v2107, %v2405
      %v2482 = vadd.f32 %v2108, %v2408
      %v2483 = vadd.f32 %v2109, %v2410
      %v2484 = vadd.f32 %v2110, %v2413
      %v2485 = vadd.f32 %v2111, %v2415
      %v2486 = vadd.f32 %v2112, %v2418
      %v2487 = vadd.f32 %v2113, %v2420
      %v2488 = vadd.f32 %v2114, %v2423
      %v2489 = vadd.f32 %v2115, %v2425
      %v2490 = vadd.f32 %v2116, %v2428
      %v2491 = vadd.f32 %v2117, %v2430
      %v2492 = vadd.f32 %v2118, %v2433
      %v2493 = vadd.f32 %v2119, %v2435
      %v2494 = vadd.f32 %v2120, %v2438
      %v2495 = vadd.f32 %v2121, %v2440
      %v2496 = vadd.f32 %v2122, %v2443
      %v2497 = vadd.f32 %v2123, %v2445
      %v2498 = vadd.f32 %v2124, %v2448
      %v2499 = vadd.f32 %v2125, %v2450
      %2500 = vst.msk [vmem:[#allocation2] sm:$0xff] %vm172, %v2452
      %2501 = vst.msk [vmem:[#allocation2 + $0x8] sm:$0xff] %vm172, %v2453
      %2502 = vst.msk [vmem:[#allocation2 + $0x10] sm:$0xff] %vm172, %v2454
      %2503 = vst.msk [vmem:[#allocation2 + $0x18] sm:$0xff] %vm172, %v2455
      %2504 = vst.msk [vmem:[#allocation2 + $0x20] sm:$0xff] %vm172, %v2456
      %2505 = vst.msk [vmem:[#allocation2 + $0x28] sm:$0xff] %vm172, %v2457
      %2506 = vst.msk [vmem:[#allocation2 + $0x30] sm:$0xff] %vm172, %v2458
      %2507 = vst.msk [vmem:[#allocation2 + $0x38] sm:$0xff] %vm172, %v2459
      %2508 = vst.msk [vmem:[#allocation2 + $0x40] sm:$0xff] %vm172, %v2460
      %2509 = vst.msk [vmem:[#allocation2 + $0x48] sm:$0xff] %vm172, %v2461
      %2510 = vst.msk [vmem:[#allocation2 + $0x50] sm:$0xff] %vm172, %v2462
      %2511 = vst.msk [vmem:[#allocation2 + $0x58] sm:$0xff] %vm172, %v2463
      %2512 = vst.msk [vmem:[#allocation2 + $0x60] sm:$0xff] %vm172, %v2464
      %2513 = vst.msk [vmem:[#allocation2 + $0x68] sm:$0xff] %vm172, %v2465
      %2514 = vst.msk [vmem:[#allocation2 + $0x70] sm:$0xff] %vm172, %v2466
      %2515 = vst.msk [vmem:[#allocation2 + $0x78] sm:$0xff] %vm172, %v2467
      %2516 = vst.msk [vmem:[#allocation2 + $0x80] sm:$0xff] %vm172, %v2468
      %2517 = vst.msk [vmem:[#allocation2 + $0x88] sm:$0xff] %vm172, %v2469
      %2518 = vst.msk [vmem:[#allocation2 + $0x90] sm:$0xff] %vm172, %v2470
      %2519 = vst.msk [vmem:[#allocation2 + $0x98] sm:$0xff] %vm172, %v2471
      %2520 = vst.msk [vmem:[#allocation2 + $0xa0] sm:$0xff] %vm172, %v2472
      %2521 = vst.msk [vmem:[#allocation2 + $0xa8] sm:$0xff] %vm172, %v2473
      %2522 = vst.msk [vmem:[#allocation2 + $0xb0] sm:$0xff] %vm172, %v2474
      %2523 = vst.msk [vmem:[#allocation2 + $0xb8] sm:$0xff] %vm172, %v2475
      %2524 = vst.msk [vmem:[#allocation2 + $0xc0] sm:$0xff] %vm172, %v2476
      %2525 = vst.msk [vmem:[#allocation2 + $0xc8] sm:$0xff] %vm172, %v2477
      %2526 = vst.msk [vmem:[#allocation2 + $0xd0] sm:$0xff] %vm172, %v2478
      %2527 = vst.msk [vmem:[#allocation2 + $0xd8] sm:$0xff] %vm172, %v2479
      %2528 = vst.msk [vmem:[#allocation2 + $0xe0] sm:$0xff] %vm172, %v2480
      %2529 = vst.msk [vmem:[#allocation2 + $0xe8] sm:$0xff] %vm172, %v2481
      %2530 = vst.msk [vmem:[#allocation2 + $0xf0] sm:$0xff] %vm172, %v2482
      %2531 = vst.msk [vmem:[#allocation2 + $0xf8] sm:$0xff] %vm172, %v2483
      %2532 = vst.msk [vmem:[#allocation2 + $0x100] sm:$0xff] %vm172, %v2484
      %2533 = vst.msk [vmem:[#allocation2 + $0x108] sm:$0xff] %vm172, %v2485
      %2534 = vst.msk [vmem:[#allocation2 + $0x110] sm:$0xff] %vm172, %v2486
      %2535 = vst.msk [vmem:[#allocation2 + $0x118] sm:$0xff] %vm172, %v2487
      %2536 = vst.msk [vmem:[#allocation2 + $0x120] sm:$0xff] %vm172, %v2488
      %2537 = vst.msk [vmem:[#allocation2 + $0x128] sm:$0xff] %vm172, %v2489
      %2538 = vst.msk [vmem:[#allocation2 + $0x130] sm:$0xff] %vm172, %v2490
      %2539 = vst.msk [vmem:[#allocation2 + $0x138] sm:$0xff] %vm172, %v2491
      %2540 = vst.msk [vmem:[#allocation2 + $0x140] sm:$0xff] %vm172, %v2492
      %2541 = vst.msk [vmem:[#allocation2 + $0x148] sm:$0xff] %vm172, %v2493
      %2542 = vst.msk [vmem:[#allocation2 + $0x150] sm:$0xff] %vm172, %v2494
      %2543 = vst.msk [vmem:[#allocation2 + $0x158] sm:$0xff] %vm172, %v2495
      %2544 = vst.msk [vmem:[#allocation2 + $0x160] sm:$0xff] %vm172, %v2496
      %2545 = vst.msk [vmem:[#allocation2 + $0x168] sm:$0xff] %vm172, %v2497
      %2546 = vst.msk [vmem:[#allocation2 + $0x170] sm:$0xff] %vm172, %v2498
      %2547 = vst.msk [vmem:[#allocation2 + $0x178] sm:$0xff] %vm172, %v2499
      %v2548 = vld [vmem:[%s165 + $0xc] sm:$0xf]
      %v2549 = vld [vmem:[%s165 + $0x10] sm:$0xf]
      %v2550 = vld [vmem:[%s165 + $0x14] sm:$0xf]
      %v2551 = vld [vmem:[%s165 + $0x18] sm:$0xf]
      %v2552 = vld [vmem:[%s165 + $0x1c] sm:$0xf]
      %v2553 = vld [vmem:[%s165 + $0x20] sm:$0xf]
      %v2554 = vld [vmem:[%s165 + $0x24] sm:$0xf]
      %v2555 = vld [vmem:[%s165 + $0x28] sm:$0xf]
      %v2556 = vld [vmem:[%s165 + $0x2c] sm:$0xf]
      %v2557 = vld [vmem:[%s165 + $0x30] sm:$0xf]
      %v2558 = vld [vmem:[%s165 + $0x34] sm:$0xf]
      %v2559 = vld [vmem:[%s165 + $0x38] sm:$0xf]
      %v2560 = vld [vmem:[%s165 + $0x3c] sm:$0xf]
      %v2561 = vld [vmem:[%s165 + $0x40] sm:$0xf]
      %v2562 = vld [vmem:[%s165 + $0x44] sm:$0xf]
      %v2563 = vld [vmem:[%s165 + $0x48] sm:$0xf]
      %v2564 = vld [vmem:[%s165 + $0x4c] sm:$0xf]
      %v2565 = vld [vmem:[%s165 + $0x50] sm:$0xf]
      %v2566 = vld [vmem:[%s165 + $0x54] sm:$0xf]
      %v2567 = vld [vmem:[%s165 + $0x58] sm:$0xf]
      %v2568 = vld [vmem:[%s165 + $0x5c] sm:$0xf]
      %v2569 = vld [vmem:[%s165 + $0x60] sm:$0xf]
      %v2570 = vld [vmem:[%s165 + $0x64] sm:$0xf]
      %v2571 = vld [vmem:[%s165 + $0x68] sm:$0xf]
      %v2572 = vld [vmem:[%s165 + $0x6c] sm:$0xf]
      %v2573 = vld [vmem:[%s165 + $0x70] sm:$0xf]
      %v2574 = vld [vmem:[%s165 + $0x74] sm:$0xf]
      %v2575 = vld [vmem:[%s165 + $0x78] sm:$0xf]
      %v2576 = vld [vmem:[%s165 + $0x7c] sm:$0xf]
      %v2577 = vld [vmem:[%s165 + $0x80] sm:$0xf]
      %v2578 = vld [vmem:[%s165 + $0x84] sm:$0xf]
      %v2579 = vld [vmem:[%s165 + $0x88] sm:$0xf]
      %v2580 = vld [vmem:[%s165 + $0x8c] sm:$0xf]
      %v2581 = vld [vmem:[%s165 + $0x90] sm:$0xf]
      %v2582 = vld [vmem:[%s165 + $0x94] sm:$0xf]
      %v2583 = vld [vmem:[%s165 + $0x98] sm:$0xf]
      %v2584 = vld [vmem:[%s165 + $0x9c] sm:$0xf]
      %v2585 = vld [vmem:[%s165 + $0xa0] sm:$0xf]
      %v2586 = vld [vmem:[%s165 + $0xa4] sm:$0xf]
      %v2587 = vld [vmem:[%s165 + $0xa8] sm:$0xf]
      %v2588 = vld [vmem:[%s165 + $0xac] sm:$0xf]
      %v2589 = vld [vmem:[%s165 + $0xb0] sm:$0xf]
      %v2590 = vld [vmem:[%s165 + $0xb4] sm:$0xf]
      %v2591 = vld [vmem:[%s165 + $0xb8] sm:$0xf]
      %v2592 = vld [vmem:[%s165 + $0xbc] sm:$0xf]
      %v2593 = vld [vmem:[%s165 + $0xc0] sm:$0xf]
      %v2594 = vld [vmem:[%s165 + $0xc4] sm:$0xf]
      %v2595 = vld [vmem:[%s165 + $0xc8] sm:$0xf]
      %v2596 = vld [vmem:[%s165 + $0xcc] sm:$0x1]
      %v2597 = vld [vmem:[#allocation2] sm:$0xff]
      %v2598 = vld [vmem:[#allocation2 + $0x8] sm:$0xff]
      %v2599 = vld [vmem:[#allocation2 + $0x10] sm:$0xff]
      %v2600 = vld [vmem:[#allocation2 + $0x18] sm:$0xff]
      %v2601 = vld [vmem:[#allocation2 + $0x20] sm:$0xff]
      %v2602 = vld [vmem:[#allocation2 + $0x28] sm:$0xff]
      %v2603 = vld [vmem:[#allocation2 + $0x30] sm:$0xff]
      %v2604 = vld [vmem:[#allocation2 + $0x38] sm:$0xff]
      %v2605 = vld [vmem:[#allocation2 + $0x40] sm:$0xff]
      %v2606 = vld [vmem:[#allocation2 + $0x48] sm:$0xff]
      %v2607 = vld [vmem:[#allocation2 + $0x50] sm:$0xff]
      %v2608 = vld [vmem:[#allocation2 + $0x58] sm:$0xff]
      %v2609 = vld [vmem:[#allocation2 + $0x60] sm:$0xff]
      %v2610 = vld [vmem:[#allocation2 + $0x68] sm:$0xff]
      %v2611 = vld [vmem:[#allocation2 + $0x70] sm:$0xff]
      %v2612 = vld [vmem:[#allocation2 + $0x78] sm:$0xff]
      %v2613 = vld [vmem:[#allocation2 + $0x80] sm:$0xff]
      %v2614 = vld [vmem:[#allocation2 + $0x88] sm:$0xff]
      %v2615 = vld [vmem:[#allocation2 + $0x90] sm:$0xff]
      %v2616 = vld [vmem:[#allocation2 + $0x98] sm:$0xff]
      %v2617 = vld [vmem:[#allocation2 + $0xa0] sm:$0xff]
      %v2618 = vld [vmem:[#allocation2 + $0xa8] sm:$0xff]
      %v2619 = vld [vmem:[#allocation2 + $0xb0] sm:$0xff]
      %v2620 = vld [vmem:[#allocation2 + $0xb8] sm:$0xff]
      %v2621 = vld [vmem:[#allocation2 + $0xc0] sm:$0xff]
      %v2622 = vld [vmem:[#allocation2 + $0xc8] sm:$0xff]
      %v2623 = vld [vmem:[#allocation2 + $0xd0] sm:$0xff]
      %v2624 = vld [vmem:[#allocation2 + $0xd8] sm:$0xff]
      %v2625 = vld [vmem:[#allocation2 + $0xe0] sm:$0xff]
      %v2626 = vld [vmem:[#allocation2 + $0xe8] sm:$0xff]
      %v2627 = vld [vmem:[#allocation2 + $0xf0] sm:$0xff]
      %v2628 = vld [vmem:[#allocation2 + $0xf8] sm:$0xff]
      %v2629 = vld [vmem:[#allocation2 + $0x100] sm:$0xff]
      %v2630 = vld [vmem:[#allocation2 + $0x108] sm:$0xff]
      %v2631 = vld [vmem:[#allocation2 + $0x110] sm:$0xff]
      %v2632 = vld [vmem:[#allocation2 + $0x118] sm:$0xff]
      %v2633 = vld [vmem:[#allocation2 + $0x120] sm:$0xff]
      %v2634 = vld [vmem:[#allocation2 + $0x128] sm:$0xff]
      %v2635 = vld [vmem:[#allocation2 + $0x130] sm:$0xff]
      %v2636 = vld [vmem:[#allocation2 + $0x138] sm:$0xff]
      %v2637 = vld [vmem:[#allocation2 + $0x140] sm:$0xff]
      %v2638 = vld [vmem:[#allocation2 + $0x148] sm:$0xff]
      %v2639 = vld [vmem:[#allocation2 + $0x150] sm:$0xff]
      %v2640 = vld [vmem:[#allocation2 + $0x158] sm:$0xff]
      %v2641 = vld [vmem:[#allocation2 + $0x160] sm:$0xff]
      %v2642 = vld [vmem:[#allocation2 + $0x168] sm:$0xff]
      %v2643 = vld [vmem:[#allocation2 + $0x170] sm:$0xff]
      %v2644 = vld [vmem:[#allocation2 + $0x178] sm:$0xff]
      %s2645 = scalar_lea.vmem %s1, 8
      %v2646 = vld [vmem:[%s2645] sm:$0x3]
      %v2696 = vunpack.c.l.b16 %v2548
      %v2697 = vunpack.c.l.b16 %v2549
      %v2698 = vunpack.c.l.b16 %v2550
      %v2699 = vunpack.c.l.b16 %v2551
      %v2700 = vunpack.c.l.b16 %v2552
      %v2701 = vunpack.c.l.b16 %v2553
      %v2702 = vunpack.c.l.b16 %v2554
      %v2703 = vunpack.c.l.b16 %v2555
      %v2704 = vunpack.c.l.b16 %v2556
      %v2705 = vunpack.c.l.b16 %v2557
      %v2706 = vunpack.c.l.b16 %v2558
      %v2707 = vunpack.c.l.b16 %v2559
      %v2708 = vunpack.c.l.b16 %v2560
      %v2709 = vunpack.c.l.b16 %v2561
      %v2710 = vunpack.c.l.b16 %v2562
      %v2711 = vunpack.c.l.b16 %v2563
      %v2712 = vunpack.c.l.b16 %v2564
      %v2713 = vunpack.c.l.b16 %v2565
      %v2714 = vunpack.c.l.b16 %v2566
      %v2715 = vunpack.c.l.b16 %v2567
      %v2716 = vunpack.c.l.b16 %v2568
      %v2717 = vunpack.c.l.b16 %v2569
      %v2718 = vunpack.c.l.b16 %v2570
      %v2719 = vunpack.c.l.b16 %v2571
      %v2720 = vunpack.c.l.b16 %v2572
      %v2721 = vunpack.c.l.b16 %v2573
      %v2722 = vunpack.c.l.b16 %v2574
      %v2723 = vunpack.c.l.b16 %v2575
      %v2724 = vunpack.c.l.b16 %v2576
      %v2725 = vunpack.c.l.b16 %v2577
      %v2726 = vunpack.c.l.b16 %v2578
      %v2727 = vunpack.c.l.b16 %v2579
      %v2728 = vunpack.c.l.b16 %v2580
      %v2729 = vunpack.c.l.b16 %v2581
      %v2730 = vunpack.c.l.b16 %v2582
      %v2731 = vunpack.c.l.b16 %v2583
      %v2732 = vunpack.c.l.b16 %v2584
      %v2733 = vunpack.c.l.b16 %v2585
      %v2734 = vunpack.c.l.b16 %v2586
      %v2735 = vunpack.c.l.b16 %v2587
      %v2736 = vunpack.c.l.b16 %v2588
      %v2737 = vunpack.c.l.b16 %v2589
      %v2738 = vunpack.c.l.b16 %v2590
      %v2739 = vunpack.c.l.b16 %v2591
      %v2740 = vunpack.c.l.b16 %v2592
      %v2741 = vunpack.c.l.b16 %v2593
      %v2742 = vunpack.c.l.b16 %v2594
      %v2743 = vunpack.c.l.b16 %v2595
      %v2744 = vunpack.c.l.b16 %v2596
      %v2745 = vpack.c.b16 %v2697, %v2696
      %v2746 = vpack.c.b16 %v2699, %v2698
      %v2747 = vpack.c.b16 %v2701, %v2700
      %v2748 = vpack.c.b16 %v2703, %v2702
      %v2749 = vpack.c.b16 %v2705, %v2704
      %v2750 = vpack.c.b16 %v2707, %v2706
      %v2751 = vpack.c.b16 %v2709, %v2708
      %v2752 = vpack.c.b16 %v2711, %v2710
      %v2753 = vpack.c.b16 %v2713, %v2712
      %v2754 = vpack.c.b16 %v2715, %v2714
      %v2755 = vpack.c.b16 %v2717, %v2716
      %v2756 = vpack.c.b16 %v2719, %v2718
      %v2757 = vpack.c.b16 %v2721, %v2720
      %v2758 = vpack.c.b16 %v2723, %v2722
      %v2759 = vpack.c.b16 %v2725, %v2724
      %v2760 = vpack.c.b16 %v2727, %v2726
      %v2761 = vpack.c.b16 %v2729, %v2728
      %v2762 = vpack.c.b16 %v2731, %v2730
      %v2763 = vpack.c.b16 %v2733, %v2732
      %v2764 = vpack.c.b16 %v2735, %v2734
      %v2765 = vpack.c.b16 %v2737, %v2736
      %v2766 = vpack.c.b16 %v2739, %v2738
      %v2767 = vpack.c.b16 %v2741, %v2740
      %v2768 = vpack.c.b16 %v2743, %v2742
      %v2769 = vpack.c.b16 %v2744, %v2744
      %v2771 = vshrl.u32 %v2745, 16
      %v2773 = vshll.u32 %v2745, 16
      %v2775 = vrot.slane %v2773, 1
      %v2776 = vor.u32 %v2771, %v2775
      %v2778 = vshll.u32 %v2746, 16
      %v2780 = vrot.slane %v2778, 1
      %v2781 = vsel %vm961, %v2776, %v2780
      %v2782 = vshrl.u32 %v2746, 16
      %v2784 = vor.u32 %v2782, %v2780
      %v2786 = vshll.u32 %v2747, 16
      %v2788 = vrot.slane %v2786, 1
      %v2789 = vsel %vm961, %v2784, %v2788
      %v2790 = vshrl.u32 %v2747, 16
      %v2792 = vor.u32 %v2790, %v2788
      %v2794 = vshll.u32 %v2748, 16
      %v2796 = vrot.slane %v2794, 1
      %v2797 = vsel %vm961, %v2792, %v2796
      %v2798 = vshrl.u32 %v2748, 16
      %v2800 = vor.u32 %v2798, %v2796
      %v2802 = vshll.u32 %v2749, 16
      %v2804 = vrot.slane %v2802, 1
      %v2805 = vsel %vm961, %v2800, %v2804
      %v2806 = vshrl.u32 %v2749, 16
      %v2808 = vor.u32 %v2806, %v2804
      %v2810 = vshll.u32 %v2750, 16
      %v2812 = vrot.slane %v2810, 1
      %v2813 = vsel %vm961, %v2808, %v2812
      %v2814 = vshrl.u32 %v2750, 16
      %v2816 = vor.u32 %v2814, %v2812
      %v2818 = vshll.u32 %v2751, 16
      %v2820 = vrot.slane %v2818, 1
      %v2821 = vsel %vm961, %v2816, %v2820
      %v2822 = vshrl.u32 %v2751, 16
      %v2824 = vor.u32 %v2822, %v2820
      %v2826 = vshll.u32 %v2752, 16
      %v2828 = vrot.slane %v2826, 1
      %v2829 = vsel %vm961, %v2824, %v2828
      %v2830 = vshrl.u32 %v2752, 16
      %v2832 = vor.u32 %v2830, %v2828
      %v2834 = vshll.u32 %v2753, 16
      %v2836 = vrot.slane %v2834, 1
      %v2837 = vsel %vm961, %v2832, %v2836
      %v2838 = vshrl.u32 %v2753, 16
      %v2840 = vor.u32 %v2838, %v2836
      %v2842 = vshll.u32 %v2754, 16
      %v2844 = vrot.slane %v2842, 1
      %v2845 = vsel %vm961, %v2840, %v2844
      %v2846 = vshrl.u32 %v2754, 16
      %v2848 = vor.u32 %v2846, %v2844
      %v2850 = vshll.u32 %v2755, 16
      %v2852 = vrot.slane %v2850, 1
      %v2853 = vsel %vm961, %v2848, %v2852
      %v2854 = vshrl.u32 %v2755, 16
      %v2856 = vor.u32 %v2854, %v2852
      %v2858 = vshll.u32 %v2756, 16
      %v2860 = vrot.slane %v2858, 1
      %v2861 = vsel %vm961, %v2856, %v2860
      %v2862 = vshrl.u32 %v2756, 16
      %v2864 = vor.u32 %v2862, %v2860
      %v2866 = vshll.u32 %v2757, 16
      %v2868 = vrot.slane %v2866, 1
      %v2869 = vsel %vm961, %v2864, %v2868
      %v2870 = vshrl.u32 %v2757, 16
      %v2872 = vor.u32 %v2870, %v2868
      %v2874 = vshll.u32 %v2758, 16
      %v2876 = vrot.slane %v2874, 1
      %v2877 = vsel %vm961, %v2872, %v2876
      %v2878 = vshrl.u32 %v2758, 16
      %v2880 = vor.u32 %v2878, %v2876
      %v2882 = vshll.u32 %v2759, 16
      %v2884 = vrot.slane %v2882, 1
      %v2885 = vsel %vm961, %v2880, %v2884
      %v2886 = vshrl.u32 %v2759, 16
      %v2888 = vor.u32 %v2886, %v2884
      %v2890 = vshll.u32 %v2760, 16
      %v2892 = vrot.slane %v2890, 1
      %v2893 = vsel %vm961, %v2888, %v2892
      %v2894 = vshrl.u32 %v2760, 16
      %v2896 = vor.u32 %v2894, %v2892
      %v2898 = vshll.u32 %v2761, 16
      %v2900 = vrot.slane %v2898, 1
      %v2901 = vsel %vm961, %v2896, %v2900
      %v2902 = vshrl.u32 %v2761, 16
      %v2904 = vor.u32 %v2902, %v2900
      %v2906 = vshll.u32 %v2762, 16
      %v2908 = vrot.slane %v2906, 1
      %v2909 = vsel %vm961, %v2904, %v2908
      %v2910 = vshrl.u32 %v2762, 16
      %v2912 = vor.u32 %v2910, %v2908
      %v2914 = vshll.u32 %v2763, 16
      %v2916 = vrot.slane %v2914, 1
      %v2917 = vsel %vm961, %v2912, %v2916
      %v2918 = vshrl.u32 %v2763, 16
      %v2920 = vor.u32 %v2918, %v2916
      %v2922 = vshll.u32 %v2764, 16
      %v2924 = vrot.slane %v2922, 1
      %v2925 = vsel %vm961, %v2920, %v2924
      %v2926 = vshrl.u32 %v2764, 16
      %v2928 = vor.u32 %v2926, %v2924
      %v2930 = vshll.u32 %v2765, 16
      %v2932 = vrot.slane %v2930, 1
      %v2933 = vsel %vm961, %v2928, %v2932
      %v2934 = vshrl.u32 %v2765, 16
      %v2936 = vor.u32 %v2934, %v2932
      %v2938 = vshll.u32 %v2766, 16
      %v2940 = vrot.slane %v2938, 1
      %v2941 = vsel %vm961, %v2936, %v2940
      %v2942 = vshrl.u32 %v2766, 16
      %v2944 = vor.u32 %v2942, %v2940
      %v2946 = vshll.u32 %v2767, 16
      %v2948 = vrot.slane %v2946, 1
      %v2949 = vsel %vm961, %v2944, %v2948
      %v2950 = vshrl.u32 %v2767, 16
      %v2952 = vor.u32 %v2950, %v2948
      %v2954 = vshll.u32 %v2768, 16
      %v2956 = vrot.slane %v2954, 1
      %v2957 = vsel %vm961, %v2952, %v2956
      %v2958 = vshrl.u32 %v2768, 16
      %v2960 = vor.u32 %v2958, %v2956
      %v2962 = vshll.u32 %v2769, 16
      %v2964 = vrot.slane %v2962, 1
      %v2965 = vsel %vm961, %v2960, %v2964
      %v2967 = vsel %vm172, %v2781, 0
      %v2970 = vsel %vm172, %v2789, 0
      %v2973 = vsel %vm172, %v2797, 0
      %v2976 = vsel %vm172, %v2805, 0
      %v2979 = vsel %vm172, %v2813, 0
      %v2982 = vsel %vm172, %v2821, 0
      %v2985 = vsel %vm172, %v2829, 0
      %v2988 = vsel %vm172, %v2837, 0
      %v2991 = vsel %vm172, %v2845, 0
      %v2994 = vsel %vm172, %v2853, 0
      %v2997 = vsel %vm172, %v2861, 0
      %v3000 = vsel %vm172, %v2869, 0
      %v3003 = vsel %vm172, %v2877, 0
      %v3006 = vsel %vm172, %v2885, 0
      %v3009 = vsel %vm172, %v2893, 0
      %v3012 = vsel %vm172, %v2901, 0
      %v3015 = vsel %vm172, %v2909, 0
      %v3018 = vsel %vm172, %v2917, 0
      %v3021 = vsel %vm172, %v2925, 0
      %v3024 = vsel %vm172, %v2933, 0
      %v3027 = vsel %vm172, %v2941, 0
      %v3030 = vsel %vm172, %v2949, 0
      %v3033 = vsel %vm172, %v2957, 0
      %v3036 = vsel %vm172, %v2965, 0
      %v3039 = vsel %vm510, %v2646, 0
      %3041 = vmatpush.bf16.msra.mxu0 0
      %3042 = vmatpush.bf16.msra.mxu0 0
      %3043 = vmatpush.bf16.msra.mxu0 0
      %3044 = vmatpush.bf16.msra.mxu0 0
      %3045 = vmatpush.bf16.msra.mxu0 0
      %3046 = vmatpush.bf16.msra.mxu0 0
      %3047 = vmatpush.bf16.msra.mxu0 0
      %3048 = vmatpush.bf16.msra.mxu0 %v3039
      %3049 = vmatmul.bf16.gmra.mxu0 %v2967
      %v3050 = vpop.f32.mrf.mxu0
      %v3051 = vadd.f32 0.0, %v3050
      %v3052 = vpop.f32.mrf.mxu0
      %v3053 = vadd.f32 0.0, %v3052
      %3054 = vmatmul.bf16.gmra.mxu0 %v2970
      %v3055 = vpop.f32.mrf.mxu0
      %v3056 = vadd.f32 0.0, %v3055
      %v3057 = vpop.f32.mrf.mxu0
      %v3058 = vadd.f32 0.0, %v3057
      %3059 = vmatmul.bf16.gmra.mxu0 %v2973
      %v3060 = vpop.f32.mrf.mxu0
      %v3061 = vadd.f32 0.0, %v3060
      %v3062 = vpop.f32.mrf.mxu0
      %v3063 = vadd.f32 0.0, %v3062
      %3064 = vmatmul.bf16.gmra.mxu0 %v2976
      %v3065 = vpop.f32.mrf.mxu0
      %v3066 = vadd.f32 0.0, %v3065
      %v3067 = vpop.f32.mrf.mxu0
      %v3068 = vadd.f32 0.0, %v3067
      %3069 = vmatmul.bf16.gmra.mxu0 %v2979
      %v3070 = vpop.f32.mrf.mxu0
      %v3071 = vadd.f32 0.0, %v3070
      %v3072 = vpop.f32.mrf.mxu0
      %v3073 = vadd.f32 0.0, %v3072
      %3074 = vmatmul.bf16.gmra.mxu0 %v2982
      %v3075 = vpop.f32.mrf.mxu0
      %v3076 = vadd.f32 0.0, %v3075
      %v3077 = vpop.f32.mrf.mxu0
      %v3078 = vadd.f32 0.0, %v3077
      %3079 = vmatmul.bf16.gmra.mxu0 %v2985
      %v3080 = vpop.f32.mrf.mxu0
      %v3081 = vadd.f32 0.0, %v3080
      %v3082 = vpop.f32.mrf.mxu0
      %v3083 = vadd.f32 0.0, %v3082
      %3084 = vmatmul.bf16.gmra.mxu0 %v2988
      %v3085 = vpop.f32.mrf.mxu0
      %v3086 = vadd.f32 0.0, %v3085
      %v3087 = vpop.f32.mrf.mxu0
      %v3088 = vadd.f32 0.0, %v3087
      %3089 = vmatmul.bf16.gmra.mxu0 %v2991
      %v3090 = vpop.f32.mrf.mxu0
      %v3091 = vadd.f32 0.0, %v3090
      %v3092 = vpop.f32.mrf.mxu0
      %v3093 = vadd.f32 0.0, %v3092
      %3094 = vmatmul.bf16.gmra.mxu0 %v2994
      %v3095 = vpop.f32.mrf.mxu0
      %v3096 = vadd.f32 0.0, %v3095
      %v3097 = vpop.f32.mrf.mxu0
      %v3098 = vadd.f32 0.0, %v3097
      %3099 = vmatmul.bf16.gmra.mxu0 %v2997
      %v3100 = vpop.f32.mrf.mxu0
      %v3101 = vadd.f32 0.0, %v3100
      %v3102 = vpop.f32.mrf.mxu0
      %v3103 = vadd.f32 0.0, %v3102
      %3104 = vmatmul.bf16.gmra.mxu0 %v3000
      %v3105 = vpop.f32.mrf.mxu0
      %v3106 = vadd.f32 0.0, %v3105
      %v3107 = vpop.f32.mrf.mxu0
      %v3108 = vadd.f32 0.0, %v3107
      %3109 = vmatmul.bf16.gmra.mxu0 %v3003
      %v3110 = vpop.f32.mrf.mxu0
      %v3111 = vadd.f32 0.0, %v3110
      %v3112 = vpop.f32.mrf.mxu0
      %v3113 = vadd.f32 0.0, %v3112
      %3114 = vmatmul.bf16.gmra.mxu0 %v3006
      %v3115 = vpop.f32.mrf.mxu0
      %v3116 = vadd.f32 0.0, %v3115
      %v3117 = vpop.f32.mrf.mxu0
      %v3118 = vadd.f32 0.0, %v3117
      %3119 = vmatmul.bf16.gmra.mxu0 %v3009
      %v3120 = vpop.f32.mrf.mxu0
      %v3121 = vadd.f32 0.0, %v3120
      %v3122 = vpop.f32.mrf.mxu0
      %v3123 = vadd.f32 0.0, %v3122
      %3124 = vmatmul.bf16.gmra.mxu0 %v3012
      %v3125 = vpop.f32.mrf.mxu0
      %v3126 = vadd.f32 0.0, %v3125
      %v3127 = vpop.f32.mrf.mxu0
      %v3128 = vadd.f32 0.0, %v3127
      %3129 = vmatmul.bf16.gmra.mxu0 %v3015
      %v3130 = vpop.f32.mrf.mxu0
      %v3131 = vadd.f32 0.0, %v3130
      %v3132 = vpop.f32.mrf.mxu0
      %v3133 = vadd.f32 0.0, %v3132
      %3134 = vmatmul.bf16.gmra.mxu0 %v3018
      %v3135 = vpop.f32.mrf.mxu0
      %v3136 = vadd.f32 0.0, %v3135
      %v3137 = vpop.f32.mrf.mxu0
      %v3138 = vadd.f32 0.0, %v3137
      %3139 = vmatmul.bf16.gmra.mxu0 %v3021
      %v3140 = vpop.f32.mrf.mxu0
      %v3141 = vadd.f32 0.0, %v3140
      %v3142 = vpop.f32.mrf.mxu0
      %v3143 = vadd.f32 0.0, %v3142
      %3144 = vmatmul.bf16.gmra.mxu0 %v3024
      %v3145 = vpop.f32.mrf.mxu0
      %v3146 = vadd.f32 0.0, %v3145
      %v3147 = vpop.f32.mrf.mxu0
      %v3148 = vadd.f32 0.0, %v3147
      %3149 = vmatmul.bf16.gmra.mxu0 %v3027
      %v3150 = vpop.f32.mrf.mxu0
      %v3151 = vadd.f32 0.0, %v3150
      %v3152 = vpop.f32.mrf.mxu0
      %v3153 = vadd.f32 0.0, %v3152
      %3154 = vmatmul.bf16.gmra.mxu0 %v3030
      %v3155 = vpop.f32.mrf.mxu0
      %v3156 = vadd.f32 0.0, %v3155
      %v3157 = vpop.f32.mrf.mxu0
      %v3158 = vadd.f32 0.0, %v3157
      %3159 = vmatmul.bf16.gmra.mxu0 %v3033
      %v3160 = vpop.f32.mrf.mxu0
      %v3161 = vadd.f32 0.0, %v3160
      %v3162 = vpop.f32.mrf.mxu0
      %v3163 = vadd.f32 0.0, %v3162
      %3164 = vmatmul.bf16.gmra.mxu0 %v3036
      %v3165 = vpop.f32.mrf.mxu0
      %v3166 = vadd.f32 0.0, %v3165
      %v3167 = vpop.f32.mrf.mxu0
      %v3168 = vadd.f32 0.0, %v3167
      %3169 = vdwg.mxu0
      %v3170 = vadd.f32 %v2597, %v3051
      %v3171 = vadd.f32 %v2598, %v3053
      %v3172 = vadd.f32 %v2599, %v3056
      %v3173 = vadd.f32 %v2600, %v3058
      %v3174 = vadd.f32 %v2601, %v3061
      %v3175 = vadd.f32 %v2602, %v3063
      %v3176 = vadd.f32 %v2603, %v3066
      %v3177 = vadd.f32 %v2604, %v3068
      %v3178 = vadd.f32 %v2605, %v3071
      %v3179 = vadd.f32 %v2606, %v3073
      %v3180 = vadd.f32 %v2607, %v3076
      %v3181 = vadd.f32 %v2608, %v3078
      %v3182 = vadd.f32 %v2609, %v3081
      %v3183 = vadd.f32 %v2610, %v3083
      %v3184 = vadd.f32 %v2611, %v3086
      %v3185 = vadd.f32 %v2612, %v3088
      %v3186 = vadd.f32 %v2613, %v3091
      %v3187 = vadd.f32 %v2614, %v3093
      %v3188 = vadd.f32 %v2615, %v3096
      %v3189 = vadd.f32 %v2616, %v3098
      %v3190 = vadd.f32 %v2617, %v3101
      %v3191 = vadd.f32 %v2618, %v3103
      %v3192 = vadd.f32 %v2619, %v3106
      %v3193 = vadd.f32 %v2620, %v3108
      %v3194 = vadd.f32 %v2621, %v3111
      %v3195 = vadd.f32 %v2622, %v3113
      %v3196 = vadd.f32 %v2623, %v3116
      %v3197 = vadd.f32 %v2624, %v3118
      %v3198 = vadd.f32 %v2625, %v3121
      %v3199 = vadd.f32 %v2626, %v3123
      %v3200 = vadd.f32 %v2627, %v3126
      %v3201 = vadd.f32 %v2628, %v3128
      %v3202 = vadd.f32 %v2629, %v3131
      %v3203 = vadd.f32 %v2630, %v3133
      %v3204 = vadd.f32 %v2631, %v3136
      %v3205 = vadd.f32 %v2632, %v3138
      %v3206 = vadd.f32 %v2633, %v3141
      %v3207 = vadd.f32 %v2634, %v3143
      %v3208 = vadd.f32 %v2635, %v3146
      %v3209 = vadd.f32 %v2636, %v3148
      %v3210 = vadd.f32 %v2637, %v3151
      %v3211 = vadd.f32 %v2638, %v3153
      %v3212 = vadd.f32 %v2639, %v3156
      %v3213 = vadd.f32 %v2640, %v3158
      %v3214 = vadd.f32 %v2641, %v3161
      %v3215 = vadd.f32 %v2642, %v3163
      %v3216 = vadd.f32 %v2643, %v3166
      %v3217 = vadd.f32 %v2644, %v3168
      %3218 = vst.msk [vmem:[#allocation2] sm:$0xff] %vm172, %v3170
      %3219 = vst.msk [vmem:[#allocation2 + $0x8] sm:$0xff] %vm172, %v3171
      %3220 = vst.msk [vmem:[#allocation2 + $0x10] sm:$0xff] %vm172, %v3172
      %3221 = vst.msk [vmem:[#allocation2 + $0x18] sm:$0xff] %vm172, %v3173
      %3222 = vst.msk [vmem:[#allocation2 + $0x20] sm:$0xff] %vm172, %v3174
      %3223 = vst.msk [vmem:[#allocation2 + $0x28] sm:$0xff] %vm172, %v3175
      %3224 = vst.msk [vmem:[#allocation2 + $0x30] sm:$0xff] %vm172, %v3176
      %3225 = vst.msk [vmem:[#allocation2 + $0x38] sm:$0xff] %vm172, %v3177
      %3226 = vst.msk [vmem:[#allocation2 + $0x40] sm:$0xff] %vm172, %v3178
      %3227 = vst.msk [vmem:[#allocation2 + $0x48] sm:$0xff] %vm172, %v3179
      %3228 = vst.msk [vmem:[#allocation2 + $0x50] sm:$0xff] %vm172, %v3180
      %3229 = vst.msk [vmem:[#allocation2 + $0x58] sm:$0xff] %vm172, %v3181
      %3230 = vst.msk [vmem:[#allocation2 + $0x60] sm:$0xff] %vm172, %v3182
      %3231 = vst.msk [vmem:[#allocation2 + $0x68] sm:$0xff] %vm172, %v3183
      %3232 = vst.msk [vmem:[#allocation2 + $0x70] sm:$0xff] %vm172, %v3184
      %3233 = vst.msk [vmem:[#allocation2 + $0x78] sm:$0xff] %vm172, %v3185
      %3234 = vst.msk [vmem:[#allocation2 + $0x80] sm:$0xff] %vm172, %v3186
      %3235 = vst.msk [vmem:[#allocation2 + $0x88] sm:$0xff] %vm172, %v3187
      %3236 = vst.msk [vmem:[#allocation2 + $0x90] sm:$0xff] %vm172, %v3188
      %3237 = vst.msk [vmem:[#allocation2 + $0x98] sm:$0xff] %vm172, %v3189
      %3238 = vst.msk [vmem:[#allocation2 + $0xa0] sm:$0xff] %vm172, %v3190
      %3239 = vst.msk [vmem:[#allocation2 + $0xa8] sm:$0xff] %vm172, %v3191
      %3240 = vst.msk [vmem:[#allocation2 + $0xb0] sm:$0xff] %vm172, %v3192
      %3241 = vst.msk [vmem:[#allocation2 + $0xb8] sm:$0xff] %vm172, %v3193
      %3242 = vst.msk [vmem:[#allocation2 + $0xc0] sm:$0xff] %vm172, %v3194
      %3243 = vst.msk [vmem:[#allocation2 + $0xc8] sm:$0xff] %vm172, %v3195
      %3244 = vst.msk [vmem:[#allocation2 + $0xd0] sm:$0xff] %vm172, %v3196
      %3245 = vst.msk [vmem:[#allocation2 + $0xd8] sm:$0xff] %vm172, %v3197
      %3246 = vst.msk [vmem:[#allocation2 + $0xe0] sm:$0xff] %vm172, %v3198
      %3247 = vst.msk [vmem:[#allocation2 + $0xe8] sm:$0xff] %vm172, %v3199
      %3248 = vst.msk [vmem:[#allocation2 + $0xf0] sm:$0xff] %vm172, %v3200
      %3249 = vst.msk [vmem:[#allocation2 + $0xf8] sm:$0xff] %vm172, %v3201
      %3250 = vst.msk [vmem:[#allocation2 + $0x100] sm:$0xff] %vm172, %v3202
      %3251 = vst.msk [vmem:[#allocation2 + $0x108] sm:$0xff] %vm172, %v3203
      %3252 = vst.msk [vmem:[#allocation2 + $0x110] sm:$0xff] %vm172, %v3204
      %3253 = vst.msk [vmem:[#allocation2 + $0x118] sm:$0xff] %vm172, %v3205
      %3254 = vst.msk [vmem:[#allocation2 + $0x120] sm:$0xff] %vm172, %v3206
      %3255 = vst.msk [vmem:[#allocation2 + $0x128] sm:$0xff] %vm172, %v3207
      %3256 = vst.msk [vmem:[#allocation2 + $0x130] sm:$0xff] %vm172, %v3208
      %3257 = vst.msk [vmem:[#allocation2 + $0x138] sm:$0xff] %vm172, %v3209
      %3258 = vst.msk [vmem:[#allocation2 + $0x140] sm:$0xff] %vm172, %v3210
      %3259 = vst.msk [vmem:[#allocation2 + $0x148] sm:$0xff] %vm172, %v3211
      %3260 = vst.msk [vmem:[#allocation2 + $0x150] sm:$0xff] %vm172, %v3212
      %3261 = vst.msk [vmem:[#allocation2 + $0x158] sm:$0xff] %vm172, %v3213
      %3262 = vst.msk [vmem:[#allocation2 + $0x160] sm:$0xff] %vm172, %v3214
      %3263 = vst.msk [vmem:[#allocation2 + $0x168] sm:$0xff] %vm172, %v3215
      %3264 = vst.msk [vmem:[#allocation2 + $0x170] sm:$0xff] %vm172, %v3216
      %3265 = vst.msk [vmem:[#allocation2 + $0x178] sm:$0xff] %vm172, %v3217
      %v3266 = vld [vmem:[%s165 + $0xc] sm:$0xe]
      %v3267 = vld [vmem:[%s165 + $0x10] sm:$0xf]
      %v3268 = vld [vmem:[%s165 + $0x14] sm:$0xf]
      %v3269 = vld [vmem:[%s165 + $0x18] sm:$0xf]
      %v3270 = vld [vmem:[%s165 + $0x1c] sm:$0xf]
      %v3271 = vld [vmem:[%s165 + $0x20] sm:$0xf]
      %v3272 = vld [vmem:[%s165 + $0x24] sm:$0xf]
      %v3273 = vld [vmem:[%s165 + $0x28] sm:$0xf]
      %v3274 = vld [vmem:[%s165 + $0x2c] sm:$0xf]
      %v3275 = vld [vmem:[%s165 + $0x30] sm:$0xf]
      %v3276 = vld [vmem:[%s165 + $0x34] sm:$0xf]
      %v3277 = vld [vmem:[%s165 + $0x38] sm:$0xf]
      %v3278 = vld [vmem:[%s165 + $0x3c] sm:$0xf]
      %v3279 = vld [vmem:[%s165 + $0x40] sm:$0xf]
      %v3280 = vld [vmem:[%s165 + $0x44] sm:$0xf]
      %v3281 = vld [vmem:[%s165 + $0x48] sm:$0xf]
      %v3282 = vld [vmem:[%s165 + $0x4c] sm:$0xf]
      %v3283 = vld [vmem:[%s165 + $0x50] sm:$0xf]
      %v3284 = vld [vmem:[%s165 + $0x54] sm:$0xf]
      %v3285 = vld [vmem:[%s165 + $0x58] sm:$0xf]
      %v3286 = vld [vmem:[%s165 + $0x5c] sm:$0xf]
      %v3287 = vld [vmem:[%s165 + $0x60] sm:$0xf]
      %v3288 = vld [vmem:[%s165 + $0x64] sm:$0xf]
      %v3289 = vld [vmem:[%s165 + $0x68] sm:$0xf]
      %v3290 = vld [vmem:[%s165 + $0x6c] sm:$0xf]
      %v3291 = vld [vmem:[%s165 + $0x70] sm:$0xf]
      %v3292 = vld [vmem:[%s165 + $0x74] sm:$0xf]
      %v3293 = vld [vmem:[%s165 + $0x78] sm:$0xf]
      %v3294 = vld [vmem:[%s165 + $0x7c] sm:$0xf]
      %v3295 = vld [vmem:[%s165 + $0x80] sm:$0xf]
      %v3296 = vld [vmem:[%s165 + $0x84] sm:$0xf]
      %v3297 = vld [vmem:[%s165 + $0x88] sm:$0xf]
      %v3298 = vld [vmem:[%s165 + $0x8c] sm:$0xf]
      %v3299 = vld [vmem:[%s165 + $0x90] sm:$0xf]
      %v3300 = vld [vmem:[%s165 + $0x94] sm:$0xf]
      %v3301 = vld [vmem:[%s165 + $0x98] sm:$0xf]
      %v3302 = vld [vmem:[%s165 + $0x9c] sm:$0xf]
      %v3303 = vld [vmem:[%s165 + $0xa0] sm:$0xf]
      %v3304 = vld [vmem:[%s165 + $0xa4] sm:$0xf]
      %v3305 = vld [vmem:[%s165 + $0xa8] sm:$0xf]
      %v3306 = vld [vmem:[%s165 + $0xac] sm:$0xf]
      %v3307 = vld [vmem:[%s165 + $0xb0] sm:$0xf]
      %v3308 = vld [vmem:[%s165 + $0xb4] sm:$0xf]
      %v3309 = vld [vmem:[%s165 + $0xb8] sm:$0xf]
      %v3310 = vld [vmem:[%s165 + $0xbc] sm:$0xf]
      %v3311 = vld [vmem:[%s165 + $0xc0] sm:$0xf]
      %v3312 = vld [vmem:[%s165 + $0xc4] sm:$0xf]
      %v3313 = vld [vmem:[%s165 + $0xc8] sm:$0xf]
      %v3314 = vld [vmem:[%s165 + $0xcc] sm:$0x1]
      %v3315 = vld [vmem:[#allocation2] sm:$0xff]
      %v3316 = vld [vmem:[#allocation2 + $0x8] sm:$0xff]
      %v3317 = vld [vmem:[#allocation2 + $0x10] sm:$0xff]
      %v3318 = vld [vmem:[#allocation2 + $0x18] sm:$0xff]
      %v3319 = vld [vmem:[#allocation2 + $0x20] sm:$0xff]
      %v3320 = vld [vmem:[#allocation2 + $0x28] sm:$0xff]
      %v3321 = vld [vmem:[#allocation2 + $0x30] sm:$0xff]
      %v3322 = vld [vmem:[#allocation2 + $0x38] sm:$0xff]
      %v3323 = vld [vmem:[#allocation2 + $0x40] sm:$0xff]
      %v3324 = vld [vmem:[#allocation2 + $0x48] sm:$0xff]
      %v3325 = vld [vmem:[#allocation2 + $0x50] sm:$0xff]
      %v3326 = vld [vmem:[#allocation2 + $0x58] sm:$0xff]
      %v3327 = vld [vmem:[#allocation2 + $0x60] sm:$0xff]
      %v3328 = vld [vmem:[#allocation2 + $0x68] sm:$0xff]
      %v3329 = vld [vmem:[#allocation2 + $0x70] sm:$0xff]
      %v3330 = vld [vmem:[#allocation2 + $0x78] sm:$0xff]
      %v3331 = vld [vmem:[#allocation2 + $0x80] sm:$0xff]
      %v3332 = vld [vmem:[#allocation2 + $0x88] sm:$0xff]
      %v3333 = vld [vmem:[#allocation2 + $0x90] sm:$0xff]
      %v3334 = vld [vmem:[#allocation2 + $0x98] sm:$0xff]
      %v3335 = vld [vmem:[#allocation2 + $0xa0] sm:$0xff]
      %v3336 = vld [vmem:[#allocation2 + $0xa8] sm:$0xff]
      %v3337 = vld [vmem:[#allocation2 + $0xb0] sm:$0xff]
      %v3338 = vld [vmem:[#allocation2 + $0xb8] sm:$0xff]
      %v3339 = vld [vmem:[#allocation2 + $0xc0] sm:$0xff]
      %v3340 = vld [vmem:[#allocation2 + $0xc8] sm:$0xff]
      %v3341 = vld [vmem:[#allocation2 + $0xd0] sm:$0xff]
      %v3342 = vld [vmem:[#allocation2 + $0xd8] sm:$0xff]
      %v3343 = vld [vmem:[#allocation2 + $0xe0] sm:$0xff]
      %v3344 = vld [vmem:[#allocation2 + $0xe8] sm:$0xff]
      %v3345 = vld [vmem:[#allocation2 + $0xf0] sm:$0xff]
      %v3346 = vld [vmem:[#allocation2 + $0xf8] sm:$0xff]
      %v3347 = vld [vmem:[#allocation2 + $0x100] sm:$0xff]
      %v3348 = vld [vmem:[#allocation2 + $0x108] sm:$0xff]
      %v3349 = vld [vmem:[#allocation2 + $0x110] sm:$0xff]
      %v3350 = vld [vmem:[#allocation2 + $0x118] sm:$0xff]
      %v3351 = vld [vmem:[#allocation2 + $0x120] sm:$0xff]
      %v3352 = vld [vmem:[#allocation2 + $0x128] sm:$0xff]
      %v3353 = vld [vmem:[#allocation2 + $0x130] sm:$0xff]
      %v3354 = vld [vmem:[#allocation2 + $0x138] sm:$0xff]
      %v3355 = vld [vmem:[#allocation2 + $0x140] sm:$0xff]
      %v3356 = vld [vmem:[#allocation2 + $0x148] sm:$0xff]
      %v3357 = vld [vmem:[#allocation2 + $0x150] sm:$0xff]
      %v3358 = vld [vmem:[#allocation2 + $0x158] sm:$0xff]
      %v3359 = vld [vmem:[#allocation2 + $0x160] sm:$0xff]
      %v3360 = vld [vmem:[#allocation2 + $0x168] sm:$0xff]
      %v3361 = vld [vmem:[#allocation2 + $0x170] sm:$0xff]
      %v3362 = vld [vmem:[#allocation2 + $0x178] sm:$0xff]
      %s3363 = scalar_lea.vmem %s1, 10
      %v3364 = vld [vmem:[%s3363] sm:$0x3]
      %v3414 = vunpack.c.l.b16 %v3266
      %v3415 = vunpack.c.l.b16 %v3267
      %v3416 = vunpack.c.l.b16 %v3268
      %v3417 = vunpack.c.l.b16 %v3269
      %v3418 = vunpack.c.l.b16 %v3270
      %v3419 = vunpack.c.l.b16 %v3271
      %v3420 = vunpack.c.l.b16 %v3272
      %v3421 = vunpack.c.l.b16 %v3273
      %v3422 = vunpack.c.l.b16 %v3274
      %v3423 = vunpack.c.l.b16 %v3275
      %v3424 = vunpack.c.l.b16 %v3276
      %v3425 = vunpack.c.l.b16 %v3277
      %v3426 = vunpack.c.l.b16 %v3278
      %v3427 = vunpack.c.l.b16 %v3279
      %v3428 = vunpack.c.l.b16 %v3280
      %v3429 = vunpack.c.l.b16 %v3281
      %v3430 = vunpack.c.l.b16 %v3282
      %v3431 = vunpack.c.l.b16 %v3283
      %v3432 = vunpack.c.l.b16 %v3284
      %v3433 = vunpack.c.l.b16 %v3285
      %v3434 = vunpack.c.l.b16 %v3286
      %v3435 = vunpack.c.l.b16 %v3287
      %v3436 = vunpack.c.l.b16 %v3288
      %v3437 = vunpack.c.l.b16 %v3289
      %v3438 = vunpack.c.l.b16 %v3290
      %v3439 = vunpack.c.l.b16 %v3291
      %v3440 = vunpack.c.l.b16 %v3292
      %v3441 = vunpack.c.l.b16 %v3293
      %v3442 = vunpack.c.l.b16 %v3294
      %v3443 = vunpack.c.l.b16 %v3295
      %v3444 = vunpack.c.l.b16 %v3296
      %v3445 = vunpack.c.l.b16 %v3297
      %v3446 = vunpack.c.l.b16 %v3298
      %v3447 = vunpack.c.l.b16 %v3299
      %v3448 = vunpack.c.l.b16 %v3300
      %v3449 = vunpack.c.l.b16 %v3301
      %v3450 = vunpack.c.l.b16 %v3302
      %v3451 = vunpack.c.l.b16 %v3303
      %v3452 = vunpack.c.l.b16 %v3304
      %v3453 = vunpack.c.l.b16 %v3305
      %v3454 = vunpack.c.l.b16 %v3306
      %v3455 = vunpack.c.l.b16 %v3307
      %v3456 = vunpack.c.l.b16 %v3308
      %v3457 = vunpack.c.l.b16 %v3309
      %v3458 = vunpack.c.l.b16 %v3310
      %v3459 = vunpack.c.l.b16 %v3311
      %v3460 = vunpack.c.l.b16 %v3312
      %v3461 = vunpack.c.l.b16 %v3313
      %v3462 = vunpack.c.l.b16 %v3314
      %v3463 = vpack.c.b16 %v3415, %v3414
      %v3464 = vpack.c.b16 %v3417, %v3416
      %v3465 = vpack.c.b16 %v3419, %v3418
      %v3466 = vpack.c.b16 %v3421, %v3420
      %v3467 = vpack.c.b16 %v3423, %v3422
      %v3468 = vpack.c.b16 %v3425, %v3424
      %v3469 = vpack.c.b16 %v3427, %v3426
      %v3470 = vpack.c.b16 %v3429, %v3428
      %v3471 = vpack.c.b16 %v3431, %v3430
      %v3472 = vpack.c.b16 %v3433, %v3432
      %v3473 = vpack.c.b16 %v3435, %v3434
      %v3474 = vpack.c.b16 %v3437, %v3436
      %v3475 = vpack.c.b16 %v3439, %v3438
      %v3476 = vpack.c.b16 %v3441, %v3440
      %v3477 = vpack.c.b16 %v3443, %v3442
      %v3478 = vpack.c.b16 %v3445, %v3444
      %v3479 = vpack.c.b16 %v3447, %v3446
      %v3480 = vpack.c.b16 %v3449, %v3448
      %v3481 = vpack.c.b16 %v3451, %v3450
      %v3482 = vpack.c.b16 %v3453, %v3452
      %v3483 = vpack.c.b16 %v3455, %v3454
      %v3484 = vpack.c.b16 %v3457, %v3456
      %v3485 = vpack.c.b16 %v3459, %v3458
      %v3486 = vpack.c.b16 %v3461, %v3460
      %v3487 = vpack.c.b16 %v3462, %v3462
      %v3488 = vrot.slane %v3463, 1
      %v3489 = vrot.slane %v3464, 1
      %v3490 = vsel %vm1680, %v3488, %v3489
      %v3491 = vrot.slane %v3465, 1
      %v3492 = vsel %vm1680, %v3489, %v3491
      %v3493 = vrot.slane %v3466, 1
      %v3494 = vsel %vm1680, %v3491, %v3493
      %v3495 = vrot.slane %v3467, 1
      %v3496 = vsel %vm1680, %v3493, %v3495
      %v3497 = vrot.slane %v3468, 1
      %v3498 = vsel %vm1680, %v3495, %v3497
      %v3499 = vrot.slane %v3469, 1
      %v3500 = vsel %vm1680, %v3497, %v3499
      %v3501 = vrot.slane %v3470, 1
      %v3502 = vsel %vm1680, %v3499, %v3501
      %v3503 = vrot.slane %v3471, 1
      %v3504 = vsel %vm1680, %v3501, %v3503
      %v3505 = vrot.slane %v3472, 1
      %v3506 = vsel %vm1680, %v3503, %v3505
      %v3507 = vrot.slane %v3473, 1
      %v3508 = vsel %vm1680, %v3505, %v3507
      %v3509 = vrot.slane %v3474, 1
      %v3510 = vsel %vm1680, %v3507, %v3509
      %v3511 = vrot.slane %v3475, 1
      %v3512 = vsel %vm1680, %v3509, %v3511
      %v3513 = vrot.slane %v3476, 1
      %v3514 = vsel %vm1680, %v3511, %v3513
      %v3515 = vrot.slane %v3477, 1
      %v3516 = vsel %vm1680, %v3513, %v3515
      %v3517 = vrot.slane %v3478, 1
      %v3518 = vsel %vm1680, %v3515, %v3517
      %v3519 = vrot.slane %v3479, 1
      %v3520 = vsel %vm1680, %v3517, %v3519
      %v3521 = vrot.slane %v3480, 1
      %v3522 = vsel %vm1680, %v3519, %v3521
      %v3523 = vrot.slane %v3481, 1
      %v3524 = vsel %vm1680, %v3521, %v3523
      %v3525 = vrot.slane %v3482, 1
      %v3526 = vsel %vm1680, %v3523, %v3525
      %v3527 = vrot.slane %v3483, 1
      %v3528 = vsel %vm1680, %v3525, %v3527
      %v3529 = vrot.slane %v3484, 1
      %v3530 = vsel %vm1680, %v3527, %v3529
      %v3531 = vrot.slane %v3485, 1
      %v3532 = vsel %vm1680, %v3529, %v3531
      %v3533 = vrot.slane %v3486, 1
      %v3534 = vsel %vm1680, %v3531, %v3533
      %v3535 = vrot.slane %v3487, 1
      %v3536 = vsel %vm1680, %v3533, %v3535
      %v3538 = vsel %vm172, %v3490, 0
      %v3541 = vsel %vm172, %v3492, 0
      %v3544 = vsel %vm172, %v3494, 0
      %v3547 = vsel %vm172, %v3496, 0
      %v3550 = vsel %vm172, %v3498, 0
      %v3553 = vsel %vm172, %v3500, 0
      %v3556 = vsel %vm172, %v3502, 0
      %v3559 = vsel %vm172, %v3504, 0
      %v3562 = vsel %vm172, %v3506, 0
      %v3565 = vsel %vm172, %v3508, 0
      %v3568 = vsel %vm172, %v3510, 0
      %v3571 = vsel %vm172, %v3512, 0
      %v3574 = vsel %vm172, %v3514, 0
      %v3577 = vsel %vm172, %v3516, 0
      %v3580 = vsel %vm172, %v3518, 0
      %v3583 = vsel %vm172, %v3520, 0
      %v3586 = vsel %vm172, %v3522, 0
      %v3589 = vsel %vm172, %v3524, 0
      %v3592 = vsel %vm172, %v3526, 0
      %v3595 = vsel %vm172, %v3528, 0
      %v3598 = vsel %vm172, %v3530, 0
      %v3601 = vsel %vm172, %v3532, 0
      %v3604 = vsel %vm172, %v3534, 0
      %v3607 = vsel %vm172, %v3536, 0
      %v3610 = vsel %vm510, %v3364, 0
      %3612 = vmatpush.bf16.msra.mxu0 0
      %3613 = vmatpush.bf16.msra.mxu0 0
      %3614 = vmatpush.bf16.msra.mxu0 0
      %3615 = vmatpush.bf16.msra.mxu0 0
      %3616 = vmatpush.bf16.msra.mxu0 0
      %3617 = vmatpush.bf16.msra.mxu0 0
      %3618 = vmatpush.bf16.msra.mxu0 0
      %3619 = vmatpush.bf16.msra.mxu0 %v3610
      %3620 = vmatmul.bf16.gmra.mxu0 %v3538
      %v3621 = vpop.f32.mrf.mxu0
      %v3622 = vadd.f32 0.0, %v3621
      %v3623 = vpop.f32.mrf.mxu0
      %v3624 = vadd.f32 0.0, %v3623
      %3625 = vmatmul.bf16.gmra.mxu0 %v3541
      %v3626 = vpop.f32.mrf.mxu0
      %v3627 = vadd.f32 0.0, %v3626
      %v3628 = vpop.f32.mrf.mxu0
      %v3629 = vadd.f32 0.0, %v3628
      %3630 = vmatmul.bf16.gmra.mxu0 %v3544
      %v3631 = vpop.f32.mrf.mxu0
      %v3632 = vadd.f32 0.0, %v3631
      %v3633 = vpop.f32.mrf.mxu0
      %v3634 = vadd.f32 0.0, %v3633
      %3635 = vmatmul.bf16.gmra.mxu0 %v3547
      %v3636 = vpop.f32.mrf.mxu0
      %v3637 = vadd.f32 0.0, %v3636
      %v3638 = vpop.f32.mrf.mxu0
      %v3639 = vadd.f32 0.0, %v3638
      %3640 = vmatmul.bf16.gmra.mxu0 %v3550
      %v3641 = vpop.f32.mrf.mxu0
      %v3642 = vadd.f32 0.0, %v3641
      %v3643 = vpop.f32.mrf.mxu0
      %v3644 = vadd.f32 0.0, %v3643
      %3645 = vmatmul.bf16.gmra.mxu0 %v3553
      %v3646 = vpop.f32.mrf.mxu0
      %v3647 = vadd.f32 0.0, %v3646
      %v3648 = vpop.f32.mrf.mxu0
      %v3649 = vadd.f32 0.0, %v3648
      %3650 = vmatmul.bf16.gmra.mxu0 %v3556
      %v3651 = vpop.f32.mrf.mxu0
      %v3652 = vadd.f32 0.0, %v3651
      %v3653 = vpop.f32.mrf.mxu0
      %v3654 = vadd.f32 0.0, %v3653
      %3655 = vmatmul.bf16.gmra.mxu0 %v3559
      %v3656 = vpop.f32.mrf.mxu0
      %v3657 = vadd.f32 0.0, %v3656
      %v3658 = vpop.f32.mrf.mxu0
      %v3659 = vadd.f32 0.0, %v3658
      %3660 = vmatmul.bf16.gmra.mxu0 %v3562
      %v3661 = vpop.f32.mrf.mxu0
      %v3662 = vadd.f32 0.0, %v3661
      %v3663 = vpop.f32.mrf.mxu0
      %v3664 = vadd.f32 0.0, %v3663
      %3665 = vmatmul.bf16.gmra.mxu0 %v3565
      %v3666 = vpop.f32.mrf.mxu0
      %v3667 = vadd.f32 0.0, %v3666
      %v3668 = vpop.f32.mrf.mxu0
      %v3669 = vadd.f32 0.0, %v3668
      %3670 = vmatmul.bf16.gmra.mxu0 %v3568
      %v3671 = vpop.f32.mrf.mxu0
      %v3672 = vadd.f32 0.0, %v3671
      %v3673 = vpop.f32.mrf.mxu0
      %v3674 = vadd.f32 0.0, %v3673
      %3675 = vmatmul.bf16.gmra.mxu0 %v3571
      %v3676 = vpop.f32.mrf.mxu0
      %v3677 = vadd.f32 0.0, %v3676
      %v3678 = vpop.f32.mrf.mxu0
      %v3679 = vadd.f32 0.0, %v3678
      %3680 = vmatmul.bf16.gmra.mxu0 %v3574
      %v3681 = vpop.f32.mrf.mxu0
      %v3682 = vadd.f32 0.0, %v3681
      %v3683 = vpop.f32.mrf.mxu0
      %v3684 = vadd.f32 0.0, %v3683
      %3685 = vmatmul.bf16.gmra.mxu0 %v3577
      %v3686 = vpop.f32.mrf.mxu0
      %v3687 = vadd.f32 0.0, %v3686
      %v3688 = vpop.f32.mrf.mxu0
      %v3689 = vadd.f32 0.0, %v3688
      %3690 = vmatmul.bf16.gmra.mxu0 %v3580
      %v3691 = vpop.f32.mrf.mxu0
      %v3692 = vadd.f32 0.0, %v3691
      %v3693 = vpop.f32.mrf.mxu0
      %v3694 = vadd.f32 0.0, %v3693
      %3695 = vmatmul.bf16.gmra.mxu0 %v3583
      %v3696 = vpop.f32.mrf.mxu0
      %v3697 = vadd.f32 0.0, %v3696
      %v3698 = vpop.f32.mrf.mxu0
      %v3699 = vadd.f32 0.0, %v3698
      %3700 = vmatmul.bf16.gmra.mxu0 %v3586
      %v3701 = vpop.f32.mrf.mxu0
      %v3702 = vadd.f32 0.0, %v3701
      %v3703 = vpop.f32.mrf.mxu0
      %v3704 = vadd.f32 0.0, %v3703
      %3705 = vmatmul.bf16.gmra.mxu0 %v3589
      %v3706 = vpop.f32.mrf.mxu0
      %v3707 = vadd.f32 0.0, %v3706
      %v3708 = vpop.f32.mrf.mxu0
      %v3709 = vadd.f32 0.0, %v3708
      %3710 = vmatmul.bf16.gmra.mxu0 %v3592
      %v3711 = vpop.f32.mrf.mxu0
      %v3712 = vadd.f32 0.0, %v3711
      %v3713 = vpop.f32.mrf.mxu0
      %v3714 = vadd.f32 0.0, %v3713
      %3715 = vmatmul.bf16.gmra.mxu0 %v3595
      %v3716 = vpop.f32.mrf.mxu0
      %v3717 = vadd.f32 0.0, %v3716
      %v3718 = vpop.f32.mrf.mxu0
      %v3719 = vadd.f32 0.0, %v3718
      %3720 = vmatmul.bf16.gmra.mxu0 %v3598
      %v3721 = vpop.f32.mrf.mxu0
      %v3722 = vadd.f32 0.0, %v3721
      %v3723 = vpop.f32.mrf.mxu0
      %v3724 = vadd.f32 0.0, %v3723
      %3725 = vmatmul.bf16.gmra.mxu0 %v3601
      %v3726 = vpop.f32.mrf.mxu0
      %v3727 = vadd.f32 0.0, %v3726
      %v3728 = vpop.f32.mrf.mxu0
      %v3729 = vadd.f32 0.0, %v3728
      %3730 = vmatmul.bf16.gmra.mxu0 %v3604
      %v3731 = vpop.f32.mrf.mxu0
      %v3732 = vadd.f32 0.0, %v3731
      %v3733 = vpop.f32.mrf.mxu0
      %v3734 = vadd.f32 0.0, %v3733
      %3735 = vmatmul.bf16.gmra.mxu0 %v3607
      %v3736 = vpop.f32.mrf.mxu0
      %v3737 = vadd.f32 0.0, %v3736
      %v3738 = vpop.f32.mrf.mxu0
      %v3739 = vadd.f32 0.0, %v3738
      %3740 = vdwg.mxu0
      %v3741 = vadd.f32 %v3315, %v3622
      %v3742 = vadd.f32 %v3316, %v3624
      %v3743 = vadd.f32 %v3317, %v3627
      %v3744 = vadd.f32 %v3318, %v3629
      %v3745 = vadd.f32 %v3319, %v3632
      %v3746 = vadd.f32 %v3320, %v3634
      %v3747 = vadd.f32 %v3321, %v3637
      %v3748 = vadd.f32 %v3322, %v3639
      %v3749 = vadd.f32 %v3323, %v3642
      %v3750 = vadd.f32 %v3324, %v3644
      %v3751 = vadd.f32 %v3325, %v3647
      %v3752 = vadd.f32 %v3326, %v3649
      %v3753 = vadd.f32 %v3327, %v3652
      %v3754 = vadd.f32 %v3328, %v3654
      %v3755 = vadd.f32 %v3329, %v3657
      %v3756 = vadd.f32 %v3330, %v3659
      %v3757 = vadd.f32 %v3331, %v3662
      %v3758 = vadd.f32 %v3332, %v3664
      %v3759 = vadd.f32 %v3333, %v3667
      %v3760 = vadd.f32 %v3334, %v3669
      %v3761 = vadd.f32 %v3335, %v3672
      %v3762 = vadd.f32 %v3336, %v3674
      %v3763 = vadd.f32 %v3337, %v3677
      %v3764 = vadd.f32 %v3338, %v3679
      %v3765 = vadd.f32 %v3339, %v3682
      %v3766 = vadd.f32 %v3340, %v3684
      %v3767 = vadd.f32 %v3341, %v3687
      %v3768 = vadd.f32 %v3342, %v3689
      %v3769 = vadd.f32 %v3343, %v3692
      %v3770 = vadd.f32 %v3344, %v3694
      %v3771 = vadd.f32 %v3345, %v3697
      %v3772 = vadd.f32 %v3346, %v3699
      %v3773 = vadd.f32 %v3347, %v3702
      %v3774 = vadd.f32 %v3348, %v3704
      %v3775 = vadd.f32 %v3349, %v3707
      %v3776 = vadd.f32 %v3350, %v3709
      %v3777 = vadd.f32 %v3351, %v3712
      %v3778 = vadd.f32 %v3352, %v3714
      %v3779 = vadd.f32 %v3353, %v3717
      %v3780 = vadd.f32 %v3354, %v3719
      %v3781 = vadd.f32 %v3355, %v3722
      %v3782 = vadd.f32 %v3356, %v3724
      %v3783 = vadd.f32 %v3357, %v3727
      %v3784 = vadd.f32 %v3358, %v3729
      %v3785 = vadd.f32 %v3359, %v3732
      %v3786 = vadd.f32 %v3360, %v3734
      %v3787 = vadd.f32 %v3361, %v3737
      %v3788 = vadd.f32 %v3362, %v3739
      %3789 = vst.msk [vmem:[#allocation2] sm:$0xff] %vm172, %v3741
      %3790 = vst.msk [vmem:[#allocation2 + $0x8] sm:$0xff] %vm172, %v3742
      %3791 = vst.msk [vmem:[#allocation2 + $0x10] sm:$0xff] %vm172, %v3743
      %3792 = vst.msk [vmem:[#allocation2 + $0x18] sm:$0xff] %vm172, %v3744
      %3793 = vst.msk [vmem:[#allocation2 + $0x20] sm:$0xff] %vm172, %v3745
      %3794 = vst.msk [vmem:[#allocation2 + $0x28] sm:$0xff] %vm172, %v3746
      %3795 = vst.msk [vmem:[#allocation2 + $0x30] sm:$0xff] %vm172, %v3747
      %3796 = vst.msk [vmem:[#allocation2 + $0x38] sm:$0xff] %vm172, %v3748
      %3797 = vst.msk [vmem:[#allocation2 + $0x40] sm:$0xff] %vm172, %v3749
      %3798 = vst.msk [vmem:[#allocation2 + $0x48] sm:$0xff] %vm172, %v3750
      %3799 = vst.msk [vmem:[#allocation2 + $0x50] sm:$0xff] %vm172, %v3751
      %3800 = vst.msk [vmem:[#allocation2 + $0x58] sm:$0xff] %vm172, %v3752
      %3801 = vst.msk [vmem:[#allocation2 + $0x60] sm:$0xff] %vm172, %v3753
      %3802 = vst.msk [vmem:[#allocation2 + $0x68] sm:$0xff] %vm172, %v3754
      %3803 = vst.msk [vmem:[#allocation2 + $0x70] sm:$0xff] %vm172, %v3755
      %3804 = vst.msk [vmem:[#allocation2 + $0x78] sm:$0xff] %vm172, %v3756
      %3805 = vst.msk [vmem:[#allocation2 + $0x80] sm:$0xff] %vm172, %v3757
      %3806 = vst.msk [vmem:[#allocation2 + $0x88] sm:$0xff] %vm172, %v3758
      %3807 = vst.msk [vmem:[#allocation2 + $0x90] sm:$0xff] %vm172, %v3759
      %3808 = vst.msk [vmem:[#allocation2 + $0x98] sm:$0xff] %vm172, %v3760
      %3809 = vst.msk [vmem:[#allocation2 + $0xa0] sm:$0xff] %vm172, %v3761
      %3810 = vst.msk [vmem:[#allocation2 + $0xa8] sm:$0xff] %vm172, %v3762
      %3811 = vst.msk [vmem:[#allocation2 + $0xb0] sm:$0xff] %vm172, %v3763
      %3812 = vst.msk [vmem:[#allocation2 + $0xb8] sm:$0xff] %vm172, %v3764
      %3813 = vst.msk [vmem:[#allocation2 + $0xc0] sm:$0xff] %vm172, %v3765
      %3814 = vst.msk [vmem:[#allocation2 + $0xc8] sm:$0xff] %vm172, %v3766
      %3815 = vst.msk [vmem:[#allocation2 + $0xd0] sm:$0xff] %vm172, %v3767
      %3816 = vst.msk [vmem:[#allocation2 + $0xd8] sm:$0xff] %vm172, %v3768
      %3817 = vst.msk [vmem:[#allocation2 + $0xe0] sm:$0xff] %vm172, %v3769
      %3818 = vst.msk [vmem:[#allocation2 + $0xe8] sm:$0xff] %vm172, %v3770
      %3819 = vst.msk [vmem:[#allocation2 + $0xf0] sm:$0xff] %vm172, %v3771
      %3820 = vst.msk [vmem:[#allocation2 + $0xf8] sm:$0xff] %vm172, %v3772
      %3821 = vst.msk [vmem:[#allocation2 + $0x100] sm:$0xff] %vm172, %v3773
      %3822 = vst.msk [vmem:[#allocation2 + $0x108] sm:$0xff] %vm172, %v3774
      %3823 = vst.msk [vmem:[#allocation2 + $0x110] sm:$0xff] %vm172, %v3775
      %3824 = vst.msk [vmem:[#allocation2 + $0x118] sm:$0xff] %vm172, %v3776
      %3825 = vst.msk [vmem:[#allocation2 + $0x120] sm:$0xff] %vm172, %v3777
      %3826 = vst.msk [vmem:[#allocation2 + $0x128] sm:$0xff] %vm172, %v3778
      %3827 = vst.msk [vmem:[#allocation2 + $0x130] sm:$0xff] %vm172, %v3779
      %3828 = vst.msk [vmem:[#allocation2 + $0x138] sm:$0xff] %vm172, %v3780
      %3829 = vst.msk [vmem:[#allocation2 + $0x140] sm:$0xff] %vm172, %v3781
      %3830 = vst.msk [vmem:[#allocation2 + $0x148] sm:$0xff] %vm172, %v3782
      %3831 = vst.msk [vmem:[#allocation2 + $0x150] sm:$0xff] %vm172, %v3783
      %3832 = vst.msk [vmem:[#allocation2 + $0x158] sm:$0xff] %vm172, %v3784
      %3833 = vst.msk [vmem:[#allocation2 + $0x160] sm:$0xff] %vm172, %v3785
      %3834 = vst.msk [vmem:[#allocation2 + $0x168] sm:$0xff] %vm172, %v3786
      %3835 = vst.msk [vmem:[#allocation2 + $0x170] sm:$0xff] %vm172, %v3787
      %3836 = vst.msk [vmem:[#allocation2 + $0x178] sm:$0xff] %vm172, %v3788
      %v3837 = vld [vmem:[%s165 + $0x18] sm:$0xf]
      %v3838 = vld [vmem:[%s165 + $0x1c] sm:$0xf]
      %v3839 = vld [vmem:[%s165 + $0x20] sm:$0xf]
      %v3840 = vld [vmem:[%s165 + $0x24] sm:$0xf]
      %v3841 = vld [vmem:[%s165 + $0x28] sm:$0xf]
      %v3842 = vld [vmem:[%s165 + $0x2c] sm:$0xf]
      %v3843 = vld [vmem:[%s165 + $0x30] sm:$0xf]
      %v3844 = vld [vmem:[%s165 + $0x34] sm:$0xf]
      %v3845 = vld [vmem:[%s165 + $0x38] sm:$0xf]
      %v3846 = vld [vmem:[%s165 + $0x3c] sm:$0xf]
      %v3847 = vld [vmem:[%s165 + $0x40] sm:$0xf]
      %v3848 = vld [vmem:[%s165 + $0x44] sm:$0xf]
      %v3849 = vld [vmem:[%s165 + $0x48] sm:$0xf]
      %v3850 = vld [vmem:[%s165 + $0x4c] sm:$0xf]
      %v3851 = vld [vmem:[%s165 + $0x50] sm:$0xf]
      %v3852 = vld [vmem:[%s165 + $0x54] sm:$0xf]
      %v3853 = vld [vmem:[%s165 + $0x58] sm:$0xf]
      %v3854 = vld [vmem:[%s165 + $0x5c] sm:$0xf]
      %v3855 = vld [vmem:[%s165 + $0x60] sm:$0xf]
      %v3856 = vld [vmem:[%s165 + $0x64] sm:$0xf]
      %v3857 = vld [vmem:[%s165 + $0x68] sm:$0xf]
      %v3858 = vld [vmem:[%s165 + $0x6c] sm:$0xf]
      %v3859 = vld [vmem:[%s165 + $0x70] sm:$0xf]
      %v3860 = vld [vmem:[%s165 + $0x74] sm:$0xf]
      %v3861 = vld [vmem:[%s165 + $0x78] sm:$0xf]
      %v3862 = vld [vmem:[%s165 + $0x7c] sm:$0xf]
      %v3863 = vld [vmem:[%s165 + $0x80] sm:$0xf]
      %v3864 = vld [vmem:[%s165 + $0x84] sm:$0xf]
      %v3865 = vld [vmem:[%s165 + $0x88] sm:$0xf]
      %v3866 = vld [vmem:[%s165 + $0x8c] sm:$0xf]
      %v3867 = vld [vmem:[%s165 + $0x90] sm:$0xf]
      %v3868 = vld [vmem:[%s165 + $0x94] sm:$0xf]
      %v3869 = vld [vmem:[%s165 + $0x98] sm:$0xf]
      %v3870 = vld [vmem:[%s165 + $0x9c] sm:$0xf]
      %v3871 = vld [vmem:[%s165 + $0xa0] sm:$0xf]
      %v3872 = vld [vmem:[%s165 + $0xa4] sm:$0xf]
      %v3873 = vld [vmem:[%s165 + $0xa8] sm:$0xf]
      %v3874 = vld [vmem:[%s165 + $0xac] sm:$0xf]
      %v3875 = vld [vmem:[%s165 + $0xb0] sm:$0xf]
      %v3876 = vld [vmem:[%s165 + $0xb4] sm:$0xf]
      %v3877 = vld [vmem:[%s165 + $0xb8] sm:$0xf]
      %v3878 = vld [vmem:[%s165 + $0xbc] sm:$0xf]
      %v3879 = vld [vmem:[%s165 + $0xc0] sm:$0xf]
      %v3880 = vld [vmem:[%s165 + $0xc4] sm:$0xf]
      %v3881 = vld [vmem:[%s165 + $0xc8] sm:$0xf]
      %v3882 = vld [vmem:[%s165 + $0xcc] sm:$0xf]
      %v3883 = vld [vmem:[%s165 + $0xd0] sm:$0xf]
      %v3884 = vld [vmem:[%s165 + $0xd4] sm:$0xf]
      %v3885 = vld [vmem:[#allocation2] sm:$0xff]
      %v3886 = vld [vmem:[#allocation2 + $0x8] sm:$0xff]
      %v3887 = vld [vmem:[#allocation2 + $0x10] sm:$0xff]
      %v3888 = vld [vmem:[#allocation2 + $0x18] sm:$0xff]
      %v3889 = vld [vmem:[#allocation2 + $0x20] sm:$0xff]
      %v3890 = vld [vmem:[#allocation2 + $0x28] sm:$0xff]
      %v3891 = vld [vmem:[#allocation2 + $0x30] sm:$0xff]
      %v3892 = vld [vmem:[#allocation2 + $0x38] sm:$0xff]
      %v3893 = vld [vmem:[#allocation2 + $0x40] sm:$0xff]
      %v3894 = vld [vmem:[#allocation2 + $0x48] sm:$0xff]
      %v3895 = vld [vmem:[#allocation2 + $0x50] sm:$0xff]
      %v3896 = vld [vmem:[#allocation2 + $0x58] sm:$0xff]
      %v3897 = vld [vmem:[#allocation2 + $0x60] sm:$0xff]
      %v3898 = vld [vmem:[#allocation2 + $0x68] sm:$0xff]
      %v3899 = vld [vmem:[#allocation2 + $0x70] sm:$0xff]
      %v3900 = vld [vmem:[#allocation2 + $0x78] sm:$0xff]
      %v3901 = vld [vmem:[#allocation2 + $0x80] sm:$0xff]
      %v3902 = vld [vmem:[#allocation2 + $0x88] sm:$0xff]
      %v3903 = vld [vmem:[#allocation2 + $0x90] sm:$0xff]
      %v3904 = vld [vmem:[#allocation2 + $0x98] sm:$0xff]
      %v3905 = vld [vmem:[#allocation2 + $0xa0] sm:$0xff]
      %v3906 = vld [vmem:[#allocation2 + $0xa8] sm:$0xff]
      %v3907 = vld [vmem:[#allocation2 + $0xb0] sm:$0xff]
      %v3908 = vld [vmem:[#allocation2 + $0xb8] sm:$0xff]
      %v3909 = vld [vmem:[#allocation2 + $0xc0] sm:$0xff]
      %v3910 = vld [vmem:[#allocation2 + $0xc8] sm:$0xff]
      %v3911 = vld [vmem:[#allocation2 + $0xd0] sm:$0xff]
      %v3912 = vld [vmem:[#allocation2 + $0xd8] sm:$0xff]
      %v3913 = vld [vmem:[#allocation2 + $0xe0] sm:$0xff]
      %v3914 = vld [vmem:[#allocation2 + $0xe8] sm:$0xff]
      %v3915 = vld [vmem:[#allocation2 + $0xf0] sm:$0xff]
      %v3916 = vld [vmem:[#allocation2 + $0xf8] sm:$0xff]
      %v3917 = vld [vmem:[#allocation2 + $0x100] sm:$0xff]
      %v3918 = vld [vmem:[#allocation2 + $0x108] sm:$0xff]
      %v3919 = vld [vmem:[#allocation2 + $0x110] sm:$0xff]
      %v3920 = vld [vmem:[#allocation2 + $0x118] sm:$0xff]
      %v3921 = vld [vmem:[#allocation2 + $0x120] sm:$0xff]
      %v3922 = vld [vmem:[#allocation2 + $0x128] sm:$0xff]
      %v3923 = vld [vmem:[#allocation2 + $0x130] sm:$0xff]
      %v3924 = vld [vmem:[#allocation2 + $0x138] sm:$0xff]
      %v3925 = vld [vmem:[#allocation2 + $0x140] sm:$0xff]
      %v3926 = vld [vmem:[#allocation2 + $0x148] sm:$0xff]
      %v3927 = vld [vmem:[#allocation2 + $0x150] sm:$0xff]
      %v3928 = vld [vmem:[#allocation2 + $0x158] sm:$0xff]
      %v3929 = vld [vmem:[#allocation2 + $0x160] sm:$0xff]
      %v3930 = vld [vmem:[#allocation2 + $0x168] sm:$0xff]
      %v3931 = vld [vmem:[#allocation2 + $0x170] sm:$0xff]
      %v3932 = vld [vmem:[#allocation2 + $0x178] sm:$0xff]
      %s3933 = scalar_lea.vmem %s1, 12
      %v3934 = vld [vmem:[%s3933] sm:$0x3]
      %v3983 = vunpack.c.l.b16 %v3837
      %v3984 = vunpack.c.l.b16 %v3838
      %v3985 = vunpack.c.l.b16 %v3839
      %v3986 = vunpack.c.l.b16 %v3840
      %v3987 = vunpack.c.l.b16 %v3841
      %v3988 = vunpack.c.l.b16 %v3842
      %v3989 = vunpack.c.l.b16 %v3843
      %v3990 = vunpack.c.l.b16 %v3844
      %v3991 = vunpack.c.l.b16 %v3845
      %v3992 = vunpack.c.l.b16 %v3846
      %v3993 = vunpack.c.l.b16 %v3847
      %v3994 = vunpack.c.l.b16 %v3848
      %v3995 = vunpack.c.l.b16 %v3849
      %v3996 = vunpack.c.l.b16 %v3850
      %v3997 = vunpack.c.l.b16 %v3851
      %v3998 = vunpack.c.l.b16 %v3852
      %v3999 = vunpack.c.l.b16 %v3853
      %v4000 = vunpack.c.l.b16 %v3854
      %v4001 = vunpack.c.l.b16 %v3855
      %v4002 = vunpack.c.l.b16 %v3856
      %v4003 = vunpack.c.l.b16 %v3857
      %v4004 = vunpack.c.l.b16 %v3858
      %v4005 = vunpack.c.l.b16 %v3859
      %v4006 = vunpack.c.l.b16 %v3860
      %v4007 = vunpack.c.l.b16 %v3861
      %v4008 = vunpack.c.l.b16 %v3862
      %v4009 = vunpack.c.l.b16 %v3863
      %v4010 = vunpack.c.l.b16 %v3864
      %v4011 = vunpack.c.l.b16 %v3865
      %v4012 = vunpack.c.l.b16 %v3866
      %v4013 = vunpack.c.l.b16 %v3867
      %v4014 = vunpack.c.l.b16 %v3868
      %v4015 = vunpack.c.l.b16 %v3869
      %v4016 = vunpack.c.l.b16 %v3870
      %v4017 = vunpack.c.l.b16 %v3871
      %v4018 = vunpack.c.l.b16 %v3872
      %v4019 = vunpack.c.l.b16 %v3873
      %v4020 = vunpack.c.l.b16 %v3874
      %v4021 = vunpack.c.l.b16 %v3875
      %v4022 = vunpack.c.l.b16 %v3876
      %v4023 = vunpack.c.l.b16 %v3877
      %v4024 = vunpack.c.l.b16 %v3878
      %v4025 = vunpack.c.l.b16 %v3879
      %v4026 = vunpack.c.l.b16 %v3880
      %v4027 = vunpack.c.l.b16 %v3881
      %v4028 = vunpack.c.l.b16 %v3882
      %v4029 = vunpack.c.l.b16 %v3883
      %v4030 = vunpack.c.l.b16 %v3884
      %v4031 = vpack.c.b16 %v3984, %v3983
      %v4032 = vpack.c.b16 %v3986, %v3985
      %v4033 = vpack.c.b16 %v3988, %v3987
      %v4034 = vpack.c.b16 %v3990, %v3989
      %v4035 = vpack.c.b16 %v3992, %v3991
      %v4036 = vpack.c.b16 %v3994, %v3993
      %v4037 = vpack.c.b16 %v3996, %v3995
      %v4038 = vpack.c.b16 %v3998, %v3997
      %v4039 = vpack.c.b16 %v4000, %v3999
      %v4040 = vpack.c.b16 %v4002, %v4001
      %v4041 = vpack.c.b16 %v4004, %v4003
      %v4042 = vpack.c.b16 %v4006, %v4005
      %v4043 = vpack.c.b16 %v4008, %v4007
      %v4044 = vpack.c.b16 %v4010, %v4009
      %v4045 = vpack.c.b16 %v4012, %v4011
      %v4046 = vpack.c.b16 %v4014, %v4013
      %v4047 = vpack.c.b16 %v4016, %v4015
      %v4048 = vpack.c.b16 %v4018, %v4017
      %v4049 = vpack.c.b16 %v4020, %v4019
      %v4050 = vpack.c.b16 %v4022, %v4021
      %v4051 = vpack.c.b16 %v4024, %v4023
      %v4052 = vpack.c.b16 %v4026, %v4025
      %v4053 = vpack.c.b16 %v4028, %v4027
      %v4054 = vpack.c.b16 %v4030, %v4029
      %v4056 = vsel %vm172, %v4031, 0
      %v4059 = vsel %vm172, %v4032, 0
      %v4062 = vsel %vm172, %v4033, 0
      %v4065 = vsel %vm172, %v4034, 0
      %v4068 = vsel %vm172, %v4035, 0
      %v4071 = vsel %vm172, %v4036, 0
      %v4074 = vsel %vm172, %v4037, 0
      %v4077 = vsel %vm172, %v4038, 0
      %v4080 = vsel %vm172, %v4039, 0
      %v4083 = vsel %vm172, %v4040, 0
      %v4086 = vsel %vm172, %v4041, 0
      %v4089 = vsel %vm172, %v4042, 0
      %v4092 = vsel %vm172, %v4043, 0
      %v4095 = vsel %vm172, %v4044, 0
      %v4098 = vsel %vm172, %v4045, 0
      %v4101 = vsel %vm172, %v4046, 0
      %v4104 = vsel %vm172, %v4047, 0
      %v4107 = vsel %vm172, %v4048, 0
      %v4110 = vsel %vm172, %v4049, 0
      %v4113 = vsel %vm172, %v4050, 0
      %v4116 = vsel %vm172, %v4051, 0
      %v4119 = vsel %vm172, %v4052, 0
      %v4122 = vsel %vm172, %v4053, 0
      %v4125 = vsel %vm172, %v4054, 0
      %v4128 = vsel %vm510, %v3934, 0
      %4130 = vmatpush.bf16.msra.mxu0 0
      %4131 = vmatpush.bf16.msra.mxu0 0
      %4132 = vmatpush.bf16.msra.mxu0 0
      %4133 = vmatpush.bf16.msra.mxu0 0
      %4134 = vmatpush.bf16.msra.mxu0 0
      %4135 = vmatpush.bf16.msra.mxu0 0
      %4136 = vmatpush.bf16.msra.mxu0 0
      %4137 = vmatpush.bf16.msra.mxu0 %v4128
      %4138 = vmatmul.bf16.gmra.mxu0 %v4056
      %v4139 = vpop.f32.mrf.mxu0
      %v4140 = vadd.f32 0.0, %v4139
      %v4141 = vpop.f32.mrf.mxu0
      %v4142 = vadd.f32 0.0, %v4141
      %4143 = vmatmul.bf16.gmra.mxu0 %v4059
      %v4144 = vpop.f32.mrf.mxu0
      %v4145 = vadd.f32 0.0, %v4144
      %v4146 = vpop.f32.mrf.mxu0
      %v4147 = vadd.f32 0.0, %v4146
      %4148 = vmatmul.bf16.gmra.mxu0 %v4062
      %v4149 = vpop.f32.mrf.mxu0
      %v4150 = vadd.f32 0.0, %v4149
      %v4151 = vpop.f32.mrf.mxu0
      %v4152 = vadd.f32 0.0, %v4151
      %4153 = vmatmul.bf16.gmra.mxu0 %v4065
      %v4154 = vpop.f32.mrf.mxu0
      %v4155 = vadd.f32 0.0, %v4154
      %v4156 = vpop.f32.mrf.mxu0
      %v4157 = vadd.f32 0.0, %v4156
      %4158 = vmatmul.bf16.gmra.mxu0 %v4068
      %v4159 = vpop.f32.mrf.mxu0
      %v4160 = vadd.f32 0.0, %v4159
      %v4161 = vpop.f32.mrf.mxu0
      %v4162 = vadd.f32 0.0, %v4161
      %4163 = vmatmul.bf16.gmra.mxu0 %v4071
      %v4164 = vpop.f32.mrf.mxu0
      %v4165 = vadd.f32 0.0, %v4164
      %v4166 = vpop.f32.mrf.mxu0
      %v4167 = vadd.f32 0.0, %v4166
      %4168 = vmatmul.bf16.gmra.mxu0 %v4074
      %v4169 = vpop.f32.mrf.mxu0
      %v4170 = vadd.f32 0.0, %v4169
      %v4171 = vpop.f32.mrf.mxu0
      %v4172 = vadd.f32 0.0, %v4171
      %4173 = vmatmul.bf16.gmra.mxu0 %v4077
      %v4174 = vpop.f32.mrf.mxu0
      %v4175 = vadd.f32 0.0, %v4174
      %v4176 = vpop.f32.mrf.mxu0
      %v4177 = vadd.f32 0.0, %v4176
      %4178 = vmatmul.bf16.gmra.mxu0 %v4080
      %v4179 = vpop.f32.mrf.mxu0
      %v4180 = vadd.f32 0.0, %v4179
      %v4181 = vpop.f32.mrf.mxu0
      %v4182 = vadd.f32 0.0, %v4181
      %4183 = vmatmul.bf16.gmra.mxu0 %v4083
      %v4184 = vpop.f32.mrf.mxu0
      %v4185 = vadd.f32 0.0, %v4184
      %v4186 = vpop.f32.mrf.mxu0
      %v4187 = vadd.f32 0.0, %v4186
      %4188 = vmatmul.bf16.gmra.mxu0 %v4086
      %v4189 = vpop.f32.mrf.mxu0
      %v4190 = vadd.f32 0.0, %v4189
      %v4191 = vpop.f32.mrf.mxu0
      %v4192 = vadd.f32 0.0, %v4191
      %4193 = vmatmul.bf16.gmra.mxu0 %v4089
      %v4194 = vpop.f32.mrf.mxu0
      %v4195 = vadd.f32 0.0, %v4194
      %v4196 = vpop.f32.mrf.mxu0
      %v4197 = vadd.f32 0.0, %v4196
      %4198 = vmatmul.bf16.gmra.mxu0 %v4092
      %v4199 = vpop.f32.mrf.mxu0
      %v4200 = vadd.f32 0.0, %v4199
      %v4201 = vpop.f32.mrf.mxu0
      %v4202 = vadd.f32 0.0, %v4201
      %4203 = vmatmul.bf16.gmra.mxu0 %v4095
      %v4204 = vpop.f32.mrf.mxu0
      %v4205 = vadd.f32 0.0, %v4204
      %v4206 = vpop.f32.mrf.mxu0
      %v4207 = vadd.f32 0.0, %v4206
      %4208 = vmatmul.bf16.gmra.mxu0 %v4098
      %v4209 = vpop.f32.mrf.mxu0
      %v4210 = vadd.f32 0.0, %v4209
      %v4211 = vpop.f32.mrf.mxu0
      %v4212 = vadd.f32 0.0, %v4211
      %4213 = vmatmul.bf16.gmra.mxu0 %v4101
      %v4214 = vpop.f32.mrf.mxu0
      %v4215 = vadd.f32 0.0, %v4214
      %v4216 = vpop.f32.mrf.mxu0
      %v4217 = vadd.f32 0.0, %v4216
      %4218 = vmatmul.bf16.gmra.mxu0 %v4104
      %v4219 = vpop.f32.mrf.mxu0
      %v4220 = vadd.f32 0.0, %v4219
      %v4221 = vpop.f32.mrf.mxu0
      %v4222 = vadd.f32 0.0, %v4221
      %4223 = vmatmul.bf16.gmra.mxu0 %v4107
      %v4224 = vpop.f32.mrf.mxu0
      %v4225 = vadd.f32 0.0, %v4224
      %v4226 = vpop.f32.mrf.mxu0
      %v4227 = vadd.f32 0.0, %v4226
      %4228 = vmatmul.bf16.gmra.mxu0 %v4110
      %v4229 = vpop.f32.mrf.mxu0
      %v4230 = vadd.f32 0.0, %v4229
      %v4231 = vpop.f32.mrf.mxu0
      %v4232 = vadd.f32 0.0, %v4231
      %4233 = vmatmul.bf16.gmra.mxu0 %v4113
      %v4234 = vpop.f32.mrf.mxu0
      %v4235 = vadd.f32 0.0, %v4234
      %v4236 = vpop.f32.mrf.mxu0
      %v4237 = vadd.f32 0.0, %v4236
      %4238 = vmatmul.bf16.gmra.mxu0 %v4116
      %v4239 = vpop.f32.mrf.mxu0
      %v4240 = vadd.f32 0.0, %v4239
      %v4241 = vpop.f32.mrf.mxu0
      %v4242 = vadd.f32 0.0, %v4241
      %4243 = vmatmul.bf16.gmra.mxu0 %v4119
      %v4244 = vpop.f32.mrf.mxu0
      %v4245 = vadd.f32 0.0, %v4244
      %v4246 = vpop.f32.mrf.mxu0
      %v4247 = vadd.f32 0.0, %v4246
      %4248 = vmatmul.bf16.gmra.mxu0 %v4122
      %v4249 = vpop.f32.mrf.mxu0
      %v4250 = vadd.f32 0.0, %v4249
      %v4251 = vpop.f32.mrf.mxu0
      %v4252 = vadd.f32 0.0, %v4251
      %4253 = vmatmul.bf16.gmra.mxu0 %v4125
      %v4254 = vpop.f32.mrf.mxu0
      %v4255 = vadd.f32 0.0, %v4254
      %v4256 = vpop.f32.mrf.mxu0
      %v4257 = vadd.f32 0.0, %v4256
      %4258 = vdwg.mxu0
      %v4259 = vadd.f32 %v3885, %v4140
      %v4260 = vadd.f32 %v3886, %v4142
      %v4261 = vadd.f32 %v3887, %v4145
      %v4262 = vadd.f32 %v3888, %v4147
      %v4263 = vadd.f32 %v3889, %v4150
      %v4264 = vadd.f32 %v3890, %v4152
      %v4265 = vadd.f32 %v3891, %v4155
      %v4266 = vadd.f32 %v3892, %v4157
      %v4267 = vadd.f32 %v3893, %v4160
      %v4268 = vadd.f32 %v3894, %v4162
      %v4269 = vadd.f32 %v3895, %v4165
      %v4270 = vadd.f32 %v3896, %v4167
      %v4271 = vadd.f32 %v3897, %v4170
      %v4272 = vadd.f32 %v3898, %v4172
      %v4273 = vadd.f32 %v3899, %v4175
      %v4274 = vadd.f32 %v3900, %v4177
      %v4275 = vadd.f32 %v3901, %v4180
      %v4276 = vadd.f32 %v3902, %v4182
      %v4277 = vadd.f32 %v3903, %v4185
      %v4278 = vadd.f32 %v3904, %v4187
      %v4279 = vadd.f32 %v3905, %v4190
      %v4280 = vadd.f32 %v3906, %v4192
      %v4281 = vadd.f32 %v3907, %v4195
      %v4282 = vadd.f32 %v3908, %v4197
      %v4283 = vadd.f32 %v3909, %v4200
      %v4284 = vadd.f32 %v3910, %v4202
      %v4285 = vadd.f32 %v3911, %v4205
      %v4286 = vadd.f32 %v3912, %v4207
      %v4287 = vadd.f32 %v3913, %v4210
      %v4288 = vadd.f32 %v3914, %v4212
      %v4289 = vadd.f32 %v3915, %v4215
      %v4290 = vadd.f32 %v3916, %v4217
      %v4291 = vadd.f32 %v3917, %v4220
      %v4292 = vadd.f32 %v3918, %v4222
      %v4293 = vadd.f32 %v3919, %v4225
      %v4294 = vadd.f32 %v3920, %v4227
      %v4295 = vadd.f32 %v3921, %v4230
      %v4296 = vadd.f32 %v3922, %v4232
      %v4297 = vadd.f32 %v3923, %v4235
      %v4298 = vadd.f32 %v3924, %v4237
      %v4299 = vadd.f32 %v3925, %v4240
      %v4300 = vadd.f32 %v3926, %v4242
      %v4301 = vadd.f32 %v3927, %v4245
      %v4302 = vadd.f32 %v3928, %v4247
      %v4303 = vadd.f32 %v3929, %v4250
      %v4304 = vadd.f32 %v3930, %v4252
      %v4305 = vadd.f32 %v3931, %v4255
      %v4306 = vadd.f32 %v3932, %v4257
      %4307 = vst.msk [vmem:[#allocation2] sm:$0xff] %vm172, %v4259
      %4308 = vst.msk [vmem:[#allocation2 + $0x8] sm:$0xff] %vm172, %v4260
      %4309 = vst.msk [vmem:[#allocation2 + $0x10] sm:$0xff] %vm172, %v4261
      %4310 = vst.msk [vmem:[#allocation2 + $0x18] sm:$0xff] %vm172, %v4262
      %4311 = vst.msk [vmem:[#allocation2 + $0x20] sm:$0xff] %vm172, %v4263
      %4312 = vst.msk [vmem:[#allocation2 + $0x28] sm:$0xff] %vm172, %v4264
      %4313 = vst.msk [vmem:[#allocation2 + $0x30] sm:$0xff] %vm172, %v4265
      %4314 = vst.msk [vmem:[#allocation2 + $0x38] sm:$0xff] %vm172, %v4266
      %4315 = vst.msk [vmem:[#allocation2 + $0x40] sm:$0xff] %vm172, %v4267
      %4316 = vst.msk [vmem:[#allocation2 + $0x48] sm:$0xff] %vm172, %v4268
      %4317 = vst.msk [vmem:[#allocation2 + $0x50] sm:$0xff] %vm172, %v4269
      %4318 = vst.msk [vmem:[#allocation2 + $0x58] sm:$0xff] %vm172, %v4270
      %4319 = vst.msk [vmem:[#allocation2 + $0x60] sm:$0xff] %vm172, %v4271
      %4320 = vst.msk [vmem:[#allocation2 + $0x68] sm:$0xff] %vm172, %v4272
      %4321 = vst.msk [vmem:[#allocation2 + $0x70] sm:$0xff] %vm172, %v4273
      %4322 = vst.msk [vmem:[#allocation2 + $0x78] sm:$0xff] %vm172, %v4274
      %4323 = vst.msk [vmem:[#allocation2 + $0x80] sm:$0xff] %vm172, %v4275
      %4324 = vst.msk [vmem:[#allocation2 + $0x88] sm:$0xff] %vm172, %v4276
      %4325 = vst.msk [vmem:[#allocation2 + $0x90] sm:$0xff] %vm172, %v4277
      %4326 = vst.msk [vmem:[#allocation2 + $0x98] sm:$0xff] %vm172, %v4278
      %4327 = vst.msk [vmem:[#allocation2 + $0xa0] sm:$0xff] %vm172, %v4279
      %4328 = vst.msk [vmem:[#allocation2 + $0xa8] sm:$0xff] %vm172, %v4280
      %4329 = vst.msk [vmem:[#allocation2 + $0xb0] sm:$0xff] %vm172, %v4281
      %4330 = vst.msk [vmem:[#allocation2 + $0xb8] sm:$0xff] %vm172, %v4282
      %4331 = vst.msk [vmem:[#allocation2 + $0xc0] sm:$0xff] %vm172, %v4283
      %4332 = vst.msk [vmem:[#allocation2 + $0xc8] sm:$0xff] %vm172, %v4284
      %4333 = vst.msk [vmem:[#allocation2 + $0xd0] sm:$0xff] %vm172, %v4285
      %4334 = vst.msk [vmem:[#allocation2 + $0xd8] sm:$0xff] %vm172, %v4286
      %4335 = vst.msk [vmem:[#allocation2 + $0xe0] sm:$0xff] %vm172, %v4287
      %4336 = vst.msk [vmem:[#allocation2 + $0xe8] sm:$0xff] %vm172, %v4288
      %4337 = vst.msk [vmem:[#allocation2 + $0xf0] sm:$0xff] %vm172, %v4289
      %4338 = vst.msk [vmem:[#allocation2 + $0xf8] sm:$0xff] %vm172, %v4290
      %4339 = vst.msk [vmem:[#allocation2 + $0x100] sm:$0xff] %vm172, %v4291
      %4340 = vst.msk [vmem:[#allocation2 + $0x108] sm:$0xff] %vm172, %v4292
      %4341 = vst.msk [vmem:[#allocation2 + $0x110] sm:$0xff] %vm172, %v4293
      %4342 = vst.msk [vmem:[#allocation2 + $0x118] sm:$0xff] %vm172, %v4294
      %4343 = vst.msk [vmem:[#allocation2 + $0x120] sm:$0xff] %vm172, %v4295
      %4344 = vst.msk [vmem:[#allocation2 + $0x128] sm:$0xff] %vm172, %v4296
      %4345 = vst.msk [vmem:[#allocation2 + $0x130] sm:$0xff] %vm172, %v4297
      %4346 = vst.msk [vmem:[#allocation2 + $0x138] sm:$0xff] %vm172, %v4298
      %4347 = vst.msk [vmem:[#allocation2 + $0x140] sm:$0xff] %vm172, %v4299
      %4348 = vst.msk [vmem:[#allocation2 + $0x148] sm:$0xff] %vm172, %v4300
      %4349 = vst.msk [vmem:[#allocation2 + $0x150] sm:$0xff] %vm172, %v4301
      %4350 = vst.msk [vmem:[#allocation2 + $0x158] sm:$0xff] %vm172, %v4302
      %4351 = vst.msk [vmem:[#allocation2 + $0x160] sm:$0xff] %vm172, %v4303
      %4352 = vst.msk [vmem:[#allocation2 + $0x168] sm:$0xff] %vm172, %v4304
      %4353 = vst.msk [vmem:[#allocation2 + $0x170] sm:$0xff] %vm172, %v4305
      %4354 = vst.msk [vmem:[#allocation2 + $0x178] sm:$0xff] %vm172, %v4306
      %v4355 = vld [vmem:[%s165 + $0x18] sm:$0xf]
      %v4356 = vld [vmem:[%s165 + $0x1c] sm:$0xf]
      %v4357 = vld [vmem:[%s165 + $0x20] sm:$0xf]
      %v4358 = vld [vmem:[%s165 + $0x24] sm:$0xf]
      %v4359 = vld [vmem:[%s165 + $0x28] sm:$0xf]
      %v4360 = vld [vmem:[%s165 + $0x2c] sm:$0xf]
      %v4361 = vld [vmem:[%s165 + $0x30] sm:$0xf]
      %v4362 = vld [vmem:[%s165 + $0x34] sm:$0xf]
      %v4363 = vld [vmem:[%s165 + $0x38] sm:$0xf]
      %v4364 = vld [vmem:[%s165 + $0x3c] sm:$0xf]
      %v4365 = vld [vmem:[%s165 + $0x40] sm:$0xf]
      %v4366 = vld [vmem:[%s165 + $0x44] sm:$0xf]
      %v4367 = vld [vmem:[%s165 + $0x48] sm:$0xf]
      %v4368 = vld [vmem:[%s165 + $0x4c] sm:$0xf]
      %v4369 = vld [vmem:[%s165 + $0x50] sm:$0xf]
      %v4370 = vld [vmem:[%s165 + $0x54] sm:$0xf]
      %v4371 = vld [vmem:[%s165 + $0x58] sm:$0xf]
      %v4372 = vld [vmem:[%s165 + $0x5c] sm:$0xf]
      %v4373 = vld [vmem:[%s165 + $0x60] sm:$0xf]
      %v4374 = vld [vmem:[%s165 + $0x64] sm:$0xf]
      %v4375 = vld [vmem:[%s165 + $0x68] sm:$0xf]
      %v4376 = vld [vmem:[%s165 + $0x6c] sm:$0xf]
      %v4377 = vld [vmem:[%s165 + $0x70] sm:$0xf]
      %v4378 = vld [vmem:[%s165 + $0x74] sm:$0xf]
      %v4379 = vld [vmem:[%s165 + $0x78] sm:$0xf]
      %v4380 = vld [vmem:[%s165 + $0x7c] sm:$0xf]
      %v4381 = vld [vmem:[%s165 + $0x80] sm:$0xf]
      %v4382 = vld [vmem:[%s165 + $0x84] sm:$0xf]
      %v4383 = vld [vmem:[%s165 + $0x88] sm:$0xf]
      %v4384 = vld [vmem:[%s165 + $0x8c] sm:$0xf]
      %v4385 = vld [vmem:[%s165 + $0x90] sm:$0xf]
      %v4386 = vld [vmem:[%s165 + $0x94] sm:$0xf]
      %v4387 = vld [vmem:[%s165 + $0x98] sm:$0xf]
      %v4388 = vld [vmem:[%s165 + $0x9c] sm:$0xf]
      %v4389 = vld [vmem:[%s165 + $0xa0] sm:$0xf]
      %v4390 = vld [vmem:[%s165 + $0xa4] sm:$0xf]
      %v4391 = vld [vmem:[%s165 + $0xa8] sm:$0xf]
      %v4392 = vld [vmem:[%s165 + $0xac] sm:$0xf]
      %v4393 = vld [vmem:[%s165 + $0xb0] sm:$0xf]
      %v4394 = vld [vmem:[%s165 + $0xb4] sm:$0xf]
      %v4395 = vld [vmem:[%s165 + $0xb8] sm:$0xf]
      %v4396 = vld [vmem:[%s165 + $0xbc] sm:$0xf]
      %v4397 = vld [vmem:[%s165 + $0xc0] sm:$0xf]
      %v4398 = vld [vmem:[%s165 + $0xc4] sm:$0xf]
      %v4399 = vld [vmem:[%s165 + $0xc8] sm:$0xf]
      %v4400 = vld [vmem:[%s165 + $0xcc] sm:$0xf]
      %v4401 = vld [vmem:[%s165 + $0xd0] sm:$0xf]
      %v4402 = vld [vmem:[%s165 + $0xd4] sm:$0xf]
      %v4403 = vld [vmem:[%s165 + $0xd8] sm:$0x1]
      %v4404 = vld [vmem:[#allocation2] sm:$0xff]
      %v4405 = vld [vmem:[#allocation2 + $0x8] sm:$0xff]
      %v4406 = vld [vmem:[#allocation2 + $0x10] sm:$0xff]
      %v4407 = vld [vmem:[#allocation2 + $0x18] sm:$0xff]
      %v4408 = vld [vmem:[#allocation2 + $0x20] sm:$0xff]
      %v4409 = vld [vmem:[#allocation2 + $0x28] sm:$0xff]
      %v4410 = vld [vmem:[#allocation2 + $0x30] sm:$0xff]
      %v4411 = vld [vmem:[#allocation2 + $0x38] sm:$0xff]
      %v4412 = vld [vmem:[#allocation2 + $0x40] sm:$0xff]
      %v4413 = vld [vmem:[#allocation2 + $0x48] sm:$0xff]
      %v4414 = vld [vmem:[#allocation2 + $0x50] sm:$0xff]
      %v4415 = vld [vmem:[#allocation2 + $0x58] sm:$0xff]
      %v4416 = vld [vmem:[#allocation2 + $0x60] sm:$0xff]
      %v4417 = vld [vmem:[#allocation2 + $0x68] sm:$0xff]
      %v4418 = vld [vmem:[#allocation2 + $0x70] sm:$0xff]
      %v4419 = vld [vmem:[#allocation2 + $0x78] sm:$0xff]
      %v4420 = vld [vmem:[#allocation2 + $0x80] sm:$0xff]
      %v4421 = vld [vmem:[#allocation2 + $0x88] sm:$0xff]
      %v4422 = vld [vmem:[#allocation2 + $0x90] sm:$0xff]
      %v4423 = vld [vmem:[#allocation2 + $0x98] sm:$0xff]
      %v4424 = vld [vmem:[#allocation2 + $0xa0] sm:$0xff]
      %v4425 = vld [vmem:[#allocation2 + $0xa8] sm:$0xff]
      %v4426 = vld [vmem:[#allocation2 + $0xb0] sm:$0xff]
      %v4427 = vld [vmem:[#allocation2 + $0xb8] sm:$0xff]
      %v4428 = vld [vmem:[#allocation2 + $0xc0] sm:$0xff]
      %v4429 = vld [vmem:[#allocation2 + $0xc8] sm:$0xff]
      %v4430 = vld [vmem:[#allocation2 + $0xd0] sm:$0xff]
      %v4431 = vld [vmem:[#allocation2 + $0xd8] sm:$0xff]
      %v4432 = vld [vmem:[#allocation2 + $0xe0] sm:$0xff]
      %v4433 = vld [vmem:[#allocation2 + $0xe8] sm:$0xff]
      %v4434 = vld [vmem:[#allocation2 + $0xf0] sm:$0xff]
      %v4435 = vld [vmem:[#allocation2 + $0xf8] sm:$0xff]
      %v4436 = vld [vmem:[#allocation2 + $0x100] sm:$0xff]
      %v4437 = vld [vmem:[#allocation2 + $0x108] sm:$0xff]
      %v4438 = vld [vmem:[#allocation2 + $0x110] sm:$0xff]
      %v4439 = vld [vmem:[#allocation2 + $0x118] sm:$0xff]
      %v4440 = vld [vmem:[#allocation2 + $0x120] sm:$0xff]
      %v4441 = vld [vmem:[#allocation2 + $0x128] sm:$0xff]
      %v4442 = vld [vmem:[#allocation2 + $0x130] sm:$0xff]
      %v4443 = vld [vmem:[#allocation2 + $0x138] sm:$0xff]
      %v4444 = vld [vmem:[#allocation2 + $0x140] sm:$0xff]
      %v4445 = vld [vmem:[#allocation2 + $0x148] sm:$0xff]
      %v4446 = vld [vmem:[#allocation2 + $0x150] sm:$0xff]
      %v4447 = vld [vmem:[#allocation2 + $0x158] sm:$0xff]
      %v4448 = vld [vmem:[#allocation2 + $0x160] sm:$0xff]
      %v4449 = vld [vmem:[#allocation2 + $0x168] sm:$0xff]
      %v4450 = vld [vmem:[#allocation2 + $0x170] sm:$0xff]
      %v4451 = vld [vmem:[#allocation2 + $0x178] sm:$0xff]
      %s4452 = scalar_lea.vmem %s1, 14
      %v4453 = vld [vmem:[%s4452] sm:$0x3]
      %v4503 = vunpack.c.l.b16 %v4355
      %v4504 = vunpack.c.l.b16 %v4356
      %v4505 = vunpack.c.l.b16 %v4357
      %v4506 = vunpack.c.l.b16 %v4358
      %v4507 = vunpack.c.l.b16 %v4359
      %v4508 = vunpack.c.l.b16 %v4360
      %v4509 = vunpack.c.l.b16 %v4361
      %v4510 = vunpack.c.l.b16 %v4362
      %v4511 = vunpack.c.l.b16 %v4363
      %v4512 = vunpack.c.l.b16 %v4364
      %v4513 = vunpack.c.l.b16 %v4365
      %v4514 = vunpack.c.l.b16 %v4366
      %v4515 = vunpack.c.l.b16 %v4367
      %v4516 = vunpack.c.l.b16 %v4368
      %v4517 = vunpack.c.l.b16 %v4369
      %v4518 = vunpack.c.l.b16 %v4370
      %v4519 = vunpack.c.l.b16 %v4371
      %v4520 = vunpack.c.l.b16 %v4372
      %v4521 = vunpack.c.l.b16 %v4373
      %v4522 = vunpack.c.l.b16 %v4374
      %v4523 = vunpack.c.l.b16 %v4375
      %v4524 = vunpack.c.l.b16 %v4376
      %v4525 = vunpack.c.l.b16 %v4377
      %v4526 = vunpack.c.l.b16 %v4378
      %v4527 = vunpack.c.l.b16 %v4379
      %v4528 = vunpack.c.l.b16 %v4380
      %v4529 = vunpack.c.l.b16 %v4381
      %v4530 = vunpack.c.l.b16 %v4382
      %v4531 = vunpack.c.l.b16 %v4383
      %v4532 = vunpack.c.l.b16 %v4384
      %v4533 = vunpack.c.l.b16 %v4385
      %v4534 = vunpack.c.l.b16 %v4386
      %v4535 = vunpack.c.l.b16 %v4387
      %v4536 = vunpack.c.l.b16 %v4388
      %v4537 = vunpack.c.l.b16 %v4389
      %v4538 = vunpack.c.l.b16 %v4390
      %v4539 = vunpack.c.l.b16 %v4391
      %v4540 = vunpack.c.l.b16 %v4392
      %v4541 = vunpack.c.l.b16 %v4393
      %v4542 = vunpack.c.l.b16 %v4394
      %v4543 = vunpack.c.l.b16 %v4395
      %v4544 = vunpack.c.l.b16 %v4396
      %v4545 = vunpack.c.l.b16 %v4397
      %v4546 = vunpack.c.l.b16 %v4398
      %v4547 = vunpack.c.l.b16 %v4399
      %v4548 = vunpack.c.l.b16 %v4400
      %v4549 = vunpack.c.l.b16 %v4401
      %v4550 = vunpack.c.l.b16 %v4402
      %v4551 = vunpack.c.l.b16 %v4403
      %v4552 = vpack.c.b16 %v4504, %v4503
      %v4553 = vpack.c.b16 %v4506, %v4505
      %v4554 = vpack.c.b16 %v4508, %v4507
      %v4555 = vpack.c.b16 %v4510, %v4509
      %v4556 = vpack.c.b16 %v4512, %v4511
      %v4557 = vpack.c.b16 %v4514, %v4513
      %v4558 = vpack.c.b16 %v4516, %v4515
      %v4559 = vpack.c.b16 %v4518, %v4517
      %v4560 = vpack.c.b16 %v4520, %v4519
      %v4561 = vpack.c.b16 %v4522, %v4521
      %v4562 = vpack.c.b16 %v4524, %v4523
      %v4563 = vpack.c.b16 %v4526, %v4525
      %v4564 = vpack.c.b16 %v4528, %v4527
      %v4565 = vpack.c.b16 %v4530, %v4529
      %v4566 = vpack.c.b16 %v4532, %v4531
      %v4567 = vpack.c.b16 %v4534, %v4533
      %v4568 = vpack.c.b16 %v4536, %v4535
      %v4569 = vpack.c.b16 %v4538, %v4537
      %v4570 = vpack.c.b16 %v4540, %v4539
      %v4571 = vpack.c.b16 %v4542, %v4541
      %v4572 = vpack.c.b16 %v4544, %v4543
      %v4573 = vpack.c.b16 %v4546, %v4545
      %v4574 = vpack.c.b16 %v4548, %v4547
      %v4575 = vpack.c.b16 %v4550, %v4549
      %v4576 = vpack.c.b16 %v4551, %v4551
      %v4578 = vshrl.u32 %v4552, 16
      %v4580 = vshll.u32 %v4552, 16
      %v4582 = vrot.slane %v4580, 1
      %v4583 = vor.u32 %v4578, %v4582
      %v4585 = vshll.u32 %v4553, 16
      %v4587 = vrot.slane %v4585, 1
      %v4588 = vsel %vm961, %v4583, %v4587
      %v4589 = vshrl.u32 %v4553, 16
      %v4591 = vor.u32 %v4589, %v4587
      %v4593 = vshll.u32 %v4554, 16
      %v4595 = vrot.slane %v4593, 1
      %v4596 = vsel %vm961, %v4591, %v4595
      %v4597 = vshrl.u32 %v4554, 16
      %v4599 = vor.u32 %v4597, %v4595
      %v4601 = vshll.u32 %v4555, 16
      %v4603 = vrot.slane %v4601, 1
      %v4604 = vsel %vm961, %v4599, %v4603
      %v4605 = vshrl.u32 %v4555, 16
      %v4607 = vor.u32 %v4605, %v4603
      %v4609 = vshll.u32 %v4556, 16
      %v4611 = vrot.slane %v4609, 1
      %v4612 = vsel %vm961, %v4607, %v4611
      %v4613 = vshrl.u32 %v4556, 16
      %v4615 = vor.u32 %v4613, %v4611
      %v4617 = vshll.u32 %v4557, 16
      %v4619 = vrot.slane %v4617, 1
      %v4620 = vsel %vm961, %v4615, %v4619
      %v4621 = vshrl.u32 %v4557, 16
      %v4623 = vor.u32 %v4621, %v4619
      %v4625 = vshll.u32 %v4558, 16
      %v4627 = vrot.slane %v4625, 1
      %v4628 = vsel %vm961, %v4623, %v4627
      %v4629 = vshrl.u32 %v4558, 16
      %v4631 = vor.u32 %v4629, %v4627
      %v4633 = vshll.u32 %v4559, 16
      %v4635 = vrot.slane %v4633, 1
      %v4636 = vsel %vm961, %v4631, %v4635
      %v4637 = vshrl.u32 %v4559, 16
      %v4639 = vor.u32 %v4637, %v4635
      %v4641 = vshll.u32 %v4560, 16
      %v4643 = vrot.slane %v4641, 1
      %v4644 = vsel %vm961, %v4639, %v4643
      %v4645 = vshrl.u32 %v4560, 16
      %v4647 = vor.u32 %v4645, %v4643
      %v4649 = vshll.u32 %v4561, 16
      %v4651 = vrot.slane %v4649, 1
      %v4652 = vsel %vm961, %v4647, %v4651
      %v4653 = vshrl.u32 %v4561, 16
      %v4655 = vor.u32 %v4653, %v4651
      %v4657 = vshll.u32 %v4562, 16
      %v4659 = vrot.slane %v4657, 1
      %v4660 = vsel %vm961, %v4655, %v4659
      %v4661 = vshrl.u32 %v4562, 16
      %v4663 = vor.u32 %v4661, %v4659
      %v4665 = vshll.u32 %v4563, 16
      %v4667 = vrot.slane %v4665, 1
      %v4668 = vsel %vm961, %v4663, %v4667
      %v4669 = vshrl.u32 %v4563, 16
      %v4671 = vor.u32 %v4669, %v4667
      %v4673 = vshll.u32 %v4564, 16
      %v4675 = vrot.slane %v4673, 1
      %v4676 = vsel %vm961, %v4671, %v4675
      %v4677 = vshrl.u32 %v4564, 16
      %v4679 = vor.u32 %v4677, %v4675
      %v4681 = vshll.u32 %v4565, 16
      %v4683 = vrot.slane %v4681, 1
      %v4684 = vsel %vm961, %v4679, %v4683
      %v4685 = vshrl.u32 %v4565, 16
      %v4687 = vor.u32 %v4685, %v4683
      %v4689 = vshll.u32 %v4566, 16
      %v4691 = vrot.slane %v4689, 1
      %v4692 = vsel %vm961, %v4687, %v4691
      %v4693 = vshrl.u32 %v4566, 16
      %v4695 = vor.u32 %v4693, %v4691
      %v4697 = vshll.u32 %v4567, 16
      %v4699 = vrot.slane %v4697, 1
      %v4700 = vsel %vm961, %v4695, %v4699
      %v4701 = vshrl.u32 %v4567, 16
      %v4703 = vor.u32 %v4701, %v4699
      %v4705 = vshll.u32 %v4568, 16
      %v4707 = vrot.slane %v4705, 1
      %v4708 = vsel %vm961, %v4703, %v4707
      %v4709 = vshrl.u32 %v4568, 16
      %v4711 = vor.u32 %v4709, %v4707
      %v4713 = vshll.u32 %v4569, 16
      %v4715 = vrot.slane %v4713, 1
      %v4716 = vsel %vm961, %v4711, %v4715
      %v4717 = vshrl.u32 %v4569, 16
      %v4719 = vor.u32 %v4717, %v4715
      %v4721 = vshll.u32 %v4570, 16
      %v4723 = vrot.slane %v4721, 1
      %v4724 = vsel %vm961, %v4719, %v4723
      %v4725 = vshrl.u32 %v4570, 16
      %v4727 = vor.u32 %v4725, %v4723
      %v4729 = vshll.u32 %v4571, 16
      %v4731 = vrot.slane %v4729, 1
      %v4732 = vsel %vm961, %v4727, %v4731
      %v4733 = vshrl.u32 %v4571, 16
      %v4735 = vor.u32 %v4733, %v4731
      %v4737 = vshll.u32 %v4572, 16
      %v4739 = vrot.slane %v4737, 1
      %v4740 = vsel %vm961, %v4735, %v4739
      %v4741 = vshrl.u32 %v4572, 16
      %v4743 = vor.u32 %v4741, %v4739
      %v4745 = vshll.u32 %v4573, 16
      %v4747 = vrot.slane %v4745, 1
      %v4748 = vsel %vm961, %v4743, %v4747
      %v4749 = vshrl.u32 %v4573, 16
      %v4751 = vor.u32 %v4749, %v4747
      %v4753 = vshll.u32 %v4574, 16
      %v4755 = vrot.slane %v4753, 1
      %v4756 = vsel %vm961, %v4751, %v4755
      %v4757 = vshrl.u32 %v4574, 16
      %v4759 = vor.u32 %v4757, %v4755
      %v4761 = vshll.u32 %v4575, 16
      %v4763 = vrot.slane %v4761, 1
      %v4764 = vsel %vm961, %v4759, %v4763
      %v4765 = vshrl.u32 %v4575, 16
      %v4767 = vor.u32 %v4765, %v4763
      %v4769 = vshll.u32 %v4576, 16
      %v4771 = vrot.slane %v4769, 1
      %v4772 = vsel %vm961, %v4767, %v4771
      %v4774 = vsel %vm172, %v4588, 0
      %v4777 = vsel %vm172, %v4596, 0
      %v4780 = vsel %vm172, %v4604, 0
      %v4783 = vsel %vm172, %v4612, 0
      %v4786 = vsel %vm172, %v4620, 0
      %v4789 = vsel %vm172, %v4628, 0
      %v4792 = vsel %vm172, %v4636, 0
      %v4795 = vsel %vm172, %v4644, 0
      %v4798 = vsel %vm172, %v4652, 0
      %v4801 = vsel %vm172, %v4660, 0
      %v4804 = vsel %vm172, %v4668, 0
      %v4807 = vsel %vm172, %v4676, 0
      %v4810 = vsel %vm172, %v4684, 0
      %v4813 = vsel %vm172, %v4692, 0
      %v4816 = vsel %vm172, %v4700, 0
      %v4819 = vsel %vm172, %v4708, 0
      %v4822 = vsel %vm172, %v4716, 0
      %v4825 = vsel %vm172, %v4724, 0
      %v4828 = vsel %vm172, %v4732, 0
      %v4831 = vsel %vm172, %v4740, 0
      %v4834 = vsel %vm172, %v4748, 0
      %v4837 = vsel %vm172, %v4756, 0
      %v4840 = vsel %vm172, %v4764, 0
      %v4843 = vsel %vm172, %v4772, 0
      %v4846 = vsel %vm510, %v4453, 0
      %4848 = vmatpush.bf16.msra.mxu0 0
      %4849 = vmatpush.bf16.msra.mxu0 0
      %4850 = vmatpush.bf16.msra.mxu0 0
      %4851 = vmatpush.bf16.msra.mxu0 0
      %4852 = vmatpush.bf16.msra.mxu0 0
      %4853 = vmatpush.bf16.msra.mxu0 0
      %4854 = vmatpush.bf16.msra.mxu0 0
      %4855 = vmatpush.bf16.msra.mxu0 %v4846
      %4856 = vmatmul.bf16.gmra.mxu0 %v4774
      %v4857 = vpop.f32.mrf.mxu0
      %v4858 = vadd.f32 0.0, %v4857
      %v4859 = vpop.f32.mrf.mxu0
      %v4860 = vadd.f32 0.0, %v4859
      %4861 = vmatmul.bf16.gmra.mxu0 %v4777
      %v4862 = vpop.f32.mrf.mxu0
      %v4863 = vadd.f32 0.0, %v4862
      %v4864 = vpop.f32.mrf.mxu0
      %v4865 = vadd.f32 0.0, %v4864
      %4866 = vmatmul.bf16.gmra.mxu0 %v4780
      %v4867 = vpop.f32.mrf.mxu0
      %v4868 = vadd.f32 0.0, %v4867
      %v4869 = vpop.f32.mrf.mxu0
      %v4870 = vadd.f32 0.0, %v4869
      %4871 = vmatmul.bf16.gmra.mxu0 %v4783
      %v4872 = vpop.f32.mrf.mxu0
      %v4873 = vadd.f32 0.0, %v4872
      %v4874 = vpop.f32.mrf.mxu0
      %v4875 = vadd.f32 0.0, %v4874
      %4876 = vmatmul.bf16.gmra.mxu0 %v4786
      %v4877 = vpop.f32.mrf.mxu0
      %v4878 = vadd.f32 0.0, %v4877
      %v4879 = vpop.f32.mrf.mxu0
      %v4880 = vadd.f32 0.0, %v4879
      %4881 = vmatmul.bf16.gmra.mxu0 %v4789
      %v4882 = vpop.f32.mrf.mxu0
      %v4883 = vadd.f32 0.0, %v4882
      %v4884 = vpop.f32.mrf.mxu0
      %v4885 = vadd.f32 0.0, %v4884
      %4886 = vmatmul.bf16.gmra.mxu0 %v4792
      %v4887 = vpop.f32.mrf.mxu0
      %v4888 = vadd.f32 0.0, %v4887
      %v4889 = vpop.f32.mrf.mxu0
      %v4890 = vadd.f32 0.0, %v4889
      %4891 = vmatmul.bf16.gmra.mxu0 %v4795
      %v4892 = vpop.f32.mrf.mxu0
      %v4893 = vadd.f32 0.0, %v4892
      %v4894 = vpop.f32.mrf.mxu0
      %v4895 = vadd.f32 0.0, %v4894
      %4896 = vmatmul.bf16.gmra.mxu0 %v4798
      %v4897 = vpop.f32.mrf.mxu0
      %v4898 = vadd.f32 0.0, %v4897
      %v4899 = vpop.f32.mrf.mxu0
      %v4900 = vadd.f32 0.0, %v4899
      %4901 = vmatmul.bf16.gmra.mxu0 %v4801
      %v4902 = vpop.f32.mrf.mxu0
      %v4903 = vadd.f32 0.0, %v4902
      %v4904 = vpop.f32.mrf.mxu0
      %v4905 = vadd.f32 0.0, %v4904
      %4906 = vmatmul.bf16.gmra.mxu0 %v4804
      %v4907 = vpop.f32.mrf.mxu0
      %v4908 = vadd.f32 0.0, %v4907
      %v4909 = vpop.f32.mrf.mxu0
      %v4910 = vadd.f32 0.0, %v4909
      %4911 = vmatmul.bf16.gmra.mxu0 %v4807
      %v4912 = vpop.f32.mrf.mxu0
      %v4913 = vadd.f32 0.0, %v4912
      %v4914 = vpop.f32.mrf.mxu0
      %v4915 = vadd.f32 0.0, %v4914
      %4916 = vmatmul.bf16.gmra.mxu0 %v4810
      %v4917 = vpop.f32.mrf.mxu0
      %v4918 = vadd.f32 0.0, %v4917
      %v4919 = vpop.f32.mrf.mxu0
      %v4920 = vadd.f32 0.0, %v4919
      %4921 = vmatmul.bf16.gmra.mxu0 %v4813
      %v4922 = vpop.f32.mrf.mxu0
      %v4923 = vadd.f32 0.0, %v4922
      %v4924 = vpop.f32.mrf.mxu0
      %v4925 = vadd.f32 0.0, %v4924
      %4926 = vmatmul.bf16.gmra.mxu0 %v4816
      %v4927 = vpop.f32.mrf.mxu0
      %v4928 = vadd.f32 0.0, %v4927
      %v4929 = vpop.f32.mrf.mxu0
      %v4930 = vadd.f32 0.0, %v4929
      %4931 = vmatmul.bf16.gmra.mxu0 %v4819
      %v4932 = vpop.f32.mrf.mxu0
      %v4933 = vadd.f32 0.0, %v4932
      %v4934 = vpop.f32.mrf.mxu0
      %v4935 = vadd.f32 0.0, %v4934
      %4936 = vmatmul.bf16.gmra.mxu0 %v4822
      %v4937 = vpop.f32.mrf.mxu0
      %v4938 = vadd.f32 0.0, %v4937
      %v4939 = vpop.f32.mrf.mxu0
      %v4940 = vadd.f32 0.0, %v4939
      %4941 = vmatmul.bf16.gmra.mxu0 %v4825
      %v4942 = vpop.f32.mrf.mxu0
      %v4943 = vadd.f32 0.0, %v4942
      %v4944 = vpop.f32.mrf.mxu0
      %v4945 = vadd.f32 0.0, %v4944
      %4946 = vmatmul.bf16.gmra.mxu0 %v4828
      %v4947 = vpop.f32.mrf.mxu0
      %v4948 = vadd.f32 0.0, %v4947
      %v4949 = vpop.f32.mrf.mxu0
      %v4950 = vadd.f32 0.0, %v4949
      %4951 = vmatmul.bf16.gmra.mxu0 %v4831
      %v4952 = vpop.f32.mrf.mxu0
      %v4953 = vadd.f32 0.0, %v4952
      %v4954 = vpop.f32.mrf.mxu0
      %v4955 = vadd.f32 0.0, %v4954
      %4956 = vmatmul.bf16.gmra.mxu0 %v4834
      %v4957 = vpop.f32.mrf.mxu0
      %v4958 = vadd.f32 0.0, %v4957
      %v4959 = vpop.f32.mrf.mxu0
      %v4960 = vadd.f32 0.0, %v4959
      %4961 = vmatmul.bf16.gmra.mxu0 %v4837
      %v4962 = vpop.f32.mrf.mxu0
      %v4963 = vadd.f32 0.0, %v4962
      %v4964 = vpop.f32.mrf.mxu0
      %v4965 = vadd.f32 0.0, %v4964
      %4966 = vmatmul.bf16.gmra.mxu0 %v4840
      %v4967 = vpop.f32.mrf.mxu0
      %v4968 = vadd.f32 0.0, %v4967
      %v4969 = vpop.f32.mrf.mxu0
      %v4970 = vadd.f32 0.0, %v4969
      %4971 = vmatmul.bf16.gmra.mxu0 %v4843
      %v4972 = vpop.f32.mrf.mxu0
      %v4973 = vadd.f32 0.0, %v4972
      %v4974 = vpop.f32.mrf.mxu0
      %v4975 = vadd.f32 0.0, %v4974
      %4976 = vdwg.mxu0
      %v4977 = vadd.f32 %v4404, %v4858
      %v4978 = vadd.f32 %v4405, %v4860
      %v4979 = vadd.f32 %v4406, %v4863
      %v4980 = vadd.f32 %v4407, %v4865
      %v4981 = vadd.f32 %v4408, %v4868
      %v4982 = vadd.f32 %v4409, %v4870
      %v4983 = vadd.f32 %v4410, %v4873
      %v4984 = vadd.f32 %v4411, %v4875
      %v4985 = vadd.f32 %v4412, %v4878
      %v4986 = vadd.f32 %v4413, %v4880
      %v4987 = vadd.f32 %v4414, %v4883
      %v4988 = vadd.f32 %v4415, %v4885
      %v4989 = vadd.f32 %v4416, %v4888
      %v4990 = vadd.f32 %v4417, %v4890
      %v4991 = vadd.f32 %v4418, %v4893
      %v4992 = vadd.f32 %v4419, %v4895
      %v4993 = vadd.f32 %v4420, %v4898
      %v4994 = vadd.f32 %v4421, %v4900
      %v4995 = vadd.f32 %v4422, %v4903
      %v4996 = vadd.f32 %v4423, %v4905
      %v4997 = vadd.f32 %v4424, %v4908
      %v4998 = vadd.f32 %v4425, %v4910
      %v4999 = vadd.f32 %v4426, %v4913
      %v5000 = vadd.f32 %v4427, %v4915
      %v5001 = vadd.f32 %v4428, %v4918
      %v5002 = vadd.f32 %v4429, %v4920
      %v5003 = vadd.f32 %v4430, %v4923
      %v5004 = vadd.f32 %v4431, %v4925
      %v5005 = vadd.f32 %v4432, %v4928
      %v5006 = vadd.f32 %v4433, %v4930
      %v5007 = vadd.f32 %v4434, %v4933
      %v5008 = vadd.f32 %v4435, %v4935
      %v5009 = vadd.f32 %v4436, %v4938
      %v5010 = vadd.f32 %v4437, %v4940
      %v5011 = vadd.f32 %v4438, %v4943
      %v5012 = vadd.f32 %v4439, %v4945
      %v5013 = vadd.f32 %v4440, %v4948
      %v5014 = vadd.f32 %v4441, %v4950
      %v5015 = vadd.f32 %v4442, %v4953
      %v5016 = vadd.f32 %v4443, %v4955
      %v5017 = vadd.f32 %v4444, %v4958
      %v5018 = vadd.f32 %v4445, %v4960
      %v5019 = vadd.f32 %v4446, %v4963
      %v5020 = vadd.f32 %v4447, %v4965
      %v5021 = vadd.f32 %v4448, %v4968
      %v5022 = vadd.f32 %v4449, %v4970
      %v5023 = vadd.f32 %v4450, %v4973
      %v5024 = vadd.f32 %v4451, %v4975
      %5025 = vst.msk [vmem:[#allocation2] sm:$0xff] %vm172, %v4977
      %5026 = vst.msk [vmem:[#allocation2 + $0x8] sm:$0xff] %vm172, %v4978
      %5027 = vst.msk [vmem:[#allocation2 + $0x10] sm:$0xff] %vm172, %v4979
      %5028 = vst.msk [vmem:[#allocation2 + $0x18] sm:$0xff] %vm172, %v4980
      %5029 = vst.msk [vmem:[#allocation2 + $0x20] sm:$0xff] %vm172, %v4981
      %5030 = vst.msk [vmem:[#allocation2 + $0x28] sm:$0xff] %vm172, %v4982
      %5031 = vst.msk [vmem:[#allocation2 + $0x30] sm:$0xff] %vm172, %v4983
      %5032 = vst.msk [vmem:[#allocation2 + $0x38] sm:$0xff] %vm172, %v4984
      %5033 = vst.msk [vmem:[#allocation2 + $0x40] sm:$0xff] %vm172, %v4985
      %5034 = vst.msk [vmem:[#allocation2 + $0x48] sm:$0xff] %vm172, %v4986
      %5035 = vst.msk [vmem:[#allocation2 + $0x50] sm:$0xff] %vm172, %v4987
      %5036 = vst.msk [vmem:[#allocation2 + $0x58] sm:$0xff] %vm172, %v4988
      %5037 = vst.msk [vmem:[#allocation2 + $0x60] sm:$0xff] %vm172, %v4989
      %5038 = vst.msk [vmem:[#allocation2 + $0x68] sm:$0xff] %vm172, %v4990
      %5039 = vst.msk [vmem:[#allocation2 + $0x70] sm:$0xff] %vm172, %v4991
      %5040 = vst.msk [vmem:[#allocation2 + $0x78] sm:$0xff] %vm172, %v4992
      %5041 = vst.msk [vmem:[#allocation2 + $0x80] sm:$0xff] %vm172, %v4993
      %5042 = vst.msk [vmem:[#allocation2 + $0x88] sm:$0xff] %vm172, %v4994
      %5043 = vst.msk [vmem:[#allocation2 + $0x90] sm:$0xff] %vm172, %v4995
      %5044 = vst.msk [vmem:[#allocation2 + $0x98] sm:$0xff] %vm172, %v4996
      %5045 = vst.msk [vmem:[#allocation2 + $0xa0] sm:$0xff] %vm172, %v4997
      %5046 = vst.msk [vmem:[#allocation2 + $0xa8] sm:$0xff] %vm172, %v4998
      %5047 = vst.msk [vmem:[#allocation2 + $0xb0] sm:$0xff] %vm172, %v4999
      %5048 = vst.msk [vmem:[#allocation2 + $0xb8] sm:$0xff] %vm172, %v5000
      %5049 = vst.msk [vmem:[#allocation2 + $0xc0] sm:$0xff] %vm172, %v5001
      %5050 = vst.msk [vmem:[#allocation2 + $0xc8] sm:$0xff] %vm172, %v5002
      %5051 = vst.msk [vmem:[#allocation2 + $0xd0] sm:$0xff] %vm172, %v5003
      %5052 = vst.msk [vmem:[#allocation2 + $0xd8] sm:$0xff] %vm172, %v5004
      %5053 = vst.msk [vmem:[#allocation2 + $0xe0] sm:$0xff] %vm172, %v5005
      %5054 = vst.msk [vmem:[#allocation2 + $0xe8] sm:$0xff] %vm172, %v5006
      %5055 = vst.msk [vmem:[#allocation2 + $0xf0] sm:$0xff] %vm172, %v5007
      %5056 = vst.msk [vmem:[#allocation2 + $0xf8] sm:$0xff] %vm172, %v5008
      %5057 = vst.msk [vmem:[#allocation2 + $0x100] sm:$0xff] %vm172, %v5009
      %5058 = vst.msk [vmem:[#allocation2 + $0x108] sm:$0xff] %vm172, %v5010
      %5059 = vst.msk [vmem:[#allocation2 + $0x110] sm:$0xff] %vm172, %v5011
      %5060 = vst.msk [vmem:[#allocation2 + $0x118] sm:$0xff] %vm172, %v5012
      %5061 = vst.msk [vmem:[#allocation2 + $0x120] sm:$0xff] %vm172, %v5013
      %5062 = vst.msk [vmem:[#allocation2 + $0x128] sm:$0xff] %vm172, %v5014
      %5063 = vst.msk [vmem:[#allocation2 + $0x130] sm:$0xff] %vm172, %v5015
      %5064 = vst.msk [vmem:[#allocation2 + $0x138] sm:$0xff] %vm172, %v5016
      %5065 = vst.msk [vmem:[#allocation2 + $0x140] sm:$0xff] %vm172, %v5017
      %5066 = vst.msk [vmem:[#allocation2 + $0x148] sm:$0xff] %vm172, %v5018
      %5067 = vst.msk [vmem:[#allocation2 + $0x150] sm:$0xff] %vm172, %v5019
      %5068 = vst.msk [vmem:[#allocation2 + $0x158] sm:$0xff] %vm172, %v5020
      %5069 = vst.msk [vmem:[#allocation2 + $0x160] sm:$0xff] %vm172, %v5021
      %5070 = vst.msk [vmem:[#allocation2 + $0x168] sm:$0xff] %vm172, %v5022
      %5071 = vst.msk [vmem:[#allocation2 + $0x170] sm:$0xff] %vm172, %v5023
      %5072 = vst.msk [vmem:[#allocation2 + $0x178] sm:$0xff] %vm172, %v5024
      %v5073 = vld [vmem:[%s165 + $0x18] sm:$0xe]
      %v5074 = vld [vmem:[%s165 + $0x1c] sm:$0xf]
      %v5075 = vld [vmem:[%s165 + $0x20] sm:$0xf]
      %v5076 = vld [vmem:[%s165 + $0x24] sm:$0xf]
      %v5077 = vld [vmem:[%s165 + $0x28] sm:$0xf]
      %v5078 = vld [vmem:[%s165 + $0x2c] sm:$0xf]
      %v5079 = vld [vmem:[%s165 + $0x30] sm:$0xf]
      %v5080 = vld [vmem:[%s165 + $0x34] sm:$0xf]
      %v5081 = vld [vmem:[%s165 + $0x38] sm:$0xf]
      %v5082 = vld [vmem:[%s165 + $0x3c] sm:$0xf]
      %v5083 = vld [vmem:[%s165 + $0x40] sm:$0xf]
      %v5084 = vld [vmem:[%s165 + $0x44] sm:$0xf]
      %v5085 = vld [vmem:[%s165 + $0x48] sm:$0xf]
      %v5086 = vld [vmem:[%s165 + $0x4c] sm:$0xf]
      %v5087 = vld [vmem:[%s165 + $0x50] sm:$0xf]
      %v5088 = vld [vmem:[%s165 + $0x54] sm:$0xf]
      %v5089 = vld [vmem:[%s165 + $0x58] sm:$0xf]
      %v5090 = vld [vmem:[%s165 + $0x5c] sm:$0xf]
      %v5091 = vld [vmem:[%s165 + $0x60] sm:$0xf]
      %v5092 = vld [vmem:[%s165 + $0x64] sm:$0xf]
      %v5093 = vld [vmem:[%s165 + $0x68] sm:$0xf]
      %v5094 = vld [vmem:[%s165 + $0x6c] sm:$0xf]
      %v5095 = vld [vmem:[%s165 + $0x70] sm:$0xf]
      %v5096 = vld [vmem:[%s165 + $0x74] sm:$0xf]
      %v5097 = vld [vmem:[%s165 + $0x78] sm:$0xf]
      %v5098 = vld [vmem:[%s165 + $0x7c] sm:$0xf]
      %v5099 = vld [vmem:[%s165 + $0x80] sm:$0xf]
      %v5100 = vld [vmem:[%s165 + $0x84] sm:$0xf]
      %v5101 = vld [vmem:[%s165 + $0x88] sm:$0xf]
      %v5102 = vld [vmem:[%s165 + $0x8c] sm:$0xf]
      %v5103 = vld [vmem:[%s165 + $0x90] sm:$0xf]
      %v5104 = vld [vmem:[%s165 + $0x94] sm:$0xf]
      %v5105 = vld [vmem:[%s165 + $0x98] sm:$0xf]
      %v5106 = vld [vmem:[%s165 + $0x9c] sm:$0xf]
      %v5107 = vld [vmem:[%s165 + $0xa0] sm:$0xf]
      %v5108 = vld [vmem:[%s165 + $0xa4] sm:$0xf]
      %v5109 = vld [vmem:[%s165 + $0xa8] sm:$0xf]
      %v5110 = vld [vmem:[%s165 + $0xac] sm:$0xf]
      %v5111 = vld [vmem:[%s165 + $0xb0] sm:$0xf]
      %v5112 = vld [vmem:[%s165 + $0xb4] sm:$0xf]
      %v5113 = vld [vmem:[%s165 + $0xb8] sm:$0xf]
      %v5114 = vld [vmem:[%s165 + $0xbc] sm:$0xf]
      %v5115 = vld [vmem:[%s165 + $0xc0] sm:$0xf]
      %v5116 = vld [vmem:[%s165 + $0xc4] sm:$0xf]
      %v5117 = vld [vmem:[%s165 + $0xc8] sm:$0xf]
      %v5118 = vld [vmem:[%s165 + $0xcc] sm:$0xf]
      %v5119 = vld [vmem:[%s165 + $0xd0] sm:$0xf]
      %v5120 = vld [vmem:[%s165 + $0xd4] sm:$0xf]
      %v5121 = vld [vmem:[%s165 + $0xd8] sm:$0x1]
      %v5122 = vld [vmem:[#allocation2] sm:$0xff]
      %v5123 = vld [vmem:[#allocation2 + $0x8] sm:$0xff]
      %v5124 = vld [vmem:[#allocation2 + $0x10] sm:$0xff]
      %v5125 = vld [vmem:[#allocation2 + $0x18] sm:$0xff]
      %v5126 = vld [vmem:[#allocation2 + $0x20] sm:$0xff]
      %v5127 = vld [vmem:[#allocation2 + $0x28] sm:$0xff]
      %v5128 = vld [vmem:[#allocation2 + $0x30] sm:$0xff]
      %v5129 = vld [vmem:[#allocation2 + $0x38] sm:$0xff]
      %v5130 = vld [vmem:[#allocation2 + $0x40] sm:$0xff]
      %v5131 = vld [vmem:[#allocation2 + $0x48] sm:$0xff]
      %v5132 = vld [vmem:[#allocation2 + $0x50] sm:$0xff]
      %v5133 = vld [vmem:[#allocation2 + $0x58] sm:$0xff]
      %v5134 = vld [vmem:[#allocation2 + $0x60] sm:$0xff]
      %v5135 = vld [vmem:[#allocation2 + $0x68] sm:$0xff]
      %v5136 = vld [vmem:[#allocation2 + $0x70] sm:$0xff]
      %v5137 = vld [vmem:[#allocation2 + $0x78] sm:$0xff]
      %v5138 = vld [vmem:[#allocation2 + $0x80] sm:$0xff]
      %v5139 = vld [vmem:[#allocation2 + $0x88] sm:$0xff]
      %v5140 = vld [vmem:[#allocation2 + $0x90] sm:$0xff]
      %v5141 = vld [vmem:[#allocation2 + $0x98] sm:$0xff]
      %v5142 = vld [vmem:[#allocation2 + $0xa0] sm:$0xff]
      %v5143 = vld [vmem:[#allocation2 + $0xa8] sm:$0xff]
      %v5144 = vld [vmem:[#allocation2 + $0xb0] sm:$0xff]
      %v5145 = vld [vmem:[#allocation2 + $0xb8] sm:$0xff]
      %v5146 = vld [vmem:[#allocation2 + $0xc0] sm:$0xff]
      %v5147 = vld [vmem:[#allocation2 + $0xc8] sm:$0xff]
      %v5148 = vld [vmem:[#allocation2 + $0xd0] sm:$0xff]
      %v5149 = vld [vmem:[#allocation2 + $0xd8] sm:$0xff]
      %v5150 = vld [vmem:[#allocation2 + $0xe0] sm:$0xff]
      %v5151 = vld [vmem:[#allocation2 + $0xe8] sm:$0xff]
      %v5152 = vld [vmem:[#allocation2 + $0xf0] sm:$0xff]
      %v5153 = vld [vmem:[#allocation2 + $0xf8] sm:$0xff]
      %v5154 = vld [vmem:[#allocation2 + $0x100] sm:$0xff]
      %v5155 = vld [vmem:[#allocation2 + $0x108] sm:$0xff]
      %v5156 = vld [vmem:[#allocation2 + $0x110] sm:$0xff]
      %v5157 = vld [vmem:[#allocation2 + $0x118] sm:$0xff]
      %v5158 = vld [vmem:[#allocation2 + $0x120] sm:$0xff]
      %v5159 = vld [vmem:[#allocation2 + $0x128] sm:$0xff]
      %v5160 = vld [vmem:[#allocation2 + $0x130] sm:$0xff]
      %v5161 = vld [vmem:[#allocation2 + $0x138] sm:$0xff]
      %v5162 = vld [vmem:[#allocation2 + $0x140] sm:$0xff]
      %v5163 = vld [vmem:[#allocation2 + $0x148] sm:$0xff]
      %v5164 = vld [vmem:[#allocation2 + $0x150] sm:$0xff]
      %v5165 = vld [vmem:[#allocation2 + $0x158] sm:$0xff]
      %v5166 = vld [vmem:[#allocation2 + $0x160] sm:$0xff]
      %v5167 = vld [vmem:[#allocation2 + $0x168] sm:$0xff]
      %v5168 = vld [vmem:[#allocation2 + $0x170] sm:$0xff]
      %v5169 = vld [vmem:[#allocation2 + $0x178] sm:$0xff]
      %s5170 = scalar_lea.vmem %s1, 16
      %v5171 = vld [vmem:[%s5170] sm:$0x3]
      %v5221 = vunpack.c.l.b16 %v5073
      %v5222 = vunpack.c.l.b16 %v5074
      %v5223 = vunpack.c.l.b16 %v5075
      %v5224 = vunpack.c.l.b16 %v5076
      %v5225 = vunpack.c.l.b16 %v5077
      %v5226 = vunpack.c.l.b16 %v5078
      %v5227 = vunpack.c.l.b16 %v5079
      %v5228 = vunpack.c.l.b16 %v5080
      %v5229 = vunpack.c.l.b16 %v5081
      %v5230 = vunpack.c.l.b16 %v5082
      %v5231 = vunpack.c.l.b16 %v5083
      %v5232 = vunpack.c.l.b16 %v5084
      %v5233 = vunpack.c.l.b16 %v5085
      %v5234 = vunpack.c.l.b16 %v5086
      %v5235 = vunpack.c.l.b16 %v5087
      %v5236 = vunpack.c.l.b16 %v5088
      %v5237 = vunpack.c.l.b16 %v5089
      %v5238 = vunpack.c.l.b16 %v5090
      %v5239 = vunpack.c.l.b16 %v5091
      %v5240 = vunpack.c.l.b16 %v5092
      %v5241 = vunpack.c.l.b16 %v5093
      %v5242 = vunpack.c.l.b16 %v5094
      %v5243 = vunpack.c.l.b16 %v5095
      %v5244 = vunpack.c.l.b16 %v5096
      %v5245 = vunpack.c.l.b16 %v5097
      %v5246 = vunpack.c.l.b16 %v5098
      %v5247 = vunpack.c.l.b16 %v5099
      %v5248 = vunpack.c.l.b16 %v5100
      %v5249 = vunpack.c.l.b16 %v5101
      %v5250 = vunpack.c.l.b16 %v5102
      %v5251 = vunpack.c.l.b16 %v5103
      %v5252 = vunpack.c.l.b16 %v5104
      %v5253 = vunpack.c.l.b16 %v5105
      %v5254 = vunpack.c.l.b16 %v5106
      %v5255 = vunpack.c.l.b16 %v5107
      %v5256 = vunpack.c.l.b16 %v5108
      %v5257 = vunpack.c.l.b16 %v5109
      %v5258 = vunpack.c.l.b16 %v5110
      %v5259 = vunpack.c.l.b16 %v5111
      %v5260 = vunpack.c.l.b16 %v5112
      %v5261 = vunpack.c.l.b16 %v5113
      %v5262 = vunpack.c.l.b16 %v5114
      %v5263 = vunpack.c.l.b16 %v5115
      %v5264 = vunpack.c.l.b16 %v5116
      %v5265 = vunpack.c.l.b16 %v5117
      %v5266 = vunpack.c.l.b16 %v5118
      %v5267 = vunpack.c.l.b16 %v5119
      %v5268 = vunpack.c.l.b16 %v5120
      %v5269 = vunpack.c.l.b16 %v5121
      %v5270 = vpack.c.b16 %v5222, %v5221
      %v5271 = vpack.c.b16 %v5224, %v5223
      %v5272 = vpack.c.b16 %v5226, %v5225
      %v5273 = vpack.c.b16 %v5228, %v5227
      %v5274 = vpack.c.b16 %v5230, %v5229
      %v5275 = vpack.c.b16 %v5232, %v5231
      %v5276 = vpack.c.b16 %v5234, %v5233
      %v5277 = vpack.c.b16 %v5236, %v5235
      %v5278 = vpack.c.b16 %v5238, %v5237
      %v5279 = vpack.c.b16 %v5240, %v5239
      %v5280 = vpack.c.b16 %v5242, %v5241
      %v5281 = vpack.c.b16 %v5244, %v5243
      %v5282 = vpack.c.b16 %v5246, %v5245
      %v5283 = vpack.c.b16 %v5248, %v5247
      %v5284 = vpack.c.b16 %v5250, %v5249
      %v5285 = vpack.c.b16 %v5252, %v5251
      %v5286 = vpack.c.b16 %v5254, %v5253
      %v5287 = vpack.c.b16 %v5256, %v5255
      %v5288 = vpack.c.b16 %v5258, %v5257
      %v5289 = vpack.c.b16 %v5260, %v5259
      %v5290 = vpack.c.b16 %v5262, %v5261
      %v5291 = vpack.c.b16 %v5264, %v5263
      %v5292 = vpack.c.b16 %v5266, %v5265
      %v5293 = vpack.c.b16 %v5268, %v5267
      %v5294 = vpack.c.b16 %v5269, %v5269
      %v5295 = vrot.slane %v5270, 1
      %v5296 = vrot.slane %v5271, 1
      %v5297 = vsel %vm1680, %v5295, %v5296
      %v5298 = vrot.slane %v5272, 1
      %v5299 = vsel %vm1680, %v5296, %v5298
      %v5300 = vrot.slane %v5273, 1
      %v5301 = vsel %vm1680, %v5298, %v5300
      %v5302 = vrot.slane %v5274, 1
      %v5303 = vsel %vm1680, %v5300, %v5302
      %v5304 = vrot.slane %v5275, 1
      %v5305 = vsel %vm1680, %v5302, %v5304
      %v5306 = vrot.slane %v5276, 1
      %v5307 = vsel %vm1680, %v5304, %v5306
      %v5308 = vrot.slane %v5277, 1
      %v5309 = vsel %vm1680, %v5306, %v5308
      %v5310 = vrot.slane %v5278, 1
      %v5311 = vsel %vm1680, %v5308, %v5310
      %v5312 = vrot.slane %v5279, 1
      %v5313 = vsel %vm1680, %v5310, %v5312
      %v5314 = vrot.slane %v5280, 1
      %v5315 = vsel %vm1680, %v5312, %v5314
      %v5316 = vrot.slane %v5281, 1
      %v5317 = vsel %vm1680, %v5314, %v5316
      %v5318 = vrot.slane %v5282, 1
      %v5319 = vsel %vm1680, %v5316, %v5318
      %v5320 = vrot.slane %v5283, 1
      %v5321 = vsel %vm1680, %v5318, %v5320
      %v5322 = vrot.slane %v5284, 1
      %v5323 = vsel %vm1680, %v5320, %v5322
      %v5324 = vrot.slane %v5285, 1
      %v5325 = vsel %vm1680, %v5322, %v5324
      %v5326 = vrot.slane %v5286, 1
      %v5327 = vsel %vm1680, %v5324, %v5326
      %v5328 = vrot.slane %v5287, 1
      %v5329 = vsel %vm1680, %v5326, %v5328
      %v5330 = vrot.slane %v5288, 1
      %v5331 = vsel %vm1680, %v5328, %v5330
      %v5332 = vrot.slane %v5289, 1
      %v5333 = vsel %vm1680, %v5330, %v5332
      %v5334 = vrot.slane %v5290, 1
      %v5335 = vsel %vm1680, %v5332, %v5334
      %v5336 = vrot.slane %v5291, 1
      %v5337 = vsel %vm1680, %v5334, %v5336
      %v5338 = vrot.slane %v5292, 1
      %v5339 = vsel %vm1680, %v5336, %v5338
      %v5340 = vrot.slane %v5293, 1
      %v5341 = vsel %vm1680, %v5338, %v5340
      %v5342 = vrot.slane %v5294, 1
      %v5343 = vsel %vm1680, %v5340, %v5342
      %v5345 = vsel %vm172, %v5297, 0
      %v5348 = vsel %vm172, %v5299, 0
      %v5351 = vsel %vm172, %v5301, 0
      %v5354 = vsel %vm172, %v5303, 0
      %v5357 = vsel %vm172, %v5305, 0
      %v5360 = vsel %vm172, %v5307, 0
      %v5363 = vsel %vm172, %v5309, 0
      %v5366 = vsel %vm172, %v5311, 0
      %v5369 = vsel %vm172, %v5313, 0
      %v5372 = vsel %vm172, %v5315, 0
      %v5375 = vsel %vm172, %v5317, 0
      %v5378 = vsel %vm172, %v5319, 0
      %v5381 = vsel %vm172, %v5321, 0
      %v5384 = vsel %vm172, %v5323, 0
      %v5387 = vsel %vm172, %v5325, 0
      %v5390 = vsel %vm172, %v5327, 0
      %v5393 = vsel %vm172, %v5329, 0
      %v5396 = vsel %vm172, %v5331, 0
      %v5399 = vsel %vm172, %v5333, 0
      %v5402 = vsel %vm172, %v5335, 0
      %v5405 = vsel %vm172, %v5337, 0
      %v5408 = vsel %vm172, %v5339, 0
      %v5411 = vsel %vm172, %v5341, 0
      %v5414 = vsel %vm172, %v5343, 0
      %v5417 = vsel %vm510, %v5171, 0
      %5419 = vmatpush.bf16.msra.mxu0 0
      %5420 = vmatpush.bf16.msra.mxu0 0
      %5421 = vmatpush.bf16.msra.mxu0 0
      %5422 = vmatpush.bf16.msra.mxu0 0
      %5423 = vmatpush.bf16.msra.mxu0 0
      %5424 = vmatpush.bf16.msra.mxu0 0
      %5425 = vmatpush.bf16.msra.mxu0 0
      %5426 = vmatpush.bf16.msra.mxu0 %v5417
      %5427 = vmatmul.bf16.gmra.mxu0 %v5345
      %v5428 = vpop.f32.mrf.mxu0
      %v5429 = vadd.f32 0.0, %v5428
      %v5430 = vpop.f32.mrf.mxu0
      %v5431 = vadd.f32 0.0, %v5430
      %5432 = vmatmul.bf16.gmra.mxu0 %v5348
      %v5433 = vpop.f32.mrf.mxu0
      %v5434 = vadd.f32 0.0, %v5433
      %v5435 = vpop.f32.mrf.mxu0
      %v5436 = vadd.f32 0.0, %v5435
      %5437 = vmatmul.bf16.gmra.mxu0 %v5351
      %v5438 = vpop.f32.mrf.mxu0
      %v5439 = vadd.f32 0.0, %v5438
      %v5440 = vpop.f32.mrf.mxu0
      %v5441 = vadd.f32 0.0, %v5440
      %5442 = vmatmul.bf16.gmra.mxu0 %v5354
      %v5443 = vpop.f32.mrf.mxu0
      %v5444 = vadd.f32 0.0, %v5443
      %v5445 = vpop.f32.mrf.mxu0
      %v5446 = vadd.f32 0.0, %v5445
      %5447 = vmatmul.bf16.gmra.mxu0 %v5357
      %v5448 = vpop.f32.mrf.mxu0
      %v5449 = vadd.f32 0.0, %v5448
      %v5450 = vpop.f32.mrf.mxu0
      %v5451 = vadd.f32 0.0, %v5450
      %5452 = vmatmul.bf16.gmra.mxu0 %v5360
      %v5453 = vpop.f32.mrf.mxu0
      %v5454 = vadd.f32 0.0, %v5453
      %v5455 = vpop.f32.mrf.mxu0
      %v5456 = vadd.f32 0.0, %v5455
      %5457 = vmatmul.bf16.gmra.mxu0 %v5363
      %v5458 = vpop.f32.mrf.mxu0
      %v5459 = vadd.f32 0.0, %v5458
      %v5460 = vpop.f32.mrf.mxu0
      %v5461 = vadd.f32 0.0, %v5460
      %5462 = vmatmul.bf16.gmra.mxu0 %v5366
      %v5463 = vpop.f32.mrf.mxu0
      %v5464 = vadd.f32 0.0, %v5463
      %v5465 = vpop.f32.mrf.mxu0
      %v5466 = vadd.f32 0.0, %v5465
      %5467 = vmatmul.bf16.gmra.mxu0 %v5369
      %v5468 = vpop.f32.mrf.mxu0
      %v5469 = vadd.f32 0.0, %v5468
      %v5470 = vpop.f32.mrf.mxu0
      %v5471 = vadd.f32 0.0, %v5470
      %5472 = vmatmul.bf16.gmra.mxu0 %v5372
      %v5473 = vpop.f32.mrf.mxu0
      %v5474 = vadd.f32 0.0, %v5473
      %v5475 = vpop.f32.mrf.mxu0
      %v5476 = vadd.f32 0.0, %v5475
      %5477 = vmatmul.bf16.gmra.mxu0 %v5375
      %v5478 = vpop.f32.mrf.mxu0
      %v5479 = vadd.f32 0.0, %v5478
      %v5480 = vpop.f32.mrf.mxu0
      %v5481 = vadd.f32 0.0, %v5480
      %5482 = vmatmul.bf16.gmra.mxu0 %v5378
      %v5483 = vpop.f32.mrf.mxu0
      %v5484 = vadd.f32 0.0, %v5483
      %v5485 = vpop.f32.mrf.mxu0
      %v5486 = vadd.f32 0.0, %v5485
      %5487 = vmatmul.bf16.gmra.mxu0 %v5381
      %v5488 = vpop.f32.mrf.mxu0
      %v5489 = vadd.f32 0.0, %v5488
      %v5490 = vpop.f32.mrf.mxu0
      %v5491 = vadd.f32 0.0, %v5490
      %5492 = vmatmul.bf16.gmra.mxu0 %v5384
      %v5493 = vpop.f32.mrf.mxu0
      %v5494 = vadd.f32 0.0, %v5493
      %v5495 = vpop.f32.mrf.mxu0
      %v5496 = vadd.f32 0.0, %v5495
      %5497 = vmatmul.bf16.gmra.mxu0 %v5387
      %v5498 = vpop.f32.mrf.mxu0
      %v5499 = vadd.f32 0.0, %v5498
      %v5500 = vpop.f32.mrf.mxu0
      %v5501 = vadd.f32 0.0, %v5500
      %5502 = vmatmul.bf16.gmra.mxu0 %v5390
      %v5503 = vpop.f32.mrf.mxu0
      %v5504 = vadd.f32 0.0, %v5503
      %v5505 = vpop.f32.mrf.mxu0
      %v5506 = vadd.f32 0.0, %v5505
      %5507 = vmatmul.bf16.gmra.mxu0 %v5393
      %v5508 = vpop.f32.mrf.mxu0
      %v5509 = vadd.f32 0.0, %v5508
      %v5510 = vpop.f32.mrf.mxu0
      %v5511 = vadd.f32 0.0, %v5510
      %5512 = vmatmul.bf16.gmra.mxu0 %v5396
      %v5513 = vpop.f32.mrf.mxu0
      %v5514 = vadd.f32 0.0, %v5513
      %v5515 = vpop.f32.mrf.mxu0
      %v5516 = vadd.f32 0.0, %v5515
      %5517 = vmatmul.bf16.gmra.mxu0 %v5399
      %v5518 = vpop.f32.mrf.mxu0
      %v5519 = vadd.f32 0.0, %v5518
      %v5520 = vpop.f32.mrf.mxu0
      %v5521 = vadd.f32 0.0, %v5520
      %5522 = vmatmul.bf16.gmra.mxu0 %v5402
      %v5523 = vpop.f32.mrf.mxu0
      %v5524 = vadd.f32 0.0, %v5523
      %v5525 = vpop.f32.mrf.mxu0
      %v5526 = vadd.f32 0.0, %v5525
      %5527 = vmatmul.bf16.gmra.mxu0 %v5405
      %v5528 = vpop.f32.mrf.mxu0
      %v5529 = vadd.f32 0.0, %v5528
      %v5530 = vpop.f32.mrf.mxu0
      %v5531 = vadd.f32 0.0, %v5530
      %5532 = vmatmul.bf16.gmra.mxu0 %v5408
      %v5533 = vpop.f32.mrf.mxu0
      %v5534 = vadd.f32 0.0, %v5533
      %v5535 = vpop.f32.mrf.mxu0
      %v5536 = vadd.f32 0.0, %v5535
      %5537 = vmatmul.bf16.gmra.mxu0 %v5411
      %v5538 = vpop.f32.mrf.mxu0
      %v5539 = vadd.f32 0.0, %v5538
      %v5540 = vpop.f32.mrf.mxu0
      %v5541 = vadd.f32 0.0, %v5540
      %5542 = vmatmul.bf16.gmra.mxu0 %v5414
      %v5543 = vpop.f32.mrf.mxu0
      %v5544 = vadd.f32 0.0, %v5543
      %v5545 = vpop.f32.mrf.mxu0
      %v5546 = vadd.f32 0.0, %v5545
      %5547 = vdwg.mxu0
      %v5548 = vadd.f32 %v5122, %v5429
      %v5549 = vadd.f32 %v5123, %v5431
      %v5550 = vadd.f32 %v5124, %v5434
      %v5551 = vadd.f32 %v5125, %v5436
      %v5552 = vadd.f32 %v5126, %v5439
      %v5553 = vadd.f32 %v5127, %v5441
      %v5554 = vadd.f32 %v5128, %v5444
      %v5555 = vadd.f32 %v5129, %v5446
      %v5556 = vadd.f32 %v5130, %v5449
      %v5557 = vadd.f32 %v5131, %v5451
      %v5558 = vadd.f32 %v5132, %v5454
      %v5559 = vadd.f32 %v5133, %v5456
      %v5560 = vadd.f32 %v5134, %v5459
      %v5561 = vadd.f32 %v5135, %v5461
      %v5562 = vadd.f32 %v5136, %v5464
      %v5563 = vadd.f32 %v5137, %v5466
      %v5564 = vadd.f32 %v5138, %v5469
      %v5565 = vadd.f32 %v5139, %v5471
      %v5566 = vadd.f32 %v5140, %v5474
      %v5567 = vadd.f32 %v5141, %v5476
      %v5568 = vadd.f32 %v5142, %v5479
      %v5569 = vadd.f32 %v5143, %v5481
      %v5570 = vadd.f32 %v5144, %v5484
      %v5571 = vadd.f32 %v5145, %v5486
      %v5572 = vadd.f32 %v5146, %v5489
      %v5573 = vadd.f32 %v5147, %v5491
      %v5574 = vadd.f32 %v5148, %v5494
      %v5575 = vadd.f32 %v5149, %v5496
      %v5576 = vadd.f32 %v5150, %v5499
      %v5577 = vadd.f32 %v5151, %v5501
      %v5578 = vadd.f32 %v5152, %v5504
      %v5579 = vadd.f32 %v5153, %v5506
      %v5580 = vadd.f32 %v5154, %v5509
      %v5581 = vadd.f32 %v5155, %v5511
      %v5582 = vadd.f32 %v5156, %v5514
      %v5583 = vadd.f32 %v5157, %v5516
      %v5584 = vadd.f32 %v5158, %v5519
      %v5585 = vadd.f32 %v5159, %v5521
      %v5586 = vadd.f32 %v5160, %v5524
      %v5587 = vadd.f32 %v5161, %v5526
      %v5588 = vadd.f32 %v5162, %v5529
      %v5589 = vadd.f32 %v5163, %v5531
      %v5590 = vadd.f32 %v5164, %v5534
      %v5591 = vadd.f32 %v5165, %v5536
      %v5592 = vadd.f32 %v5166, %v5539
      %v5593 = vadd.f32 %v5167, %v5541
      %v5594 = vadd.f32 %v5168, %v5544
      %v5595 = vadd.f32 %v5169, %v5546
      %5596 = vst.msk [vmem:[#allocation2] sm:$0xff] %vm172, %v5548
      %5597 = vst.msk [vmem:[#allocation2 + $0x8] sm:$0xff] %vm172, %v5549
      %5598 = vst.msk [vmem:[#allocation2 + $0x10] sm:$0xff] %vm172, %v5550
      %5599 = vst.msk [vmem:[#allocation2 + $0x18] sm:$0xff] %vm172, %v5551
      %5600 = vst.msk [vmem:[#allocation2 + $0x20] sm:$0xff] %vm172, %v5552
      %5601 = vst.msk [vmem:[#allocation2 + $0x28] sm:$0xff] %vm172, %v5553
      %5602 = vst.msk [vmem:[#allocation2 + $0x30] sm:$0xff] %vm172, %v5554
      %5603 = vst.msk [vmem:[#allocation2 + $0x38] sm:$0xff] %vm172, %v5555
      %5604 = vst.msk [vmem:[#allocation2 + $0x40] sm:$0xff] %vm172, %v5556
      %5605 = vst.msk [vmem:[#allocation2 + $0x48] sm:$0xff] %vm172, %v5557
      %5606 = vst.msk [vmem:[#allocation2 + $0x50] sm:$0xff] %vm172, %v5558
      %5607 = vst.msk [vmem:[#allocation2 + $0x58] sm:$0xff] %vm172, %v5559
      %5608 = vst.msk [vmem:[#allocation2 + $0x60] sm:$0xff] %vm172, %v5560
      %5609 = vst.msk [vmem:[#allocation2 + $0x68] sm:$0xff] %vm172, %v5561
      %5610 = vst.msk [vmem:[#allocation2 + $0x70] sm:$0xff] %vm172, %v5562
      %5611 = vst.msk [vmem:[#allocation2 + $0x78] sm:$0xff] %vm172, %v5563
      %5612 = vst.msk [vmem:[#allocation2 + $0x80] sm:$0xff] %vm172, %v5564
      %5613 = vst.msk [vmem:[#allocation2 + $0x88] sm:$0xff] %vm172, %v5565
      %5614 = vst.msk [vmem:[#allocation2 + $0x90] sm:$0xff] %vm172, %v5566
      %5615 = vst.msk [vmem:[#allocation2 + $0x98] sm:$0xff] %vm172, %v5567
      %5616 = vst.msk [vmem:[#allocation2 + $0xa0] sm:$0xff] %vm172, %v5568
      %5617 = vst.msk [vmem:[#allocation2 + $0xa8] sm:$0xff] %vm172, %v5569
      %5618 = vst.msk [vmem:[#allocation2 + $0xb0] sm:$0xff] %vm172, %v5570
      %5619 = vst.msk [vmem:[#allocation2 + $0xb8] sm:$0xff] %vm172, %v5571
      %5620 = vst.msk [vmem:[#allocation2 + $0xc0] sm:$0xff] %vm172, %v5572
      %5621 = vst.msk [vmem:[#allocation2 + $0xc8] sm:$0xff] %vm172, %v5573
      %5622 = vst.msk [vmem:[#allocation2 + $0xd0] sm:$0xff] %vm172, %v5574
      %5623 = vst.msk [vmem:[#allocation2 + $0xd8] sm:$0xff] %vm172, %v5575
      %5624 = vst.msk [vmem:[#allocation2 + $0xe0] sm:$0xff] %vm172, %v5576
      %5625 = vst.msk [vmem:[#allocation2 + $0xe8] sm:$0xff] %vm172, %v5577
      %5626 = vst.msk [vmem:[#allocation2 + $0xf0] sm:$0xff] %vm172, %v5578
      %5627 = vst.msk [vmem:[#allocation2 + $0xf8] sm:$0xff] %vm172, %v5579
      %5628 = vst.msk [vmem:[#allocation2 + $0x100] sm:$0xff] %vm172, %v5580
      %5629 = vst.msk [vmem:[#allocation2 + $0x108] sm:$0xff] %vm172, %v5581
      %5630 = vst.msk [vmem:[#allocation2 + $0x110] sm:$0xff] %vm172, %v5582
      %5631 = vst.msk [vmem:[#allocation2 + $0x118] sm:$0xff] %vm172, %v5583
      %5632 = vst.msk [vmem:[#allocation2 + $0x120] sm:$0xff] %vm172, %v5584
      %5633 = vst.msk [vmem:[#allocation2 + $0x128] sm:$0xff] %vm172, %v5585
      %5634 = vst.msk [vmem:[#allocation2 + $0x130] sm:$0xff] %vm172, %v5586
      %5635 = vst.msk [vmem:[#allocation2 + $0x138] sm:$0xff] %vm172, %v5587
      %5636 = vst.msk [vmem:[#allocation2 + $0x140] sm:$0xff] %vm172, %v5588
      %5637 = vst.msk [vmem:[#allocation2 + $0x148] sm:$0xff] %vm172, %v5589
      %5638 = vst.msk [vmem:[#allocation2 + $0x150] sm:$0xff] %vm172, %v5590
      %5639 = vst.msk [vmem:[#allocation2 + $0x158] sm:$0xff] %vm172, %v5591
      %5640 = vst.msk [vmem:[#allocation2 + $0x160] sm:$0xff] %vm172, %v5592
      %5641 = vst.msk [vmem:[#allocation2 + $0x168] sm:$0xff] %vm172, %v5593
      %5642 = vst.msk [vmem:[#allocation2 + $0x170] sm:$0xff] %vm172, %v5594
      %5643 = vst.msk [vmem:[#allocation2 + $0x178] sm:$0xff] %vm172, %v5595
      %v5644 = vld [vmem:[#allocation2] sm:$0xff]
      %v5645 = vld [vmem:[#allocation2 + $0x8] sm:$0xff]
      %v5646 = vld [vmem:[#allocation2 + $0x18] sm:$0xff]
      %v5647 = vld [vmem:[#allocation2 + $0x20] sm:$0xff]
      %v5648 = vld [vmem:[#allocation2 + $0x30] sm:$0xff]
      %v5649 = vld [vmem:[#allocation2 + $0x38] sm:$0xff]
      %v5650 = vld [vmem:[#allocation2 + $0x48] sm:$0xff]
      %v5651 = vld [vmem:[#allocation2 + $0x50] sm:$0xff]
      %v5652 = vld [vmem:[#allocation2 + $0x60] sm:$0xff]
      %v5653 = vld [vmem:[#allocation2 + $0x68] sm:$0xff]
      %v5654 = vld [vmem:[#allocation2 + $0x78] sm:$0xff]
      %v5655 = vld [vmem:[#allocation2 + $0x80] sm:$0xff]
      %v5656 = vld [vmem:[#allocation2 + $0x90] sm:$0xff]
      %v5657 = vld [vmem:[#allocation2 + $0x98] sm:$0xff]
      %v5658 = vld [vmem:[#allocation2 + $0xa8] sm:$0xff]
      %v5659 = vld [vmem:[#allocation2 + $0xb0] sm:$0xff]
      %v5660 = vld [vmem:[#allocation2 + $0xc0] sm:$0xff]
      %v5661 = vld [vmem:[#allocation2 + $0xc8] sm:$0xff]
      %v5662 = vld [vmem:[#allocation2 + $0xd8] sm:$0xff]
      %v5663 = vld [vmem:[#allocation2 + $0xe0] sm:$0xff]
      %v5664 = vld [vmem:[#allocation2 + $0xf0] sm:$0xff]
      %v5665 = vld [vmem:[#allocation2 + $0xf8] sm:$0xff]
      %v5666 = vld [vmem:[#allocation2 + $0x108] sm:$0xff]
      %v5667 = vld [vmem:[#allocation2 + $0x110] sm:$0xff]
      %v5668 = vld [vmem:[#allocation2 + $0x120] sm:$0xff]
      %v5669 = vld [vmem:[#allocation2 + $0x128] sm:$0xff]
      %v5670 = vld [vmem:[#allocation2 + $0x138] sm:$0xff]
      %v5671 = vld [vmem:[#allocation2 + $0x140] sm:$0xff]
      %v5672 = vld [vmem:[#allocation2 + $0x150] sm:$0xff]
      %v5673 = vld [vmem:[#allocation2 + $0x158] sm:$0xff]
      %v5674 = vld [vmem:[#allocation2 + $0x168] sm:$0xff]
      %v5675 = vld [vmem:[#allocation2 + $0x170] sm:$0xff]
      %v5676 = vld [vmem:[%s2] sm:$0x1]
      %v5678 = vperm.slane %v5676, 0
      %v5680 = vadd.f32 %v5644, %v5678
      %v5681 = vadd.f32 %v5645, %v5678
      %v5682 = vadd.f32 %v5646, %v5678
      %v5683 = vadd.f32 %v5647, %v5678
      %v5684 = vadd.f32 %v5648, %v5678
      %v5685 = vadd.f32 %v5649, %v5678
      %v5686 = vadd.f32 %v5650, %v5678
      %v5687 = vadd.f32 %v5651, %v5678
      %v5688 = vadd.f32 %v5652, %v5678
      %v5689 = vadd.f32 %v5653, %v5678
      %v5690 = vadd.f32 %v5654, %v5678
      %v5691 = vadd.f32 %v5655, %v5678
      %v5692 = vadd.f32 %v5656, %v5678
      %v5693 = vadd.f32 %v5657, %v5678
      %v5694 = vadd.f32 %v5658, %v5678
      %v5695 = vadd.f32 %v5659, %v5678
      %v5696 = vadd.f32 %v5660, %v5678
      %v5697 = vadd.f32 %v5661, %v5678
      %v5698 = vadd.f32 %v5662, %v5678
      %v5699 = vadd.f32 %v5663, %v5678
      %v5700 = vadd.f32 %v5664, %v5678
      %v5701 = vadd.f32 %v5665, %v5678
      %v5702 = vadd.f32 %v5666, %v5678
      %v5703 = vadd.f32 %v5667, %v5678
      %v5704 = vadd.f32 %v5668, %v5678
      %v5705 = vadd.f32 %v5669, %v5678
      %v5706 = vadd.f32 %v5670, %v5678
      %v5707 = vadd.f32 %v5671, %v5678
      %v5708 = vadd.f32 %v5672, %v5678
      %v5709 = vadd.f32 %v5673, %v5678
      %v5710 = vadd.f32 %v5674, %v5678
      %v5711 = vadd.f32 %v5675, %v5678
      %vm5712 = vcmp.gt.f32.partialorder %v5680, 0.0
      %vm5713 = vcmp.gt.f32.partialorder %v5681, 0.0
      %vm5714 = vcmp.gt.f32.partialorder %v5682, 0.0
      %vm5715 = vcmp.gt.f32.partialorder %v5683, 0.0
      %vm5716 = vcmp.gt.f32.partialorder %v5684, 0.0
      %vm5717 = vcmp.gt.f32.partialorder %v5685, 0.0
      %vm5718 = vcmp.gt.f32.partialorder %v5686, 0.0
      %vm5719 = vcmp.gt.f32.partialorder %v5687, 0.0
      %vm5720 = vcmp.gt.f32.partialorder %v5688, 0.0
      %vm5721 = vcmp.gt.f32.partialorder %v5689, 0.0
      %vm5722 = vcmp.gt.f32.partialorder %v5690, 0.0
      %vm5723 = vcmp.gt.f32.partialorder %v5691, 0.0
      %vm5724 = vcmp.gt.f32.partialorder %v5692, 0.0
      %vm5725 = vcmp.gt.f32.partialorder %v5693, 0.0
      %vm5726 = vcmp.gt.f32.partialorder %v5694, 0.0
      %vm5727 = vcmp.gt.f32.partialorder %v5695, 0.0
      %vm5728 = vcmp.gt.f32.partialorder %v5696, 0.0
      %vm5729 = vcmp.gt.f32.partialorder %v5697, 0.0
      %vm5730 = vcmp.gt.f32.partialorder %v5698, 0.0
      %vm5731 = vcmp.gt.f32.partialorder %v5699, 0.0
      %vm5732 = vcmp.gt.f32.partialorder %v5700, 0.0
      %vm5733 = vcmp.gt.f32.partialorder %v5701, 0.0
      %vm5734 = vcmp.gt.f32.partialorder %v5702, 0.0
      %vm5735 = vcmp.gt.f32.partialorder %v5703, 0.0
      %vm5736 = vcmp.gt.f32.partialorder %v5704, 0.0
      %vm5737 = vcmp.gt.f32.partialorder %v5705, 0.0
      %vm5738 = vcmp.gt.f32.partialorder %v5706, 0.0
      %vm5739 = vcmp.gt.f32.partialorder %v5707, 0.0
      %vm5740 = vcmp.gt.f32.partialorder %v5708, 0.0
      %vm5741 = vcmp.gt.f32.partialorder %v5709, 0.0
      %vm5742 = vcmp.gt.f32.partialorder %v5710, 0.0
      %vm5743 = vcmp.gt.f32.partialorder %v5711, 0.0
      %v5744 = vmul.f32 %v5680, 0.3
      %v5745 = vmul.f32 %v5681, 0.3
      %v5746 = vmul.f32 %v5682, 0.3
      %v5747 = vmul.f32 %v5683, 0.3
      %v5748 = vmul.f32 %v5684, 0.3
      %v5749 = vmul.f32 %v5685, 0.3
      %v5750 = vmul.f32 %v5686, 0.3
      %v5751 = vmul.f32 %v5687, 0.3
      %v5752 = vmul.f32 %v5688, 0.3
      %v5753 = vmul.f32 %v5689, 0.3
      %v5754 = vmul.f32 %v5690, 0.3
      %v5755 = vmul.f32 %v5691, 0.3
      %v5756 = vmul.f32 %v5692, 0.3
      %v5757 = vmul.f32 %v5693, 0.3
      %v5758 = vmul.f32 %v5694, 0.3
      %v5759 = vmul.f32 %v5695, 0.3
      %v5760 = vmul.f32 %v5696, 0.3
      %v5761 = vmul.f32 %v5697, 0.3
      %v5762 = vmul.f32 %v5698, 0.3
      %v5763 = vmul.f32 %v5699, 0.3
      %v5764 = vmul.f32 %v5700, 0.3
      %v5765 = vmul.f32 %v5701, 0.3
      %v5766 = vmul.f32 %v5702, 0.3
      %v5767 = vmul.f32 %v5703, 0.3
      %v5768 = vmul.f32 %v5704, 0.3
      %v5769 = vmul.f32 %v5705, 0.3
      %v5770 = vmul.f32 %v5706, 0.3
      %v5771 = vmul.f32 %v5707, 0.3
      %v5772 = vmul.f32 %v5708, 0.3
      %v5773 = vmul.f32 %v5709, 0.3
      %v5774 = vmul.f32 %v5710, 0.3
      %v5775 = vmul.f32 %v5711, 0.3
      %v5776 = vsel %vm5712, %v5680, %v5744
      %v5777 = vsel %vm5713, %v5681, %v5745
      %v5778 = vsel %vm5714, %v5682, %v5746
      %v5779 = vsel %vm5715, %v5683, %v5747
      %v5780 = vsel %vm5716, %v5684, %v5748
      %v5781 = vsel %vm5717, %v5685, %v5749
      %v5782 = vsel %vm5718, %v5686, %v5750
      %v5783 = vsel %vm5719, %v5687, %v5751
      %v5784 = vsel %vm5720, %v5688, %v5752
      %v5785 = vsel %vm5721, %v5689, %v5753
      %v5786 = vsel %vm5722, %v5690, %v5754
      %v5787 = vsel %vm5723, %v5691, %v5755
      %v5788 = vsel %vm5724, %v5692, %v5756
      %v5789 = vsel %vm5725, %v5693, %v5757
      %v5790 = vsel %vm5726, %v5694, %v5758
      %v5791 = vsel %vm5727, %v5695, %v5759
      %v5792 = vsel %vm5728, %v5696, %v5760
      %v5793 = vsel %vm5729, %v5697, %v5761
      %v5794 = vsel %vm5730, %v5698, %v5762
      %v5795 = vsel %vm5731, %v5699, %v5763
      %v5796 = vsel %vm5732, %v5700, %v5764
      %v5797 = vsel %vm5733, %v5701, %v5765
      %v5798 = vsel %vm5734, %v5702, %v5766
      %v5799 = vsel %vm5735, %v5703, %v5767
      %v5800 = vsel %vm5736, %v5704, %v5768
      %v5801 = vsel %vm5737, %v5705, %v5769
      %v5802 = vsel %vm5738, %v5706, %v5770
      %v5803 = vsel %vm5739, %v5707, %v5771
      %v5804 = vsel %vm5740, %v5708, %v5772
      %v5805 = vsel %vm5741, %v5709, %v5773
      %v5806 = vsel %vm5742, %v5710, %v5774
      %v5807 = vsel %vm5743, %v5711, %v5775
      %v5808 = vpack.c.bf16 %v5776, %v5776
      %v5809 = vpack.c.bf16 %v5777, %v5777
      %v5810 = vpack.c.bf16 %v5778, %v5778
      %v5811 = vpack.c.bf16 %v5779, %v5779
      %v5812 = vpack.c.bf16 %v5780, %v5780
      %v5813 = vpack.c.bf16 %v5781, %v5781
      %v5814 = vpack.c.bf16 %v5782, %v5782
      %v5815 = vpack.c.bf16 %v5783, %v5783
      %v5816 = vpack.c.bf16 %v5784, %v5784
      %v5817 = vpack.c.bf16 %v5785, %v5785
      %v5818 = vpack.c.bf16 %v5786, %v5786
      %v5819 = vpack.c.bf16 %v5787, %v5787
      %v5820 = vpack.c.bf16 %v5788, %v5788
      %v5821 = vpack.c.bf16 %v5789, %v5789
      %v5822 = vpack.c.bf16 %v5790, %v5790
      %v5823 = vpack.c.bf16 %v5791, %v5791
      %v5824 = vpack.c.bf16 %v5792, %v5792
      %v5825 = vpack.c.bf16 %v5793, %v5793
      %v5826 = vpack.c.bf16 %v5794, %v5794
      %v5827 = vpack.c.bf16 %v5795, %v5795
      %v5828 = vpack.c.bf16 %v5796, %v5796
      %v5829 = vpack.c.bf16 %v5797, %v5797
      %v5830 = vpack.c.bf16 %v5798, %v5798
      %v5831 = vpack.c.bf16 %v5799, %v5799
      %v5832 = vpack.c.bf16 %v5800, %v5800
      %v5833 = vpack.c.bf16 %v5801, %v5801
      %v5834 = vpack.c.bf16 %v5802, %v5802
      %v5835 = vpack.c.bf16 %v5803, %v5803
      %v5836 = vpack.c.bf16 %v5804, %v5804
      %v5837 = vpack.c.bf16 %v5805, %v5805
      %v5838 = vpack.c.bf16 %v5806, %v5806
      %v5839 = vpack.c.bf16 %v5807, %v5807
      %vm5840 = vcmask 27648
      %5841 = vst.msk [vmem:[%s170] sm:$0xf] %vm5840, %v5808
      %5842 = vst.msk [vmem:[%s170 + $0x4] sm:$0xf] %vm5840, %v5809
      %5843 = vst.msk [vmem:[%s170 + $0x8] sm:$0xf] %vm5840, %v5810
      %5844 = vst.msk [vmem:[%s170 + $0xc] sm:$0xf] %vm5840, %v5811
      %5845 = vst.msk [vmem:[%s170 + $0x10] sm:$0xf] %vm5840, %v5812
      %5846 = vst.msk [vmem:[%s170 + $0x14] sm:$0xf] %vm5840, %v5813
      %5847 = vst.msk [vmem:[%s170 + $0x18] sm:$0xf] %vm5840, %v5814
      %5848 = vst.msk [vmem:[%s170 + $0x1c] sm:$0xf] %vm5840, %v5815
      %5849 = vst.msk [vmem:[%s170 + $0x20] sm:$0xf] %vm5840, %v5816
      %5850 = vst.msk [vmem:[%s170 + $0x24] sm:$0xf] %vm5840, %v5817
      %5851 = vst.msk [vmem:[%s170 + $0x28] sm:$0xf] %vm5840, %v5818
      %5852 = vst.msk [vmem:[%s170 + $0x2c] sm:$0xf] %vm5840, %v5819
      %5853 = vst.msk [vmem:[%s170 + $0x30] sm:$0xf] %vm5840, %v5820
      %5854 = vst.msk [vmem:[%s170 + $0x34] sm:$0xf] %vm5840, %v5821
      %5855 = vst.msk [vmem:[%s170 + $0x38] sm:$0xf] %vm5840, %v5822
      %5856 = vst.msk [vmem:[%s170 + $0x3c] sm:$0xf] %vm5840, %v5823
      %5857 = vst.msk [vmem:[%s170 + $0x40] sm:$0xf] %vm5840, %v5824
      %5858 = vst.msk [vmem:[%s170 + $0x44] sm:$0xf] %vm5840, %v5825
      %5859 = vst.msk [vmem:[%s170 + $0x48] sm:$0xf] %vm5840, %v5826
      %5860 = vst.msk [vmem:[%s170 + $0x4c] sm:$0xf] %vm5840, %v5827
      %5861 = vst.msk [vmem:[%s170 + $0x50] sm:$0xf] %vm5840, %v5828
      %5862 = vst.msk [vmem:[%s170 + $0x54] sm:$0xf] %vm5840, %v5829
      %5863 = vst.msk [vmem:[%s170 + $0x58] sm:$0xf] %vm5840, %v5830
      %5864 = vst.msk [vmem:[%s170 + $0x5c] sm:$0xf] %vm5840, %v5831
      %5865 = vst.msk [vmem:[%s170 + $0x60] sm:$0xf] %vm5840, %v5832
      %5866 = vst.msk [vmem:[%s170 + $0x64] sm:$0xf] %vm5840, %v5833
      %5867 = vst.msk [vmem:[%s170 + $0x68] sm:$0xf] %vm5840, %v5834
      %5868 = vst.msk [vmem:[%s170 + $0x6c] sm:$0xf] %vm5840, %v5835
      %5869 = vst.msk [vmem:[%s170 + $0x70] sm:$0xf] %vm5840, %v5836
      %5870 = vst.msk [vmem:[%s170 + $0x74] sm:$0xf] %vm5840, %v5837
      %5871 = vst.msk [vmem:[%s170 + $0x78] sm:$0xf] %vm5840, %v5838
      %5872 = vst.msk [vmem:[%s170 + $0x7c] sm:$0xf] %vm5840, %v5839
      %p5873 = scmp.lt.s32.totalorder %s14, 1
      %s5874 = scalar_select %p5873, %s14, 1
      %s5875 = smul.addr %s5874, 32
      %s5876 = smul.addr %s5875, 4
      %s5877 = scalar_lea.vmem %s3, %s5876
      // Predicated region
      $region33: #{bottleneck_forward.4} parent=31 // pred_check
        %p5878 = pneg %p100
      $region34: #{bottleneck_forward.4} parent=31 // pred_check_branch
        %5880 = sbr.rel (%p5878) target = $region36
      $region35: #{bottleneck_forward.4} parent=31 // pred_region
        _
      $region36: #{bottleneck_forward.4} parent=31 // pred_fallthru
        _
    $region32: #{bottleneck_forward.4} parent=5 // pred_fallthru
      _
    %p5881 = scmp.le.s32.totalorder 2, %s9
    // Predicated region
    $region37: #{bottleneck_forward.4} parent=5 // pred_check
      %p5882 = pneg %p5881
    $region38: #{bottleneck_forward.4} parent=5 // pred_check_branch
      %5884 = sbr.rel (%p5882) target = $region40
    $region39: #{bottleneck_forward.4} parent=5 // pred_region
      %s5885 = ssub.s32 %s9, 2
      // Predicated region
      $region41: #{bottleneck_forward.4} parent=39 // pred_check
        %p5886 = pneg %p106
      $region42: #{bottleneck_forward.4} parent=39 // pred_check_branch
        %5888 = sbr.rel (%p5886) target = $region44
      $region43: #{bottleneck_forward.4} parent=39 // pred_region
        %p5889 = scmp.lt.s32.totalorder %s15, 1
        %s5890 = scalar_select %p5889, %s15, 1
        %s5891 = smul.addr %s5890, 32
        %s5892 = smul.addr %s5891, 4
        %s5893 = scalar_lea.vmem %s3, %s5892
      $region44: #{bottleneck_forward.4} parent=39 // pred_fallthru
        _
    $region40: #{bottleneck_forward.4} parent=5 // pred_fallthru
      _
  $region6: #{bottleneck_forward.4} parent=0 // loop_footer
    %s13 = sadd.s32 1, %s9
  $region7: #{bottleneck_forward.4} parent=0 // loop_footer_branch
    %8 = sbr.rel target = $region3
  $region8: #{bottleneck_forward.4} parent=0 // loop_exit
    _

</llo_original>
